<compile_context>
chip_gen: v6e
topology: v6e:2x2x1
jax: 0.10.0
libtpu: 0.0.40
codegen_flags: <defaults>
</compile_context>

<pallas_src>
import jax
import jax.numpy as jnp
from jax.experimental import pallas as pl
from jax.experimental.pallas import tpu as pltpu

IN_FEATURES = 143000                      # fc1 input width
H1, H2, H3, OUT = 256, 128, 64, 130
K_TILE = 17920                            # 128 * 140 ; int8 W1 tile ~4.6 MiB
K_PAD = pl.cdiv(IN_FEATURES, K_TILE) * K_TILE     # 143360 -> 8 grid steps


def _fwd_kernel(x_ref, w1_ref, s1_ref, b1_ref,
                w2_ref, b2_ref, w3_ref, b3_ref, w4_ref, b4_ref,
                o_ref, acc_ref):
    """Fused forward pass.

    Grid: (K_PAD // K_TILE,) -- a pure reduction over the padded fc1 input
    dim.  Each step streams one (K_TILE, 256) int8 W1 tile, dequantizes it to
    bf16 on the VPU and accumulates into a resident f32 [B, 256] accumulator.
    The last step applies the per-column scale + bias + relu and runs the
    tiny fc2/fc3/fc4 + sigmoid epilogue directly on the VMEM-resident h1.
    """
    k = pl.program_id(0)

    @pl.when(k == 0)
    def _():
        acc_ref[...] = jnp.zeros_like(acc_ref)

    x_tile = x_ref[...].astype(jnp.bfloat16)          # [B, K_TILE]  f32 -> bf16
    w_tile = w1_ref[...].astype(jnp.bfloat16)         # [K_TILE, 256] i8 -> bf16
    acc_ref[...] += jnp.dot(x_tile, w_tile,
                            preferred_element_type=jnp.float32)

    @pl.when(k == pl.num_programs(0) - 1)
    def _():
        # fc1 finalize: per-output-column dequant scale, bias, relu.
        h1 = jnp.maximum(acc_ref[...] * s1_ref[...] + b1_ref[...], 0.0)
        # dropout1: identity in eval mode
        h2 = jnp.maximum(
            jnp.dot(h1, w2_ref[...], preferred_element_type=jnp.float32)
            + b2_ref[...], 0.0)
        # dropout2: identity in eval mode
        h3 = jnp.maximum(
            jnp.dot(h2, w3_ref[...], preferred_element_type=jnp.float32)
            + b3_ref[...], 0.0)
        logits = (jnp.dot(h3, w4_ref[...], preferred_element_type=jnp.float32)
                  + b4_ref[...])
        o_ref[...] = jax.nn.sigmoid(logits).astype(o_ref.dtype)


def prepare_params(params):
    """One-time parameter prep (run once, outside the per-call jit).

    W1 -> int8 with per-output-column f32 scales (absmax / 127), zero-padded
    along the reduction dim to K_PAD.  Zero padding contributes exactly 0 to
    the accumulation.  Biases become [1, N] rows for clean VMEM tiles.
    """
    w1, b1, w2, b2, w3, b3, w4, b4 = params
    absmax = jnp.max(jnp.abs(w1), axis=0, keepdims=True)           # [1, 256]
    s1 = jnp.where(absmax > 0, absmax / 127.0, 1.0).astype(jnp.float32)
    w1_q = jnp.clip(jnp.round(w1 / s1), -127, 127).astype(jnp.int8)
    w1_q = jnp.pad(w1_q, ((0, K_PAD - IN_FEATURES), (0, 0)))
    b1r, b2r, b3r, b4r = (b.reshape(1, -1) for b in (b1, b2, b3, b4))
    return (w1_q, s1, b1r, w2, b2r, w3, b3r, w4, b4r)


@jax.jit
def feedforward_model(x, prepared):
    """x: [B, 143000] float32 -> [B, 130] float32 (sigmoid probabilities)."""
    w1_q, s1, b1r, w2, b2r, w3, b3r, w4, b4r = prepared
    B, K = x.shape
    assert K == IN_FEATURES

    # Cheap per-call prep: zero-pad the f32 activations (no bf16
    # materialization -- the cast happens per-tile inside the kernel).
    x_p = jnp.pad(x, ((0, 0), (0, K_PAD - K)))

    n_k = K_PAD // K_TILE
    const = lambda k: (0, 0)

    out = pl.pallas_call(
        _fwd_kernel,
        out_shape=jax.ShapeDtypeStruct((B, OUT), jnp.float32),
        grid_spec=pltpu.PrefetchScalarGridSpec(
            num_scalar_prefetch=0,
            grid=(n_k,),
            in_specs=[
                pl.BlockSpec((B, K_TILE), lambda k: (0, k)),     # x tile (f32)
                pl.BlockSpec((K_TILE, H1), lambda k: (k, 0)),    # W1 int8 tile
                pl.BlockSpec((1, H1), const),                    # fc1 scales
                pl.BlockSpec((1, H1), const),                    # b1
                pl.BlockSpec((H1, H2), const),                   # w2
                pl.BlockSpec((1, H2), const),                    # b2
                pl.BlockSpec((H2, H3), const),                   # w3
                pl.BlockSpec((1, H3), const),                    # b3
                pl.BlockSpec((H3, OUT), const),                  # w4
                pl.BlockSpec((1, OUT), const),                   # b4
            ],
            out_specs=pl.BlockSpec((B, OUT), const),
            scratch_shapes=[pltpu.VMEM((B, H1), jnp.float32)],   # f32 accumulator
        ),
        compiler_params=pltpu.CompilerParams(
            dimension_semantics=("arbitrary",),
            vmem_limit_bytes=48 << 20,       # well under 64 MiB physical on v7x
        ),
        cost_estimate=pl.CostEstimate(
            flops=2 * B * (K_PAD * H1 + H1 * H2 + H2 * H3 + H3 * OUT),
            transcendentals=B * OUT,
            bytes_accessed=(K_PAD * H1 * 1          # int8 W1 stream (dominant)
                            + B * K_PAD * 4         # f32 x stream
                            + 4 * (H1 * H2 + H2 * H3 + H3 * OUT
                                   + 2 * H1 + H2 + H3 + OUT + B * OUT)),
        ),
    )(x_p, w1_q, s1, b1r, w2, b2r, w3, b3r, w4, b4r)
    return out


def init_params(key):
    """Deterministic synthetic parameters (same shapes as the torch module)."""
    ks = jax.random.split(key, 8)

    def lin(kw, kb, fan_in, fan_out):
        scale = 1.0 / jnp.sqrt(jnp.float32(fan_in))
        w = jax.random.uniform(kw, (fan_in, fan_out), jnp.float32,
                               minval=-scale, maxval=scale)
        b = jax.random.uniform(kb, (fan_out,), jnp.float32,
                               minval=-scale, maxval=scale)
        return w, b

    w1, b1 = lin(ks[0], ks[1], IN_FEATURES, H1)
    w2, b2 = lin(ks[2], ks[3], H1, H2)
    w3, b3 = lin(ks[4], ks[5], H2, H3)
    w4, b4 = lin(ks[6], ks[7], H3, OUT)
    return (w1, b1, w2, b2, w3, b3, w4, b4)


def reference_f32(x, params):
    """Full-precision reference of the torch module (eval mode)."""
    w1, b1, w2, b2, w3, b3, w4, b4 = params
    h = jax.nn.relu(x @ w1 + b1)
    h = jax.nn.relu(h @ w2 + b2)
    h = jax.nn.relu(h @ w3 + b3)
    return jax.nn.sigmoid(h @ w4 + b4)


def reference_quant(x, prepared):
    """Reference matching the kernel's numerics (int8 W1 dequantized to bf16,
    bf16 activations, f32 accumulation, per-column scale applied to acc)."""
    w1_q, s1, b1r, w2, b2r, w3, b3r, w4, b4r = prepared
    acc = jnp.dot(x.astype(jnp.bfloat16),
                  w1_q[:IN_FEATURES].astype(jnp.bfloat16),
                  preferred_element_type=jnp.float32)
    h = jax.nn.relu(acc * s1 + b1r)
    h = jax.nn.relu(h @ w2 + b2r)
    h = jax.nn.relu(h @ w3 + b3r)
    return jax.nn.sigmoid(h @ w4 + b4r)


if __name__ == "__main__":
    key = jax.random.PRNGKey(0)
    kx, kp = jax.random.split(key)

    batch = 2
    x = jax.random.normal(kx, (batch, IN_FEATURES), jnp.float32)
    params = init_params(kp)

    # One-time prep (int8 quantization + padding of W1) happens OUTSIDE the
    # jitted per-call forward pass.
    prepared = prepare_params(params)

    out = jax.block_until_ready(feedforward_model(x, prepared))
    assert out.shape == (batch, OUT), out.shape

    # Tight check vs a reference with matching int8/bf16 fc1 numerics.
    ref_q = jax.block_until_ready(reference_quant(x, prepared))
    assert jnp.allclose(out, ref_q, atol=5e-3, rtol=5e-3), (
        float(jnp.max(jnp.abs(out - ref_q))))

    # Loose check vs the full-f32 reference (int8 weight-quantization error).
    ref_f32 = jax.block_until_ready(reference_f32(x, params))
    assert jnp.allclose(out, ref_f32, atol=3e-2, rtol=3e-2), (
        float(jnp.max(jnp.abs(out - ref_f32))))

    print("KERNEL_OK")
</pallas_src>

<mosaic_0001>
module attributes {stable_mosaic.version = 11 : i64} {
  func.func @_fwd_kernel(%arg0: i32, %arg1: memref<2x17920xf32, #tpu.memory_space<vmem>>, %arg2: memref<17920x256xi8, #tpu.memory_space<vmem>>, %arg3: memref<1x256xf32, #tpu.memory_space<vmem>>, %arg4: memref<1x256xf32, #tpu.memory_space<vmem>>, %arg5: memref<256x128xf32, #tpu.memory_space<vmem>>, %arg6: memref<1x128xf32, #tpu.memory_space<vmem>>, %arg7: memref<128x64xf32, #tpu.memory_space<vmem>>, %arg8: memref<1x64xf32, #tpu.memory_space<vmem>>, %arg9: memref<64x130xf32, #tpu.memory_space<vmem>>, %arg10: memref<1x130xf32, #tpu.memory_space<vmem>>, %arg11: memref<2x130xf32, #tpu.memory_space<vmem>>, %arg12: memref<2x256xf32, #tpu.memory_space<vmem>>) attributes {dimension_semantics = [#tpu.dimension_semantics<arbitrary>], iteration_bounds = array<i64: 8>, scalar_prefetch = 0 : i64, scratch_operands = 1 : i64, tpu.core_type = #tpu.core_type<tc>, window_params = [{transform_indices = @transform_0, window_bounds = array<i64: 2, 17920>}, {transform_indices = @transform_1, window_bounds = array<i64: 17920, 256>}, {pipeline_mode = #tpu.pipeline_mode<synchronous>, transform_indices = @transform_2, window_bounds = array<i64: 1, 256>}, {pipeline_mode = #tpu.pipeline_mode<synchronous>, transform_indices = @transform_3, window_bounds = array<i64: 1, 256>}, {pipeline_mode = #tpu.pipeline_mode<synchronous>, transform_indices = @transform_4, window_bounds = array<i64: 256, 128>}, {pipeline_mode = #tpu.pipeline_mode<synchronous>, transform_indices = @transform_5, window_bounds = array<i64: 1, 128>}, {pipeline_mode = #tpu.pipeline_mode<synchronous>, transform_indices = @transform_6, window_bounds = array<i64: 128, 64>}, {pipeline_mode = #tpu.pipeline_mode<synchronous>, transform_indices = @transform_7, window_bounds = array<i64: 1, 64>}, {pipeline_mode = #tpu.pipeline_mode<synchronous>, transform_indices = @transform_8, window_bounds = array<i64: 64, 130>}, {pipeline_mode = #tpu.pipeline_mode<synchronous>, transform_indices = @transform_9, window_bounds = array<i64: 1, 130>}, {pipeline_mode = #tpu.pipeline_mode<synchronous>, transform_indices = @transform_10, window_bounds = array<i64: 2, 130>}]} {
    %c0_i32 = arith.constant 0 : i32
    %0 = arith.cmpi eq, %arg0, %c0_i32 : i32
    %1 = arith.extui %0 : i1 to i32
    %c0_i32_0 = arith.constant 0 : i32
    %2 = arith.cmpi ne, %1, %c0_i32_0 : i32
    scf.if %2 {
      %cst_9 = arith.constant 0.000000e+00 : f32
      %14 = vector.broadcast %cst_9 : f32 to vector<2x256xf32>
      %c0_10 = arith.constant 0 : index
      %c0_11 = arith.constant 0 : index
      %15 = vector.load %arg12[%c0_10, %c0_11] : memref<2x256xf32, #tpu.memory_space<vmem>>, vector<2x256xf32>
      tpu.vector_store %arg12[%c0_10, %c0_11], %14 {strides = array<i32>} : memref<2x256xf32, #tpu.memory_space<vmem>>, vector<2x256xf32>,
    } else {
    }
    %c0 = arith.constant 0 : index
    %c0_1 = arith.constant 0 : index
    %3 = vector.load %arg1[%c0, %c0_1] : memref<2x17920xf32, #tpu.memory_space<vmem>>, vector<2x17920xf32>
    %4 = arith.truncf %3 : vector<2x17920xf32> to vector<2x17920xbf16>
    %c0_2 = arith.constant 0 : index
    %c0_3 = arith.constant 0 : index
    %5 = vector.load %arg2[%c0_2, %c0_3] : memref<17920x256xi8, #tpu.memory_space<vmem>>, vector<17920x256xi8>
    %6 = arith.sitofp %5 : vector<17920x256xi8> to vector<17920x256xbf16>
    %c0_4 = arith.constant 0 : index
    %c0_5 = arith.constant 0 : index
    %7 = vector.load %arg12[%c0_4, %c0_5] : memref<2x256xf32, #tpu.memory_space<vmem>>, vector<2x256xf32>
    %cst = arith.constant dense<0.000000e+00> : vector<2x256xf32>
    %8 = tpu.matmul %4, %6, %cst {dimension_numbers = #tpu.dot_dimension_numbers<[1], [0], [0], [1], [0, 0, 1, 1], [], []>} : vector<2x17920xbf16>, vector<17920x256xbf16>, vector<2x256xf32> -> vector<2x256xf32>
    %9 = arith.addf %7, %8 : vector<2x256xf32>
    %c0_6 = arith.constant 0 : index
    %c0_7 = arith.constant 0 : index
    %10 = vector.load %arg12[%c0_6, %c0_7] : memref<2x256xf32, #tpu.memory_space<vmem>>, vector<2x256xf32>
    tpu.vector_store %arg12[%c0_6, %c0_7], %9 {strides = array<i32>} : memref<2x256xf32, #tpu.memory_space<vmem>>, vector<2x256xf32>,
    %c7_i32 = arith.constant 7 : i32
    %11 = arith.cmpi eq, %arg0, %c7_i32 : i32
    %12 = arith.extui %11 : i1 to i32
    %c0_i32_8 = arith.constant 0 : i32
    %13 = arith.cmpi ne, %12, %c0_i32_8 : i32
    scf.if %13 {
      %c0_9 = arith.constant 0 : index
      %c0_10 = arith.constant 0 : index
      %14 = vector.load %arg12[%c0_9, %c0_10] : memref<2x256xf32, #tpu.memory_space<vmem>>, vector<2x256xf32>
      %c0_11 = arith.constant 0 : index
      %c0_12 = arith.constant 0 : index
      %15 = vector.load %arg3[%c0_11, %c0_12] : memref<1x256xf32, #tpu.memory_space<vmem>>, vector<1x256xf32>
      %16 = vector.broadcast %15 : vector<1x256xf32> to vector<2x256xf32>
      %17 = arith.mulf %14, %16 : vector<2x256xf32>
      %c0_13 = arith.constant 0 : index
      %c0_14 = arith.constant 0 : index
      %18 = vector.load %arg4[%c0_13, %c0_14] : memref<1x256xf32, #tpu.memory_space<vmem>>, vector<1x256xf32>
      %19 = vector.broadcast %18 : vector<1x256xf32> to vector<2x256xf32>
      %20 = arith.addf %17, %19 : vector<2x256xf32>
      %cst_15 = arith.constant 0.000000e+00 : f32
      %21 = vector.broadcast %cst_15 : f32 to vector<2x256xf32>
      %22 = arith.maximumf %20, %21 : vector<2x256xf32>
      %c0_16 = arith.constant 0 : index
      %c0_17 = arith.constant 0 : index
      %23 = vector.load %arg5[%c0_16, %c0_17] : memref<256x128xf32, #tpu.memory_space<vmem>>, vector<256x128xf32>
      %cst_18 = arith.constant dense<0.000000e+00> : vector<2x128xf32>
      %24 = tpu.matmul %22, %23, %cst_18 {dimension_numbers = #tpu.dot_dimension_numbers<[1], [0], [0], [1], [0, 0, 1, 1], [], []>} : vector<2x256xf32>, vector<256x128xf32>, vector<2x128xf32> -> vector<2x128xf32>
      %c0_19 = arith.constant 0 : index
      %c0_20 = arith.constant 0 : index
      %25 = vector.load %arg6[%c0_19, %c0_20] : memref<1x128xf32, #tpu.memory_space<vmem>>, vector<1x128xf32>
      %26 = vector.broadcast %25 : vector<1x128xf32> to vector<2x128xf32>
      %27 = arith.addf %24, %26 : vector<2x128xf32>
      %cst_21 = arith.constant 0.000000e+00 : f32
      %28 = vector.broadcast %cst_21 : f32 to vector<2x128xf32>
      %29 = arith.maximumf %27, %28 : vector<2x128xf32>
      %c0_22 = arith.constant 0 : index
      %c0_23 = arith.constant 0 : index
      %30 = vector.load %arg7[%c0_22, %c0_23] : memref<128x64xf32, #tpu.memory_space<vmem>>, vector<128x64xf32>
      %cst_24 = arith.constant dense<0.000000e+00> : vector<2x64xf32>
      %31 = tpu.matmul %29, %30, %cst_24 {dimension_numbers = #tpu.dot_dimension_numbers<[1], [0], [0], [1], [0, 0, 1, 1], [], []>} : vector<2x128xf32>, vector<128x64xf32>, vector<2x64xf32> -> vector<2x64xf32>
      %c0_25 = arith.constant 0 : index
      %c0_26 = arith.constant 0 : index
      %32 = vector.load %arg8[%c0_25, %c0_26] : memref<1x64xf32, #tpu.memory_space<vmem>>, vector<1x64xf32>
      %33 = vector.broadcast %32 : vector<1x64xf32> to vector<2x64xf32>
      %34 = arith.addf %31, %33 : vector<2x64xf32>
      %cst_27 = arith.constant 0.000000e+00 : f32
      %35 = vector.broadcast %cst_27 : f32 to vector<2x64xf32>
      %36 = arith.maximumf %34, %35 : vector<2x64xf32>
      %c0_28 = arith.constant 0 : index
      %c0_29 = arith.constant 0 : index
      %37 = vector.load %arg9[%c0_28, %c0_29] : memref<64x130xf32, #tpu.memory_space<vmem>>, vector<64x130xf32>
      %cst_30 = arith.constant dense<0.000000e+00> : vector<2x130xf32>
      %38 = tpu.matmul %36, %37, %cst_30 {dimension_numbers = #tpu.dot_dimension_numbers<[1], [0], [0], [1], [0, 0, 1, 1], [], []>} : vector<2x64xf32>, vector<64x130xf32>, vector<2x130xf32> -> vector<2x130xf32>
      %c0_31 = arith.constant 0 : index
      %c0_32 = arith.constant 0 : index
      %39 = vector.load %arg10[%c0_31, %c0_32] : memref<1x130xf32, #tpu.memory_space<vmem>>, vector<1x130xf32>
      %40 = vector.broadcast %39 : vector<1x130xf32> to vector<2x130xf32>
      %41 = arith.addf %38, %40 : vector<2x130xf32>
      %42 = arith.negf %41 : vector<2x130xf32>
      %43 = math.exp %42 : vector<2x130xf32>
      %cst_33 = arith.constant 1.000000e+00 : f32
      %44 = vector.broadcast %cst_33 : f32 to vector<2x130xf32>
      %45 = arith.addf %44, %43 : vector<2x130xf32>
      %46 = arith.divf %44, %45 : vector<2x130xf32>
      %c0_34 = arith.constant 0 : index
      %c0_35 = arith.constant 0 : index
      %47 = vector.load %arg11[%c0_34, %c0_35] : memref<2x130xf32, #tpu.memory_space<vmem>>, vector<2x130xf32>
      tpu.vector_store %arg11[%c0_34, %c0_35], %46 {strides = array<i32>} : memref<2x130xf32, #tpu.memory_space<vmem>>, vector<2x130xf32>,
    } else {
    }
    return
  }
  func.func @transform_0(%arg0: i32) -> (i32, i32) {
    %c0_i32 = arith.constant 0 : i32
    %c0_i32_0 = arith.constant 0 : i32
    return %c0_i32, %arg0 : i32, i32
  }
  func.func @transform_1(%arg0: i32) -> (i32, i32) {
    %c0_i32 = arith.constant 0 : i32
    %c0_i32_0 = arith.constant 0 : i32
    return %arg0, %c0_i32 : i32, i32
  }
  func.func @transform_2(%arg0: i32) -> (i32, i32) {
    %c0_i32 = arith.constant 0 : i32
    %c0_i32_0 = arith.constant 0 : i32
    %c0_i32_1 = arith.constant 0 : i32
    return %c0_i32, %c0_i32_0 : i32, i32
  }
  func.func @transform_3(%arg0: i32) -> (i32, i32) {
    %c0_i32 = arith.constant 0 : i32
    %c0_i32_0 = arith.constant 0 : i32
    %c0_i32_1 = arith.constant 0 : i32
    return %c0_i32, %c0_i32_0 : i32, i32
  }
  func.func @transform_4(%arg0: i32) -> (i32, i32) {
    %c0_i32 = arith.constant 0 : i32
    %c0_i32_0 = arith.constant 0 : i32
    %c0_i32_1 = arith.constant 0 : i32
    return %c0_i32, %c0_i32_0 : i32, i32
  }
  func.func @transform_5(%arg0: i32) -> (i32, i32) {
    %c0_i32 = arith.constant 0 : i32
    %c0_i32_0 = arith.constant 0 : i32
    %c0_i32_1 = arith.constant 0 : i32
    return %c0_i32, %c0_i32_0 : i32, i32
  }
  func.func @transform_6(%arg0: i32) -> (i32, i32) {
    %c0_i32 = arith.constant 0 : i32
    %c0_i32_0 = arith.constant 0 : i32
    %c0_i32_1 = arith.constant 0 : i32
    return %c0_i32, %c0_i32_0 : i32, i32
  }
  func.func @transform_7(%arg0: i32) -> (i32, i32) {
    %c0_i32 = arith.constant 0 : i32
    %c0_i32_0 = arith.constant 0 : i32
    %c0_i32_1 = arith.constant 0 : i32
    return %c0_i32, %c0_i32_0 : i32, i32
  }
  func.func @transform_8(%arg0: i32) -> (i32, i32) {
    %c0_i32 = arith.constant 0 : i32
    %c0_i32_0 = arith.constant 0 : i32
    %c0_i32_1 = arith.constant 0 : i32
    return %c0_i32, %c0_i32_0 : i32, i32
  }
  func.func @transform_9(%arg0: i32) -> (i32, i32) {
    %c0_i32 = arith.constant 0 : i32
    %c0_i32_0 = arith.constant 0 : i32
    %c0_i32_1 = arith.constant 0 : i32
    return %c0_i32, %c0_i32_0 : i32, i32
  }
  func.func @transform_10(%arg0: i32) -> (i32, i32) {
    %c0_i32 = arith.constant 0 : i32
    %c0_i32_0 = arith.constant 0 : i32
    %c0_i32_1 = arith.constant 0 : i32
    return %c0_i32, %c0_i32_0 : i32, i32
  }
}

</mosaic_0001>

<llo_original>
// kernel: feedforward_model.1
$region0: #{feedforward_model.1}
  #allocation0 [shape = 'u32[]', space=smem, size = 0x4, offset = 0x4, fixed_abs, tag = 'smem constant byte address 0x4 - core index']
  #allocation1 [shape = 'u32[144,128]{1,0:T(1,128)}', space=vmem, size = 0x12000, scoped, tag = 'internal scratch']
  #allocation2 [shape = 'f32[2,256]{1,0:T(2,128)}', space=vmem, size = 0x800, scoped, tag = 'scratch operand']
  %s0 = inlined_call_operand.vmem [shape: f32[2,143360], index: 0, kind: input, shape index: {}]
  %s1 = inlined_call_operand.hbm [shape: s8[143360,256], index: 1, kind: input, shape index: {}]
  %s2 = inlined_call_operand.vmem [shape: f32[1,256], index: 2, kind: input, shape index: {}]
  %s3 = inlined_call_operand.vmem [shape: f32[1,256], index: 3, kind: input, shape index: {}]
  %s4 = inlined_call_operand.vmem [shape: f32[256,128], index: 4, kind: input, shape index: {}]
  %s5 = inlined_call_operand.vmem [shape: f32[1,128], index: 5, kind: input, shape index: {}]
  %s6 = inlined_call_operand.vmem [shape: f32[128,64], index: 6, kind: input, shape index: {}]
  %s7 = inlined_call_operand.vmem [shape: f32[1,64], index: 7, kind: input, shape index: {}]
  %s8 = inlined_call_operand.vmem [shape: f32[64,130], index: 8, kind: input, shape index: {}]
  %s9 = inlined_call_operand.vmem [shape: f32[1,130], index: 9, kind: input, shape index: {}]
  %s10 = inlined_call_operand.hbm [shape: f32[2,130], index: 10, kind: output, shape index: {}]
  %s11 = sld [smem:[#allocation0]]
  $region85: #{feedforward_model.1} parent=0
    _
  %s13 = ssub.s32 1, %s11
  %s14 = scalar_select 0, %s13, %s11
  $region1: #{feedforward_model.1} parent=0
    #allocation3 [shape = 'u8[9175040]{0}', space=vmem, size = 0x8c0000, scoped, tag = 'input window, operand 1']
    #allocation4 [shape = 's32[2]{0}', space=sflag, size = 0x8, scoped, tag = 'scoped memory for feedforward_model.1']
    #allocation5 [shape = 's32[2]{0}', space=sflag, size = 0x8, scoped, tag = 'scoped memory for feedforward_model.1']
    #allocation6 [shape = 'u8[2048]{0}', space=vmem, size = 0x800, scoped, tag = 'output window, operand 0, single buffered']
    %15 = vsyncpa [#allocation4], 0
    %s16 = scalar_lea.sflag [#allocation4], 1
    %17 = vsyncpa %s16, 0
    %18 = vsyncpa [#allocation5], 0
    loop: start=0, step=1, limit=10
    $region2: #{feedforward_model.1} parent=1 // loop_pre_header
      _
    $region3: #{feedforward_model.1} parent=1 // loop_header
      %s20 = sphi 0, %s24
      %p21 = scmp.ge.s32.totalorder %s20, 10
      %s30 = sphi 0, %s32
      %s33 = sphi 0, %s30
      %s34 = sphi 0, %s33
      %s50 = sphi 0, %s34
      %s56 = sphi 0, %s58
      %s59 = sphi 0, %s56
      %s60 = sphi 0, %s59
      %s76 = sphi 0, %s60
      %s80 = sphi 0, %s80
      %s82 = sphi 0, %s80
      %s83 = sphi 0, %s82
      %s97 = sphi 0, %s83
      %s101 = sphi 0, %s101
      %s103 = sphi 0, %s101
      %s104 = sphi 0, %s103
      %s118 = sphi 0, %s104
      %s122 = sphi 0, %s122
      %s124 = sphi 0, %s122
      %s125 = sphi 0, %s124
      %s139 = sphi 0, %s125
      %s143 = sphi 0, %s143
      %s145 = sphi 0, %s143
      %s146 = sphi 0, %s145
      %s160 = sphi 0, %s146
      %s164 = sphi 0, %s164
      %s166 = sphi 0, %s164
      %s167 = sphi 0, %s166
      %s181 = sphi 0, %s167
      %s185 = sphi 0, %s185
      %s187 = sphi 0, %s185
      %s188 = sphi 0, %s187
      %s202 = sphi 0, %s188
      %s206 = sphi 0, %s206
      %s208 = sphi 0, %s206
      %s209 = sphi 0, %s208
      %s223 = sphi 0, %s209
      %s227 = sphi 0, %s227
      %s229 = sphi 0, %s227
      %s230 = sphi 0, %s229
      %s244 = sphi 0, %s230
      %s248 = sphi 0, %s248
      %s250 = sphi 0, %s248
      %s251 = sphi 0, %s250
      %s265 = sphi 0, %s251
    $region4: #{feedforward_model.1} parent=1 // loop_header_branch
      %23 = sbr.rel (%p21) target = $region8
    $region5: #{feedforward_model.1} parent=1 // loop_body
      %s25 = ssub.s32 %s20, 1
      %s26 = ssub.s32 %s20, 2
      %s27 = sadd.s32 %s20, 1
      %s28 = ssub.s32 %s20, %s27
      %p29 = scmp.eq.s32.totalorder %s28, 0
      %s31 = sadd.s32 %s30, 1
      %s32 = scalar_select %p29, %s30, %s31
      %p35 = pneg %p29
      %p36 = scmp.eq.s32.totalorder %s20, 7
      %p37 = por %p35, %p36
      %p38 = scmp.ne.s32.totalorder %s30, %s33
      %p39 = scmp.eq.s32.totalorder %s20, 0
      %p40 = por %p38, %p39
      %p41 = scmp.ne.s32.totalorder %s30, %s33
      %p42 = scmp.eq.s32.totalorder %s25, 7
      %p43 = por %p41, %p42
      %p44 = scmp.ne.s32.totalorder %s33, %s34
      %p45 = scmp.eq.s32.totalorder %s25, 0
      %p46 = por %p44, %p45
      %p47 = scmp.ne.s32.totalorder %s33, %s34
      %p48 = scmp.eq.s32.totalorder %s26, 7
      %p49 = por %p47, %p48
      %p51 = scmp.ne.s32.totalorder %s34, %s50
      %p52 = scmp.eq.s32.totalorder %s26, 0
      %p53 = por %p51, %p52
      %s54 = ssub.s32 %s20, %s27
      %p55 = scmp.eq.s32.totalorder %s54, 0
      %s57 = sadd.s32 %s56, 1
      %s58 = scalar_select %p55, %s56, %s57
      %p61 = pneg %p55
      %p62 = scmp.eq.s32.totalorder %s20, 7
      %p63 = por %p61, %p62
      %p64 = scmp.ne.s32.totalorder %s56, %s59
      %p65 = scmp.eq.s32.totalorder %s20, 0
      %p66 = por %p64, %p65
      %p67 = scmp.ne.s32.totalorder %s56, %s59
      %p68 = scmp.eq.s32.totalorder %s25, 7
      %p69 = por %p67, %p68
      %p70 = scmp.ne.s32.totalorder %s59, %s60
      %p71 = scmp.eq.s32.totalorder %s25, 0
      %p72 = por %p70, %p71
      %p73 = scmp.ne.s32.totalorder %s59, %s60
      %p74 = scmp.eq.s32.totalorder %s26, 7
      %p75 = por %p73, %p74
      %p77 = scmp.ne.s32.totalorder %s60, %s76
      %p78 = scmp.eq.s32.totalorder %s26, 0
      %p79 = por %p77, %p78
      %s81 = sadd.s32 %s80, 1
      %p84 = scmp.eq.s32.totalorder %s20, 7
      %p85 = scmp.ne.s32.totalorder %s80, %s82
      %p86 = scmp.eq.s32.totalorder %s20, 0
      %p87 = por %p85, %p86
      %p88 = scmp.ne.s32.totalorder %s80, %s82
      %p89 = scmp.eq.s32.totalorder %s25, 7
      %p90 = por %p88, %p89
      %p91 = scmp.ne.s32.totalorder %s82, %s83
      %p92 = scmp.eq.s32.totalorder %s25, 0
      %p93 = por %p91, %p92
      %p94 = scmp.ne.s32.totalorder %s82, %s83
      %p95 = scmp.eq.s32.totalorder %s26, 7
      %p96 = por %p94, %p95
      %p98 = scmp.ne.s32.totalorder %s83, %s97
      %p99 = scmp.eq.s32.totalorder %s26, 0
      %p100 = por %p98, %p99
      %s102 = sadd.s32 %s101, 1
      %p105 = scmp.eq.s32.totalorder %s20, 7
      %p106 = scmp.ne.s32.totalorder %s101, %s103
      %p107 = scmp.eq.s32.totalorder %s20, 0
      %p108 = por %p106, %p107
      %p109 = scmp.ne.s32.totalorder %s101, %s103
      %p110 = scmp.eq.s32.totalorder %s25, 7
      %p111 = por %p109, %p110
      %p112 = scmp.ne.s32.totalorder %s103, %s104
      %p113 = scmp.eq.s32.totalorder %s25, 0
      %p114 = por %p112, %p113
      %p115 = scmp.ne.s32.totalorder %s103, %s104
      %p116 = scmp.eq.s32.totalorder %s26, 7
      %p117 = por %p115, %p116
      %p119 = scmp.ne.s32.totalorder %s104, %s118
      %p120 = scmp.eq.s32.totalorder %s26, 0
      %p121 = por %p119, %p120
      %s123 = sadd.s32 %s122, 1
      %p126 = scmp.eq.s32.totalorder %s20, 7
      %p127 = scmp.ne.s32.totalorder %s122, %s124
      %p128 = scmp.eq.s32.totalorder %s20, 0
      %p129 = por %p127, %p128
      %p130 = scmp.ne.s32.totalorder %s122, %s124
      %p131 = scmp.eq.s32.totalorder %s25, 7
      %p132 = por %p130, %p131
      %p133 = scmp.ne.s32.totalorder %s124, %s125
      %p134 = scmp.eq.s32.totalorder %s25, 0
      %p135 = por %p133, %p134
      %p136 = scmp.ne.s32.totalorder %s124, %s125
      %p137 = scmp.eq.s32.totalorder %s26, 7
      %p138 = por %p136, %p137
      %p140 = scmp.ne.s32.totalorder %s125, %s139
      %p141 = scmp.eq.s32.totalorder %s26, 0
      %p142 = por %p140, %p141
      %s144 = sadd.s32 %s143, 1
      %p147 = scmp.eq.s32.totalorder %s20, 7
      %p148 = scmp.ne.s32.totalorder %s143, %s145
      %p149 = scmp.eq.s32.totalorder %s20, 0
      %p150 = por %p148, %p149
      %p151 = scmp.ne.s32.totalorder %s143, %s145
      %p152 = scmp.eq.s32.totalorder %s25, 7
      %p153 = por %p151, %p152
      %p154 = scmp.ne.s32.totalorder %s145, %s146
      %p155 = scmp.eq.s32.totalorder %s25, 0
      %p156 = por %p154, %p155
      %p157 = scmp.ne.s32.totalorder %s145, %s146
      %p158 = scmp.eq.s32.totalorder %s26, 7
      %p159 = por %p157, %p158
      %p161 = scmp.ne.s32.totalorder %s146, %s160
      %p162 = scmp.eq.s32.totalorder %s26, 0
      %p163 = por %p161, %p162
      %s165 = sadd.s32 %s164, 1
      %p168 = scmp.eq.s32.totalorder %s20, 7
      %p169 = scmp.ne.s32.totalorder %s164, %s166
      %p170 = scmp.eq.s32.totalorder %s20, 0
      %p171 = por %p169, %p170
      %p172 = scmp.ne.s32.totalorder %s164, %s166
      %p173 = scmp.eq.s32.totalorder %s25, 7
      %p174 = por %p172, %p173
      %p175 = scmp.ne.s32.totalorder %s166, %s167
      %p176 = scmp.eq.s32.totalorder %s25, 0
      %p177 = por %p175, %p176
      %p178 = scmp.ne.s32.totalorder %s166, %s167
      %p179 = scmp.eq.s32.totalorder %s26, 7
      %p180 = por %p178, %p179
      %p182 = scmp.ne.s32.totalorder %s167, %s181
      %p183 = scmp.eq.s32.totalorder %s26, 0
      %p184 = por %p182, %p183
      %s186 = sadd.s32 %s185, 1
      %p189 = scmp.eq.s32.totalorder %s20, 7
      %p190 = scmp.ne.s32.totalorder %s185, %s187
      %p191 = scmp.eq.s32.totalorder %s20, 0
      %p192 = por %p190, %p191
      %p193 = scmp.ne.s32.totalorder %s185, %s187
      %p194 = scmp.eq.s32.totalorder %s25, 7
      %p195 = por %p193, %p194
      %p196 = scmp.ne.s32.totalorder %s187, %s188
      %p197 = scmp.eq.s32.totalorder %s25, 0
      %p198 = por %p196, %p197
      %p199 = scmp.ne.s32.totalorder %s187, %s188
      %p200 = scmp.eq.s32.totalorder %s26, 7
      %p201 = por %p199, %p200
      %p203 = scmp.ne.s32.totalorder %s188, %s202
      %p204 = scmp.eq.s32.totalorder %s26, 0
      %p205 = por %p203, %p204
      %s207 = sadd.s32 %s206, 1
      %p210 = scmp.eq.s32.totalorder %s20, 7
      %p211 = scmp.ne.s32.totalorder %s206, %s208
      %p212 = scmp.eq.s32.totalorder %s20, 0
      %p213 = por %p211, %p212
      %p214 = scmp.ne.s32.totalorder %s206, %s208
      %p215 = scmp.eq.s32.totalorder %s25, 7
      %p216 = por %p214, %p215
      %p217 = scmp.ne.s32.totalorder %s208, %s209
      %p218 = scmp.eq.s32.totalorder %s25, 0
      %p219 = por %p217, %p218
      %p220 = scmp.ne.s32.totalorder %s208, %s209
      %p221 = scmp.eq.s32.totalorder %s26, 7
      %p222 = por %p220, %p221
      %p224 = scmp.ne.s32.totalorder %s209, %s223
      %p225 = scmp.eq.s32.totalorder %s26, 0
      %p226 = por %p224, %p225
      %s228 = sadd.s32 %s227, 1
      %p231 = scmp.eq.s32.totalorder %s20, 7
      %p232 = scmp.ne.s32.totalorder %s227, %s229
      %p233 = scmp.eq.s32.totalorder %s20, 0
      %p234 = por %p232, %p233
      %p235 = scmp.ne.s32.totalorder %s227, %s229
      %p236 = scmp.eq.s32.totalorder %s25, 7
      %p237 = por %p235, %p236
      %p238 = scmp.ne.s32.totalorder %s229, %s230
      %p239 = scmp.eq.s32.totalorder %s25, 0
      %p240 = por %p238, %p239
      %p241 = scmp.ne.s32.totalorder %s229, %s230
      %p242 = scmp.eq.s32.totalorder %s26, 7
      %p243 = por %p241, %p242
      %p245 = scmp.ne.s32.totalorder %s230, %s244
      %p246 = scmp.eq.s32.totalorder %s26, 0
      %p247 = por %p245, %p246
      %s249 = sadd.s32 %s248, 1
      %p252 = scmp.eq.s32.totalorder %s20, 7
      %p253 = scmp.ne.s32.totalorder %s248, %s250
      %p254 = scmp.eq.s32.totalorder %s20, 0
      %p255 = por %p253, %p254
      %p256 = scmp.ne.s32.totalorder %s248, %s250
      %p257 = scmp.eq.s32.totalorder %s25, 7
      %p258 = por %p256, %p257
      %p259 = scmp.ne.s32.totalorder %s250, %s251
      %p260 = scmp.eq.s32.totalorder %s25, 0
      %p261 = por %p259, %p260
      %p262 = scmp.ne.s32.totalorder %s250, %s251
      %p263 = scmp.eq.s32.totalorder %s26, 7
      %p264 = por %p262, %p263
      %p266 = scmp.ne.s32.totalorder %s251, %s265
      %p267 = scmp.eq.s32.totalorder %s26, 0
      %p268 = por %p266, %p267
      %p269 = scmp.le.s32.totalorder 1, %s20
      %p270 = scmp.lt.s32.totalorder %s20, 9
      %p271 = pnand %p269, %p270
      %p272 = pneg %p271
      // Predicated region
      $region9: #{feedforward_model.1} parent=5 // pred_check
        _
      $region10: #{feedforward_model.1} parent=5 // pred_check_branch
        %274 = sbr.rel (%p271) target = $region12
      $region11: #{feedforward_model.1} parent=5 // pred_region
        %s275 = ssub.s32 %s20, 1
        // Predicated region
        $region13: #{feedforward_model.1} parent=11 // pred_check
          %p276 = pneg %p93
        $region14: #{feedforward_model.1} parent=11 // pred_check_branch
          %278 = sbr.rel (%p276) target = $region16
        $region15: #{feedforward_model.1} parent=11 // pred_region
          _
        $region16: #{feedforward_model.1} parent=11 // pred_fallthru
          _
        // Predicated region
        $region17: #{feedforward_model.1} parent=11 // pred_check
          %p279 = pneg %p114
        $region18: #{feedforward_model.1} parent=11 // pred_check_branch
          %281 = sbr.rel (%p279) target = $region20
        $region19: #{feedforward_model.1} parent=11 // pred_region
          _
        $region20: #{feedforward_model.1} parent=11 // pred_fallthru
          _
        // Predicated region
        $region21: #{feedforward_model.1} parent=11 // pred_check
          %p282 = pneg %p135
        $region22: #{feedforward_model.1} parent=11 // pred_check_branch
          %284 = sbr.rel (%p282) target = $region24
        $region23: #{feedforward_model.1} parent=11 // pred_region
          _
        $region24: #{feedforward_model.1} parent=11 // pred_fallthru
          _
        // Predicated region
        $region25: #{feedforward_model.1} parent=11 // pred_check
          %p285 = pneg %p156
        $region26: #{feedforward_model.1} parent=11 // pred_check_branch
          %287 = sbr.rel (%p285) target = $region28
        $region27: #{feedforward_model.1} parent=11 // pred_region
          _
        $region28: #{feedforward_model.1} parent=11 // pred_fallthru
          _
        // Predicated region
        $region29: #{feedforward_model.1} parent=11 // pred_check
          %p288 = pneg %p177
        $region30: #{feedforward_model.1} parent=11 // pred_check_branch
          %290 = sbr.rel (%p288) target = $region32
        $region31: #{feedforward_model.1} parent=11 // pred_region
          _
        $region32: #{feedforward_model.1} parent=11 // pred_fallthru
          _
        // Predicated region
        $region33: #{feedforward_model.1} parent=11 // pred_check
          %p291 = pneg %p198
        $region34: #{feedforward_model.1} parent=11 // pred_check_branch
          %293 = sbr.rel (%p291) target = $region36
        $region35: #{feedforward_model.1} parent=11 // pred_region
          _
        $region36: #{feedforward_model.1} parent=11 // pred_fallthru
          _
        // Predicated region
        $region37: #{feedforward_model.1} parent=11 // pred_check
          %p294 = pneg %p219
        $region38: #{feedforward_model.1} parent=11 // pred_check_branch
          %296 = sbr.rel (%p294) target = $region40
        $region39: #{feedforward_model.1} parent=11 // pred_region
          _
        $region40: #{feedforward_model.1} parent=11 // pred_fallthru
          _
        // Predicated region
        $region41: #{feedforward_model.1} parent=11 // pred_check
          %p297 = pneg %p240
        $region42: #{feedforward_model.1} parent=11 // pred_check_branch
          %299 = sbr.rel (%p297) target = $region44
        $region43: #{feedforward_model.1} parent=11 // pred_region
          _
        $region44: #{feedforward_model.1} parent=11 // pred_fallthru
          _
      $region12: #{feedforward_model.1} parent=5 // pred_fallthru
        _
      %p300 = scmp.lt.s32.totalorder %s20, 8
      // Predicated region
      $region45: #{feedforward_model.1} parent=5 // pred_check
        %p301 = pneg %p300
      $region46: #{feedforward_model.1} parent=5 // pred_check_branch
        %303 = sbr.rel (%p301) target = $region48
      $region47: #{feedforward_model.1} parent=5 // pred_region
        // Predicated region
        $region49: #{feedforward_model.1} parent=47 // pred_check
          %p304 = pneg %p40
        $region50: #{feedforward_model.1} parent=47 // pred_check_branch
          %306 = sbr.rel (%p304) target = $region52
        $region51: #{feedforward_model.1} parent=47 // pred_region
          %s307 = smul.u32 140, %s20
          %p308 = scmp.lt.s32.totalorder %s307, 1119
          %s309 = scalar_select %p308, %s307, 1119
          %s310 = smul.addr %s309, 2
          %s311 = scalar_lea.vmem %s0, %s310
          %s312 = smul.u32 140, %s20
        $region52: #{feedforward_model.1} parent=47 // pred_fallthru
          _
        // Predicated region
        $region53: #{feedforward_model.1} parent=47 // pred_check
          %p313 = pneg %p66
        $region54: #{feedforward_model.1} parent=47 // pred_check_branch
          %315 = sbr.rel (%p313) target = $region56
        $region55: #{feedforward_model.1} parent=47 // pred_region
          %s316 = sand.u32 %s56, 1
          %s317 = scalar_lea.sflag [#allocation4], %s316
          %s318 = sand.u32 %s56, 1
          %s319 = smul.addr %s318, 8960
          %s320 = scalar_lea.vmem [#allocation3], %s319
          %s321 = smul.u32 560, %s20
          %s323 = ssub.s32 143360, 143360
          %324 = vsyncadd %s317, %s323
          %s325 = smul.addr %s321, 2
          %s326 = smul.addr %s325, 128
          %s327 = scalar_lea.hbm %s1, %s326
          %s328 = sshll.u32 %s320, 4
          %s329 = int_to_ptr.vmem [resolvable:$true] %s328
          %334 = dma.hbm_to_vmem [thread:$0]  %s327, 143360, %s329, %s317, 256, 256, 16
        $region56: #{feedforward_model.1} parent=47 // pred_fallthru
          _
      $region48: #{feedforward_model.1} parent=5 // pred_fallthru
        _
      %p335 = scmp.le.s32.totalorder 1, %s20
      %p336 = scmp.lt.s32.totalorder %s20, 9
      %p337 = pnand %p335, %p336
      %p338 = pneg %p337
      // Predicated region
      $region57: #{feedforward_model.1} parent=5 // pred_check
        _
      $region58: #{feedforward_model.1} parent=5 // pred_check_branch
        %340 = sbr.rel (%p337) target = $region60
      $region59: #{feedforward_model.1} parent=5 // pred_region
        %s341 = ssub.s32 %s20, 1
        %s342 = sand.u32 %s59, 1
        %s343 = scalar_lea.sflag [#allocation4], %s342
        %s344 = sand.u32 %s59, 1
        %s345 = smul.addr %s344, 8960
        %s346 = scalar_lea.vmem [#allocation3], %s345
        // Predicated region
        $region61: #{feedforward_model.1} parent=59 // pred_check
          %p347 = pneg %p72
        $region62: #{feedforward_model.1} parent=59 // pred_check_branch
          %349 = sbr.rel (%p347) target = $region64
        $region63: #{feedforward_model.1} parent=59 // pred_region
          %350 = dma.done %s343, 143360
        $region64: #{feedforward_model.1} parent=59 // pred_fallthru
          _
        %s351 = smul.u32 140, %s25
        %p352 = scmp.lt.s32.totalorder %s351, 1119
        %s353 = scalar_select %p352, %s351, 1119
        %s354 = smul.addr %s353, 2
        %s355 = scalar_lea.vmem %s0, %s354
        %p356 = pneg %p46
        %p357 = pneg %p43
        %s358 = sand.u32 %s59, 1
        %s359 = scalar_lea.sflag [#allocation4], %s358
        %s360 = sand.u32 %s59, 1
        %s361 = smul.addr %s360, 8960
        %s362 = scalar_lea.vmem [#allocation3], %s361
        %p363 = pneg %p72
        %p364 = pneg %p69
        %p365 = pneg %p93
        %p366 = pneg %p90
        %p367 = pneg %p114
        %p368 = pneg %p111
        %p369 = pneg %p135
        %p370 = pneg %p132
        %p371 = pneg %p156
        %p372 = pneg %p153
        %p373 = pneg %p177
        %p374 = pneg %p174
        %p375 = pneg %p198
        %p376 = pneg %p195
        %p377 = pneg %p219
        %p378 = pneg %p216
        %p379 = pneg %p240
        %p380 = pneg %p237
        %p381 = pneg %p261
        %p382 = pneg %p258
        %s383 = smul.u32 140, %s25
        %p384 = scmp.lt.s32.totalorder %s383, 1119
        %s385 = scalar_select %p384, %s383, 1119
        %s386 = smul.addr %s385, 2
        %s387 = scalar_lea.vmem %s0, %s386
        %s388 = smul.u32 140, %s25
        %s389 = smul.u32 560, %s25
        %p390 = scmp.eq.s32.totalorder %s25, 0
        // Predicated region
        $region65: #{feedforward_model.1} parent=59 // pred_check
          %p391 = pneg %p390
        $region66: #{feedforward_model.1} parent=59 // pred_check_branch
          %393 = sbr.rel (%p391) target = $region68
        $region67: #{feedforward_model.1} parent=59 // pred_region
          %394 = vst [vmem:[#allocation2] sm:$0xf] 0.0
        $region68: #{feedforward_model.1} parent=59 // pred_fallthru
          _
        %v395 = vld [vmem:[%s387] sm:$0xff]
        %v396 = vld [vmem:[%s387 + $0x8] sm:$0xff]
        %v397 = vld [vmem:[%s387 + $0x10] sm:$0xff]
        %v398 = vld [vmem:[%s387 + $0x18] sm:$0xff]
        %v399 = vld [vmem:[%s387 + $0x20] sm:$0xff]
        %v400 = vld [vmem:[%s387 + $0x28] sm:$0xff]
        %v401 = vld [vmem:[%s387 + $0x30] sm:$0xff]
        %v402 = vld [vmem:[%s387 + $0x38] sm:$0xff]
        %v403 = vld [vmem:[%s387 + $0x40] sm:$0xff]
        %v404 = vld [vmem:[%s387 + $0x48] sm:$0xff]
        %v405 = vld [vmem:[%s387 + $0x50] sm:$0xff]
        %v406 = vld [vmem:[%s387 + $0x58] sm:$0xff]
        %v407 = vld [vmem:[%s387 + $0x60] sm:$0xff]
        %v408 = vld [vmem:[%s387 + $0x68] sm:$0xff]
        %v409 = vld [vmem:[%s387 + $0x70] sm:$0xff]
        %v410 = vld [vmem:[%s387 + $0x78] sm:$0xff]
        %v411 = vld [vmem:[%s387 + $0x80] sm:$0xff]
        %v412 = vld [vmem:[%s387 + $0x88] sm:$0xff]
        %v413 = vld [vmem:[%s387 + $0x90] sm:$0xff]
        %v414 = vld [vmem:[%s387 + $0x98] sm:$0xff]
        %v415 = vld [vmem:[%s387 + $0xa0] sm:$0xff]
        %v416 = vld [vmem:[%s387 + $0xa8] sm:$0xff]
        %v417 = vld [vmem:[%s387 + $0xb0] sm:$0xff]
        %v418 = vld [vmem:[%s387 + $0xb8] sm:$0xff]
        %v419 = vld [vmem:[%s387 + $0xc0] sm:$0xff]
        %v420 = vld [vmem:[%s387 + $0xc8] sm:$0xff]
        %v421 = vld [vmem:[%s387 + $0xd0] sm:$0xff]
        %v422 = vld [vmem:[%s387 + $0xd8] sm:$0xff]
        %v423 = vld [vmem:[%s387 + $0xe0] sm:$0xff]
        %v424 = vld [vmem:[%s387 + $0xe8] sm:$0xff]
        %v425 = vld [vmem:[%s387 + $0xf0] sm:$0xff]
        %v426 = vld [vmem:[%s387 + $0xf8] sm:$0xff]
        %v427 = vld [vmem:[%s387 + $0x100] sm:$0xff]
        %v428 = vld [vmem:[%s387 + $0x108] sm:$0xff]
        %v429 = vld [vmem:[%s387 + $0x110] sm:$0xff]
        %v465 = vcombine.high %v395, %v395
        %v467 = vunpack.c.l.s4 1983009808
        %v468 = vunpack.c.0.s8 %v467
        %v469 = vlaneseq
        %v470 = vshrl.u32 %v469, 7
        %v471 = vsub.s32 %v468, %v470
        %v472 = vrot.slane %v395, %v471
        %v474 = vunpack.c.l.s4 1983009808
        %v475 = vunpack.c.0.s8 %v474
        %v476 = vlaneseq
        %v477 = vshrl.u32 %v476, 7
        %v478 = vsub.s32 %v475, %v477
        %v479 = vrot.slane %v465, %v478
        %v480 = vcombine.high %v472, %v472
        %v481 = vcombine.high %v479, %v479
        %v482 = vcombine.high %v396, %v396
        %v484 = vunpack.c.l.s4 1983009808
        %v485 = vunpack.c.0.s8 %v484
        %v486 = vlaneseq
        %v487 = vshrl.u32 %v486, 7
        %v488 = vsub.s32 %v485, %v487
        %v489 = vrot.slane %v396, %v488
        %v491 = vunpack.c.l.s4 1983009808
        %v492 = vunpack.c.0.s8 %v491
        %v493 = vlaneseq
        %v494 = vshrl.u32 %v493, 7
        %v495 = vsub.s32 %v492, %v494
        %v496 = vrot.slane %v482, %v495
        %v497 = vcombine.high %v489, %v489
        %v498 = vcombine.high %v496, %v496
        %v499 = vcombine.high %v397, %v397
        %v501 = vunpack.c.l.s4 1983009808
        %v502 = vunpack.c.0.s8 %v501
        %v503 = vlaneseq
        %v504 = vshrl.u32 %v503, 7
        %v505 = vsub.s32 %v502, %v504
        %v506 = vrot.slane %v397, %v505
        %v508 = vunpack.c.l.s4 1983009808
        %v509 = vunpack.c.0.s8 %v508
        %v510 = vlaneseq
        %v511 = vshrl.u32 %v510, 7
        %v512 = vsub.s32 %v509, %v511
        %v513 = vrot.slane %v499, %v512
        %v514 = vcombine.high %v506, %v506
        %v515 = vcombine.high %v513, %v513
        %v516 = vcombine.high %v398, %v398
        %v518 = vunpack.c.l.s4 1983009808
        %v519 = vunpack.c.0.s8 %v518
        %v520 = vlaneseq
        %v521 = vshrl.u32 %v520, 7
        %v522 = vsub.s32 %v519, %v521
        %v523 = vrot.slane %v398, %v522
        %v525 = vunpack.c.l.s4 1983009808
        %v526 = vunpack.c.0.s8 %v525
        %v527 = vlaneseq
        %v528 = vshrl.u32 %v527, 7
        %v529 = vsub.s32 %v526, %v528
        %v530 = vrot.slane %v516, %v529
        %v531 = vcombine.high %v523, %v523
        %v532 = vcombine.high %v530, %v530
        %v533 = vcombine.high %v399, %v399
        %v535 = vunpack.c.l.s4 1983009808
        %v536 = vunpack.c.0.s8 %v535
        %v537 = vlaneseq
        %v538 = vshrl.u32 %v537, 7
        %v539 = vsub.s32 %v536, %v538
        %v540 = vrot.slane %v399, %v539
        %v542 = vunpack.c.l.s4 1983009808
        %v543 = vunpack.c.0.s8 %v542
        %v544 = vlaneseq
        %v545 = vshrl.u32 %v544, 7
        %v546 = vsub.s32 %v543, %v545
        %v547 = vrot.slane %v533, %v546
        %v548 = vcombine.high %v540, %v540
        %v549 = vcombine.high %v547, %v547
        %v550 = vcombine.high %v400, %v400
        %v552 = vunpack.c.l.s4 1983009808
        %v553 = vunpack.c.0.s8 %v552
        %v554 = vlaneseq
        %v555 = vshrl.u32 %v554, 7
        %v556 = vsub.s32 %v553, %v555
        %v557 = vrot.slane %v400, %v556
        %v559 = vunpack.c.l.s4 1983009808
        %v560 = vunpack.c.0.s8 %v559
        %v561 = vlaneseq
        %v562 = vshrl.u32 %v561, 7
        %v563 = vsub.s32 %v560, %v562
        %v564 = vrot.slane %v550, %v563
        %v565 = vcombine.high %v557, %v557
        %v566 = vcombine.high %v564, %v564
        %v567 = vcombine.high %v401, %v401
        %v569 = vunpack.c.l.s4 1983009808
        %v570 = vunpack.c.0.s8 %v569
        %v571 = vlaneseq
        %v572 = vshrl.u32 %v571, 7
        %v573 = vsub.s32 %v570, %v572
        %v574 = vrot.slane %v401, %v573
        %v576 = vunpack.c.l.s4 1983009808
        %v577 = vunpack.c.0.s8 %v576
        %v578 = vlaneseq
        %v579 = vshrl.u32 %v578, 7
        %v580 = vsub.s32 %v577, %v579
        %v581 = vrot.slane %v567, %v580
        %v582 = vcombine.high %v574, %v574
        %v583 = vcombine.high %v581, %v581
        %v584 = vcombine.high %v402, %v402
        %v586 = vunpack.c.l.s4 1983009808
        %v587 = vunpack.c.0.s8 %v586
        %v588 = vlaneseq
        %v589 = vshrl.u32 %v588, 7
        %v590 = vsub.s32 %v587, %v589
        %v591 = vrot.slane %v402, %v590
        %v593 = vunpack.c.l.s4 1983009808
        %v594 = vunpack.c.0.s8 %v593
        %v595 = vlaneseq
        %v596 = vshrl.u32 %v595, 7
        %v597 = vsub.s32 %v594, %v596
        %v598 = vrot.slane %v584, %v597
        %v599 = vcombine.high %v591, %v591
        %v600 = vcombine.high %v598, %v598
        %v601 = vcombine.high %v403, %v403
        %v603 = vunpack.c.l.s4 1983009808
        %v604 = vunpack.c.0.s8 %v603
        %v605 = vlaneseq
        %v606 = vshrl.u32 %v605, 7
        %v607 = vsub.s32 %v604, %v606
        %v608 = vrot.slane %v403, %v607
        %v610 = vunpack.c.l.s4 1983009808
        %v611 = vunpack.c.0.s8 %v610
        %v612 = vlaneseq
        %v613 = vshrl.u32 %v612, 7
        %v614 = vsub.s32 %v611, %v613
        %v615 = vrot.slane %v601, %v614
        %v616 = vcombine.high %v608, %v608
        %v617 = vcombine.high %v615, %v615
        %v618 = vcombine.high %v404, %v404
        %v620 = vunpack.c.l.s4 1983009808
        %v621 = vunpack.c.0.s8 %v620
        %v622 = vlaneseq
        %v623 = vshrl.u32 %v622, 7
        %v624 = vsub.s32 %v621, %v623
        %v625 = vrot.slane %v404, %v624
        %v627 = vunpack.c.l.s4 1983009808
        %v628 = vunpack.c.0.s8 %v627
        %v629 = vlaneseq
        %v630 = vshrl.u32 %v629, 7
        %v631 = vsub.s32 %v628, %v630
        %v632 = vrot.slane %v618, %v631
        %v633 = vcombine.high %v625, %v625
        %v634 = vcombine.high %v632, %v632
        %v635 = vcombine.high %v405, %v405
        %v637 = vunpack.c.l.s4 1983009808
        %v638 = vunpack.c.0.s8 %v637
        %v639 = vlaneseq
        %v640 = vshrl.u32 %v639, 7
        %v641 = vsub.s32 %v638, %v640
        %v642 = vrot.slane %v405, %v641
        %v644 = vunpack.c.l.s4 1983009808
        %v645 = vunpack.c.0.s8 %v644
        %v646 = vlaneseq
        %v647 = vshrl.u32 %v646, 7
        %v648 = vsub.s32 %v645, %v647
        %v649 = vrot.slane %v635, %v648
        %v650 = vcombine.high %v642, %v642
        %v651 = vcombine.high %v649, %v649
        %v652 = vcombine.high %v406, %v406
        %v654 = vunpack.c.l.s4 1983009808
        %v655 = vunpack.c.0.s8 %v654
        %v656 = vlaneseq
        %v657 = vshrl.u32 %v656, 7
        %v658 = vsub.s32 %v655, %v657
        %v659 = vrot.slane %v406, %v658
        %v661 = vunpack.c.l.s4 1983009808
        %v662 = vunpack.c.0.s8 %v661
        %v663 = vlaneseq
        %v664 = vshrl.u32 %v663, 7
        %v665 = vsub.s32 %v662, %v664
        %v666 = vrot.slane %v652, %v665
        %v667 = vcombine.high %v659, %v659
        %v668 = vcombine.high %v666, %v666
        %v669 = vcombine.high %v407, %v407
        %v671 = vunpack.c.l.s4 1983009808
        %v672 = vunpack.c.0.s8 %v671
        %v673 = vlaneseq
        %v674 = vshrl.u32 %v673, 7
        %v675 = vsub.s32 %v672, %v674
        %v676 = vrot.slane %v407, %v675
        %v678 = vunpack.c.l.s4 1983009808
        %v679 = vunpack.c.0.s8 %v678
        %v680 = vlaneseq
        %v681 = vshrl.u32 %v680, 7
        %v682 = vsub.s32 %v679, %v681
        %v683 = vrot.slane %v669, %v682
        %v684 = vcombine.high %v676, %v676
        %v685 = vcombine.high %v683, %v683
        %v686 = vcombine.high %v408, %v408
        %v688 = vunpack.c.l.s4 1983009808
        %v689 = vunpack.c.0.s8 %v688
        %v690 = vlaneseq
        %v691 = vshrl.u32 %v690, 7
        %v692 = vsub.s32 %v689, %v691
        %v693 = vrot.slane %v408, %v692
        %v695 = vunpack.c.l.s4 1983009808
        %v696 = vunpack.c.0.s8 %v695
        %v697 = vlaneseq
        %v698 = vshrl.u32 %v697, 7
        %v699 = vsub.s32 %v696, %v698
        %v700 = vrot.slane %v686, %v699
        %v701 = vcombine.high %v693, %v693
        %v702 = vcombine.high %v700, %v700
        %v703 = vcombine.high %v409, %v409
        %v705 = vunpack.c.l.s4 1983009808
        %v706 = vunpack.c.0.s8 %v705
        %v707 = vlaneseq
        %v708 = vshrl.u32 %v707, 7
        %v709 = vsub.s32 %v706, %v708
        %v710 = vrot.slane %v409, %v709
        %v712 = vunpack.c.l.s4 1983009808
        %v713 = vunpack.c.0.s8 %v712
        %v714 = vlaneseq
        %v715 = vshrl.u32 %v714, 7
        %v716 = vsub.s32 %v713, %v715
        %v717 = vrot.slane %v703, %v716
        %v718 = vcombine.high %v710, %v710
        %v719 = vcombine.high %v717, %v717
        %v720 = vcombine.high %v410, %v410
        %v722 = vunpack.c.l.s4 1983009808
        %v723 = vunpack.c.0.s8 %v722
        %v724 = vlaneseq
        %v725 = vshrl.u32 %v724, 7
        %v726 = vsub.s32 %v723, %v725
        %v727 = vrot.slane %v410, %v726
        %v729 = vunpack.c.l.s4 1983009808
        %v730 = vunpack.c.0.s8 %v729
        %v731 = vlaneseq
        %v732 = vshrl.u32 %v731, 7
        %v733 = vsub.s32 %v730, %v732
        %v734 = vrot.slane %v720, %v733
        %v735 = vcombine.high %v727, %v727
        %v736 = vcombine.high %v734, %v734
        %v737 = vcombine.high %v411, %v411
        %v739 = vunpack.c.l.s4 1983009808
        %v740 = vunpack.c.0.s8 %v739
        %v741 = vlaneseq
        %v742 = vshrl.u32 %v741, 7
        %v743 = vsub.s32 %v740, %v742
        %v744 = vrot.slane %v411, %v743
        %v746 = vunpack.c.l.s4 1983009808
        %v747 = vunpack.c.0.s8 %v746
        %v748 = vlaneseq
        %v749 = vshrl.u32 %v748, 7
        %v750 = vsub.s32 %v747, %v749
        %v751 = vrot.slane %v737, %v750
        %v752 = vcombine.high %v744, %v744
        %v753 = vcombine.high %v751, %v751
        %v754 = vcombine.high %v412, %v412
        %v756 = vunpack.c.l.s4 1983009808
        %v757 = vunpack.c.0.s8 %v756
        %v758 = vlaneseq
        %v759 = vshrl.u32 %v758, 7
        %v760 = vsub.s32 %v757, %v759
        %v761 = vrot.slane %v412, %v760
        %v763 = vunpack.c.l.s4 1983009808
        %v764 = vunpack.c.0.s8 %v763
        %v765 = vlaneseq
        %v766 = vshrl.u32 %v765, 7
        %v767 = vsub.s32 %v764, %v766
        %v768 = vrot.slane %v754, %v767
        %v769 = vcombine.high %v761, %v761
        %v770 = vcombine.high %v768, %v768
        %v771 = vcombine.high %v413, %v413
        %v773 = vunpack.c.l.s4 1983009808
        %v774 = vunpack.c.0.s8 %v773
        %v775 = vlaneseq
        %v776 = vshrl.u32 %v775, 7
        %v777 = vsub.s32 %v774, %v776
        %v778 = vrot.slane %v413, %v777
        %v780 = vunpack.c.l.s4 1983009808
        %v781 = vunpack.c.0.s8 %v780
        %v782 = vlaneseq
        %v783 = vshrl.u32 %v782, 7
        %v784 = vsub.s32 %v781, %v783
        %v785 = vrot.slane %v771, %v784
        %v786 = vcombine.high %v778, %v778
        %v787 = vcombine.high %v785, %v785
        %v788 = vcombine.high %v414, %v414
        %v790 = vunpack.c.l.s4 1983009808
        %v791 = vunpack.c.0.s8 %v790
        %v792 = vlaneseq
        %v793 = vshrl.u32 %v792, 7
        %v794 = vsub.s32 %v791, %v793
        %v795 = vrot.slane %v414, %v794
        %v797 = vunpack.c.l.s4 1983009808
        %v798 = vunpack.c.0.s8 %v797
        %v799 = vlaneseq
        %v800 = vshrl.u32 %v799, 7
        %v801 = vsub.s32 %v798, %v800
        %v802 = vrot.slane %v788, %v801
        %v803 = vcombine.high %v795, %v795
        %v804 = vcombine.high %v802, %v802
        %v805 = vcombine.high %v415, %v415
        %v807 = vunpack.c.l.s4 1983009808
        %v808 = vunpack.c.0.s8 %v807
        %v809 = vlaneseq
        %v810 = vshrl.u32 %v809, 7
        %v811 = vsub.s32 %v808, %v810
        %v812 = vrot.slane %v415, %v811
        %v814 = vunpack.c.l.s4 1983009808
        %v815 = vunpack.c.0.s8 %v814
        %v816 = vlaneseq
        %v817 = vshrl.u32 %v816, 7
        %v818 = vsub.s32 %v815, %v817
        %v819 = vrot.slane %v805, %v818
        %v820 = vcombine.high %v812, %v812
        %v821 = vcombine.high %v819, %v819
        %v822 = vcombine.high %v416, %v416
        %v824 = vunpack.c.l.s4 1983009808
        %v825 = vunpack.c.0.s8 %v824
        %v826 = vlaneseq
        %v827 = vshrl.u32 %v826, 7
        %v828 = vsub.s32 %v825, %v827
        %v829 = vrot.slane %v416, %v828
        %v831 = vunpack.c.l.s4 1983009808
        %v832 = vunpack.c.0.s8 %v831
        %v833 = vlaneseq
        %v834 = vshrl.u32 %v833, 7
        %v835 = vsub.s32 %v832, %v834
        %v836 = vrot.slane %v822, %v835
        %v837 = vcombine.high %v829, %v829
        %v838 = vcombine.high %v836, %v836
        %v839 = vcombine.high %v417, %v417
        %v841 = vunpack.c.l.s4 1983009808
        %v842 = vunpack.c.0.s8 %v841
        %v843 = vlaneseq
        %v844 = vshrl.u32 %v843, 7
        %v845 = vsub.s32 %v842, %v844
        %v846 = vrot.slane %v417, %v845
        %v848 = vunpack.c.l.s4 1983009808
        %v849 = vunpack.c.0.s8 %v848
        %v850 = vlaneseq
        %v851 = vshrl.u32 %v850, 7
        %v852 = vsub.s32 %v849, %v851
        %v853 = vrot.slane %v839, %v852
        %v854 = vcombine.high %v846, %v846
        %v855 = vcombine.high %v853, %v853
        %v856 = vcombine.high %v418, %v418
        %v858 = vunpack.c.l.s4 1983009808
        %v859 = vunpack.c.0.s8 %v858
        %v860 = vlaneseq
        %v861 = vshrl.u32 %v860, 7
        %v862 = vsub.s32 %v859, %v861
        %v863 = vrot.slane %v418, %v862
        %v865 = vunpack.c.l.s4 1983009808
        %v866 = vunpack.c.0.s8 %v865
        %v867 = vlaneseq
        %v868 = vshrl.u32 %v867, 7
        %v869 = vsub.s32 %v866, %v868
        %v870 = vrot.slane %v856, %v869
        %v871 = vcombine.high %v863, %v863
        %v872 = vcombine.high %v870, %v870
        %v873 = vcombine.high %v419, %v419
        %v875 = vunpack.c.l.s4 1983009808
        %v876 = vunpack.c.0.s8 %v875
        %v877 = vlaneseq
        %v878 = vshrl.u32 %v877, 7
        %v879 = vsub.s32 %v876, %v878
        %v880 = vrot.slane %v419, %v879
        %v882 = vunpack.c.l.s4 1983009808
        %v883 = vunpack.c.0.s8 %v882
        %v884 = vlaneseq
        %v885 = vshrl.u32 %v884, 7
        %v886 = vsub.s32 %v883, %v885
        %v887 = vrot.slane %v873, %v886
        %v888 = vcombine.high %v880, %v880
        %v889 = vcombine.high %v887, %v887
        %v890 = vcombine.high %v420, %v420
        %v892 = vunpack.c.l.s4 1983009808
        %v893 = vunpack.c.0.s8 %v892
        %v894 = vlaneseq
        %v895 = vshrl.u32 %v894, 7
        %v896 = vsub.s32 %v893, %v895
        %v897 = vrot.slane %v420, %v896
        %v899 = vunpack.c.l.s4 1983009808
        %v900 = vunpack.c.0.s8 %v899
        %v901 = vlaneseq
        %v902 = vshrl.u32 %v901, 7
        %v903 = vsub.s32 %v900, %v902
        %v904 = vrot.slane %v890, %v903
        %v905 = vcombine.high %v897, %v897
        %v906 = vcombine.high %v904, %v904
        %v907 = vcombine.high %v421, %v421
        %v909 = vunpack.c.l.s4 1983009808
        %v910 = vunpack.c.0.s8 %v909
        %v911 = vlaneseq
        %v912 = vshrl.u32 %v911, 7
        %v913 = vsub.s32 %v910, %v912
        %v914 = vrot.slane %v421, %v913
        %v916 = vunpack.c.l.s4 1983009808
        %v917 = vunpack.c.0.s8 %v916
        %v918 = vlaneseq
        %v919 = vshrl.u32 %v918, 7
        %v920 = vsub.s32 %v917, %v919
        %v921 = vrot.slane %v907, %v920
        %v922 = vcombine.high %v914, %v914
        %v923 = vcombine.high %v921, %v921
        %v924 = vcombine.high %v422, %v422
        %v926 = vunpack.c.l.s4 1983009808
        %v927 = vunpack.c.0.s8 %v926
        %v928 = vlaneseq
        %v929 = vshrl.u32 %v928, 7
        %v930 = vsub.s32 %v927, %v929
        %v931 = vrot.slane %v422, %v930
        %v933 = vunpack.c.l.s4 1983009808
        %v934 = vunpack.c.0.s8 %v933
        %v935 = vlaneseq
        %v936 = vshrl.u32 %v935, 7
        %v937 = vsub.s32 %v934, %v936
        %v938 = vrot.slane %v924, %v937
        %v939 = vcombine.high %v931, %v931
        %v940 = vcombine.high %v938, %v938
        %v941 = vcombine.high %v423, %v423
        %v943 = vunpack.c.l.s4 1983009808
        %v944 = vunpack.c.0.s8 %v943
        %v945 = vlaneseq
        %v946 = vshrl.u32 %v945, 7
        %v947 = vsub.s32 %v944, %v946
        %v948 = vrot.slane %v423, %v947
        %v950 = vunpack.c.l.s4 1983009808
        %v951 = vunpack.c.0.s8 %v950
        %v952 = vlaneseq
        %v953 = vshrl.u32 %v952, 7
        %v954 = vsub.s32 %v951, %v953
        %v955 = vrot.slane %v941, %v954
        %v956 = vcombine.high %v948, %v948
        %v957 = vcombine.high %v955, %v955
        %v958 = vcombine.high %v424, %v424
        %v960 = vunpack.c.l.s4 1983009808
        %v961 = vunpack.c.0.s8 %v960
        %v962 = vlaneseq
        %v963 = vshrl.u32 %v962, 7
        %v964 = vsub.s32 %v961, %v963
        %v965 = vrot.slane %v424, %v964
        %v967 = vunpack.c.l.s4 1983009808
        %v968 = vunpack.c.0.s8 %v967
        %v969 = vlaneseq
        %v970 = vshrl.u32 %v969, 7
        %v971 = vsub.s32 %v968, %v970
        %v972 = vrot.slane %v958, %v971
        %v973 = vcombine.high %v965, %v965
        %v974 = vcombine.high %v972, %v972
        %v975 = vcombine.high %v425, %v425
        %v977 = vunpack.c.l.s4 1983009808
        %v978 = vunpack.c.0.s8 %v977
        %v979 = vlaneseq
        %v980 = vshrl.u32 %v979, 7
        %v981 = vsub.s32 %v978, %v980
        %v982 = vrot.slane %v425, %v981
        %v984 = vunpack.c.l.s4 1983009808
        %v985 = vunpack.c.0.s8 %v984
        %v986 = vlaneseq
        %v987 = vshrl.u32 %v986, 7
        %v988 = vsub.s32 %v985, %v987
        %v989 = vrot.slane %v975, %v988
        %v990 = vcombine.high %v982, %v982
        %v991 = vcombine.high %v989, %v989
        %v992 = vcombine.high %v426, %v426
        %v994 = vunpack.c.l.s4 1983009808
        %v995 = vunpack.c.0.s8 %v994
        %v996 = vlaneseq
        %v997 = vshrl.u32 %v996, 7
        %v998 = vsub.s32 %v995, %v997
        %v999 = vrot.slane %v426, %v998
        %v1001 = vunpack.c.l.s4 1983009808
        %v1002 = vunpack.c.0.s8 %v1001
        %v1003 = vlaneseq
        %v1004 = vshrl.u32 %v1003, 7
        %v1005 = vsub.s32 %v1002, %v1004
        %v1006 = vrot.slane %v992, %v1005
        %v1007 = vcombine.high %v999, %v999
        %v1008 = vcombine.high %v1006, %v1006
        %v1009 = vcombine.high %v427, %v427
        %v1011 = vunpack.c.l.s4 1983009808
        %v1012 = vunpack.c.0.s8 %v1011
        %v1013 = vlaneseq
        %v1014 = vshrl.u32 %v1013, 7
        %v1015 = vsub.s32 %v1012, %v1014
        %v1016 = vrot.slane %v427, %v1015
        %v1018 = vunpack.c.l.s4 1983009808
        %v1019 = vunpack.c.0.s8 %v1018
        %v1020 = vlaneseq
        %v1021 = vshrl.u32 %v1020, 7
        %v1022 = vsub.s32 %v1019, %v1021
        %v1023 = vrot.slane %v1009, %v1022
        %v1024 = vcombine.high %v1016, %v1016
        %v1025 = vcombine.high %v1023, %v1023
        %v1026 = vcombine.high %v428, %v428
        %v1028 = vunpack.c.l.s4 1983009808
        %v1029 = vunpack.c.0.s8 %v1028
        %v1030 = vlaneseq
        %v1031 = vshrl.u32 %v1030, 7
        %v1032 = vsub.s32 %v1029, %v1031
        %v1033 = vrot.slane %v428, %v1032
        %v1035 = vunpack.c.l.s4 1983009808
        %v1036 = vunpack.c.0.s8 %v1035
        %v1037 = vlaneseq
        %v1038 = vshrl.u32 %v1037, 7
        %v1039 = vsub.s32 %v1036, %v1038
        %v1040 = vrot.slane %v1026, %v1039
        %v1041 = vcombine.high %v1033, %v1033
        %v1042 = vcombine.high %v1040, %v1040
        %v1043 = vcombine.high %v429, %v429
        %v1045 = vunpack.c.l.s4 1983009808
        %v1046 = vunpack.c.0.s8 %v1045
        %v1047 = vlaneseq
        %v1048 = vshrl.u32 %v1047, 7
        %v1049 = vsub.s32 %v1046, %v1048
        %v1050 = vrot.slane %v429, %v1049
        %v1052 = vunpack.c.l.s4 1983009808
        %v1053 = vunpack.c.0.s8 %v1052
        %v1054 = vlaneseq
        %v1055 = vshrl.u32 %v1054, 7
        %v1056 = vsub.s32 %v1053, %v1055
        %v1057 = vrot.slane %v1043, %v1056
        %v1058 = vcombine.high %v1050, %v1050
        %v1059 = vcombine.high %v1057, %v1057
        %v1200 = vpack.c.bf16 %v472, %v472
        %v1201 = vpack.c.bf16 %v480, %v480
        %v1202 = vpack.c.bf16 %v479, %v479
        %v1203 = vpack.c.bf16 %v481, %v481
        %v1204 = vpack.c.bf16 %v489, %v489
        %v1205 = vpack.c.bf16 %v497, %v497
        %v1206 = vpack.c.bf16 %v496, %v496
        %v1207 = vpack.c.bf16 %v498, %v498
        %v1208 = vpack.c.bf16 %v506, %v506
        %v1209 = vpack.c.bf16 %v514, %v514
        %v1210 = vpack.c.bf16 %v513, %v513
        %v1211 = vpack.c.bf16 %v515, %v515
        %v1212 = vpack.c.bf16 %v523, %v523
        %v1213 = vpack.c.bf16 %v531, %v531
        %v1214 = vpack.c.bf16 %v530, %v530
        %v1215 = vpack.c.bf16 %v532, %v532
        %v1216 = vpack.c.bf16 %v540, %v540
        %v1217 = vpack.c.bf16 %v548, %v548
        %v1218 = vpack.c.bf16 %v547, %v547
        %v1219 = vpack.c.bf16 %v549, %v549
        %v1220 = vpack.c.bf16 %v557, %v557
        %v1221 = vpack.c.bf16 %v565, %v565
        %v1222 = vpack.c.bf16 %v564, %v564
        %v1223 = vpack.c.bf16 %v566, %v566
        %v1224 = vpack.c.bf16 %v574, %v574
        %v1225 = vpack.c.bf16 %v582, %v582
        %v1226 = vpack.c.bf16 %v581, %v581
        %v1227 = vpack.c.bf16 %v583, %v583
        %v1228 = vpack.c.bf16 %v591, %v591
        %v1229 = vpack.c.bf16 %v599, %v599
        %v1230 = vpack.c.bf16 %v598, %v598
        %v1231 = vpack.c.bf16 %v600, %v600
        %v1232 = vpack.c.bf16 %v608, %v608
        %v1233 = vpack.c.bf16 %v616, %v616
        %v1234 = vpack.c.bf16 %v615, %v615
        %v1235 = vpack.c.bf16 %v617, %v617
        %v1236 = vpack.c.bf16 %v625, %v625
        %v1237 = vpack.c.bf16 %v633, %v633
        %v1238 = vpack.c.bf16 %v632, %v632
        %v1239 = vpack.c.bf16 %v634, %v634
        %v1240 = vpack.c.bf16 %v642, %v642
        %v1241 = vpack.c.bf16 %v650, %v650
        %v1242 = vpack.c.bf16 %v649, %v649
        %v1243 = vpack.c.bf16 %v651, %v651
        %v1244 = vpack.c.bf16 %v659, %v659
        %v1245 = vpack.c.bf16 %v667, %v667
        %v1246 = vpack.c.bf16 %v666, %v666
        %v1247 = vpack.c.bf16 %v668, %v668
        %v1248 = vpack.c.bf16 %v676, %v676
        %v1249 = vpack.c.bf16 %v684, %v684
        %v1250 = vpack.c.bf16 %v683, %v683
        %v1251 = vpack.c.bf16 %v685, %v685
        %v1252 = vpack.c.bf16 %v693, %v693
        %v1253 = vpack.c.bf16 %v701, %v701
        %v1254 = vpack.c.bf16 %v700, %v700
        %v1255 = vpack.c.bf16 %v702, %v702
        %v1256 = vpack.c.bf16 %v710, %v710
        %v1257 = vpack.c.bf16 %v718, %v718
        %v1258 = vpack.c.bf16 %v717, %v717
        %v1259 = vpack.c.bf16 %v719, %v719
        %v1260 = vpack.c.bf16 %v727, %v727
        %v1261 = vpack.c.bf16 %v735, %v735
        %v1262 = vpack.c.bf16 %v734, %v734
        %v1263 = vpack.c.bf16 %v736, %v736
        %v1264 = vpack.c.bf16 %v744, %v744
        %v1265 = vpack.c.bf16 %v752, %v752
        %v1266 = vpack.c.bf16 %v751, %v751
        %v1267 = vpack.c.bf16 %v753, %v753
        %v1268 = vpack.c.bf16 %v761, %v761
        %v1269 = vpack.c.bf16 %v769, %v769
        %v1270 = vpack.c.bf16 %v768, %v768
        %v1271 = vpack.c.bf16 %v770, %v770
        %v1272 = vpack.c.bf16 %v778, %v778
        %v1273 = vpack.c.bf16 %v786, %v786
        %v1274 = vpack.c.bf16 %v785, %v785
        %v1275 = vpack.c.bf16 %v787, %v787
        %v1276 = vpack.c.bf16 %v795, %v795
        %v1277 = vpack.c.bf16 %v803, %v803
        %v1278 = vpack.c.bf16 %v802, %v802
        %v1279 = vpack.c.bf16 %v804, %v804
        %v1280 = vpack.c.bf16 %v812, %v812
        %v1281 = vpack.c.bf16 %v820, %v820
        %v1282 = vpack.c.bf16 %v819, %v819
        %v1283 = vpack.c.bf16 %v821, %v821
        %v1284 = vpack.c.bf16 %v829, %v829
        %v1285 = vpack.c.bf16 %v837, %v837
        %v1286 = vpack.c.bf16 %v836, %v836
        %v1287 = vpack.c.bf16 %v838, %v838
        %v1288 = vpack.c.bf16 %v846, %v846
        %v1289 = vpack.c.bf16 %v854, %v854
        %v1290 = vpack.c.bf16 %v853, %v853
        %v1291 = vpack.c.bf16 %v855, %v855
        %v1292 = vpack.c.bf16 %v863, %v863
        %v1293 = vpack.c.bf16 %v871, %v871
        %v1294 = vpack.c.bf16 %v870, %v870
        %v1295 = vpack.c.bf16 %v872, %v872
        %v1296 = vpack.c.bf16 %v880, %v880
        %v1297 = vpack.c.bf16 %v888, %v888
        %v1298 = vpack.c.bf16 %v887, %v887
        %v1299 = vpack.c.bf16 %v889, %v889
        %v1300 = vpack.c.bf16 %v897, %v897
        %v1301 = vpack.c.bf16 %v905, %v905
        %v1302 = vpack.c.bf16 %v904, %v904
        %v1303 = vpack.c.bf16 %v906, %v906
        %v1304 = vpack.c.bf16 %v914, %v914
        %v1305 = vpack.c.bf16 %v922, %v922
        %v1306 = vpack.c.bf16 %v921, %v921
        %v1307 = vpack.c.bf16 %v923, %v923
        %v1308 = vpack.c.bf16 %v931, %v931
        %v1309 = vpack.c.bf16 %v939, %v939
        %v1310 = vpack.c.bf16 %v938, %v938
        %v1311 = vpack.c.bf16 %v940, %v940
        %v1312 = vpack.c.bf16 %v948, %v948
        %v1313 = vpack.c.bf16 %v956, %v956
        %v1314 = vpack.c.bf16 %v955, %v955
        %v1315 = vpack.c.bf16 %v957, %v957
        %v1316 = vpack.c.bf16 %v965, %v965
        %v1317 = vpack.c.bf16 %v973, %v973
        %v1318 = vpack.c.bf16 %v972, %v972
        %v1319 = vpack.c.bf16 %v974, %v974
        %v1320 = vpack.c.bf16 %v982, %v982
        %v1321 = vpack.c.bf16 %v990, %v990
        %v1322 = vpack.c.bf16 %v989, %v989
        %v1323 = vpack.c.bf16 %v991, %v991
        %v1324 = vpack.c.bf16 %v999, %v999
        %v1325 = vpack.c.bf16 %v1007, %v1007
        %v1326 = vpack.c.bf16 %v1006, %v1006
        %v1327 = vpack.c.bf16 %v1008, %v1008
        %v1328 = vpack.c.bf16 %v1016, %v1016
        %v1329 = vpack.c.bf16 %v1024, %v1024
        %v1330 = vpack.c.bf16 %v1023, %v1023
        %v1331 = vpack.c.bf16 %v1025, %v1025
        %v1332 = vpack.c.bf16 %v1033, %v1033
        %v1333 = vpack.c.bf16 %v1041, %v1041
        %v1334 = vpack.c.bf16 %v1040, %v1040
        %v1335 = vpack.c.bf16 %v1042, %v1042
        %v1336 = vpack.c.bf16 %v1050, %v1050
        %v1337 = vpack.c.bf16 %v1058, %v1058
        %v1338 = vpack.c.bf16 %v1057, %v1057
        %v1339 = vpack.c.bf16 %v1059, %v1059
        %v1340 = vld [vmem:[%s346] sm:$0xff]
        %v1341 = vld [vmem:[%s346 + $0x8] sm:$0xff]
        %v1342 = vld [vmem:[%s346 + $0x10] sm:$0xff]
        %v1343 = vld [vmem:[%s346 + $0x18] sm:$0xff]
        %v1344 = vld [vmem:[%s346 + $0x20] sm:$0xff]
        %v1345 = vld [vmem:[%s346 + $0x28] sm:$0xff]
        %v1346 = vld [vmem:[%s346 + $0x30] sm:$0xff]
        %v1347 = vld [vmem:[%s346 + $0x38] sm:$0xff]
        %v1348 = vld [vmem:[%s346 + $0x40] sm:$0xff]
        %v1349 = vld [vmem:[%s346 + $0x48] sm:$0xff]
        %v1350 = vld [vmem:[%s346 + $0x50] sm:$0xff]
        %v1351 = vld [vmem:[%s346 + $0x58] sm:$0xff]
        %v1352 = vld [vmem:[%s346 + $0x60] sm:$0xff]
        %v1353 = vld [vmem:[%s346 + $0x68] sm:$0xff]
        %v1354 = vld [vmem:[%s346 + $0x70] sm:$0xff]
        %v1355 = vld [vmem:[%s346 + $0x78] sm:$0xff]
        %v1356 = vld [vmem:[%s346 + $0x80] sm:$0xff]
        %v1357 = vld [vmem:[%s346 + $0x88] sm:$0xff]
        %v1358 = vld [vmem:[%s346 + $0x90] sm:$0xff]
        %v1359 = vld [vmem:[%s346 + $0x98] sm:$0xff]
        %v1360 = vld [vmem:[%s346 + $0xa0] sm:$0xff]
        %v1361 = vld [vmem:[%s346 + $0xa8] sm:$0xff]
        %v1362 = vld [vmem:[%s346 + $0xb0] sm:$0xff]
        %v1363 = vld [vmem:[%s346 + $0xb8] sm:$0xff]
        %v1364 = vld [vmem:[%s346 + $0xc0] sm:$0xff]
        %v1365 = vld [vmem:[%s346 + $0xc8] sm:$0xff]
        %v1366 = vld [vmem:[%s346 + $0xd0] sm:$0xff]
        %v1367 = vld [vmem:[%s346 + $0xd8] sm:$0xff]
        %v1368 = vld [vmem:[%s346 + $0xe0] sm:$0xff]
        %v1369 = vld [vmem:[%s346 + $0xe8] sm:$0xff]
        %v1370 = vld [vmem:[%s346 + $0xf0] sm:$0xff]
        %v1371 = vld [vmem:[%s346 + $0xf8] sm:$0xff]
        %v1372 = vld [vmem:[%s346 + $0x100] sm:$0xff]
        %v1373 = vld [vmem:[%s346 + $0x108] sm:$0xff]
        %v1374 = vld [vmem:[%s346 + $0x110] sm:$0xff]
        %v1375 = vld [vmem:[%s346 + $0x118] sm:$0xff]
        %v1376 = vld [vmem:[%s346 + $0x120] sm:$0xff]
        %v1377 = vld [vmem:[%s346 + $0x128] sm:$0xff]
        %v1378 = vld [vmem:[%s346 + $0x130] sm:$0xff]
        %v1379 = vld [vmem:[%s346 + $0x138] sm:$0xff]
        %v1380 = vld [vmem:[%s346 + $0x140] sm:$0xff]
        %v1381 = vld [vmem:[%s346 + $0x148] sm:$0xff]
        %v1382 = vld [vmem:[%s346 + $0x150] sm:$0xff]
        %v1383 = vld [vmem:[%s346 + $0x158] sm:$0xff]
        %v1384 = vld [vmem:[%s346 + $0x160] sm:$0xff]
        %v1385 = vld [vmem:[%s346 + $0x168] sm:$0xff]
        %v1386 = vld [vmem:[%s346 + $0x170] sm:$0xff]
        %v1387 = vld [vmem:[%s346 + $0x178] sm:$0xff]
        %v1388 = vld [vmem:[%s346 + $0x180] sm:$0xff]
        %v1389 = vld [vmem:[%s346 + $0x188] sm:$0xff]
        %v1390 = vld [vmem:[%s346 + $0x190] sm:$0xff]
        %v1391 = vld [vmem:[%s346 + $0x198] sm:$0xff]
        %v1392 = vld [vmem:[%s346 + $0x1a0] sm:$0xff]
        %v1393 = vld [vmem:[%s346 + $0x1a8] sm:$0xff]
        %v1394 = vld [vmem:[%s346 + $0x1b0] sm:$0xff]
        %v1395 = vld [vmem:[%s346 + $0x1b8] sm:$0xff]
        %v1396 = vld [vmem:[%s346 + $0x1c0] sm:$0xff]
        %v1397 = vld [vmem:[%s346 + $0x1c8] sm:$0xff]
        %v1398 = vld [vmem:[%s346 + $0x1d0] sm:$0xff]
        %v1399 = vld [vmem:[%s346 + $0x1d8] sm:$0xff]
        %v1400 = vld [vmem:[%s346 + $0x1e0] sm:$0xff]
        %v1401 = vld [vmem:[%s346 + $0x1e8] sm:$0xff]
        %v1402 = vld [vmem:[%s346 + $0x1f0] sm:$0xff]
        %v1403 = vld [vmem:[%s346 + $0x1f8] sm:$0xff]
        %v1404 = vld [vmem:[%s346 + $0x200] sm:$0xff]
        %v1405 = vld [vmem:[%s346 + $0x208] sm:$0xff]
        %v1406 = vld [vmem:[%s346 + $0x210] sm:$0xff]
        %v1407 = vld [vmem:[%s346 + $0x218] sm:$0xff]
        %v1408 = vld [vmem:[%s346 + $0x220] sm:$0xff]
        %v1409 = vld [vmem:[%s346 + $0x228] sm:$0xff]
        %v1410 = vld [vmem:[%s346 + $0x230] sm:$0xff]
        %v1411 = vld [vmem:[%s346 + $0x238] sm:$0xff]
        %v1412 = vld [vmem:[%s346 + $0x240] sm:$0xff]
        %v1413 = vld [vmem:[%s346 + $0x248] sm:$0xff]
        %v1414 = vld [vmem:[%s346 + $0x250] sm:$0xff]
        %v1415 = vld [vmem:[%s346 + $0x258] sm:$0xff]
        %v1416 = vld [vmem:[%s346 + $0x260] sm:$0xff]
        %v1417 = vld [vmem:[%s346 + $0x268] sm:$0xff]
        %v1418 = vld [vmem:[%s346 + $0x270] sm:$0xff]
        %v1419 = vld [vmem:[%s346 + $0x278] sm:$0xff]
        %v1420 = vld [vmem:[%s346 + $0x280] sm:$0xff]
        %v1421 = vld [vmem:[%s346 + $0x288] sm:$0xff]
        %v1422 = vld [vmem:[%s346 + $0x290] sm:$0xff]
        %v1423 = vld [vmem:[%s346 + $0x298] sm:$0xff]
        %v1424 = vld [vmem:[%s346 + $0x2a0] sm:$0xff]
        %v1425 = vld [vmem:[%s346 + $0x2a8] sm:$0xff]
        %v1426 = vld [vmem:[%s346 + $0x2b0] sm:$0xff]
        %v1427 = vld [vmem:[%s346 + $0x2b8] sm:$0xff]
        %v1428 = vld [vmem:[%s346 + $0x2c0] sm:$0xff]
        %v1429 = vld [vmem:[%s346 + $0x2c8] sm:$0xff]
        %v1430 = vld [vmem:[%s346 + $0x2d0] sm:$0xff]
        %v1431 = vld [vmem:[%s346 + $0x2d8] sm:$0xff]
        %v1432 = vld [vmem:[%s346 + $0x2e0] sm:$0xff]
        %v1433 = vld [vmem:[%s346 + $0x2e8] sm:$0xff]
        %v1434 = vld [vmem:[%s346 + $0x2f0] sm:$0xff]
        %v1435 = vld [vmem:[%s346 + $0x2f8] sm:$0xff]
        %v1436 = vld [vmem:[%s346 + $0x300] sm:$0xff]
        %v1437 = vld [vmem:[%s346 + $0x308] sm:$0xff]
        %v1438 = vld [vmem:[%s346 + $0x310] sm:$0xff]
        %v1439 = vld [vmem:[%s346 + $0x318] sm:$0xff]
        %v1440 = vld [vmem:[%s346 + $0x320] sm:$0xff]
        %v1441 = vld [vmem:[%s346 + $0x328] sm:$0xff]
        %v1442 = vld [vmem:[%s346 + $0x330] sm:$0xff]
        %v1443 = vld [vmem:[%s346 + $0x338] sm:$0xff]
        %v1444 = vld [vmem:[%s346 + $0x340] sm:$0xff]
        %v1445 = vld [vmem:[%s346 + $0x348] sm:$0xff]
        %v1446 = vld [vmem:[%s346 + $0x350] sm:$0xff]
        %v1447 = vld [vmem:[%s346 + $0x358] sm:$0xff]
        %v1448 = vld [vmem:[%s346 + $0x360] sm:$0xff]
        %v1449 = vld [vmem:[%s346 + $0x368] sm:$0xff]
        %v1450 = vld [vmem:[%s346 + $0x370] sm:$0xff]
        %v1451 = vld [vmem:[%s346 + $0x378] sm:$0xff]
        %v1452 = vld [vmem:[%s346 + $0x380] sm:$0xff]
        %v1453 = vld [vmem:[%s346 + $0x388] sm:$0xff]
        %v1454 = vld [vmem:[%s346 + $0x390] sm:$0xff]
        %v1455 = vld [vmem:[%s346 + $0x398] sm:$0xff]
        %v1456 = vld [vmem:[%s346 + $0x3a0] sm:$0xff]
        %v1457 = vld [vmem:[%s346 + $0x3a8] sm:$0xff]
        %v1458 = vld [vmem:[%s346 + $0x3b0] sm:$0xff]
        %v1459 = vld [vmem:[%s346 + $0x3b8] sm:$0xff]
        %v1460 = vld [vmem:[%s346 + $0x3c0] sm:$0xff]
        %v1461 = vld [vmem:[%s346 + $0x3c8] sm:$0xff]
        %v1462 = vld [vmem:[%s346 + $0x3d0] sm:$0xff]
        %v1463 = vld [vmem:[%s346 + $0x3d8] sm:$0xff]
        %v1464 = vld [vmem:[%s346 + $0x3e0] sm:$0xff]
        %v1465 = vld [vmem:[%s346 + $0x3e8] sm:$0xff]
        %v1466 = vld [vmem:[%s346 + $0x3f0] sm:$0xff]
        %v1467 = vld [vmem:[%s346 + $0x3f8] sm:$0xff]
        %v1468 = vld [vmem:[%s346 + $0x400] sm:$0xff]
        %v1469 = vld [vmem:[%s346 + $0x408] sm:$0xff]
        %v1470 = vld [vmem:[%s346 + $0x410] sm:$0xff]
        %v1471 = vld [vmem:[%s346 + $0x418] sm:$0xff]
        %v1472 = vld [vmem:[%s346 + $0x420] sm:$0xff]
        %v1473 = vld [vmem:[%s346 + $0x428] sm:$0xff]
        %v1474 = vld [vmem:[%s346 + $0x430] sm:$0xff]
        %v1475 = vld [vmem:[%s346 + $0x438] sm:$0xff]
        %v1476 = vld [vmem:[%s346 + $0x440] sm:$0xff]
        %v1477 = vld [vmem:[%s346 + $0x448] sm:$0xff]
        %v1478 = vld [vmem:[%s346 + $0x450] sm:$0xff]
        %v1479 = vld [vmem:[%s346 + $0x458] sm:$0xff]
        %v1480 = vld [vmem:[%s346 + $0x460] sm:$0xff]
        %v1481 = vld [vmem:[%s346 + $0x468] sm:$0xff]
        %v1482 = vld [vmem:[%s346 + $0x470] sm:$0xff]
        %v1483 = vld [vmem:[%s346 + $0x478] sm:$0xff]
        %v1484 = vld [vmem:[%s346 + $0x480] sm:$0xff]
        %v1485 = vld [vmem:[%s346 + $0x488] sm:$0xff]
        %v1486 = vld [vmem:[%s346 + $0x490] sm:$0xff]
        %v1487 = vld [vmem:[%s346 + $0x498] sm:$0xff]
        %v1488 = vld [vmem:[%s346 + $0x4a0] sm:$0xff]
        %v1489 = vld [vmem:[%s346 + $0x4a8] sm:$0xff]
        %v1490 = vld [vmem:[%s346 + $0x4b0] sm:$0xff]
        %v1491 = vld [vmem:[%s346 + $0x4b8] sm:$0xff]
        %v1492 = vld [vmem:[%s346 + $0x4c0] sm:$0xff]
        %v1493 = vld [vmem:[%s346 + $0x4c8] sm:$0xff]
        %v1494 = vld [vmem:[%s346 + $0x4d0] sm:$0xff]
        %v1495 = vld [vmem:[%s346 + $0x4d8] sm:$0xff]
        %v1496 = vld [vmem:[%s346 + $0x4e0] sm:$0xff]
        %v1497 = vld [vmem:[%s346 + $0x4e8] sm:$0xff]
        %v1498 = vld [vmem:[%s346 + $0x4f0] sm:$0xff]
        %v1499 = vld [vmem:[%s346 + $0x4f8] sm:$0xff]
        %v1500 = vld [vmem:[%s346 + $0x500] sm:$0xff]
        %v1501 = vld [vmem:[%s346 + $0x508] sm:$0xff]
        %v1502 = vld [vmem:[%s346 + $0x510] sm:$0xff]
        %v1503 = vld [vmem:[%s346 + $0x518] sm:$0xff]
        %v1504 = vld [vmem:[%s346 + $0x520] sm:$0xff]
        %v1505 = vld [vmem:[%s346 + $0x528] sm:$0xff]
        %v1506 = vld [vmem:[%s346 + $0x530] sm:$0xff]
        %v1507 = vld [vmem:[%s346 + $0x538] sm:$0xff]
        %v1508 = vld [vmem:[%s346 + $0x540] sm:$0xff]
        %v1509 = vld [vmem:[%s346 + $0x548] sm:$0xff]
        %v1510 = vld [vmem:[%s346 + $0x550] sm:$0xff]
        %v1511 = vld [vmem:[%s346 + $0x558] sm:$0xff]
        %v1512 = vld [vmem:[%s346 + $0x560] sm:$0xff]
        %v1513 = vld [vmem:[%s346 + $0x568] sm:$0xff]
        %v1514 = vld [vmem:[%s346 + $0x570] sm:$0xff]
        %v1515 = vld [vmem:[%s346 + $0x578] sm:$0xff]
        %v1516 = vld [vmem:[%s346 + $0x580] sm:$0xff]
        %v1517 = vld [vmem:[%s346 + $0x588] sm:$0xff]
        %v1518 = vld [vmem:[%s346 + $0x590] sm:$0xff]
        %v1519 = vld [vmem:[%s346 + $0x598] sm:$0xff]
        %v1520 = vld [vmem:[%s346 + $0x5a0] sm:$0xff]
        %v1521 = vld [vmem:[%s346 + $0x5a8] sm:$0xff]
        %v1522 = vld [vmem:[%s346 + $0x5b0] sm:$0xff]
        %v1523 = vld [vmem:[%s346 + $0x5b8] sm:$0xff]
        %v1524 = vld [vmem:[%s346 + $0x5c0] sm:$0xff]
        %v1525 = vld [vmem:[%s346 + $0x5c8] sm:$0xff]
        %v1526 = vld [vmem:[%s346 + $0x5d0] sm:$0xff]
        %v1527 = vld [vmem:[%s346 + $0x5d8] sm:$0xff]
        %v1528 = vld [vmem:[%s346 + $0x5e0] sm:$0xff]
        %v1529 = vld [vmem:[%s346 + $0x5e8] sm:$0xff]
        %v1530 = vld [vmem:[%s346 + $0x5f0] sm:$0xff]
        %v1531 = vld [vmem:[%s346 + $0x5f8] sm:$0xff]
        %v1532 = vld [vmem:[%s346 + $0x600] sm:$0xff]
        %v1533 = vld [vmem:[%s346 + $0x608] sm:$0xff]
        %v1534 = vld [vmem:[%s346 + $0x610] sm:$0xff]
        %v1535 = vld [vmem:[%s346 + $0x618] sm:$0xff]
        %v1536 = vld [vmem:[%s346 + $0x620] sm:$0xff]
        %v1537 = vld [vmem:[%s346 + $0x628] sm:$0xff]
        %v1538 = vld [vmem:[%s346 + $0x630] sm:$0xff]
        %v1539 = vld [vmem:[%s346 + $0x638] sm:$0xff]
        %v1540 = vld [vmem:[%s346 + $0x640] sm:$0xff]
        %v1541 = vld [vmem:[%s346 + $0x648] sm:$0xff]
        %v1542 = vld [vmem:[%s346 + $0x650] sm:$0xff]
        %v1543 = vld [vmem:[%s346 + $0x658] sm:$0xff]
        %v1544 = vld [vmem:[%s346 + $0x660] sm:$0xff]
        %v1545 = vld [vmem:[%s346 + $0x668] sm:$0xff]
        %v1546 = vld [vmem:[%s346 + $0x670] sm:$0xff]
        %v1547 = vld [vmem:[%s346 + $0x678] sm:$0xff]
        %v1548 = vld [vmem:[%s346 + $0x680] sm:$0xff]
        %v1549 = vld [vmem:[%s346 + $0x688] sm:$0xff]
        %v1550 = vld [vmem:[%s346 + $0x690] sm:$0xff]
        %v1551 = vld [vmem:[%s346 + $0x698] sm:$0xff]
        %v1552 = vld [vmem:[%s346 + $0x6a0] sm:$0xff]
        %v1553 = vld [vmem:[%s346 + $0x6a8] sm:$0xff]
        %v1554 = vld [vmem:[%s346 + $0x6b0] sm:$0xff]
        %v1555 = vld [vmem:[%s346 + $0x6b8] sm:$0xff]
        %v1556 = vld [vmem:[%s346 + $0x6c0] sm:$0xff]
        %v1557 = vld [vmem:[%s346 + $0x6c8] sm:$0xff]
        %v1558 = vld [vmem:[%s346 + $0x6d0] sm:$0xff]
        %v1559 = vld [vmem:[%s346 + $0x6d8] sm:$0xff]
        %v1560 = vld [vmem:[%s346 + $0x6e0] sm:$0xff]
        %v1561 = vld [vmem:[%s346 + $0x6e8] sm:$0xff]
        %v1562 = vld [vmem:[%s346 + $0x6f0] sm:$0xff]
        %v1563 = vld [vmem:[%s346 + $0x6f8] sm:$0xff]
        %v1564 = vld [vmem:[%s346 + $0x700] sm:$0xff]
        %v1565 = vld [vmem:[%s346 + $0x708] sm:$0xff]
        %v1566 = vld [vmem:[%s346 + $0x710] sm:$0xff]
        %v1567 = vld [vmem:[%s346 + $0x718] sm:$0xff]
        %v1568 = vld [vmem:[%s346 + $0x720] sm:$0xff]
        %v1569 = vld [vmem:[%s346 + $0x728] sm:$0xff]
        %v1570 = vld [vmem:[%s346 + $0x730] sm:$0xff]
        %v1571 = vld [vmem:[%s346 + $0x738] sm:$0xff]
        %v1572 = vld [vmem:[%s346 + $0x740] sm:$0xff]
        %v1573 = vld [vmem:[%s346 + $0x748] sm:$0xff]
        %v1574 = vld [vmem:[%s346 + $0x750] sm:$0xff]
        %v1575 = vld [vmem:[%s346 + $0x758] sm:$0xff]
        %v1576 = vld [vmem:[%s346 + $0x760] sm:$0xff]
        %v1577 = vld [vmem:[%s346 + $0x768] sm:$0xff]
        %v1578 = vld [vmem:[%s346 + $0x770] sm:$0xff]
        %v1579 = vld [vmem:[%s346 + $0x778] sm:$0xff]
        %v1580 = vld [vmem:[%s346 + $0x780] sm:$0xff]
        %v1581 = vld [vmem:[%s346 + $0x788] sm:$0xff]
        %v1582 = vld [vmem:[%s346 + $0x790] sm:$0xff]
        %v1583 = vld [vmem:[%s346 + $0x798] sm:$0xff]
        %v1584 = vld [vmem:[%s346 + $0x7a0] sm:$0xff]
        %v1585 = vld [vmem:[%s346 + $0x7a8] sm:$0xff]
        %v1586 = vld [vmem:[%s346 + $0x7b0] sm:$0xff]
        %v1587 = vld [vmem:[%s346 + $0x7b8] sm:$0xff]
        %v1588 = vld [vmem:[%s346 + $0x7c0] sm:$0xff]
        %v1589 = vld [vmem:[%s346 + $0x7c8] sm:$0xff]
        %v1590 = vld [vmem:[%s346 + $0x7d0] sm:$0xff]
        %v1591 = vld [vmem:[%s346 + $0x7d8] sm:$0xff]
        %v1592 = vld [vmem:[%s346 + $0x7e0] sm:$0xff]
        %v1593 = vld [vmem:[%s346 + $0x7e8] sm:$0xff]
        %v1594 = vld [vmem:[%s346 + $0x7f0] sm:$0xff]
        %v1595 = vld [vmem:[%s346 + $0x7f8] sm:$0xff]
        %v1596 = vld [vmem:[%s346 + $0x800] sm:$0xff]
        %v1597 = vld [vmem:[%s346 + $0x808] sm:$0xff]
        %v1598 = vld [vmem:[%s346 + $0x810] sm:$0xff]
        %v1599 = vld [vmem:[%s346 + $0x818] sm:$0xff]
        %v1600 = vld [vmem:[%s346 + $0x820] sm:$0xff]
        %v1601 = vld [vmem:[%s346 + $0x828] sm:$0xff]
        %v1602 = vld [vmem:[%s346 + $0x830] sm:$0xff]
        %v1603 = vld [vmem:[%s346 + $0x838] sm:$0xff]
        %v1604 = vld [vmem:[%s346 + $0x840] sm:$0xff]
        %v1605 = vld [vmem:[%s346 + $0x848] sm:$0xff]
        %v1606 = vld [vmem:[%s346 + $0x850] sm:$0xff]
        %v1607 = vld [vmem:[%s346 + $0x858] sm:$0xff]
        %v1608 = vld [vmem:[%s346 + $0x860] sm:$0xff]
        %v1609 = vld [vmem:[%s346 + $0x868] sm:$0xff]
        %v1610 = vld [vmem:[%s346 + $0x870] sm:$0xff]
        %v1611 = vld [vmem:[%s346 + $0x878] sm:$0xff]
        %v1612 = vld [vmem:[%s346 + $0x880] sm:$0xff]
        %v1613 = vld [vmem:[%s346 + $0x888] sm:$0xff]
        %v1614 = vld [vmem:[%s346 + $0x890] sm:$0xff]
        %v1615 = vld [vmem:[%s346 + $0x898] sm:$0xff]
        %v1616 = vld [vmem:[%s346 + $0x8a0] sm:$0xff]
        %v1617 = vld [vmem:[%s346 + $0x8a8] sm:$0xff]
        %v1618 = vld [vmem:[%s346 + $0x8b0] sm:$0xff]
        %v1619 = vld [vmem:[%s346 + $0x8b8] sm:$0xff]
        %v1620 = vld [vmem:[%s346 + $0x8c0] sm:$0xff]
        %v1621 = vld [vmem:[%s346 + $0x8c8] sm:$0xff]
        %v1622 = vld [vmem:[%s346 + $0x8d0] sm:$0xff]
        %v1623 = vld [vmem:[%s346 + $0x8d8] sm:$0xff]
        %v1624 = vld [vmem:[%s346 + $0x8e0] sm:$0xff]
        %v1625 = vld [vmem:[%s346 + $0x8e8] sm:$0xff]
        %v1626 = vld [vmem:[%s346 + $0x8f0] sm:$0xff]
        %v1627 = vld [vmem:[%s346 + $0x8f8] sm:$0xff]
        %v1628 = vld [vmem:[%s346 + $0x900] sm:$0xff]
        %v1629 = vld [vmem:[%s346 + $0x908] sm:$0xff]
        %v1630 = vld [vmem:[%s346 + $0x910] sm:$0xff]
        %v1631 = vld [vmem:[%s346 + $0x918] sm:$0xff]
        %v1632 = vld [vmem:[%s346 + $0x920] sm:$0xff]
        %v1633 = vld [vmem:[%s346 + $0x928] sm:$0xff]
        %v1634 = vld [vmem:[%s346 + $0x930] sm:$0xff]
        %v1635 = vld [vmem:[%s346 + $0x938] sm:$0xff]
        %v1636 = vld [vmem:[%s346 + $0x940] sm:$0xff]
        %v1637 = vld [vmem:[%s346 + $0x948] sm:$0xff]
        %v1638 = vld [vmem:[%s346 + $0x950] sm:$0xff]
        %v1639 = vld [vmem:[%s346 + $0x958] sm:$0xff]
        %v1640 = vld [vmem:[%s346 + $0x960] sm:$0xff]
        %v1641 = vld [vmem:[%s346 + $0x968] sm:$0xff]
        %v1642 = vld [vmem:[%s346 + $0x970] sm:$0xff]
        %v1643 = vld [vmem:[%s346 + $0x978] sm:$0xff]
        %v1644 = vld [vmem:[%s346 + $0x980] sm:$0xff]
        %v1645 = vld [vmem:[%s346 + $0x988] sm:$0xff]
        %v1646 = vld [vmem:[%s346 + $0x990] sm:$0xff]
        %v1647 = vld [vmem:[%s346 + $0x998] sm:$0xff]
        %v1648 = vld [vmem:[%s346 + $0x9a0] sm:$0xff]
        %v1649 = vld [vmem:[%s346 + $0x9a8] sm:$0xff]
        %v1650 = vld [vmem:[%s346 + $0x9b0] sm:$0xff]
        %v1651 = vld [vmem:[%s346 + $0x9b8] sm:$0xff]
        %v1652 = vld [vmem:[%s346 + $0x9c0] sm:$0xff]
        %v1653 = vld [vmem:[%s346 + $0x9c8] sm:$0xff]
        %v1654 = vld [vmem:[%s346 + $0x9d0] sm:$0xff]
        %v1655 = vld [vmem:[%s346 + $0x9d8] sm:$0xff]
        %v1656 = vld [vmem:[%s346 + $0x9e0] sm:$0xff]
        %v1657 = vld [vmem:[%s346 + $0x9e8] sm:$0xff]
        %v1658 = vld [vmem:[%s346 + $0x9f0] sm:$0xff]
        %v1659 = vld [vmem:[%s346 + $0x9f8] sm:$0xff]
        %v1660 = vld [vmem:[%s346 + $0xa00] sm:$0xff]
        %v1661 = vld [vmem:[%s346 + $0xa08] sm:$0xff]
        %v1662 = vld [vmem:[%s346 + $0xa10] sm:$0xff]
        %v1663 = vld [vmem:[%s346 + $0xa18] sm:$0xff]
        %v1664 = vld [vmem:[%s346 + $0xa20] sm:$0xff]
        %v1665 = vld [vmem:[%s346 + $0xa28] sm:$0xff]
        %v1666 = vld [vmem:[%s346 + $0xa30] sm:$0xff]
        %v1667 = vld [vmem:[%s346 + $0xa38] sm:$0xff]
        %v1668 = vld [vmem:[%s346 + $0xa40] sm:$0xff]
        %v1669 = vld [vmem:[%s346 + $0xa48] sm:$0xff]
        %v1670 = vld [vmem:[%s346 + $0xa50] sm:$0xff]
        %v1671 = vld [vmem:[%s346 + $0xa58] sm:$0xff]
        %v1672 = vld [vmem:[%s346 + $0xa60] sm:$0xff]
        %v1673 = vld [vmem:[%s346 + $0xa68] sm:$0xff]
        %v1674 = vld [vmem:[%s346 + $0xa70] sm:$0xff]
        %v1675 = vld [vmem:[%s346 + $0xa78] sm:$0xff]
        %v1676 = vld [vmem:[%s346 + $0xa80] sm:$0xff]
        %v1677 = vld [vmem:[%s346 + $0xa88] sm:$0xff]
        %v1678 = vld [vmem:[%s346 + $0xa90] sm:$0xff]
        %v1679 = vld [vmem:[%s346 + $0xa98] sm:$0xff]
        %v1680 = vld [vmem:[%s346 + $0xaa0] sm:$0xff]
        %v1681 = vld [vmem:[%s346 + $0xaa8] sm:$0xff]
        %v1682 = vld [vmem:[%s346 + $0xab0] sm:$0xff]
        %v1683 = vld [vmem:[%s346 + $0xab8] sm:$0xff]
        %v1684 = vld [vmem:[%s346 + $0xac0] sm:$0xff]
        %v1685 = vld [vmem:[%s346 + $0xac8] sm:$0xff]
        %v1686 = vld [vmem:[%s346 + $0xad0] sm:$0xff]
        %v1687 = vld [vmem:[%s346 + $0xad8] sm:$0xff]
        %v1688 = vld [vmem:[%s346 + $0xae0] sm:$0xff]
        %v1689 = vld [vmem:[%s346 + $0xae8] sm:$0xff]
        %v1690 = vld [vmem:[%s346 + $0xaf0] sm:$0xff]
        %v1691 = vld [vmem:[%s346 + $0xaf8] sm:$0xff]
        %v1692 = vld [vmem:[%s346 + $0xb00] sm:$0xff]
        %v1693 = vld [vmem:[%s346 + $0xb08] sm:$0xff]
        %v1694 = vld [vmem:[%s346 + $0xb10] sm:$0xff]
        %v1695 = vld [vmem:[%s346 + $0xb18] sm:$0xff]
        %v1696 = vld [vmem:[%s346 + $0xb20] sm:$0xff]
        %v1697 = vld [vmem:[%s346 + $0xb28] sm:$0xff]
        %v1698 = vld [vmem:[%s346 + $0xb30] sm:$0xff]
        %v1699 = vld [vmem:[%s346 + $0xb38] sm:$0xff]
        %v1700 = vld [vmem:[%s346 + $0xb40] sm:$0xff]
        %v1701 = vld [vmem:[%s346 + $0xb48] sm:$0xff]
        %v1702 = vld [vmem:[%s346 + $0xb50] sm:$0xff]
        %v1703 = vld [vmem:[%s346 + $0xb58] sm:$0xff]
        %v1704 = vld [vmem:[%s346 + $0xb60] sm:$0xff]
        %v1705 = vld [vmem:[%s346 + $0xb68] sm:$0xff]
        %v1706 = vld [vmem:[%s346 + $0xb70] sm:$0xff]
        %v1707 = vld [vmem:[%s346 + $0xb78] sm:$0xff]
        %v1708 = vld [vmem:[%s346 + $0xb80] sm:$0xff]
        %v1709 = vld [vmem:[%s346 + $0xb88] sm:$0xff]
        %v1710 = vld [vmem:[%s346 + $0xb90] sm:$0xff]
        %v1711 = vld [vmem:[%s346 + $0xb98] sm:$0xff]
        %v1712 = vld [vmem:[%s346 + $0xba0] sm:$0xff]
        %v1713 = vld [vmem:[%s346 + $0xba8] sm:$0xff]
        %v1714 = vld [vmem:[%s346 + $0xbb0] sm:$0xff]
        %v1715 = vld [vmem:[%s346 + $0xbb8] sm:$0xff]
        %v1716 = vld [vmem:[%s346 + $0xbc0] sm:$0xff]
        %v1717 = vld [vmem:[%s346 + $0xbc8] sm:$0xff]
        %v1718 = vld [vmem:[%s346 + $0xbd0] sm:$0xff]
        %v1719 = vld [vmem:[%s346 + $0xbd8] sm:$0xff]
        %v1720 = vld [vmem:[%s346 + $0xbe0] sm:$0xff]
        %v1721 = vld [vmem:[%s346 + $0xbe8] sm:$0xff]
        %v1722 = vld [vmem:[%s346 + $0xbf0] sm:$0xff]
        %v1723 = vld [vmem:[%s346 + $0xbf8] sm:$0xff]
        %v1724 = vld [vmem:[%s346 + $0xc00] sm:$0xff]
        %v1725 = vld [vmem:[%s346 + $0xc08] sm:$0xff]
        %v1726 = vld [vmem:[%s346 + $0xc10] sm:$0xff]
        %v1727 = vld [vmem:[%s346 + $0xc18] sm:$0xff]
        %v1728 = vld [vmem:[%s346 + $0xc20] sm:$0xff]
        %v1729 = vld [vmem:[%s346 + $0xc28] sm:$0xff]
        %v1730 = vld [vmem:[%s346 + $0xc30] sm:$0xff]
        %v1731 = vld [vmem:[%s346 + $0xc38] sm:$0xff]
        %v1732 = vld [vmem:[%s346 + $0xc40] sm:$0xff]
        %v1733 = vld [vmem:[%s346 + $0xc48] sm:$0xff]
        %v1734 = vld [vmem:[%s346 + $0xc50] sm:$0xff]
        %v1735 = vld [vmem:[%s346 + $0xc58] sm:$0xff]
        %v1736 = vld [vmem:[%s346 + $0xc60] sm:$0xff]
        %v1737 = vld [vmem:[%s346 + $0xc68] sm:$0xff]
        %v1738 = vld [vmem:[%s346 + $0xc70] sm:$0xff]
        %v1739 = vld [vmem:[%s346 + $0xc78] sm:$0xff]
        %v1740 = vld [vmem:[%s346 + $0xc80] sm:$0xff]
        %v1741 = vld [vmem:[%s346 + $0xc88] sm:$0xff]
        %v1742 = vld [vmem:[%s346 + $0xc90] sm:$0xff]
        %v1743 = vld [vmem:[%s346 + $0xc98] sm:$0xff]
        %v1744 = vld [vmem:[%s346 + $0xca0] sm:$0xff]
        %v1745 = vld [vmem:[%s346 + $0xca8] sm:$0xff]
        %v1746 = vld [vmem:[%s346 + $0xcb0] sm:$0xff]
        %v1747 = vld [vmem:[%s346 + $0xcb8] sm:$0xff]
        %v1748 = vld [vmem:[%s346 + $0xcc0] sm:$0xff]
        %v1749 = vld [vmem:[%s346 + $0xcc8] sm:$0xff]
        %v1750 = vld [vmem:[%s346 + $0xcd0] sm:$0xff]
        %v1751 = vld [vmem:[%s346 + $0xcd8] sm:$0xff]
        %v1752 = vld [vmem:[%s346 + $0xce0] sm:$0xff]
        %v1753 = vld [vmem:[%s346 + $0xce8] sm:$0xff]
        %v1754 = vld [vmem:[%s346 + $0xcf0] sm:$0xff]
        %v1755 = vld [vmem:[%s346 + $0xcf8] sm:$0xff]
        %v1756 = vld [vmem:[%s346 + $0xd00] sm:$0xff]
        %v1757 = vld [vmem:[%s346 + $0xd08] sm:$0xff]
        %v1758 = vld [vmem:[%s346 + $0xd10] sm:$0xff]
        %v1759 = vld [vmem:[%s346 + $0xd18] sm:$0xff]
        %v1760 = vld [vmem:[%s346 + $0xd20] sm:$0xff]
        %v1761 = vld [vmem:[%s346 + $0xd28] sm:$0xff]
        %v1762 = vld [vmem:[%s346 + $0xd30] sm:$0xff]
        %v1763 = vld [vmem:[%s346 + $0xd38] sm:$0xff]
        %v1764 = vld [vmem:[%s346 + $0xd40] sm:$0xff]
        %v1765 = vld [vmem:[%s346 + $0xd48] sm:$0xff]
        %v1766 = vld [vmem:[%s346 + $0xd50] sm:$0xff]
        %v1767 = vld [vmem:[%s346 + $0xd58] sm:$0xff]
        %v1768 = vld [vmem:[%s346 + $0xd60] sm:$0xff]
        %v1769 = vld [vmem:[%s346 + $0xd68] sm:$0xff]
        %v1770 = vld [vmem:[%s346 + $0xd70] sm:$0xff]
        %v1771 = vld [vmem:[%s346 + $0xd78] sm:$0xff]
        %v1772 = vld [vmem:[%s346 + $0xd80] sm:$0xff]
        %v1773 = vld [vmem:[%s346 + $0xd88] sm:$0xff]
        %v1774 = vld [vmem:[%s346 + $0xd90] sm:$0xff]
        %v1775 = vld [vmem:[%s346 + $0xd98] sm:$0xff]
        %v1776 = vld [vmem:[%s346 + $0xda0] sm:$0xff]
        %v1777 = vld [vmem:[%s346 + $0xda8] sm:$0xff]
        %v1778 = vld [vmem:[%s346 + $0xdb0] sm:$0xff]
        %v1779 = vld [vmem:[%s346 + $0xdb8] sm:$0xff]
        %v1780 = vld [vmem:[%s346 + $0xdc0] sm:$0xff]
        %v1781 = vld [vmem:[%s346 + $0xdc8] sm:$0xff]
        %v1782 = vld [vmem:[%s346 + $0xdd0] sm:$0xff]
        %v1783 = vld [vmem:[%s346 + $0xdd8] sm:$0xff]
        %v1784 = vld [vmem:[%s346 + $0xde0] sm:$0xff]
        %v1785 = vld [vmem:[%s346 + $0xde8] sm:$0xff]
        %v1786 = vld [vmem:[%s346 + $0xdf0] sm:$0xff]
        %v1787 = vld [vmem:[%s346 + $0xdf8] sm:$0xff]
        %v1788 = vld [vmem:[%s346 + $0xe00] sm:$0xff]
        %v1789 = vld [vmem:[%s346 + $0xe08] sm:$0xff]
        %v1790 = vld [vmem:[%s346 + $0xe10] sm:$0xff]
        %v1791 = vld [vmem:[%s346 + $0xe18] sm:$0xff]
        %v1792 = vld [vmem:[%s346 + $0xe20] sm:$0xff]
        %v1793 = vld [vmem:[%s346 + $0xe28] sm:$0xff]
        %v1794 = vld [vmem:[%s346 + $0xe30] sm:$0xff]
        %v1795 = vld [vmem:[%s346 + $0xe38] sm:$0xff]
        %v1796 = vld [vmem:[%s346 + $0xe40] sm:$0xff]
        %v1797 = vld [vmem:[%s346 + $0xe48] sm:$0xff]
        %v1798 = vld [vmem:[%s346 + $0xe50] sm:$0xff]
        %v1799 = vld [vmem:[%s346 + $0xe58] sm:$0xff]
        %v1800 = vld [vmem:[%s346 + $0xe60] sm:$0xff]
        %v1801 = vld [vmem:[%s346 + $0xe68] sm:$0xff]
        %v1802 = vld [vmem:[%s346 + $0xe70] sm:$0xff]
        %v1803 = vld [vmem:[%s346 + $0xe78] sm:$0xff]
        %v1804 = vld [vmem:[%s346 + $0xe80] sm:$0xff]
        %v1805 = vld [vmem:[%s346 + $0xe88] sm:$0xff]
        %v1806 = vld [vmem:[%s346 + $0xe90] sm:$0xff]
        %v1807 = vld [vmem:[%s346 + $0xe98] sm:$0xff]
        %v1808 = vld [vmem:[%s346 + $0xea0] sm:$0xff]
        %v1809 = vld [vmem:[%s346 + $0xea8] sm:$0xff]
        %v1810 = vld [vmem:[%s346 + $0xeb0] sm:$0xff]
        %v1811 = vld [vmem:[%s346 + $0xeb8] sm:$0xff]
        %v1812 = vld [vmem:[%s346 + $0xec0] sm:$0xff]
        %v1813 = vld [vmem:[%s346 + $0xec8] sm:$0xff]
        %v1814 = vld [vmem:[%s346 + $0xed0] sm:$0xff]
        %v1815 = vld [vmem:[%s346 + $0xed8] sm:$0xff]
        %v1816 = vld [vmem:[%s346 + $0xee0] sm:$0xff]
        %v1817 = vld [vmem:[%s346 + $0xee8] sm:$0xff]
        %v1818 = vld [vmem:[%s346 + $0xef0] sm:$0xff]
        %v1819 = vld [vmem:[%s346 + $0xef8] sm:$0xff]
        %v1820 = vld [vmem:[%s346 + $0xf00] sm:$0xff]
        %v1821 = vld [vmem:[%s346 + $0xf08] sm:$0xff]
        %v1822 = vld [vmem:[%s346 + $0xf10] sm:$0xff]
        %v1823 = vld [vmem:[%s346 + $0xf18] sm:$0xff]
        %v1824 = vld [vmem:[%s346 + $0xf20] sm:$0xff]
        %v1825 = vld [vmem:[%s346 + $0xf28] sm:$0xff]
        %v1826 = vld [vmem:[%s346 + $0xf30] sm:$0xff]
        %v1827 = vld [vmem:[%s346 + $0xf38] sm:$0xff]
        %v1828 = vld [vmem:[%s346 + $0xf40] sm:$0xff]
        %v1829 = vld [vmem:[%s346 + $0xf48] sm:$0xff]
        %v1830 = vld [vmem:[%s346 + $0xf50] sm:$0xff]
        %v1831 = vld [vmem:[%s346 + $0xf58] sm:$0xff]
        %v1832 = vld [vmem:[%s346 + $0xf60] sm:$0xff]
        %v1833 = vld [vmem:[%s346 + $0xf68] sm:$0xff]
        %v1834 = vld [vmem:[%s346 + $0xf70] sm:$0xff]
        %v1835 = vld [vmem:[%s346 + $0xf78] sm:$0xff]
        %v1836 = vld [vmem:[%s346 + $0xf80] sm:$0xff]
        %v1837 = vld [vmem:[%s346 + $0xf88] sm:$0xff]
        %v1838 = vld [vmem:[%s346 + $0xf90] sm:$0xff]
        %v1839 = vld [vmem:[%s346 + $0xf98] sm:$0xff]
        %v1840 = vld [vmem:[%s346 + $0xfa0] sm:$0xff]
        %v1841 = vld [vmem:[%s346 + $0xfa8] sm:$0xff]
        %v1842 = vld [vmem:[%s346 + $0xfb0] sm:$0xff]
        %v1843 = vld [vmem:[%s346 + $0xfb8] sm:$0xff]
        %v1844 = vld [vmem:[%s346 + $0xfc0] sm:$0xff]
        %v1845 = vld [vmem:[%s346 + $0xfc8] sm:$0xff]
        %v1846 = vld [vmem:[%s346 + $0xfd0] sm:$0xff]
        %v1847 = vld [vmem:[%s346 + $0xfd8] sm:$0xff]
        %v1848 = vld [vmem:[%s346 + $0xfe0] sm:$0xff]
        %v1849 = vld [vmem:[%s346 + $0xfe8] sm:$0xff]
        %v1850 = vld [vmem:[%s346 + $0xff0] sm:$0xff]
        %v1851 = vld [vmem:[%s346 + $0xff8] sm:$0xff]
        %v1852 = vld [vmem:[%s346 + $0x1000] sm:$0xff]
        %v1853 = vld [vmem:[%s346 + $0x1008] sm:$0xff]
        %v1854 = vld [vmem:[%s346 + $0x1010] sm:$0xff]
        %v1855 = vld [vmem:[%s346 + $0x1018] sm:$0xff]
        %v1856 = vld [vmem:[%s346 + $0x1020] sm:$0xff]
        %v1857 = vld [vmem:[%s346 + $0x1028] sm:$0xff]
        %v1858 = vld [vmem:[%s346 + $0x1030] sm:$0xff]
        %v1859 = vld [vmem:[%s346 + $0x1038] sm:$0xff]
        %v1860 = vld [vmem:[%s346 + $0x1040] sm:$0xff]
        %v1861 = vld [vmem:[%s346 + $0x1048] sm:$0xff]
        %v1862 = vld [vmem:[%s346 + $0x1050] sm:$0xff]
        %v1863 = vld [vmem:[%s346 + $0x1058] sm:$0xff]
        %v1864 = vld [vmem:[%s346 + $0x1060] sm:$0xff]
        %v1865 = vld [vmem:[%s346 + $0x1068] sm:$0xff]
        %v1866 = vld [vmem:[%s346 + $0x1070] sm:$0xff]
        %v1867 = vld [vmem:[%s346 + $0x1078] sm:$0xff]
        %v1868 = vld [vmem:[%s346 + $0x1080] sm:$0xff]
        %v1869 = vld [vmem:[%s346 + $0x1088] sm:$0xff]
        %v1870 = vld [vmem:[%s346 + $0x1090] sm:$0xff]
        %v1871 = vld [vmem:[%s346 + $0x1098] sm:$0xff]
        %v1872 = vld [vmem:[%s346 + $0x10a0] sm:$0xff]
        %v1873 = vld [vmem:[%s346 + $0x10a8] sm:$0xff]
        %v1874 = vld [vmem:[%s346 + $0x10b0] sm:$0xff]
        %v1875 = vld [vmem:[%s346 + $0x10b8] sm:$0xff]
        %v1876 = vld [vmem:[%s346 + $0x10c0] sm:$0xff]
        %v1877 = vld [vmem:[%s346 + $0x10c8] sm:$0xff]
        %v1878 = vld [vmem:[%s346 + $0x10d0] sm:$0xff]
        %v1879 = vld [vmem:[%s346 + $0x10d8] sm:$0xff]
        %v1880 = vld [vmem:[%s346 + $0x10e0] sm:$0xff]
        %v1881 = vld [vmem:[%s346 + $0x10e8] sm:$0xff]
        %v1882 = vld [vmem:[%s346 + $0x10f0] sm:$0xff]
        %v1883 = vld [vmem:[%s346 + $0x10f8] sm:$0xff]
        %v1884 = vld [vmem:[%s346 + $0x1100] sm:$0xff]
        %v1885 = vld [vmem:[%s346 + $0x1108] sm:$0xff]
        %v1886 = vld [vmem:[%s346 + $0x1110] sm:$0xff]
        %v1887 = vld [vmem:[%s346 + $0x1118] sm:$0xff]
        %v1888 = vld [vmem:[%s346 + $0x1120] sm:$0xff]
        %v1889 = vld [vmem:[%s346 + $0x1128] sm:$0xff]
        %v1890 = vld [vmem:[%s346 + $0x1130] sm:$0xff]
        %v1891 = vld [vmem:[%s346 + $0x1138] sm:$0xff]
        %v1892 = vld [vmem:[%s346 + $0x1140] sm:$0xff]
        %v1893 = vld [vmem:[%s346 + $0x1148] sm:$0xff]
        %v1894 = vld [vmem:[%s346 + $0x1150] sm:$0xff]
        %v1895 = vld [vmem:[%s346 + $0x1158] sm:$0xff]
        %v1896 = vld [vmem:[%s346 + $0x1160] sm:$0xff]
        %v1897 = vld [vmem:[%s346 + $0x1168] sm:$0xff]
        %v1898 = vld [vmem:[%s346 + $0x1170] sm:$0xff]
        %v1899 = vld [vmem:[%s346 + $0x1178] sm:$0xff]
        %v1900 = vld [vmem:[%s346 + $0x1180] sm:$0xff]
        %v1901 = vld [vmem:[%s346 + $0x1188] sm:$0xff]
        %v1902 = vld [vmem:[%s346 + $0x1190] sm:$0xff]
        %v1903 = vld [vmem:[%s346 + $0x1198] sm:$0xff]
        %v1904 = vld [vmem:[%s346 + $0x11a0] sm:$0xff]
        %v1905 = vld [vmem:[%s346 + $0x11a8] sm:$0xff]
        %v1906 = vld [vmem:[%s346 + $0x11b0] sm:$0xff]
        %v1907 = vld [vmem:[%s346 + $0x11b8] sm:$0xff]
        %v1908 = vld [vmem:[%s346 + $0x11c0] sm:$0xff]
        %v1909 = vld [vmem:[%s346 + $0x11c8] sm:$0xff]
        %v1910 = vld [vmem:[%s346 + $0x11d0] sm:$0xff]
        %v1911 = vld [vmem:[%s346 + $0x11d8] sm:$0xff]
        %v1912 = vld [vmem:[%s346 + $0x11e0] sm:$0xff]
        %v1913 = vld [vmem:[%s346 + $0x11e8] sm:$0xff]
        %v1914 = vld [vmem:[%s346 + $0x11f0] sm:$0xff]
        %v1915 = vld [vmem:[%s346 + $0x11f8] sm:$0xff]
        %v1916 = vld [vmem:[%s346 + $0x1200] sm:$0xff]
        %v1917 = vld [vmem:[%s346 + $0x1208] sm:$0xff]
        %v1918 = vld [vmem:[%s346 + $0x1210] sm:$0xff]
        %v1919 = vld [vmem:[%s346 + $0x1218] sm:$0xff]
        %v1920 = vld [vmem:[%s346 + $0x1220] sm:$0xff]
        %v1921 = vld [vmem:[%s346 + $0x1228] sm:$0xff]
        %v1922 = vld [vmem:[%s346 + $0x1230] sm:$0xff]
        %v1923 = vld [vmem:[%s346 + $0x1238] sm:$0xff]
        %v1924 = vld [vmem:[%s346 + $0x1240] sm:$0xff]
        %v1925 = vld [vmem:[%s346 + $0x1248] sm:$0xff]
        %v1926 = vld [vmem:[%s346 + $0x1250] sm:$0xff]
        %v1927 = vld [vmem:[%s346 + $0x1258] sm:$0xff]
        %v1928 = vld [vmem:[%s346 + $0x1260] sm:$0xff]
        %v1929 = vld [vmem:[%s346 + $0x1268] sm:$0xff]
        %v1930 = vld [vmem:[%s346 + $0x1270] sm:$0xff]
        %v1931 = vld [vmem:[%s346 + $0x1278] sm:$0xff]
        %v1932 = vld [vmem:[%s346 + $0x1280] sm:$0xff]
        %v1933 = vld [vmem:[%s346 + $0x1288] sm:$0xff]
        %v1934 = vld [vmem:[%s346 + $0x1290] sm:$0xff]
        %v1935 = vld [vmem:[%s346 + $0x1298] sm:$0xff]
        %v1936 = vld [vmem:[%s346 + $0x12a0] sm:$0xff]
        %v1937 = vld [vmem:[%s346 + $0x12a8] sm:$0xff]
        %v1938 = vld [vmem:[%s346 + $0x12b0] sm:$0xff]
        %v1939 = vld [vmem:[%s346 + $0x12b8] sm:$0xff]
        %v1940 = vld [vmem:[%s346 + $0x12c0] sm:$0xff]
        %v1941 = vld [vmem:[%s346 + $0x12c8] sm:$0xff]
        %v1942 = vld [vmem:[%s346 + $0x12d0] sm:$0xff]
        %v1943 = vld [vmem:[%s346 + $0x12d8] sm:$0xff]
        %v1944 = vld [vmem:[%s346 + $0x12e0] sm:$0xff]
        %v1945 = vld [vmem:[%s346 + $0x12e8] sm:$0xff]
        %v1946 = vld [vmem:[%s346 + $0x12f0] sm:$0xff]
        %v1947 = vld [vmem:[%s346 + $0x12f8] sm:$0xff]
        %v1948 = vld [vmem:[%s346 + $0x1300] sm:$0xff]
        %v1949 = vld [vmem:[%s346 + $0x1308] sm:$0xff]
        %v1950 = vld [vmem:[%s346 + $0x1310] sm:$0xff]
        %v1951 = vld [vmem:[%s346 + $0x1318] sm:$0xff]
        %v1952 = vld [vmem:[%s346 + $0x1320] sm:$0xff]
        %v1953 = vld [vmem:[%s346 + $0x1328] sm:$0xff]
        %v1954 = vld [vmem:[%s346 + $0x1330] sm:$0xff]
        %v1955 = vld [vmem:[%s346 + $0x1338] sm:$0xff]
        %v1956 = vld [vmem:[%s346 + $0x1340] sm:$0xff]
        %v1957 = vld [vmem:[%s346 + $0x1348] sm:$0xff]
        %v1958 = vld [vmem:[%s346 + $0x1350] sm:$0xff]
        %v1959 = vld [vmem:[%s346 + $0x1358] sm:$0xff]
        %v1960 = vld [vmem:[%s346 + $0x1360] sm:$0xff]
        %v1961 = vld [vmem:[%s346 + $0x1368] sm:$0xff]
        %v1962 = vld [vmem:[%s346 + $0x1370] sm:$0xff]
        %v1963 = vld [vmem:[%s346 + $0x1378] sm:$0xff]
        %v1964 = vld [vmem:[%s346 + $0x1380] sm:$0xff]
        %v1965 = vld [vmem:[%s346 + $0x1388] sm:$0xff]
        %v1966 = vld [vmem:[%s346 + $0x1390] sm:$0xff]
        %v1967 = vld [vmem:[%s346 + $0x1398] sm:$0xff]
        %v1968 = vld [vmem:[%s346 + $0x13a0] sm:$0xff]
        %v1969 = vld [vmem:[%s346 + $0x13a8] sm:$0xff]
        %v1970 = vld [vmem:[%s346 + $0x13b0] sm:$0xff]
        %v1971 = vld [vmem:[%s346 + $0x13b8] sm:$0xff]
        %v1972 = vld [vmem:[%s346 + $0x13c0] sm:$0xff]
        %v1973 = vld [vmem:[%s346 + $0x13c8] sm:$0xff]
        %v1974 = vld [vmem:[%s346 + $0x13d0] sm:$0xff]
        %v1975 = vld [vmem:[%s346 + $0x13d8] sm:$0xff]
        %v1976 = vld [vmem:[%s346 + $0x13e0] sm:$0xff]
        %v1977 = vld [vmem:[%s346 + $0x13e8] sm:$0xff]
        %v1978 = vld [vmem:[%s346 + $0x13f0] sm:$0xff]
        %v1979 = vld [vmem:[%s346 + $0x13f8] sm:$0xff]
        %v1980 = vld [vmem:[%s346 + $0x1400] sm:$0xff]
        %v1981 = vld [vmem:[%s346 + $0x1408] sm:$0xff]
        %v1982 = vld [vmem:[%s346 + $0x1410] sm:$0xff]
        %v1983 = vld [vmem:[%s346 + $0x1418] sm:$0xff]
        %v1984 = vld [vmem:[%s346 + $0x1420] sm:$0xff]
        %v1985 = vld [vmem:[%s346 + $0x1428] sm:$0xff]
        %v1986 = vld [vmem:[%s346 + $0x1430] sm:$0xff]
        %v1987 = vld [vmem:[%s346 + $0x1438] sm:$0xff]
        %v1988 = vld [vmem:[%s346 + $0x1440] sm:$0xff]
        %v1989 = vld [vmem:[%s346 + $0x1448] sm:$0xff]
        %v1990 = vld [vmem:[%s346 + $0x1450] sm:$0xff]
        %v1991 = vld [vmem:[%s346 + $0x1458] sm:$0xff]
        %v1992 = vld [vmem:[%s346 + $0x1460] sm:$0xff]
        %v1993 = vld [vmem:[%s346 + $0x1468] sm:$0xff]
        %v1994 = vld [vmem:[%s346 + $0x1470] sm:$0xff]
        %v1995 = vld [vmem:[%s346 + $0x1478] sm:$0xff]
        %v1996 = vld [vmem:[%s346 + $0x1480] sm:$0xff]
        %v1997 = vld [vmem:[%s346 + $0x1488] sm:$0xff]
        %v1998 = vld [vmem:[%s346 + $0x1490] sm:$0xff]
        %v1999 = vld [vmem:[%s346 + $0x1498] sm:$0xff]
        %v2000 = vld [vmem:[%s346 + $0x14a0] sm:$0xff]
        %v2001 = vld [vmem:[%s346 + $0x14a8] sm:$0xff]
        %v2002 = vld [vmem:[%s346 + $0x14b0] sm:$0xff]
        %v2003 = vld [vmem:[%s346 + $0x14b8] sm:$0xff]
        %v2004 = vld [vmem:[%s346 + $0x14c0] sm:$0xff]
        %v2005 = vld [vmem:[%s346 + $0x14c8] sm:$0xff]
        %v2006 = vld [vmem:[%s346 + $0x14d0] sm:$0xff]
        %v2007 = vld [vmem:[%s346 + $0x14d8] sm:$0xff]
        %v2008 = vld [vmem:[%s346 + $0x14e0] sm:$0xff]
        %v2009 = vld [vmem:[%s346 + $0x14e8] sm:$0xff]
        %v2010 = vld [vmem:[%s346 + $0x14f0] sm:$0xff]
        %v2011 = vld [vmem:[%s346 + $0x14f8] sm:$0xff]
        %v2012 = vld [vmem:[%s346 + $0x1500] sm:$0xff]
        %v2013 = vld [vmem:[%s346 + $0x1508] sm:$0xff]
        %v2014 = vld [vmem:[%s346 + $0x1510] sm:$0xff]
        %v2015 = vld [vmem:[%s346 + $0x1518] sm:$0xff]
        %v2016 = vld [vmem:[%s346 + $0x1520] sm:$0xff]
        %v2017 = vld [vmem:[%s346 + $0x1528] sm:$0xff]
        %v2018 = vld [vmem:[%s346 + $0x1530] sm:$0xff]
        %v2019 = vld [vmem:[%s346 + $0x1538] sm:$0xff]
        %v2020 = vld [vmem:[%s346 + $0x1540] sm:$0xff]
        %v2021 = vld [vmem:[%s346 + $0x1548] sm:$0xff]
        %v2022 = vld [vmem:[%s346 + $0x1550] sm:$0xff]
        %v2023 = vld [vmem:[%s346 + $0x1558] sm:$0xff]
        %v2024 = vld [vmem:[%s346 + $0x1560] sm:$0xff]
        %v2025 = vld [vmem:[%s346 + $0x1568] sm:$0xff]
        %v2026 = vld [vmem:[%s346 + $0x1570] sm:$0xff]
        %v2027 = vld [vmem:[%s346 + $0x1578] sm:$0xff]
        %v2028 = vld [vmem:[%s346 + $0x1580] sm:$0xff]
        %v2029 = vld [vmem:[%s346 + $0x1588] sm:$0xff]
        %v2030 = vld [vmem:[%s346 + $0x1590] sm:$0xff]
        %v2031 = vld [vmem:[%s346 + $0x1598] sm:$0xff]
        %v2032 = vld [vmem:[%s346 + $0x15a0] sm:$0xff]
        %v2033 = vld [vmem:[%s346 + $0x15a8] sm:$0xff]
        %v2034 = vld [vmem:[%s346 + $0x15b0] sm:$0xff]
        %v2035 = vld [vmem:[%s346 + $0x15b8] sm:$0xff]
        %v2036 = vld [vmem:[%s346 + $0x15c0] sm:$0xff]
        %v2037 = vld [vmem:[%s346 + $0x15c8] sm:$0xff]
        %v2038 = vld [vmem:[%s346 + $0x15d0] sm:$0xff]
        %v2039 = vld [vmem:[%s346 + $0x15d8] sm:$0xff]
        %v2040 = vld [vmem:[%s346 + $0x15e0] sm:$0xff]
        %v2041 = vld [vmem:[%s346 + $0x15e8] sm:$0xff]
        %v2042 = vld [vmem:[%s346 + $0x15f0] sm:$0xff]
        %v2043 = vld [vmem:[%s346 + $0x15f8] sm:$0xff]
        %v2044 = vld [vmem:[%s346 + $0x1600] sm:$0xff]
        %v2045 = vld [vmem:[%s346 + $0x1608] sm:$0xff]
        %v2046 = vld [vmem:[%s346 + $0x1610] sm:$0xff]
        %v2047 = vld [vmem:[%s346 + $0x1618] sm:$0xff]
        %v2048 = vld [vmem:[%s346 + $0x1620] sm:$0xff]
        %v2049 = vld [vmem:[%s346 + $0x1628] sm:$0xff]
        %v2050 = vld [vmem:[%s346 + $0x1630] sm:$0xff]
        %v2051 = vld [vmem:[%s346 + $0x1638] sm:$0xff]
        %v2052 = vld [vmem:[%s346 + $0x1640] sm:$0xff]
        %v2053 = vld [vmem:[%s346 + $0x1648] sm:$0xff]
        %v2054 = vld [vmem:[%s346 + $0x1650] sm:$0xff]
        %v2055 = vld [vmem:[%s346 + $0x1658] sm:$0xff]
        %v2056 = vld [vmem:[%s346 + $0x1660] sm:$0xff]
        %v2057 = vld [vmem:[%s346 + $0x1668] sm:$0xff]
        %v2058 = vld [vmem:[%s346 + $0x1670] sm:$0xff]
        %v2059 = vld [vmem:[%s346 + $0x1678] sm:$0xff]
        %v2060 = vld [vmem:[%s346 + $0x1680] sm:$0xff]
        %v2061 = vld [vmem:[%s346 + $0x1688] sm:$0xff]
        %v2062 = vld [vmem:[%s346 + $0x1690] sm:$0xff]
        %v2063 = vld [vmem:[%s346 + $0x1698] sm:$0xff]
        %v2064 = vld [vmem:[%s346 + $0x16a0] sm:$0xff]
        %v2065 = vld [vmem:[%s346 + $0x16a8] sm:$0xff]
        %v2066 = vld [vmem:[%s346 + $0x16b0] sm:$0xff]
        %v2067 = vld [vmem:[%s346 + $0x16b8] sm:$0xff]
        %v2068 = vld [vmem:[%s346 + $0x16c0] sm:$0xff]
        %v2069 = vld [vmem:[%s346 + $0x16c8] sm:$0xff]
        %v2070 = vld [vmem:[%s346 + $0x16d0] sm:$0xff]
        %v2071 = vld [vmem:[%s346 + $0x16d8] sm:$0xff]
        %v2072 = vld [vmem:[%s346 + $0x16e0] sm:$0xff]
        %v2073 = vld [vmem:[%s346 + $0x16e8] sm:$0xff]
        %v2074 = vld [vmem:[%s346 + $0x16f0] sm:$0xff]
        %v2075 = vld [vmem:[%s346 + $0x16f8] sm:$0xff]
        %v2076 = vld [vmem:[%s346 + $0x1700] sm:$0xff]
        %v2077 = vld [vmem:[%s346 + $0x1708] sm:$0xff]
        %v2078 = vld [vmem:[%s346 + $0x1710] sm:$0xff]
        %v2079 = vld [vmem:[%s346 + $0x1718] sm:$0xff]
        %v2080 = vld [vmem:[%s346 + $0x1720] sm:$0xff]
        %v2081 = vld [vmem:[%s346 + $0x1728] sm:$0xff]
        %v2082 = vld [vmem:[%s346 + $0x1730] sm:$0xff]
        %v2083 = vld [vmem:[%s346 + $0x1738] sm:$0xff]
        %v2084 = vld [vmem:[%s346 + $0x1740] sm:$0xff]
        %v2085 = vld [vmem:[%s346 + $0x1748] sm:$0xff]
        %v2086 = vld [vmem:[%s346 + $0x1750] sm:$0xff]
        %v2087 = vld [vmem:[%s346 + $0x1758] sm:$0xff]
        %v2088 = vld [vmem:[%s346 + $0x1760] sm:$0xff]
        %v2089 = vld [vmem:[%s346 + $0x1768] sm:$0xff]
        %v2090 = vld [vmem:[%s346 + $0x1770] sm:$0xff]
        %v2091 = vld [vmem:[%s346 + $0x1778] sm:$0xff]
        %v2092 = vld [vmem:[%s346 + $0x1780] sm:$0xff]
        %v2093 = vld [vmem:[%s346 + $0x1788] sm:$0xff]
        %v2094 = vld [vmem:[%s346 + $0x1790] sm:$0xff]
        %v2095 = vld [vmem:[%s346 + $0x1798] sm:$0xff]
        %v2096 = vld [vmem:[%s346 + $0x17a0] sm:$0xff]
        %v2097 = vld [vmem:[%s346 + $0x17a8] sm:$0xff]
        %v2098 = vld [vmem:[%s346 + $0x17b0] sm:$0xff]
        %v2099 = vld [vmem:[%s346 + $0x17b8] sm:$0xff]
        %v2100 = vld [vmem:[%s346 + $0x17c0] sm:$0xff]
        %v2101 = vld [vmem:[%s346 + $0x17c8] sm:$0xff]
        %v2102 = vld [vmem:[%s346 + $0x17d0] sm:$0xff]
        %v2103 = vld [vmem:[%s346 + $0x17d8] sm:$0xff]
        %v2104 = vld [vmem:[%s346 + $0x17e0] sm:$0xff]
        %v2105 = vld [vmem:[%s346 + $0x17e8] sm:$0xff]
        %v2106 = vld [vmem:[%s346 + $0x17f0] sm:$0xff]
        %v2107 = vld [vmem:[%s346 + $0x17f8] sm:$0xff]
        %v2108 = vld [vmem:[%s346 + $0x1800] sm:$0xff]
        %v2109 = vld [vmem:[%s346 + $0x1808] sm:$0xff]
        %v2110 = vld [vmem:[%s346 + $0x1810] sm:$0xff]
        %v2111 = vld [vmem:[%s346 + $0x1818] sm:$0xff]
        %v2112 = vld [vmem:[%s346 + $0x1820] sm:$0xff]
        %v2113 = vld [vmem:[%s346 + $0x1828] sm:$0xff]
        %v2114 = vld [vmem:[%s346 + $0x1830] sm:$0xff]
        %v2115 = vld [vmem:[%s346 + $0x1838] sm:$0xff]
        %v2116 = vld [vmem:[%s346 + $0x1840] sm:$0xff]
        %v2117 = vld [vmem:[%s346 + $0x1848] sm:$0xff]
        %v2118 = vld [vmem:[%s346 + $0x1850] sm:$0xff]
        %v2119 = vld [vmem:[%s346 + $0x1858] sm:$0xff]
        %v2120 = vld [vmem:[%s346 + $0x1860] sm:$0xff]
        %v2121 = vld [vmem:[%s346 + $0x1868] sm:$0xff]
        %v2122 = vld [vmem:[%s346 + $0x1870] sm:$0xff]
        %v2123 = vld [vmem:[%s346 + $0x1878] sm:$0xff]
        %v2124 = vld [vmem:[%s346 + $0x1880] sm:$0xff]
        %v2125 = vld [vmem:[%s346 + $0x1888] sm:$0xff]
        %v2126 = vld [vmem:[%s346 + $0x1890] sm:$0xff]
        %v2127 = vld [vmem:[%s346 + $0x1898] sm:$0xff]
        %v2128 = vld [vmem:[%s346 + $0x18a0] sm:$0xff]
        %v2129 = vld [vmem:[%s346 + $0x18a8] sm:$0xff]
        %v2130 = vld [vmem:[%s346 + $0x18b0] sm:$0xff]
        %v2131 = vld [vmem:[%s346 + $0x18b8] sm:$0xff]
        %v2132 = vld [vmem:[%s346 + $0x18c0] sm:$0xff]
        %v2133 = vld [vmem:[%s346 + $0x18c8] sm:$0xff]
        %v2134 = vld [vmem:[%s346 + $0x18d0] sm:$0xff]
        %v2135 = vld [vmem:[%s346 + $0x18d8] sm:$0xff]
        %v2136 = vld [vmem:[%s346 + $0x18e0] sm:$0xff]
        %v2137 = vld [vmem:[%s346 + $0x18e8] sm:$0xff]
        %v2138 = vld [vmem:[%s346 + $0x18f0] sm:$0xff]
        %v2139 = vld [vmem:[%s346 + $0x18f8] sm:$0xff]
        %v2140 = vld [vmem:[%s346 + $0x1900] sm:$0xff]
        %v2141 = vld [vmem:[%s346 + $0x1908] sm:$0xff]
        %v2142 = vld [vmem:[%s346 + $0x1910] sm:$0xff]
        %v2143 = vld [vmem:[%s346 + $0x1918] sm:$0xff]
        %v2144 = vld [vmem:[%s346 + $0x1920] sm:$0xff]
        %v2145 = vld [vmem:[%s346 + $0x1928] sm:$0xff]
        %v2146 = vld [vmem:[%s346 + $0x1930] sm:$0xff]
        %v2147 = vld [vmem:[%s346 + $0x1938] sm:$0xff]
        %v2148 = vld [vmem:[%s346 + $0x1940] sm:$0xff]
        %v2149 = vld [vmem:[%s346 + $0x1948] sm:$0xff]
        %v2150 = vld [vmem:[%s346 + $0x1950] sm:$0xff]
        %v2151 = vld [vmem:[%s346 + $0x1958] sm:$0xff]
        %v2152 = vld [vmem:[%s346 + $0x1960] sm:$0xff]
        %v2153 = vld [vmem:[%s346 + $0x1968] sm:$0xff]
        %v2154 = vld [vmem:[%s346 + $0x1970] sm:$0xff]
        %v2155 = vld [vmem:[%s346 + $0x1978] sm:$0xff]
        %v2156 = vld [vmem:[%s346 + $0x1980] sm:$0xff]
        %v2157 = vld [vmem:[%s346 + $0x1988] sm:$0xff]
        %v2158 = vld [vmem:[%s346 + $0x1990] sm:$0xff]
        %v2159 = vld [vmem:[%s346 + $0x1998] sm:$0xff]
        %v2160 = vld [vmem:[%s346 + $0x19a0] sm:$0xff]
        %v2161 = vld [vmem:[%s346 + $0x19a8] sm:$0xff]
        %v2162 = vld [vmem:[%s346 + $0x19b0] sm:$0xff]
        %v2163 = vld [vmem:[%s346 + $0x19b8] sm:$0xff]
        %v2164 = vld [vmem:[%s346 + $0x19c0] sm:$0xff]
        %v2165 = vld [vmem:[%s346 + $0x19c8] sm:$0xff]
        %v2166 = vld [vmem:[%s346 + $0x19d0] sm:$0xff]
        %v2167 = vld [vmem:[%s346 + $0x19d8] sm:$0xff]
        %v2168 = vld [vmem:[%s346 + $0x19e0] sm:$0xff]
        %v2169 = vld [vmem:[%s346 + $0x19e8] sm:$0xff]
        %v2170 = vld [vmem:[%s346 + $0x19f0] sm:$0xff]
        %v2171 = vld [vmem:[%s346 + $0x19f8] sm:$0xff]
        %v2172 = vld [vmem:[%s346 + $0x1a00] sm:$0xff]
        %v2173 = vld [vmem:[%s346 + $0x1a08] sm:$0xff]
        %v2174 = vld [vmem:[%s346 + $0x1a10] sm:$0xff]
        %v2175 = vld [vmem:[%s346 + $0x1a18] sm:$0xff]
        %v2176 = vld [vmem:[%s346 + $0x1a20] sm:$0xff]
        %v2177 = vld [vmem:[%s346 + $0x1a28] sm:$0xff]
        %v2178 = vld [vmem:[%s346 + $0x1a30] sm:$0xff]
        %v2179 = vld [vmem:[%s346 + $0x1a38] sm:$0xff]
        %v2180 = vld [vmem:[%s346 + $0x1a40] sm:$0xff]
        %v2181 = vld [vmem:[%s346 + $0x1a48] sm:$0xff]
        %v2182 = vld [vmem:[%s346 + $0x1a50] sm:$0xff]
        %v2183 = vld [vmem:[%s346 + $0x1a58] sm:$0xff]
        %v2184 = vld [vmem:[%s346 + $0x1a60] sm:$0xff]
        %v2185 = vld [vmem:[%s346 + $0x1a68] sm:$0xff]
        %v2186 = vld [vmem:[%s346 + $0x1a70] sm:$0xff]
        %v2187 = vld [vmem:[%s346 + $0x1a78] sm:$0xff]
        %v2188 = vld [vmem:[%s346 + $0x1a80] sm:$0xff]
        %v2189 = vld [vmem:[%s346 + $0x1a88] sm:$0xff]
        %v2190 = vld [vmem:[%s346 + $0x1a90] sm:$0xff]
        %v2191 = vld [vmem:[%s346 + $0x1a98] sm:$0xff]
        %v2192 = vld [vmem:[%s346 + $0x1aa0] sm:$0xff]
        %v2193 = vld [vmem:[%s346 + $0x1aa8] sm:$0xff]
        %v2194 = vld [vmem:[%s346 + $0x1ab0] sm:$0xff]
        %v2195 = vld [vmem:[%s346 + $0x1ab8] sm:$0xff]
        %v2196 = vld [vmem:[%s346 + $0x1ac0] sm:$0xff]
        %v2197 = vld [vmem:[%s346 + $0x1ac8] sm:$0xff]
        %v2198 = vld [vmem:[%s346 + $0x1ad0] sm:$0xff]
        %v2199 = vld [vmem:[%s346 + $0x1ad8] sm:$0xff]
        %v2200 = vld [vmem:[%s346 + $0x1ae0] sm:$0xff]
        %v2201 = vld [vmem:[%s346 + $0x1ae8] sm:$0xff]
        %v2202 = vld [vmem:[%s346 + $0x1af0] sm:$0xff]
        %v2203 = vld [vmem:[%s346 + $0x1af8] sm:$0xff]
        %v2204 = vld [vmem:[%s346 + $0x1b00] sm:$0xff]
        %v2205 = vld [vmem:[%s346 + $0x1b08] sm:$0xff]
        %v2206 = vld [vmem:[%s346 + $0x1b10] sm:$0xff]
        %v2207 = vld [vmem:[%s346 + $0x1b18] sm:$0xff]
        %v2208 = vld [vmem:[%s346 + $0x1b20] sm:$0xff]
        %v2209 = vld [vmem:[%s346 + $0x1b28] sm:$0xff]
        %v2210 = vld [vmem:[%s346 + $0x1b30] sm:$0xff]
        %v2211 = vld [vmem:[%s346 + $0x1b38] sm:$0xff]
        %v2212 = vld [vmem:[%s346 + $0x1b40] sm:$0xff]
        %v2213 = vld [vmem:[%s346 + $0x1b48] sm:$0xff]
        %v2214 = vld [vmem:[%s346 + $0x1b50] sm:$0xff]
        %v2215 = vld [vmem:[%s346 + $0x1b58] sm:$0xff]
        %v2216 = vld [vmem:[%s346 + $0x1b60] sm:$0xff]
        %v2217 = vld [vmem:[%s346 + $0x1b68] sm:$0xff]
        %v2218 = vld [vmem:[%s346 + $0x1b70] sm:$0xff]
        %v2219 = vld [vmem:[%s346 + $0x1b78] sm:$0xff]
        %v2220 = vld [vmem:[%s346 + $0x1b80] sm:$0xff]
        %v2221 = vld [vmem:[%s346 + $0x1b88] sm:$0xff]
        %v2222 = vld [vmem:[%s346 + $0x1b90] sm:$0xff]
        %v2223 = vld [vmem:[%s346 + $0x1b98] sm:$0xff]
        %v2224 = vld [vmem:[%s346 + $0x1ba0] sm:$0xff]
        %v2225 = vld [vmem:[%s346 + $0x1ba8] sm:$0xff]
        %v2226 = vld [vmem:[%s346 + $0x1bb0] sm:$0xff]
        %v2227 = vld [vmem:[%s346 + $0x1bb8] sm:$0xff]
        %v2228 = vld [vmem:[%s346 + $0x1bc0] sm:$0xff]
        %v2229 = vld [vmem:[%s346 + $0x1bc8] sm:$0xff]
        %v2230 = vld [vmem:[%s346 + $0x1bd0] sm:$0xff]
        %v2231 = vld [vmem:[%s346 + $0x1bd8] sm:$0xff]
        %v2232 = vld [vmem:[%s346 + $0x1be0] sm:$0xff]
        %v2233 = vld [vmem:[%s346 + $0x1be8] sm:$0xff]
        %v2234 = vld [vmem:[%s346 + $0x1bf0] sm:$0xff]
        %v2235 = vld [vmem:[%s346 + $0x1bf8] sm:$0xff]
        %v2236 = vld [vmem:[%s346 + $0x1c00] sm:$0xff]
        %v2237 = vld [vmem:[%s346 + $0x1c08] sm:$0xff]
        %v2238 = vld [vmem:[%s346 + $0x1c10] sm:$0xff]
        %v2239 = vld [vmem:[%s346 + $0x1c18] sm:$0xff]
        %v2240 = vld [vmem:[%s346 + $0x1c20] sm:$0xff]
        %v2241 = vld [vmem:[%s346 + $0x1c28] sm:$0xff]
        %v2242 = vld [vmem:[%s346 + $0x1c30] sm:$0xff]
        %v2243 = vld [vmem:[%s346 + $0x1c38] sm:$0xff]
        %v2244 = vld [vmem:[%s346 + $0x1c40] sm:$0xff]
        %v2245 = vld [vmem:[%s346 + $0x1c48] sm:$0xff]
        %v2246 = vld [vmem:[%s346 + $0x1c50] sm:$0xff]
        %v2247 = vld [vmem:[%s346 + $0x1c58] sm:$0xff]
        %v2248 = vld [vmem:[%s346 + $0x1c60] sm:$0xff]
        %v2249 = vld [vmem:[%s346 + $0x1c68] sm:$0xff]
        %v2250 = vld [vmem:[%s346 + $0x1c70] sm:$0xff]
        %v2251 = vld [vmem:[%s346 + $0x1c78] sm:$0xff]
        %v2252 = vld [vmem:[%s346 + $0x1c80] sm:$0xff]
        %v2253 = vld [vmem:[%s346 + $0x1c88] sm:$0xff]
        %v2254 = vld [vmem:[%s346 + $0x1c90] sm:$0xff]
        %v2255 = vld [vmem:[%s346 + $0x1c98] sm:$0xff]
        %v2256 = vld [vmem:[%s346 + $0x1ca0] sm:$0xff]
        %v2257 = vld [vmem:[%s346 + $0x1ca8] sm:$0xff]
        %v2258 = vld [vmem:[%s346 + $0x1cb0] sm:$0xff]
        %v2259 = vld [vmem:[%s346 + $0x1cb8] sm:$0xff]
        %v2260 = vld [vmem:[%s346 + $0x1cc0] sm:$0xff]
        %v2261 = vld [vmem:[%s346 + $0x1cc8] sm:$0xff]
        %v2262 = vld [vmem:[%s346 + $0x1cd0] sm:$0xff]
        %v2263 = vld [vmem:[%s346 + $0x1cd8] sm:$0xff]
        %v2264 = vld [vmem:[%s346 + $0x1ce0] sm:$0xff]
        %v2265 = vld [vmem:[%s346 + $0x1ce8] sm:$0xff]
        %v2266 = vld [vmem:[%s346 + $0x1cf0] sm:$0xff]
        %v2267 = vld [vmem:[%s346 + $0x1cf8] sm:$0xff]
        %v2268 = vld [vmem:[%s346 + $0x1d00] sm:$0xff]
        %v2269 = vld [vmem:[%s346 + $0x1d08] sm:$0xff]
        %v2270 = vld [vmem:[%s346 + $0x1d10] sm:$0xff]
        %v2271 = vld [vmem:[%s346 + $0x1d18] sm:$0xff]
        %v2272 = vld [vmem:[%s346 + $0x1d20] sm:$0xff]
        %v2273 = vld [vmem:[%s346 + $0x1d28] sm:$0xff]
        %v2274 = vld [vmem:[%s346 + $0x1d30] sm:$0xff]
        %v2275 = vld [vmem:[%s346 + $0x1d38] sm:$0xff]
        %v2276 = vld [vmem:[%s346 + $0x1d40] sm:$0xff]
        %v2277 = vld [vmem:[%s346 + $0x1d48] sm:$0xff]
        %v2278 = vld [vmem:[%s346 + $0x1d50] sm:$0xff]
        %v2279 = vld [vmem:[%s346 + $0x1d58] sm:$0xff]
        %v2280 = vld [vmem:[%s346 + $0x1d60] sm:$0xff]
        %v2281 = vld [vmem:[%s346 + $0x1d68] sm:$0xff]
        %v2282 = vld [vmem:[%s346 + $0x1d70] sm:$0xff]
        %v2283 = vld [vmem:[%s346 + $0x1d78] sm:$0xff]
        %v2284 = vld [vmem:[%s346 + $0x1d80] sm:$0xff]
        %v2285 = vld [vmem:[%s346 + $0x1d88] sm:$0xff]
        %v2286 = vld [vmem:[%s346 + $0x1d90] sm:$0xff]
        %v2287 = vld [vmem:[%s346 + $0x1d98] sm:$0xff]
        %v2288 = vld [vmem:[%s346 + $0x1da0] sm:$0xff]
        %v2289 = vld [vmem:[%s346 + $0x1da8] sm:$0xff]
        %v2290 = vld [vmem:[%s346 + $0x1db0] sm:$0xff]
        %v2291 = vld [vmem:[%s346 + $0x1db8] sm:$0xff]
        %v2292 = vld [vmem:[%s346 + $0x1dc0] sm:$0xff]
        %v2293 = vld [vmem:[%s346 + $0x1dc8] sm:$0xff]
        %v2294 = vld [vmem:[%s346 + $0x1dd0] sm:$0xff]
        %v2295 = vld [vmem:[%s346 + $0x1dd8] sm:$0xff]
        %v2296 = vld [vmem:[%s346 + $0x1de0] sm:$0xff]
        %v2297 = vld [vmem:[%s346 + $0x1de8] sm:$0xff]
        %v2298 = vld [vmem:[%s346 + $0x1df0] sm:$0xff]
        %v2299 = vld [vmem:[%s346 + $0x1df8] sm:$0xff]
        %v2300 = vld [vmem:[%s346 + $0x1e00] sm:$0xff]
        %v2301 = vld [vmem:[%s346 + $0x1e08] sm:$0xff]
        %v2302 = vld [vmem:[%s346 + $0x1e10] sm:$0xff]
        %v2303 = vld [vmem:[%s346 + $0x1e18] sm:$0xff]
        %v2304 = vld [vmem:[%s346 + $0x1e20] sm:$0xff]
        %v2305 = vld [vmem:[%s346 + $0x1e28] sm:$0xff]
        %v2306 = vld [vmem:[%s346 + $0x1e30] sm:$0xff]
        %v2307 = vld [vmem:[%s346 + $0x1e38] sm:$0xff]
        %v2308 = vld [vmem:[%s346 + $0x1e40] sm:$0xff]
        %v2309 = vld [vmem:[%s346 + $0x1e48] sm:$0xff]
        %v2310 = vld [vmem:[%s346 + $0x1e50] sm:$0xff]
        %v2311 = vld [vmem:[%s346 + $0x1e58] sm:$0xff]
        %v2312 = vld [vmem:[%s346 + $0x1e60] sm:$0xff]
        %v2313 = vld [vmem:[%s346 + $0x1e68] sm:$0xff]
        %v2314 = vld [vmem:[%s346 + $0x1e70] sm:$0xff]
        %v2315 = vld [vmem:[%s346 + $0x1e78] sm:$0xff]
        %v2316 = vld [vmem:[%s346 + $0x1e80] sm:$0xff]
        %v2317 = vld [vmem:[%s346 + $0x1e88] sm:$0xff]
        %v2318 = vld [vmem:[%s346 + $0x1e90] sm:$0xff]
        %v2319 = vld [vmem:[%s346 + $0x1e98] sm:$0xff]
        %v2320 = vld [vmem:[%s346 + $0x1ea0] sm:$0xff]
        %v2321 = vld [vmem:[%s346 + $0x1ea8] sm:$0xff]
        %v2322 = vld [vmem:[%s346 + $0x1eb0] sm:$0xff]
        %v2323 = vld [vmem:[%s346 + $0x1eb8] sm:$0xff]
        %v2324 = vld [vmem:[%s346 + $0x1ec0] sm:$0xff]
        %v2325 = vld [vmem:[%s346 + $0x1ec8] sm:$0xff]
        %v2326 = vld [vmem:[%s346 + $0x1ed0] sm:$0xff]
        %v2327 = vld [vmem:[%s346 + $0x1ed8] sm:$0xff]
        %v2328 = vld [vmem:[%s346 + $0x1ee0] sm:$0xff]
        %v2329 = vld [vmem:[%s346 + $0x1ee8] sm:$0xff]
        %v2330 = vld [vmem:[%s346 + $0x1ef0] sm:$0xff]
        %v2331 = vld [vmem:[%s346 + $0x1ef8] sm:$0xff]
        %v2332 = vld [vmem:[%s346 + $0x1f00] sm:$0xff]
        %v2333 = vld [vmem:[%s346 + $0x1f08] sm:$0xff]
        %v2334 = vld [vmem:[%s346 + $0x1f10] sm:$0xff]
        %v2335 = vld [vmem:[%s346 + $0x1f18] sm:$0xff]
        %v2336 = vld [vmem:[%s346 + $0x1f20] sm:$0xff]
        %v2337 = vld [vmem:[%s346 + $0x1f28] sm:$0xff]
        %v2338 = vld [vmem:[%s346 + $0x1f30] sm:$0xff]
        %v2339 = vld [vmem:[%s346 + $0x1f38] sm:$0xff]
        %v2340 = vld [vmem:[%s346 + $0x1f40] sm:$0xff]
        %v2341 = vld [vmem:[%s346 + $0x1f48] sm:$0xff]
        %v2342 = vld [vmem:[%s346 + $0x1f50] sm:$0xff]
        %v2343 = vld [vmem:[%s346 + $0x1f58] sm:$0xff]
        %v2344 = vld [vmem:[%s346 + $0x1f60] sm:$0xff]
        %v2345 = vld [vmem:[%s346 + $0x1f68] sm:$0xff]
        %v2346 = vld [vmem:[%s346 + $0x1f70] sm:$0xff]
        %v2347 = vld [vmem:[%s346 + $0x1f78] sm:$0xff]
        %v2348 = vld [vmem:[%s346 + $0x1f80] sm:$0xff]
        %v2349 = vld [vmem:[%s346 + $0x1f88] sm:$0xff]
        %v2350 = vld [vmem:[%s346 + $0x1f90] sm:$0xff]
        %v2351 = vld [vmem:[%s346 + $0x1f98] sm:$0xff]
        %v2352 = vld [vmem:[%s346 + $0x1fa0] sm:$0xff]
        %v2353 = vld [vmem:[%s346 + $0x1fa8] sm:$0xff]
        %v2354 = vld [vmem:[%s346 + $0x1fb0] sm:$0xff]
        %v2355 = vld [vmem:[%s346 + $0x1fb8] sm:$0xff]
        %v2356 = vld [vmem:[%s346 + $0x1fc0] sm:$0xff]
        %v2357 = vld [vmem:[%s346 + $0x1fc8] sm:$0xff]
        %v2358 = vld [vmem:[%s346 + $0x1fd0] sm:$0xff]
        %v2359 = vld [vmem:[%s346 + $0x1fd8] sm:$0xff]
        %v2360 = vld [vmem:[%s346 + $0x1fe0] sm:$0xff]
        %v2361 = vld [vmem:[%s346 + $0x1fe8] sm:$0xff]
        %v2362 = vld [vmem:[%s346 + $0x1ff0] sm:$0xff]
        %v2363 = vld [vmem:[%s346 + $0x1ff8] sm:$0xff]
        %v2364 = vld [vmem:[%s346 + $0x2000] sm:$0xff]
        %v2365 = vld [vmem:[%s346 + $0x2008] sm:$0xff]
        %v2366 = vld [vmem:[%s346 + $0x2010] sm:$0xff]
        %v2367 = vld [vmem:[%s346 + $0x2018] sm:$0xff]
        %v2368 = vld [vmem:[%s346 + $0x2020] sm:$0xff]
        %v2369 = vld [vmem:[%s346 + $0x2028] sm:$0xff]
        %v2370 = vld [vmem:[%s346 + $0x2030] sm:$0xff]
        %v2371 = vld [vmem:[%s346 + $0x2038] sm:$0xff]
        %v2372 = vld [vmem:[%s346 + $0x2040] sm:$0xff]
        %v2373 = vld [vmem:[%s346 + $0x2048] sm:$0xff]
        %v2374 = vld [vmem:[%s346 + $0x2050] sm:$0xff]
        %v2375 = vld [vmem:[%s346 + $0x2058] sm:$0xff]
        %v2376 = vld [vmem:[%s346 + $0x2060] sm:$0xff]
        %v2377 = vld [vmem:[%s346 + $0x2068] sm:$0xff]
        %v2378 = vld [vmem:[%s346 + $0x2070] sm:$0xff]
        %v2379 = vld [vmem:[%s346 + $0x2078] sm:$0xff]
        %v2380 = vld [vmem:[%s346 + $0x2080] sm:$0xff]
        %v2381 = vld [vmem:[%s346 + $0x2088] sm:$0xff]
        %v2382 = vld [vmem:[%s346 + $0x2090] sm:$0xff]
        %v2383 = vld [vmem:[%s346 + $0x2098] sm:$0xff]
        %v2384 = vld [vmem:[%s346 + $0x20a0] sm:$0xff]
        %v2385 = vld [vmem:[%s346 + $0x20a8] sm:$0xff]
        %v2386 = vld [vmem:[%s346 + $0x20b0] sm:$0xff]
        %v2387 = vld [vmem:[%s346 + $0x20b8] sm:$0xff]
        %v2388 = vld [vmem:[%s346 + $0x20c0] sm:$0xff]
        %v2389 = vld [vmem:[%s346 + $0x20c8] sm:$0xff]
        %v2390 = vld [vmem:[%s346 + $0x20d0] sm:$0xff]
        %v2391 = vld [vmem:[%s346 + $0x20d8] sm:$0xff]
        %v2392 = vld [vmem:[%s346 + $0x20e0] sm:$0xff]
        %v2393 = vld [vmem:[%s346 + $0x20e8] sm:$0xff]
        %v2394 = vld [vmem:[%s346 + $0x20f0] sm:$0xff]
        %v2395 = vld [vmem:[%s346 + $0x20f8] sm:$0xff]
        %v2396 = vld [vmem:[%s346 + $0x2100] sm:$0xff]
        %v2397 = vld [vmem:[%s346 + $0x2108] sm:$0xff]
        %v2398 = vld [vmem:[%s346 + $0x2110] sm:$0xff]
        %v2399 = vld [vmem:[%s346 + $0x2118] sm:$0xff]
        %v2400 = vld [vmem:[%s346 + $0x2120] sm:$0xff]
        %v2401 = vld [vmem:[%s346 + $0x2128] sm:$0xff]
        %v2402 = vld [vmem:[%s346 + $0x2130] sm:$0xff]
        %v2403 = vld [vmem:[%s346 + $0x2138] sm:$0xff]
        %v2404 = vld [vmem:[%s346 + $0x2140] sm:$0xff]
        %v2405 = vld [vmem:[%s346 + $0x2148] sm:$0xff]
        %v2406 = vld [vmem:[%s346 + $0x2150] sm:$0xff]
        %v2407 = vld [vmem:[%s346 + $0x2158] sm:$0xff]
        %v2408 = vld [vmem:[%s346 + $0x2160] sm:$0xff]
        %v2409 = vld [vmem:[%s346 + $0x2168] sm:$0xff]
        %v2410 = vld [vmem:[%s346 + $0x2170] sm:$0xff]
        %v2411 = vld [vmem:[%s346 + $0x2178] sm:$0xff]
        %v2412 = vld [vmem:[%s346 + $0x2180] sm:$0xff]
        %v2413 = vld [vmem:[%s346 + $0x2188] sm:$0xff]
        %v2414 = vld [vmem:[%s346 + $0x2190] sm:$0xff]
        %v2415 = vld [vmem:[%s346 + $0x2198] sm:$0xff]
        %v2416 = vld [vmem:[%s346 + $0x21a0] sm:$0xff]
        %v2417 = vld [vmem:[%s346 + $0x21a8] sm:$0xff]
        %v2418 = vld [vmem:[%s346 + $0x21b0] sm:$0xff]
        %v2419 = vld [vmem:[%s346 + $0x21b8] sm:$0xff]
        %v2420 = vld [vmem:[%s346 + $0x21c0] sm:$0xff]
        %v2421 = vld [vmem:[%s346 + $0x21c8] sm:$0xff]
        %v2422 = vld [vmem:[%s346 + $0x21d0] sm:$0xff]
        %v2423 = vld [vmem:[%s346 + $0x21d8] sm:$0xff]
        %v2424 = vld [vmem:[%s346 + $0x21e0] sm:$0xff]
        %v2425 = vld [vmem:[%s346 + $0x21e8] sm:$0xff]
        %v2426 = vld [vmem:[%s346 + $0x21f0] sm:$0xff]
        %v2427 = vld [vmem:[%s346 + $0x21f8] sm:$0xff]
        %v2428 = vld [vmem:[%s346 + $0x2200] sm:$0xff]
        %v2429 = vld [vmem:[%s346 + $0x2208] sm:$0xff]
        %v2430 = vld [vmem:[%s346 + $0x2210] sm:$0xff]
        %v2431 = vld [vmem:[%s346 + $0x2218] sm:$0xff]
        %v2432 = vld [vmem:[%s346 + $0x2220] sm:$0xff]
        %v2433 = vld [vmem:[%s346 + $0x2228] sm:$0xff]
        %v2434 = vld [vmem:[%s346 + $0x2230] sm:$0xff]
        %v2435 = vld [vmem:[%s346 + $0x2238] sm:$0xff]
        %v2436 = vld [vmem:[%s346 + $0x2240] sm:$0xff]
        %v2437 = vld [vmem:[%s346 + $0x2248] sm:$0xff]
        %v2438 = vld [vmem:[%s346 + $0x2250] sm:$0xff]
        %v2439 = vld [vmem:[%s346 + $0x2258] sm:$0xff]
        %v2440 = vld [vmem:[%s346 + $0x2260] sm:$0xff]
        %v2441 = vld [vmem:[%s346 + $0x2268] sm:$0xff]
        %v2442 = vld [vmem:[%s346 + $0x2270] sm:$0xff]
        %v2443 = vld [vmem:[%s346 + $0x2278] sm:$0xff]
        %v2444 = vld [vmem:[%s346 + $0x2280] sm:$0xff]
        %v2445 = vld [vmem:[%s346 + $0x2288] sm:$0xff]
        %v2446 = vld [vmem:[%s346 + $0x2290] sm:$0xff]
        %v2447 = vld [vmem:[%s346 + $0x2298] sm:$0xff]
        %v2448 = vld [vmem:[%s346 + $0x22a0] sm:$0xff]
        %v2449 = vld [vmem:[%s346 + $0x22a8] sm:$0xff]
        %v2450 = vld [vmem:[%s346 + $0x22b0] sm:$0xff]
        %v2451 = vld [vmem:[%s346 + $0x22b8] sm:$0xff]
        %v2452 = vld [vmem:[%s346 + $0x22c0] sm:$0xff]
        %v2453 = vld [vmem:[%s346 + $0x22c8] sm:$0xff]
        %v2454 = vld [vmem:[%s346 + $0x22d0] sm:$0xff]
        %v2455 = vld [vmem:[%s346 + $0x22d8] sm:$0xff]
        %v2456 = vld [vmem:[%s346 + $0x22e0] sm:$0xff]
        %v2457 = vld [vmem:[%s346 + $0x22e8] sm:$0xff]
        %v2458 = vld [vmem:[%s346 + $0x22f0] sm:$0xff]
        %v2459 = vld [vmem:[%s346 + $0x22f8] sm:$0xff]
        %v2460 = vunpack.c.l.s8.bf16 %v1340
        %v2461 = vunpack.c.l.s8.bf16 %v1341
        %v2462 = vunpack.c.h.s8.bf16 %v1340
        %v2463 = vunpack.c.h.s8.bf16 %v1341
        %v2464 = vunpack.c.l.s8.bf16 %v1342
        %v2465 = vunpack.c.l.s8.bf16 %v1343
        %v2466 = vunpack.c.h.s8.bf16 %v1342
        %v2467 = vunpack.c.h.s8.bf16 %v1343
        %v2468 = vunpack.c.l.s8.bf16 %v1344
        %v2469 = vunpack.c.l.s8.bf16 %v1345
        %v2470 = vunpack.c.h.s8.bf16 %v1344
        %v2471 = vunpack.c.h.s8.bf16 %v1345
        %v2472 = vunpack.c.l.s8.bf16 %v1346
        %v2473 = vunpack.c.l.s8.bf16 %v1347
        %v2474 = vunpack.c.h.s8.bf16 %v1346
        %v2475 = vunpack.c.h.s8.bf16 %v1347
        %v2476 = vunpack.c.l.s8.bf16 %v1348
        %v2477 = vunpack.c.l.s8.bf16 %v1349
        %v2478 = vunpack.c.h.s8.bf16 %v1348
        %v2479 = vunpack.c.h.s8.bf16 %v1349
        %v2480 = vunpack.c.l.s8.bf16 %v1350
        %v2481 = vunpack.c.l.s8.bf16 %v1351
        %v2482 = vunpack.c.h.s8.bf16 %v1350
        %v2483 = vunpack.c.h.s8.bf16 %v1351
        %v2484 = vunpack.c.l.s8.bf16 %v1352
        %v2485 = vunpack.c.l.s8.bf16 %v1353
        %v2486 = vunpack.c.h.s8.bf16 %v1352
        %v2487 = vunpack.c.h.s8.bf16 %v1353
        %v2488 = vunpack.c.l.s8.bf16 %v1354
        %v2489 = vunpack.c.l.s8.bf16 %v1355
        %v2490 = vunpack.c.h.s8.bf16 %v1354
        %v2491 = vunpack.c.h.s8.bf16 %v1355
        %v2492 = vunpack.c.l.s8.bf16 %v1356
        %v2493 = vunpack.c.l.s8.bf16 %v1357
        %v2494 = vunpack.c.h.s8.bf16 %v1356
        %v2495 = vunpack.c.h.s8.bf16 %v1357
        %v2496 = vunpack.c.l.s8.bf16 %v1358
        %v2497 = vunpack.c.l.s8.bf16 %v1359
        %v2498 = vunpack.c.h.s8.bf16 %v1358
        %v2499 = vunpack.c.h.s8.bf16 %v1359
        %v2500 = vunpack.c.l.s8.bf16 %v1360
        %v2501 = vunpack.c.l.s8.bf16 %v1361
        %v2502 = vunpack.c.h.s8.bf16 %v1360
        %v2503 = vunpack.c.h.s8.bf16 %v1361
        %v2504 = vunpack.c.l.s8.bf16 %v1362
        %v2505 = vunpack.c.l.s8.bf16 %v1363
        %v2506 = vunpack.c.h.s8.bf16 %v1362
        %v2507 = vunpack.c.h.s8.bf16 %v1363
        %v2508 = vunpack.c.l.s8.bf16 %v1364
        %v2509 = vunpack.c.l.s8.bf16 %v1365
        %v2510 = vunpack.c.h.s8.bf16 %v1364
        %v2511 = vunpack.c.h.s8.bf16 %v1365
        %v2512 = vunpack.c.l.s8.bf16 %v1366
        %v2513 = vunpack.c.l.s8.bf16 %v1367
        %v2514 = vunpack.c.h.s8.bf16 %v1366
        %v2515 = vunpack.c.h.s8.bf16 %v1367
        %v2516 = vunpack.c.l.s8.bf16 %v1368
        %v2517 = vunpack.c.l.s8.bf16 %v1369
        %v2518 = vunpack.c.h.s8.bf16 %v1368
        %v2519 = vunpack.c.h.s8.bf16 %v1369
        %v2520 = vunpack.c.l.s8.bf16 %v1370
        %v2521 = vunpack.c.l.s8.bf16 %v1371
        %v2522 = vunpack.c.h.s8.bf16 %v1370
        %v2523 = vunpack.c.h.s8.bf16 %v1371
        %v2524 = vunpack.c.l.s8.bf16 %v1372
        %v2525 = vunpack.c.l.s8.bf16 %v1373
        %v2526 = vunpack.c.h.s8.bf16 %v1372
        %v2527 = vunpack.c.h.s8.bf16 %v1373
        %v2528 = vunpack.c.l.s8.bf16 %v1374
        %v2529 = vunpack.c.l.s8.bf16 %v1375
        %v2530 = vunpack.c.h.s8.bf16 %v1374
        %v2531 = vunpack.c.h.s8.bf16 %v1375
        %v2532 = vunpack.c.l.s8.bf16 %v1376
        %v2533 = vunpack.c.l.s8.bf16 %v1377
        %v2534 = vunpack.c.h.s8.bf16 %v1376
        %v2535 = vunpack.c.h.s8.bf16 %v1377
        %v2536 = vunpack.c.l.s8.bf16 %v1378
        %v2537 = vunpack.c.l.s8.bf16 %v1379
        %v2538 = vunpack.c.h.s8.bf16 %v1378
        %v2539 = vunpack.c.h.s8.bf16 %v1379
        %v2540 = vunpack.c.l.s8.bf16 %v1380
        %v2541 = vunpack.c.l.s8.bf16 %v1381
        %v2542 = vunpack.c.h.s8.bf16 %v1380
        %v2543 = vunpack.c.h.s8.bf16 %v1381
        %v2544 = vunpack.c.l.s8.bf16 %v1382
        %v2545 = vunpack.c.l.s8.bf16 %v1383
        %v2546 = vunpack.c.h.s8.bf16 %v1382
        %v2547 = vunpack.c.h.s8.bf16 %v1383
        %v2548 = vunpack.c.l.s8.bf16 %v1384
        %v2549 = vunpack.c.l.s8.bf16 %v1385
        %v2550 = vunpack.c.h.s8.bf16 %v1384
        %v2551 = vunpack.c.h.s8.bf16 %v1385
        %v2552 = vunpack.c.l.s8.bf16 %v1386
        %v2553 = vunpack.c.l.s8.bf16 %v1387
        %v2554 = vunpack.c.h.s8.bf16 %v1386
        %v2555 = vunpack.c.h.s8.bf16 %v1387
        %v2556 = vunpack.c.l.s8.bf16 %v1388
        %v2557 = vunpack.c.l.s8.bf16 %v1389
        %v2558 = vunpack.c.h.s8.bf16 %v1388
        %v2559 = vunpack.c.h.s8.bf16 %v1389
        %v2560 = vunpack.c.l.s8.bf16 %v1390
        %v2561 = vunpack.c.l.s8.bf16 %v1391
        %v2562 = vunpack.c.h.s8.bf16 %v1390
        %v2563 = vunpack.c.h.s8.bf16 %v1391
        %v2564 = vunpack.c.l.s8.bf16 %v1392
        %v2565 = vunpack.c.l.s8.bf16 %v1393
        %v2566 = vunpack.c.h.s8.bf16 %v1392
        %v2567 = vunpack.c.h.s8.bf16 %v1393
        %v2568 = vunpack.c.l.s8.bf16 %v1394
        %v2569 = vunpack.c.l.s8.bf16 %v1395
        %v2570 = vunpack.c.h.s8.bf16 %v1394
        %v2571 = vunpack.c.h.s8.bf16 %v1395
        %v2572 = vunpack.c.l.s8.bf16 %v1396
        %v2573 = vunpack.c.l.s8.bf16 %v1397
        %v2574 = vunpack.c.h.s8.bf16 %v1396
        %v2575 = vunpack.c.h.s8.bf16 %v1397
        %v2576 = vunpack.c.l.s8.bf16 %v1398
        %v2577 = vunpack.c.l.s8.bf16 %v1399
        %v2578 = vunpack.c.h.s8.bf16 %v1398
        %v2579 = vunpack.c.h.s8.bf16 %v1399
        %v2580 = vunpack.c.l.s8.bf16 %v1400
        %v2581 = vunpack.c.l.s8.bf16 %v1401
        %v2582 = vunpack.c.h.s8.bf16 %v1400
        %v2583 = vunpack.c.h.s8.bf16 %v1401
        %v2584 = vunpack.c.l.s8.bf16 %v1402
        %v2585 = vunpack.c.l.s8.bf16 %v1403
        %v2586 = vunpack.c.h.s8.bf16 %v1402
        %v2587 = vunpack.c.h.s8.bf16 %v1403
        %v2588 = vunpack.c.l.s8.bf16 %v1404
        %v2589 = vunpack.c.l.s8.bf16 %v1405
        %v2590 = vunpack.c.h.s8.bf16 %v1404
        %v2591 = vunpack.c.h.s8.bf16 %v1405
        %v2592 = vunpack.c.l.s8.bf16 %v1406
        %v2593 = vunpack.c.l.s8.bf16 %v1407
        %v2594 = vunpack.c.h.s8.bf16 %v1406
        %v2595 = vunpack.c.h.s8.bf16 %v1407
        %v2596 = vunpack.c.l.s8.bf16 %v1408
        %v2597 = vunpack.c.l.s8.bf16 %v1409
        %v2598 = vunpack.c.h.s8.bf16 %v1408
        %v2599 = vunpack.c.h.s8.bf16 %v1409
        %v2600 = vunpack.c.l.s8.bf16 %v1410
        %v2601 = vunpack.c.l.s8.bf16 %v1411
        %v2602 = vunpack.c.h.s8.bf16 %v1410
        %v2603 = vunpack.c.h.s8.bf16 %v1411
        %v2604 = vunpack.c.l.s8.bf16 %v1412
        %v2605 = vunpack.c.l.s8.bf16 %v1413
        %v2606 = vunpack.c.h.s8.bf16 %v1412
        %v2607 = vunpack.c.h.s8.bf16 %v1413
        %v2608 = vunpack.c.l.s8.bf16 %v1414
        %v2609 = vunpack.c.l.s8.bf16 %v1415
        %v2610 = vunpack.c.h.s8.bf16 %v1414
        %v2611 = vunpack.c.h.s8.bf16 %v1415
        %v2612 = vunpack.c.l.s8.bf16 %v1416
        %v2613 = vunpack.c.l.s8.bf16 %v1417
        %v2614 = vunpack.c.h.s8.bf16 %v1416
        %v2615 = vunpack.c.h.s8.bf16 %v1417
        %v2616 = vunpack.c.l.s8.bf16 %v1418
        %v2617 = vunpack.c.l.s8.bf16 %v1419
        %v2618 = vunpack.c.h.s8.bf16 %v1418
        %v2619 = vunpack.c.h.s8.bf16 %v1419
        %v2620 = vunpack.c.l.s8.bf16 %v1420
        %v2621 = vunpack.c.l.s8.bf16 %v1421
        %v2622 = vunpack.c.h.s8.bf16 %v1420
        %v2623 = vunpack.c.h.s8.bf16 %v1421
        %v2624 = vunpack.c.l.s8.bf16 %v1422
        %v2625 = vunpack.c.l.s8.bf16 %v1423
        %v2626 = vunpack.c.h.s8.bf16 %v1422
        %v2627 = vunpack.c.h.s8.bf16 %v1423
        %v2628 = vunpack.c.l.s8.bf16 %v1424
        %v2629 = vunpack.c.l.s8.bf16 %v1425
        %v2630 = vunpack.c.h.s8.bf16 %v1424
        %v2631 = vunpack.c.h.s8.bf16 %v1425
        %v2632 = vunpack.c.l.s8.bf16 %v1426
        %v2633 = vunpack.c.l.s8.bf16 %v1427
        %v2634 = vunpack.c.h.s8.bf16 %v1426
        %v2635 = vunpack.c.h.s8.bf16 %v1427
        %v2636 = vunpack.c.l.s8.bf16 %v1428
        %v2637 = vunpack.c.l.s8.bf16 %v1429
        %v2638 = vunpack.c.h.s8.bf16 %v1428
        %v2639 = vunpack.c.h.s8.bf16 %v1429
        %v2640 = vunpack.c.l.s8.bf16 %v1430
        %v2641 = vunpack.c.l.s8.bf16 %v1431
        %v2642 = vunpack.c.h.s8.bf16 %v1430
        %v2643 = vunpack.c.h.s8.bf16 %v1431
        %v2644 = vunpack.c.l.s8.bf16 %v1432
        %v2645 = vunpack.c.l.s8.bf16 %v1433
        %v2646 = vunpack.c.h.s8.bf16 %v1432
        %v2647 = vunpack.c.h.s8.bf16 %v1433
        %v2648 = vunpack.c.l.s8.bf16 %v1434
        %v2649 = vunpack.c.l.s8.bf16 %v1435
        %v2650 = vunpack.c.h.s8.bf16 %v1434
        %v2651 = vunpack.c.h.s8.bf16 %v1435
        %v2652 = vunpack.c.l.s8.bf16 %v1436
        %v2653 = vunpack.c.l.s8.bf16 %v1437
        %v2654 = vunpack.c.h.s8.bf16 %v1436
        %v2655 = vunpack.c.h.s8.bf16 %v1437
        %v2656 = vunpack.c.l.s8.bf16 %v1438
        %v2657 = vunpack.c.l.s8.bf16 %v1439
        %v2658 = vunpack.c.h.s8.bf16 %v1438
        %v2659 = vunpack.c.h.s8.bf16 %v1439
        %v2660 = vunpack.c.l.s8.bf16 %v1440
        %v2661 = vunpack.c.l.s8.bf16 %v1441
        %v2662 = vunpack.c.h.s8.bf16 %v1440
        %v2663 = vunpack.c.h.s8.bf16 %v1441
        %v2664 = vunpack.c.l.s8.bf16 %v1442
        %v2665 = vunpack.c.l.s8.bf16 %v1443
        %v2666 = vunpack.c.h.s8.bf16 %v1442
        %v2667 = vunpack.c.h.s8.bf16 %v1443
        %v2668 = vunpack.c.l.s8.bf16 %v1444
        %v2669 = vunpack.c.l.s8.bf16 %v1445
        %v2670 = vunpack.c.h.s8.bf16 %v1444
        %v2671 = vunpack.c.h.s8.bf16 %v1445
        %v2672 = vunpack.c.l.s8.bf16 %v1446
        %v2673 = vunpack.c.l.s8.bf16 %v1447
        %v2674 = vunpack.c.h.s8.bf16 %v1446
        %v2675 = vunpack.c.h.s8.bf16 %v1447
        %v2676 = vunpack.c.l.s8.bf16 %v1448
        %v2677 = vunpack.c.l.s8.bf16 %v1449
        %v2678 = vunpack.c.h.s8.bf16 %v1448
        %v2679 = vunpack.c.h.s8.bf16 %v1449
        %v2680 = vunpack.c.l.s8.bf16 %v1450
        %v2681 = vunpack.c.l.s8.bf16 %v1451
        %v2682 = vunpack.c.h.s8.bf16 %v1450
        %v2683 = vunpack.c.h.s8.bf16 %v1451
        %v2684 = vunpack.c.l.s8.bf16 %v1452
        %v2685 = vunpack.c.l.s8.bf16 %v1453
        %v2686 = vunpack.c.h.s8.bf16 %v1452
        %v2687 = vunpack.c.h.s8.bf16 %v1453
        %v2688 = vunpack.c.l.s8.bf16 %v1454
        %v2689 = vunpack.c.l.s8.bf16 %v1455
        %v2690 = vunpack.c.h.s8.bf16 %v1454
        %v2691 = vunpack.c.h.s8.bf16 %v1455
        %v2692 = vunpack.c.l.s8.bf16 %v1456
        %v2693 = vunpack.c.l.s8.bf16 %v1457
        %v2694 = vunpack.c.h.s8.bf16 %v1456
        %v2695 = vunpack.c.h.s8.bf16 %v1457
        %v2696 = vunpack.c.l.s8.bf16 %v1458
        %v2697 = vunpack.c.l.s8.bf16 %v1459
        %v2698 = vunpack.c.h.s8.bf16 %v1458
        %v2699 = vunpack.c.h.s8.bf16 %v1459
        %v2700 = vunpack.c.l.s8.bf16 %v1460
        %v2701 = vunpack.c.l.s8.bf16 %v1461
        %v2702 = vunpack.c.h.s8.bf16 %v1460
        %v2703 = vunpack.c.h.s8.bf16 %v1461
        %v2704 = vunpack.c.l.s8.bf16 %v1462
        %v2705 = vunpack.c.l.s8.bf16 %v1463
        %v2706 = vunpack.c.h.s8.bf16 %v1462
        %v2707 = vunpack.c.h.s8.bf16 %v1463
        %v2708 = vunpack.c.l.s8.bf16 %v1464
        %v2709 = vunpack.c.l.s8.bf16 %v1465
        %v2710 = vunpack.c.h.s8.bf16 %v1464
        %v2711 = vunpack.c.h.s8.bf16 %v1465
        %v2712 = vunpack.c.l.s8.bf16 %v1466
        %v2713 = vunpack.c.l.s8.bf16 %v1467
        %v2714 = vunpack.c.h.s8.bf16 %v1466
        %v2715 = vunpack.c.h.s8.bf16 %v1467
        %v2716 = vunpack.c.l.s8.bf16 %v1468
        %v2717 = vunpack.c.l.s8.bf16 %v1469
        %v2718 = vunpack.c.h.s8.bf16 %v1468
        %v2719 = vunpack.c.h.s8.bf16 %v1469
        %v2720 = vunpack.c.l.s8.bf16 %v1470
        %v2721 = vunpack.c.l.s8.bf16 %v1471
        %v2722 = vunpack.c.h.s8.bf16 %v1470
        %v2723 = vunpack.c.h.s8.bf16 %v1471
        %v2724 = vunpack.c.l.s8.bf16 %v1472
        %v2725 = vunpack.c.l.s8.bf16 %v1473
        %v2726 = vunpack.c.h.s8.bf16 %v1472
        %v2727 = vunpack.c.h.s8.bf16 %v1473
        %v2728 = vunpack.c.l.s8.bf16 %v1474
        %v2729 = vunpack.c.l.s8.bf16 %v1475
        %v2730 = vunpack.c.h.s8.bf16 %v1474
        %v2731 = vunpack.c.h.s8.bf16 %v1475
        %v2732 = vunpack.c.l.s8.bf16 %v1476
        %v2733 = vunpack.c.l.s8.bf16 %v1477
        %v2734 = vunpack.c.h.s8.bf16 %v1476
        %v2735 = vunpack.c.h.s8.bf16 %v1477
        %v2736 = vunpack.c.l.s8.bf16 %v1478
        %v2737 = vunpack.c.l.s8.bf16 %v1479
        %v2738 = vunpack.c.h.s8.bf16 %v1478
        %v2739 = vunpack.c.h.s8.bf16 %v1479
        %v2740 = vunpack.c.l.s8.bf16 %v1480
        %v2741 = vunpack.c.l.s8.bf16 %v1481
        %v2742 = vunpack.c.h.s8.bf16 %v1480
        %v2743 = vunpack.c.h.s8.bf16 %v1481
        %v2744 = vunpack.c.l.s8.bf16 %v1482
        %v2745 = vunpack.c.l.s8.bf16 %v1483
        %v2746 = vunpack.c.h.s8.bf16 %v1482
        %v2747 = vunpack.c.h.s8.bf16 %v1483
        %v2748 = vunpack.c.l.s8.bf16 %v1484
        %v2749 = vunpack.c.l.s8.bf16 %v1485
        %v2750 = vunpack.c.h.s8.bf16 %v1484
        %v2751 = vunpack.c.h.s8.bf16 %v1485
        %v2752 = vunpack.c.l.s8.bf16 %v1486
        %v2753 = vunpack.c.l.s8.bf16 %v1487
        %v2754 = vunpack.c.h.s8.bf16 %v1486
        %v2755 = vunpack.c.h.s8.bf16 %v1487
        %v2756 = vunpack.c.l.s8.bf16 %v1488
        %v2757 = vunpack.c.l.s8.bf16 %v1489
        %v2758 = vunpack.c.h.s8.bf16 %v1488
        %v2759 = vunpack.c.h.s8.bf16 %v1489
        %v2760 = vunpack.c.l.s8.bf16 %v1490
        %v2761 = vunpack.c.l.s8.bf16 %v1491
        %v2762 = vunpack.c.h.s8.bf16 %v1490
        %v2763 = vunpack.c.h.s8.bf16 %v1491
        %v2764 = vunpack.c.l.s8.bf16 %v1492
        %v2765 = vunpack.c.l.s8.bf16 %v1493
        %v2766 = vunpack.c.h.s8.bf16 %v1492
        %v2767 = vunpack.c.h.s8.bf16 %v1493
        %v2768 = vunpack.c.l.s8.bf16 %v1494
        %v2769 = vunpack.c.l.s8.bf16 %v1495
        %v2770 = vunpack.c.h.s8.bf16 %v1494
        %v2771 = vunpack.c.h.s8.bf16 %v1495
        %v2772 = vunpack.c.l.s8.bf16 %v1496
        %v2773 = vunpack.c.l.s8.bf16 %v1497
        %v2774 = vunpack.c.h.s8.bf16 %v1496
        %v2775 = vunpack.c.h.s8.bf16 %v1497
        %v2776 = vunpack.c.l.s8.bf16 %v1498
        %v2777 = vunpack.c.l.s8.bf16 %v1499
        %v2778 = vunpack.c.h.s8.bf16 %v1498
        %v2779 = vunpack.c.h.s8.bf16 %v1499
        %v2780 = vunpack.c.l.s8.bf16 %v1500
        %v2781 = vunpack.c.l.s8.bf16 %v1501
        %v2782 = vunpack.c.h.s8.bf16 %v1500
        %v2783 = vunpack.c.h.s8.bf16 %v1501
        %v2784 = vunpack.c.l.s8.bf16 %v1502
        %v2785 = vunpack.c.l.s8.bf16 %v1503
        %v2786 = vunpack.c.h.s8.bf16 %v1502
        %v2787 = vunpack.c.h.s8.bf16 %v1503
        %v2788 = vunpack.c.l.s8.bf16 %v1504
        %v2789 = vunpack.c.l.s8.bf16 %v1505
        %v2790 = vunpack.c.h.s8.bf16 %v1504
        %v2791 = vunpack.c.h.s8.bf16 %v1505
        %v2792 = vunpack.c.l.s8.bf16 %v1506
        %v2793 = vunpack.c.l.s8.bf16 %v1507
        %v2794 = vunpack.c.h.s8.bf16 %v1506
        %v2795 = vunpack.c.h.s8.bf16 %v1507
        %v2796 = vunpack.c.l.s8.bf16 %v1508
        %v2797 = vunpack.c.l.s8.bf16 %v1509
        %v2798 = vunpack.c.h.s8.bf16 %v1508
        %v2799 = vunpack.c.h.s8.bf16 %v1509
        %v2800 = vunpack.c.l.s8.bf16 %v1510
        %v2801 = vunpack.c.l.s8.bf16 %v1511
        %v2802 = vunpack.c.h.s8.bf16 %v1510
        %v2803 = vunpack.c.h.s8.bf16 %v1511
        %v2804 = vunpack.c.l.s8.bf16 %v1512
        %v2805 = vunpack.c.l.s8.bf16 %v1513
        %v2806 = vunpack.c.h.s8.bf16 %v1512
        %v2807 = vunpack.c.h.s8.bf16 %v1513
        %v2808 = vunpack.c.l.s8.bf16 %v1514
        %v2809 = vunpack.c.l.s8.bf16 %v1515
        %v2810 = vunpack.c.h.s8.bf16 %v1514
        %v2811 = vunpack.c.h.s8.bf16 %v1515
        %v2812 = vunpack.c.l.s8.bf16 %v1516
        %v2813 = vunpack.c.l.s8.bf16 %v1517
        %v2814 = vunpack.c.h.s8.bf16 %v1516
        %v2815 = vunpack.c.h.s8.bf16 %v1517
        %v2816 = vunpack.c.l.s8.bf16 %v1518
        %v2817 = vunpack.c.l.s8.bf16 %v1519
        %v2818 = vunpack.c.h.s8.bf16 %v1518
        %v2819 = vunpack.c.h.s8.bf16 %v1519
        %v2820 = vunpack.c.l.s8.bf16 %v1520
        %v2821 = vunpack.c.l.s8.bf16 %v1521
        %v2822 = vunpack.c.h.s8.bf16 %v1520
        %v2823 = vunpack.c.h.s8.bf16 %v1521
        %v2824 = vunpack.c.l.s8.bf16 %v1522
        %v2825 = vunpack.c.l.s8.bf16 %v1523
        %v2826 = vunpack.c.h.s8.bf16 %v1522
        %v2827 = vunpack.c.h.s8.bf16 %v1523
        %v2828 = vunpack.c.l.s8.bf16 %v1524
        %v2829 = vunpack.c.l.s8.bf16 %v1525
        %v2830 = vunpack.c.h.s8.bf16 %v1524
        %v2831 = vunpack.c.h.s8.bf16 %v1525
        %v2832 = vunpack.c.l.s8.bf16 %v1526
        %v2833 = vunpack.c.l.s8.bf16 %v1527
        %v2834 = vunpack.c.h.s8.bf16 %v1526
        %v2835 = vunpack.c.h.s8.bf16 %v1527
        %v2836 = vunpack.c.l.s8.bf16 %v1528
        %v2837 = vunpack.c.l.s8.bf16 %v1529
        %v2838 = vunpack.c.h.s8.bf16 %v1528
        %v2839 = vunpack.c.h.s8.bf16 %v1529
        %v2840 = vunpack.c.l.s8.bf16 %v1530
        %v2841 = vunpack.c.l.s8.bf16 %v1531
        %v2842 = vunpack.c.h.s8.bf16 %v1530
        %v2843 = vunpack.c.h.s8.bf16 %v1531
        %v2844 = vunpack.c.l.s8.bf16 %v1532
        %v2845 = vunpack.c.l.s8.bf16 %v1533
        %v2846 = vunpack.c.h.s8.bf16 %v1532
        %v2847 = vunpack.c.h.s8.bf16 %v1533
        %v2848 = vunpack.c.l.s8.bf16 %v1534
        %v2849 = vunpack.c.l.s8.bf16 %v1535
        %v2850 = vunpack.c.h.s8.bf16 %v1534
        %v2851 = vunpack.c.h.s8.bf16 %v1535
        %v2852 = vunpack.c.l.s8.bf16 %v1536
        %v2853 = vunpack.c.l.s8.bf16 %v1537
        %v2854 = vunpack.c.h.s8.bf16 %v1536
        %v2855 = vunpack.c.h.s8.bf16 %v1537
        %v2856 = vunpack.c.l.s8.bf16 %v1538
        %v2857 = vunpack.c.l.s8.bf16 %v1539
        %v2858 = vunpack.c.h.s8.bf16 %v1538
        %v2859 = vunpack.c.h.s8.bf16 %v1539
        %v2860 = vunpack.c.l.s8.bf16 %v1540
        %v2861 = vunpack.c.l.s8.bf16 %v1541
        %v2862 = vunpack.c.h.s8.bf16 %v1540
        %v2863 = vunpack.c.h.s8.bf16 %v1541
        %v2864 = vunpack.c.l.s8.bf16 %v1542
        %v2865 = vunpack.c.l.s8.bf16 %v1543
        %v2866 = vunpack.c.h.s8.bf16 %v1542
        %v2867 = vunpack.c.h.s8.bf16 %v1543
        %v2868 = vunpack.c.l.s8.bf16 %v1544
        %v2869 = vunpack.c.l.s8.bf16 %v1545
        %v2870 = vunpack.c.h.s8.bf16 %v1544
        %v2871 = vunpack.c.h.s8.bf16 %v1545
        %v2872 = vunpack.c.l.s8.bf16 %v1546
        %v2873 = vunpack.c.l.s8.bf16 %v1547
        %v2874 = vunpack.c.h.s8.bf16 %v1546
        %v2875 = vunpack.c.h.s8.bf16 %v1547
        %v2876 = vunpack.c.l.s8.bf16 %v1548
        %v2877 = vunpack.c.l.s8.bf16 %v1549
        %v2878 = vunpack.c.h.s8.bf16 %v1548
        %v2879 = vunpack.c.h.s8.bf16 %v1549
        %v2880 = vunpack.c.l.s8.bf16 %v1550
        %v2881 = vunpack.c.l.s8.bf16 %v1551
        %v2882 = vunpack.c.h.s8.bf16 %v1550
        %v2883 = vunpack.c.h.s8.bf16 %v1551
        %v2884 = vunpack.c.l.s8.bf16 %v1552
        %v2885 = vunpack.c.l.s8.bf16 %v1553
        %v2886 = vunpack.c.h.s8.bf16 %v1552
        %v2887 = vunpack.c.h.s8.bf16 %v1553
        %v2888 = vunpack.c.l.s8.bf16 %v1554
        %v2889 = vunpack.c.l.s8.bf16 %v1555
        %v2890 = vunpack.c.h.s8.bf16 %v1554
        %v2891 = vunpack.c.h.s8.bf16 %v1555
        %v2892 = vunpack.c.l.s8.bf16 %v1556
        %v2893 = vunpack.c.l.s8.bf16 %v1557
        %v2894 = vunpack.c.h.s8.bf16 %v1556
        %v2895 = vunpack.c.h.s8.bf16 %v1557
        %v2896 = vunpack.c.l.s8.bf16 %v1558
        %v2897 = vunpack.c.l.s8.bf16 %v1559
        %v2898 = vunpack.c.h.s8.bf16 %v1558
        %v2899 = vunpack.c.h.s8.bf16 %v1559
        %v2900 = vunpack.c.l.s8.bf16 %v1560
        %v2901 = vunpack.c.l.s8.bf16 %v1561
        %v2902 = vunpack.c.h.s8.bf16 %v1560
        %v2903 = vunpack.c.h.s8.bf16 %v1561
        %v2904 = vunpack.c.l.s8.bf16 %v1562
        %v2905 = vunpack.c.l.s8.bf16 %v1563
        %v2906 = vunpack.c.h.s8.bf16 %v1562
        %v2907 = vunpack.c.h.s8.bf16 %v1563
        %v2908 = vunpack.c.l.s8.bf16 %v1564
        %v2909 = vunpack.c.l.s8.bf16 %v1565
        %v2910 = vunpack.c.h.s8.bf16 %v1564
        %v2911 = vunpack.c.h.s8.bf16 %v1565
        %v2912 = vunpack.c.l.s8.bf16 %v1566
        %v2913 = vunpack.c.l.s8.bf16 %v1567
        %v2914 = vunpack.c.h.s8.bf16 %v1566
        %v2915 = vunpack.c.h.s8.bf16 %v1567
        %v2916 = vunpack.c.l.s8.bf16 %v1568
        %v2917 = vunpack.c.l.s8.bf16 %v1569
        %v2918 = vunpack.c.h.s8.bf16 %v1568
        %v2919 = vunpack.c.h.s8.bf16 %v1569
        %v2920 = vunpack.c.l.s8.bf16 %v1570
        %v2921 = vunpack.c.l.s8.bf16 %v1571
        %v2922 = vunpack.c.h.s8.bf16 %v1570
        %v2923 = vunpack.c.h.s8.bf16 %v1571
        %v2924 = vunpack.c.l.s8.bf16 %v1572
        %v2925 = vunpack.c.l.s8.bf16 %v1573
        %v2926 = vunpack.c.h.s8.bf16 %v1572
        %v2927 = vunpack.c.h.s8.bf16 %v1573
        %v2928 = vunpack.c.l.s8.bf16 %v1574
        %v2929 = vunpack.c.l.s8.bf16 %v1575
        %v2930 = vunpack.c.h.s8.bf16 %v1574
        %v2931 = vunpack.c.h.s8.bf16 %v1575
        %v2932 = vunpack.c.l.s8.bf16 %v1576
        %v2933 = vunpack.c.l.s8.bf16 %v1577
        %v2934 = vunpack.c.h.s8.bf16 %v1576
        %v2935 = vunpack.c.h.s8.bf16 %v1577
        %v2936 = vunpack.c.l.s8.bf16 %v1578
        %v2937 = vunpack.c.l.s8.bf16 %v1579
        %v2938 = vunpack.c.h.s8.bf16 %v1578
        %v2939 = vunpack.c.h.s8.bf16 %v1579
        %v2940 = vunpack.c.l.s8.bf16 %v1580
        %v2941 = vunpack.c.l.s8.bf16 %v1581
        %v2942 = vunpack.c.h.s8.bf16 %v1580
        %v2943 = vunpack.c.h.s8.bf16 %v1581
        %v2944 = vunpack.c.l.s8.bf16 %v1582
        %v2945 = vunpack.c.l.s8.bf16 %v1583
        %v2946 = vunpack.c.h.s8.bf16 %v1582
        %v2947 = vunpack.c.h.s8.bf16 %v1583
        %v2948 = vunpack.c.l.s8.bf16 %v1584
        %v2949 = vunpack.c.l.s8.bf16 %v1585
        %v2950 = vunpack.c.h.s8.bf16 %v1584
        %v2951 = vunpack.c.h.s8.bf16 %v1585
        %v2952 = vunpack.c.l.s8.bf16 %v1586
        %v2953 = vunpack.c.l.s8.bf16 %v1587
        %v2954 = vunpack.c.h.s8.bf16 %v1586
        %v2955 = vunpack.c.h.s8.bf16 %v1587
        %v2956 = vunpack.c.l.s8.bf16 %v1588
        %v2957 = vunpack.c.l.s8.bf16 %v1589
        %v2958 = vunpack.c.h.s8.bf16 %v1588
        %v2959 = vunpack.c.h.s8.bf16 %v1589
        %v2960 = vunpack.c.l.s8.bf16 %v1590
        %v2961 = vunpack.c.l.s8.bf16 %v1591
        %v2962 = vunpack.c.h.s8.bf16 %v1590
        %v2963 = vunpack.c.h.s8.bf16 %v1591
        %v2964 = vunpack.c.l.s8.bf16 %v1592
        %v2965 = vunpack.c.l.s8.bf16 %v1593
        %v2966 = vunpack.c.h.s8.bf16 %v1592
        %v2967 = vunpack.c.h.s8.bf16 %v1593
        %v2968 = vunpack.c.l.s8.bf16 %v1594
        %v2969 = vunpack.c.l.s8.bf16 %v1595
        %v2970 = vunpack.c.h.s8.bf16 %v1594
        %v2971 = vunpack.c.h.s8.bf16 %v1595
        %v2972 = vunpack.c.l.s8.bf16 %v1596
        %v2973 = vunpack.c.l.s8.bf16 %v1597
        %v2974 = vunpack.c.h.s8.bf16 %v1596
        %v2975 = vunpack.c.h.s8.bf16 %v1597
        %v2976 = vunpack.c.l.s8.bf16 %v1598
        %v2977 = vunpack.c.l.s8.bf16 %v1599
        %v2978 = vunpack.c.h.s8.bf16 %v1598
        %v2979 = vunpack.c.h.s8.bf16 %v1599
        %v2980 = vunpack.c.l.s8.bf16 %v1600
        %v2981 = vunpack.c.l.s8.bf16 %v1601
        %v2982 = vunpack.c.h.s8.bf16 %v1600
        %v2983 = vunpack.c.h.s8.bf16 %v1601
        %v2984 = vunpack.c.l.s8.bf16 %v1602
        %v2985 = vunpack.c.l.s8.bf16 %v1603
        %v2986 = vunpack.c.h.s8.bf16 %v1602
        %v2987 = vunpack.c.h.s8.bf16 %v1603
        %v2988 = vunpack.c.l.s8.bf16 %v1604
        %v2989 = vunpack.c.l.s8.bf16 %v1605
        %v2990 = vunpack.c.h.s8.bf16 %v1604
        %v2991 = vunpack.c.h.s8.bf16 %v1605
        %v2992 = vunpack.c.l.s8.bf16 %v1606
        %v2993 = vunpack.c.l.s8.bf16 %v1607
        %v2994 = vunpack.c.h.s8.bf16 %v1606
        %v2995 = vunpack.c.h.s8.bf16 %v1607
        %v2996 = vunpack.c.l.s8.bf16 %v1608
        %v2997 = vunpack.c.l.s8.bf16 %v1609
        %v2998 = vunpack.c.h.s8.bf16 %v1608
        %v2999 = vunpack.c.h.s8.bf16 %v1609
        %v3000 = vunpack.c.l.s8.bf16 %v1610
        %v3001 = vunpack.c.l.s8.bf16 %v1611
        %v3002 = vunpack.c.h.s8.bf16 %v1610
        %v3003 = vunpack.c.h.s8.bf16 %v1611
        %v3004 = vunpack.c.l.s8.bf16 %v1612
        %v3005 = vunpack.c.l.s8.bf16 %v1613
        %v3006 = vunpack.c.h.s8.bf16 %v1612
        %v3007 = vunpack.c.h.s8.bf16 %v1613
        %v3008 = vunpack.c.l.s8.bf16 %v1614
        %v3009 = vunpack.c.l.s8.bf16 %v1615
        %v3010 = vunpack.c.h.s8.bf16 %v1614
        %v3011 = vunpack.c.h.s8.bf16 %v1615
        %v3012 = vunpack.c.l.s8.bf16 %v1616
        %v3013 = vunpack.c.l.s8.bf16 %v1617
        %v3014 = vunpack.c.h.s8.bf16 %v1616
        %v3015 = vunpack.c.h.s8.bf16 %v1617
        %v3016 = vunpack.c.l.s8.bf16 %v1618
        %v3017 = vunpack.c.l.s8.bf16 %v1619
        %v3018 = vunpack.c.h.s8.bf16 %v1618
        %v3019 = vunpack.c.h.s8.bf16 %v1619
        %v3020 = vunpack.c.l.s8.bf16 %v1620
        %v3021 = vunpack.c.l.s8.bf16 %v1621
        %v3022 = vunpack.c.h.s8.bf16 %v1620
        %v3023 = vunpack.c.h.s8.bf16 %v1621
        %v3024 = vunpack.c.l.s8.bf16 %v1622
        %v3025 = vunpack.c.l.s8.bf16 %v1623
        %v3026 = vunpack.c.h.s8.bf16 %v1622
        %v3027 = vunpack.c.h.s8.bf16 %v1623
        %v3028 = vunpack.c.l.s8.bf16 %v1624
        %v3029 = vunpack.c.l.s8.bf16 %v1625
        %v3030 = vunpack.c.h.s8.bf16 %v1624
        %v3031 = vunpack.c.h.s8.bf16 %v1625
        %v3032 = vunpack.c.l.s8.bf16 %v1626
        %v3033 = vunpack.c.l.s8.bf16 %v1627
        %v3034 = vunpack.c.h.s8.bf16 %v1626
        %v3035 = vunpack.c.h.s8.bf16 %v1627
        %v3036 = vunpack.c.l.s8.bf16 %v1628
        %v3037 = vunpack.c.l.s8.bf16 %v1629
        %v3038 = vunpack.c.h.s8.bf16 %v1628
        %v3039 = vunpack.c.h.s8.bf16 %v1629
        %v3040 = vunpack.c.l.s8.bf16 %v1630
        %v3041 = vunpack.c.l.s8.bf16 %v1631
        %v3042 = vunpack.c.h.s8.bf16 %v1630
        %v3043 = vunpack.c.h.s8.bf16 %v1631
        %v3044 = vunpack.c.l.s8.bf16 %v1632
        %v3045 = vunpack.c.l.s8.bf16 %v1633
        %v3046 = vunpack.c.h.s8.bf16 %v1632
        %v3047 = vunpack.c.h.s8.bf16 %v1633
        %v3048 = vunpack.c.l.s8.bf16 %v1634
        %v3049 = vunpack.c.l.s8.bf16 %v1635
        %v3050 = vunpack.c.h.s8.bf16 %v1634
        %v3051 = vunpack.c.h.s8.bf16 %v1635
        %v3052 = vunpack.c.l.s8.bf16 %v1636
        %v3053 = vunpack.c.l.s8.bf16 %v1637
        %v3054 = vunpack.c.h.s8.bf16 %v1636
        %v3055 = vunpack.c.h.s8.bf16 %v1637
        %v3056 = vunpack.c.l.s8.bf16 %v1638
        %v3057 = vunpack.c.l.s8.bf16 %v1639
        %v3058 = vunpack.c.h.s8.bf16 %v1638
        %v3059 = vunpack.c.h.s8.bf16 %v1639
        %v3060 = vunpack.c.l.s8.bf16 %v1640
        %v3061 = vunpack.c.l.s8.bf16 %v1641
        %v3062 = vunpack.c.h.s8.bf16 %v1640
        %v3063 = vunpack.c.h.s8.bf16 %v1641
        %v3064 = vunpack.c.l.s8.bf16 %v1642
        %v3065 = vunpack.c.l.s8.bf16 %v1643
        %v3066 = vunpack.c.h.s8.bf16 %v1642
        %v3067 = vunpack.c.h.s8.bf16 %v1643
        %v3068 = vunpack.c.l.s8.bf16 %v1644
        %v3069 = vunpack.c.l.s8.bf16 %v1645
        %v3070 = vunpack.c.h.s8.bf16 %v1644
        %v3071 = vunpack.c.h.s8.bf16 %v1645
        %v3072 = vunpack.c.l.s8.bf16 %v1646
        %v3073 = vunpack.c.l.s8.bf16 %v1647
        %v3074 = vunpack.c.h.s8.bf16 %v1646
        %v3075 = vunpack.c.h.s8.bf16 %v1647
        %v3076 = vunpack.c.l.s8.bf16 %v1648
        %v3077 = vunpack.c.l.s8.bf16 %v1649
        %v3078 = vunpack.c.h.s8.bf16 %v1648
        %v3079 = vunpack.c.h.s8.bf16 %v1649
        %v3080 = vunpack.c.l.s8.bf16 %v1650
        %v3081 = vunpack.c.l.s8.bf16 %v1651
        %v3082 = vunpack.c.h.s8.bf16 %v1650
        %v3083 = vunpack.c.h.s8.bf16 %v1651
        %v3084 = vunpack.c.l.s8.bf16 %v1652
        %v3085 = vunpack.c.l.s8.bf16 %v1653
        %v3086 = vunpack.c.h.s8.bf16 %v1652
        %v3087 = vunpack.c.h.s8.bf16 %v1653
        %v3088 = vunpack.c.l.s8.bf16 %v1654
        %v3089 = vunpack.c.l.s8.bf16 %v1655
        %v3090 = vunpack.c.h.s8.bf16 %v1654
        %v3091 = vunpack.c.h.s8.bf16 %v1655
        %v3092 = vunpack.c.l.s8.bf16 %v1656
        %v3093 = vunpack.c.l.s8.bf16 %v1657
        %v3094 = vunpack.c.h.s8.bf16 %v1656
        %v3095 = vunpack.c.h.s8.bf16 %v1657
        %v3096 = vunpack.c.l.s8.bf16 %v1658
        %v3097 = vunpack.c.l.s8.bf16 %v1659
        %v3098 = vunpack.c.h.s8.bf16 %v1658
        %v3099 = vunpack.c.h.s8.bf16 %v1659
        %v3100 = vunpack.c.l.s8.bf16 %v1660
        %v3101 = vunpack.c.l.s8.bf16 %v1661
        %v3102 = vunpack.c.h.s8.bf16 %v1660
        %v3103 = vunpack.c.h.s8.bf16 %v1661
        %v3104 = vunpack.c.l.s8.bf16 %v1662
        %v3105 = vunpack.c.l.s8.bf16 %v1663
        %v3106 = vunpack.c.h.s8.bf16 %v1662
        %v3107 = vunpack.c.h.s8.bf16 %v1663
        %v3108 = vunpack.c.l.s8.bf16 %v1664
        %v3109 = vunpack.c.l.s8.bf16 %v1665
        %v3110 = vunpack.c.h.s8.bf16 %v1664
        %v3111 = vunpack.c.h.s8.bf16 %v1665
        %v3112 = vunpack.c.l.s8.bf16 %v1666
        %v3113 = vunpack.c.l.s8.bf16 %v1667
        %v3114 = vunpack.c.h.s8.bf16 %v1666
        %v3115 = vunpack.c.h.s8.bf16 %v1667
        %v3116 = vunpack.c.l.s8.bf16 %v1668
        %v3117 = vunpack.c.l.s8.bf16 %v1669
        %v3118 = vunpack.c.h.s8.bf16 %v1668
        %v3119 = vunpack.c.h.s8.bf16 %v1669
        %v3120 = vunpack.c.l.s8.bf16 %v1670
        %v3121 = vunpack.c.l.s8.bf16 %v1671
        %v3122 = vunpack.c.h.s8.bf16 %v1670
        %v3123 = vunpack.c.h.s8.bf16 %v1671
        %v3124 = vunpack.c.l.s8.bf16 %v1672
        %v3125 = vunpack.c.l.s8.bf16 %v1673
        %v3126 = vunpack.c.h.s8.bf16 %v1672
        %v3127 = vunpack.c.h.s8.bf16 %v1673
        %v3128 = vunpack.c.l.s8.bf16 %v1674
        %v3129 = vunpack.c.l.s8.bf16 %v1675
        %v3130 = vunpack.c.h.s8.bf16 %v1674
        %v3131 = vunpack.c.h.s8.bf16 %v1675
        %v3132 = vunpack.c.l.s8.bf16 %v1676
        %v3133 = vunpack.c.l.s8.bf16 %v1677
        %v3134 = vunpack.c.h.s8.bf16 %v1676
        %v3135 = vunpack.c.h.s8.bf16 %v1677
        %v3136 = vunpack.c.l.s8.bf16 %v1678
        %v3137 = vunpack.c.l.s8.bf16 %v1679
        %v3138 = vunpack.c.h.s8.bf16 %v1678
        %v3139 = vunpack.c.h.s8.bf16 %v1679
        %v3140 = vunpack.c.l.s8.bf16 %v1680
        %v3141 = vunpack.c.l.s8.bf16 %v1681
        %v3142 = vunpack.c.h.s8.bf16 %v1680
        %v3143 = vunpack.c.h.s8.bf16 %v1681
        %v3144 = vunpack.c.l.s8.bf16 %v1682
        %v3145 = vunpack.c.l.s8.bf16 %v1683
        %v3146 = vunpack.c.h.s8.bf16 %v1682
        %v3147 = vunpack.c.h.s8.bf16 %v1683
        %v3148 = vunpack.c.l.s8.bf16 %v1684
        %v3149 = vunpack.c.l.s8.bf16 %v1685
        %v3150 = vunpack.c.h.s8.bf16 %v1684
        %v3151 = vunpack.c.h.s8.bf16 %v1685
        %v3152 = vunpack.c.l.s8.bf16 %v1686
        %v3153 = vunpack.c.l.s8.bf16 %v1687
        %v3154 = vunpack.c.h.s8.bf16 %v1686
        %v3155 = vunpack.c.h.s8.bf16 %v1687
        %v3156 = vunpack.c.l.s8.bf16 %v1688
        %v3157 = vunpack.c.l.s8.bf16 %v1689
        %v3158 = vunpack.c.h.s8.bf16 %v1688
        %v3159 = vunpack.c.h.s8.bf16 %v1689
        %v3160 = vunpack.c.l.s8.bf16 %v1690
        %v3161 = vunpack.c.l.s8.bf16 %v1691
        %v3162 = vunpack.c.h.s8.bf16 %v1690
        %v3163 = vunpack.c.h.s8.bf16 %v1691
        %v3164 = vunpack.c.l.s8.bf16 %v1692
        %v3165 = vunpack.c.l.s8.bf16 %v1693
        %v3166 = vunpack.c.h.s8.bf16 %v1692
        %v3167 = vunpack.c.h.s8.bf16 %v1693
        %v3168 = vunpack.c.l.s8.bf16 %v1694
        %v3169 = vunpack.c.l.s8.bf16 %v1695
        %v3170 = vunpack.c.h.s8.bf16 %v1694
        %v3171 = vunpack.c.h.s8.bf16 %v1695
        %v3172 = vunpack.c.l.s8.bf16 %v1696
        %v3173 = vunpack.c.l.s8.bf16 %v1697
        %v3174 = vunpack.c.h.s8.bf16 %v1696
        %v3175 = vunpack.c.h.s8.bf16 %v1697
        %v3176 = vunpack.c.l.s8.bf16 %v1698
        %v3177 = vunpack.c.l.s8.bf16 %v1699
        %v3178 = vunpack.c.h.s8.bf16 %v1698
        %v3179 = vunpack.c.h.s8.bf16 %v1699
        %v3180 = vunpack.c.l.s8.bf16 %v1700
        %v3181 = vunpack.c.l.s8.bf16 %v1701
        %v3182 = vunpack.c.h.s8.bf16 %v1700
        %v3183 = vunpack.c.h.s8.bf16 %v1701
        %v3184 = vunpack.c.l.s8.bf16 %v1702
        %v3185 = vunpack.c.l.s8.bf16 %v1703
        %v3186 = vunpack.c.h.s8.bf16 %v1702
        %v3187 = vunpack.c.h.s8.bf16 %v1703
        %v3188 = vunpack.c.l.s8.bf16 %v1704
        %v3189 = vunpack.c.l.s8.bf16 %v1705
        %v3190 = vunpack.c.h.s8.bf16 %v1704
        %v3191 = vunpack.c.h.s8.bf16 %v1705
        %v3192 = vunpack.c.l.s8.bf16 %v1706
        %v3193 = vunpack.c.l.s8.bf16 %v1707
        %v3194 = vunpack.c.h.s8.bf16 %v1706
        %v3195 = vunpack.c.h.s8.bf16 %v1707
        %v3196 = vunpack.c.l.s8.bf16 %v1708
        %v3197 = vunpack.c.l.s8.bf16 %v1709
        %v3198 = vunpack.c.h.s8.bf16 %v1708
        %v3199 = vunpack.c.h.s8.bf16 %v1709
        %v3200 = vunpack.c.l.s8.bf16 %v1710
        %v3201 = vunpack.c.l.s8.bf16 %v1711
        %v3202 = vunpack.c.h.s8.bf16 %v1710
        %v3203 = vunpack.c.h.s8.bf16 %v1711
        %v3204 = vunpack.c.l.s8.bf16 %v1712
        %v3205 = vunpack.c.l.s8.bf16 %v1713
        %v3206 = vunpack.c.h.s8.bf16 %v1712
        %v3207 = vunpack.c.h.s8.bf16 %v1713
        %v3208 = vunpack.c.l.s8.bf16 %v1714
        %v3209 = vunpack.c.l.s8.bf16 %v1715
        %v3210 = vunpack.c.h.s8.bf16 %v1714
        %v3211 = vunpack.c.h.s8.bf16 %v1715
        %v3212 = vunpack.c.l.s8.bf16 %v1716
        %v3213 = vunpack.c.l.s8.bf16 %v1717
        %v3214 = vunpack.c.h.s8.bf16 %v1716
        %v3215 = vunpack.c.h.s8.bf16 %v1717
        %v3216 = vunpack.c.l.s8.bf16 %v1718
        %v3217 = vunpack.c.l.s8.bf16 %v1719
        %v3218 = vunpack.c.h.s8.bf16 %v1718
        %v3219 = vunpack.c.h.s8.bf16 %v1719
        %v3220 = vunpack.c.l.s8.bf16 %v1720
        %v3221 = vunpack.c.l.s8.bf16 %v1721
        %v3222 = vunpack.c.h.s8.bf16 %v1720
        %v3223 = vunpack.c.h.s8.bf16 %v1721
        %v3224 = vunpack.c.l.s8.bf16 %v1722
        %v3225 = vunpack.c.l.s8.bf16 %v1723
        %v3226 = vunpack.c.h.s8.bf16 %v1722
        %v3227 = vunpack.c.h.s8.bf16 %v1723
        %v3228 = vunpack.c.l.s8.bf16 %v1724
        %v3229 = vunpack.c.l.s8.bf16 %v1725
        %v3230 = vunpack.c.h.s8.bf16 %v1724
        %v3231 = vunpack.c.h.s8.bf16 %v1725
        %v3232 = vunpack.c.l.s8.bf16 %v1726
        %v3233 = vunpack.c.l.s8.bf16 %v1727
        %v3234 = vunpack.c.h.s8.bf16 %v1726
        %v3235 = vunpack.c.h.s8.bf16 %v1727
        %v3236 = vunpack.c.l.s8.bf16 %v1728
        %v3237 = vunpack.c.l.s8.bf16 %v1729
        %v3238 = vunpack.c.h.s8.bf16 %v1728
        %v3239 = vunpack.c.h.s8.bf16 %v1729
        %v3240 = vunpack.c.l.s8.bf16 %v1730
        %v3241 = vunpack.c.l.s8.bf16 %v1731
        %v3242 = vunpack.c.h.s8.bf16 %v1730
        %v3243 = vunpack.c.h.s8.bf16 %v1731
        %v3244 = vunpack.c.l.s8.bf16 %v1732
        %v3245 = vunpack.c.l.s8.bf16 %v1733
        %v3246 = vunpack.c.h.s8.bf16 %v1732
        %v3247 = vunpack.c.h.s8.bf16 %v1733
        %v3248 = vunpack.c.l.s8.bf16 %v1734
        %v3249 = vunpack.c.l.s8.bf16 %v1735
        %v3250 = vunpack.c.h.s8.bf16 %v1734
        %v3251 = vunpack.c.h.s8.bf16 %v1735
        %v3252 = vunpack.c.l.s8.bf16 %v1736
        %v3253 = vunpack.c.l.s8.bf16 %v1737
        %v3254 = vunpack.c.h.s8.bf16 %v1736
        %v3255 = vunpack.c.h.s8.bf16 %v1737
        %v3256 = vunpack.c.l.s8.bf16 %v1738
        %v3257 = vunpack.c.l.s8.bf16 %v1739
        %v3258 = vunpack.c.h.s8.bf16 %v1738
        %v3259 = vunpack.c.h.s8.bf16 %v1739
        %v3260 = vunpack.c.l.s8.bf16 %v1740
        %v3261 = vunpack.c.l.s8.bf16 %v1741
        %v3262 = vunpack.c.h.s8.bf16 %v1740
        %v3263 = vunpack.c.h.s8.bf16 %v1741
        %v3264 = vunpack.c.l.s8.bf16 %v1742
        %v3265 = vunpack.c.l.s8.bf16 %v1743
        %v3266 = vunpack.c.h.s8.bf16 %v1742
        %v3267 = vunpack.c.h.s8.bf16 %v1743
        %v3268 = vunpack.c.l.s8.bf16 %v1744
        %v3269 = vunpack.c.l.s8.bf16 %v1745
        %v3270 = vunpack.c.h.s8.bf16 %v1744
        %v3271 = vunpack.c.h.s8.bf16 %v1745
        %v3272 = vunpack.c.l.s8.bf16 %v1746
        %v3273 = vunpack.c.l.s8.bf16 %v1747
        %v3274 = vunpack.c.h.s8.bf16 %v1746
        %v3275 = vunpack.c.h.s8.bf16 %v1747
        %v3276 = vunpack.c.l.s8.bf16 %v1748
        %v3277 = vunpack.c.l.s8.bf16 %v1749
        %v3278 = vunpack.c.h.s8.bf16 %v1748
        %v3279 = vunpack.c.h.s8.bf16 %v1749
        %v3280 = vunpack.c.l.s8.bf16 %v1750
        %v3281 = vunpack.c.l.s8.bf16 %v1751
        %v3282 = vunpack.c.h.s8.bf16 %v1750
        %v3283 = vunpack.c.h.s8.bf16 %v1751
        %v3284 = vunpack.c.l.s8.bf16 %v1752
        %v3285 = vunpack.c.l.s8.bf16 %v1753
        %v3286 = vunpack.c.h.s8.bf16 %v1752
        %v3287 = vunpack.c.h.s8.bf16 %v1753
        %v3288 = vunpack.c.l.s8.bf16 %v1754
        %v3289 = vunpack.c.l.s8.bf16 %v1755
        %v3290 = vunpack.c.h.s8.bf16 %v1754
        %v3291 = vunpack.c.h.s8.bf16 %v1755
        %v3292 = vunpack.c.l.s8.bf16 %v1756
        %v3293 = vunpack.c.l.s8.bf16 %v1757
        %v3294 = vunpack.c.h.s8.bf16 %v1756
        %v3295 = vunpack.c.h.s8.bf16 %v1757
        %v3296 = vunpack.c.l.s8.bf16 %v1758
        %v3297 = vunpack.c.l.s8.bf16 %v1759
        %v3298 = vunpack.c.h.s8.bf16 %v1758
        %v3299 = vunpack.c.h.s8.bf16 %v1759
        %v3300 = vunpack.c.l.s8.bf16 %v1760
        %v3301 = vunpack.c.l.s8.bf16 %v1761
        %v3302 = vunpack.c.h.s8.bf16 %v1760
        %v3303 = vunpack.c.h.s8.bf16 %v1761
        %v3304 = vunpack.c.l.s8.bf16 %v1762
        %v3305 = vunpack.c.l.s8.bf16 %v1763
        %v3306 = vunpack.c.h.s8.bf16 %v1762
        %v3307 = vunpack.c.h.s8.bf16 %v1763
        %v3308 = vunpack.c.l.s8.bf16 %v1764
        %v3309 = vunpack.c.l.s8.bf16 %v1765
        %v3310 = vunpack.c.h.s8.bf16 %v1764
        %v3311 = vunpack.c.h.s8.bf16 %v1765
        %v3312 = vunpack.c.l.s8.bf16 %v1766
        %v3313 = vunpack.c.l.s8.bf16 %v1767
        %v3314 = vunpack.c.h.s8.bf16 %v1766
        %v3315 = vunpack.c.h.s8.bf16 %v1767
        %v3316 = vunpack.c.l.s8.bf16 %v1768
        %v3317 = vunpack.c.l.s8.bf16 %v1769
        %v3318 = vunpack.c.h.s8.bf16 %v1768
        %v3319 = vunpack.c.h.s8.bf16 %v1769
        %v3320 = vunpack.c.l.s8.bf16 %v1770
        %v3321 = vunpack.c.l.s8.bf16 %v1771
        %v3322 = vunpack.c.h.s8.bf16 %v1770
        %v3323 = vunpack.c.h.s8.bf16 %v1771
        %v3324 = vunpack.c.l.s8.bf16 %v1772
        %v3325 = vunpack.c.l.s8.bf16 %v1773
        %v3326 = vunpack.c.h.s8.bf16 %v1772
        %v3327 = vunpack.c.h.s8.bf16 %v1773
        %v3328 = vunpack.c.l.s8.bf16 %v1774
        %v3329 = vunpack.c.l.s8.bf16 %v1775
        %v3330 = vunpack.c.h.s8.bf16 %v1774
        %v3331 = vunpack.c.h.s8.bf16 %v1775
        %v3332 = vunpack.c.l.s8.bf16 %v1776
        %v3333 = vunpack.c.l.s8.bf16 %v1777
        %v3334 = vunpack.c.h.s8.bf16 %v1776
        %v3335 = vunpack.c.h.s8.bf16 %v1777
        %v3336 = vunpack.c.l.s8.bf16 %v1778
        %v3337 = vunpack.c.l.s8.bf16 %v1779
        %v3338 = vunpack.c.h.s8.bf16 %v1778
        %v3339 = vunpack.c.h.s8.bf16 %v1779
        %v3340 = vunpack.c.l.s8.bf16 %v1780
        %v3341 = vunpack.c.l.s8.bf16 %v1781
        %v3342 = vunpack.c.h.s8.bf16 %v1780
        %v3343 = vunpack.c.h.s8.bf16 %v1781
        %v3344 = vunpack.c.l.s8.bf16 %v1782
        %v3345 = vunpack.c.l.s8.bf16 %v1783
        %v3346 = vunpack.c.h.s8.bf16 %v1782
        %v3347 = vunpack.c.h.s8.bf16 %v1783
        %v3348 = vunpack.c.l.s8.bf16 %v1784
        %v3349 = vunpack.c.l.s8.bf16 %v1785
        %v3350 = vunpack.c.h.s8.bf16 %v1784
        %v3351 = vunpack.c.h.s8.bf16 %v1785
        %v3352 = vunpack.c.l.s8.bf16 %v1786
        %v3353 = vunpack.c.l.s8.bf16 %v1787
        %v3354 = vunpack.c.h.s8.bf16 %v1786
        %v3355 = vunpack.c.h.s8.bf16 %v1787
        %v3356 = vunpack.c.l.s8.bf16 %v1788
        %v3357 = vunpack.c.l.s8.bf16 %v1789
        %v3358 = vunpack.c.h.s8.bf16 %v1788
        %v3359 = vunpack.c.h.s8.bf16 %v1789
        %v3360 = vunpack.c.l.s8.bf16 %v1790
        %v3361 = vunpack.c.l.s8.bf16 %v1791
        %v3362 = vunpack.c.h.s8.bf16 %v1790
        %v3363 = vunpack.c.h.s8.bf16 %v1791
        %v3364 = vunpack.c.l.s8.bf16 %v1792
        %v3365 = vunpack.c.l.s8.bf16 %v1793
        %v3366 = vunpack.c.h.s8.bf16 %v1792
        %v3367 = vunpack.c.h.s8.bf16 %v1793
        %v3368 = vunpack.c.l.s8.bf16 %v1794
        %v3369 = vunpack.c.l.s8.bf16 %v1795
        %v3370 = vunpack.c.h.s8.bf16 %v1794
        %v3371 = vunpack.c.h.s8.bf16 %v1795
        %v3372 = vunpack.c.l.s8.bf16 %v1796
        %v3373 = vunpack.c.l.s8.bf16 %v1797
        %v3374 = vunpack.c.h.s8.bf16 %v1796
        %v3375 = vunpack.c.h.s8.bf16 %v1797
        %v3376 = vunpack.c.l.s8.bf16 %v1798
        %v3377 = vunpack.c.l.s8.bf16 %v1799
        %v3378 = vunpack.c.h.s8.bf16 %v1798
        %v3379 = vunpack.c.h.s8.bf16 %v1799
        %v3380 = vunpack.c.l.s8.bf16 %v1800
        %v3381 = vunpack.c.l.s8.bf16 %v1801
        %v3382 = vunpack.c.h.s8.bf16 %v1800
        %v3383 = vunpack.c.h.s8.bf16 %v1801
        %v3384 = vunpack.c.l.s8.bf16 %v1802
        %v3385 = vunpack.c.l.s8.bf16 %v1803
        %v3386 = vunpack.c.h.s8.bf16 %v1802
        %v3387 = vunpack.c.h.s8.bf16 %v1803
        %v3388 = vunpack.c.l.s8.bf16 %v1804
        %v3389 = vunpack.c.l.s8.bf16 %v1805
        %v3390 = vunpack.c.h.s8.bf16 %v1804
        %v3391 = vunpack.c.h.s8.bf16 %v1805
        %v3392 = vunpack.c.l.s8.bf16 %v1806
        %v3393 = vunpack.c.l.s8.bf16 %v1807
        %v3394 = vunpack.c.h.s8.bf16 %v1806
        %v3395 = vunpack.c.h.s8.bf16 %v1807
        %v3396 = vunpack.c.l.s8.bf16 %v1808
        %v3397 = vunpack.c.l.s8.bf16 %v1809
        %v3398 = vunpack.c.h.s8.bf16 %v1808
        %v3399 = vunpack.c.h.s8.bf16 %v1809
        %v3400 = vunpack.c.l.s8.bf16 %v1810
        %v3401 = vunpack.c.l.s8.bf16 %v1811
        %v3402 = vunpack.c.h.s8.bf16 %v1810
        %v3403 = vunpack.c.h.s8.bf16 %v1811
        %v3404 = vunpack.c.l.s8.bf16 %v1812
        %v3405 = vunpack.c.l.s8.bf16 %v1813
        %v3406 = vunpack.c.h.s8.bf16 %v1812
        %v3407 = vunpack.c.h.s8.bf16 %v1813
        %v3408 = vunpack.c.l.s8.bf16 %v1814
        %v3409 = vunpack.c.l.s8.bf16 %v1815
        %v3410 = vunpack.c.h.s8.bf16 %v1814
        %v3411 = vunpack.c.h.s8.bf16 %v1815
        %v3412 = vunpack.c.l.s8.bf16 %v1816
        %v3413 = vunpack.c.l.s8.bf16 %v1817
        %v3414 = vunpack.c.h.s8.bf16 %v1816
        %v3415 = vunpack.c.h.s8.bf16 %v1817
        %v3416 = vunpack.c.l.s8.bf16 %v1818
        %v3417 = vunpack.c.l.s8.bf16 %v1819
        %v3418 = vunpack.c.h.s8.bf16 %v1818
        %v3419 = vunpack.c.h.s8.bf16 %v1819
        %v3420 = vunpack.c.l.s8.bf16 %v1820
        %v3421 = vunpack.c.l.s8.bf16 %v1821
        %v3422 = vunpack.c.h.s8.bf16 %v1820
        %v3423 = vunpack.c.h.s8.bf16 %v1821
        %v3424 = vunpack.c.l.s8.bf16 %v1822
        %v3425 = vunpack.c.l.s8.bf16 %v1823
        %v3426 = vunpack.c.h.s8.bf16 %v1822
        %v3427 = vunpack.c.h.s8.bf16 %v1823
        %v3428 = vunpack.c.l.s8.bf16 %v1824
        %v3429 = vunpack.c.l.s8.bf16 %v1825
        %v3430 = vunpack.c.h.s8.bf16 %v1824
        %v3431 = vunpack.c.h.s8.bf16 %v1825
        %v3432 = vunpack.c.l.s8.bf16 %v1826
        %v3433 = vunpack.c.l.s8.bf16 %v1827
        %v3434 = vunpack.c.h.s8.bf16 %v1826
        %v3435 = vunpack.c.h.s8.bf16 %v1827
        %v3436 = vunpack.c.l.s8.bf16 %v1828
        %v3437 = vunpack.c.l.s8.bf16 %v1829
        %v3438 = vunpack.c.h.s8.bf16 %v1828
        %v3439 = vunpack.c.h.s8.bf16 %v1829
        %v3440 = vunpack.c.l.s8.bf16 %v1830
        %v3441 = vunpack.c.l.s8.bf16 %v1831
        %v3442 = vunpack.c.h.s8.bf16 %v1830
        %v3443 = vunpack.c.h.s8.bf16 %v1831
        %v3444 = vunpack.c.l.s8.bf16 %v1832
        %v3445 = vunpack.c.l.s8.bf16 %v1833
        %v3446 = vunpack.c.h.s8.bf16 %v1832
        %v3447 = vunpack.c.h.s8.bf16 %v1833
        %v3448 = vunpack.c.l.s8.bf16 %v1834
        %v3449 = vunpack.c.l.s8.bf16 %v1835
        %v3450 = vunpack.c.h.s8.bf16 %v1834
        %v3451 = vunpack.c.h.s8.bf16 %v1835
        %v3452 = vunpack.c.l.s8.bf16 %v1836
        %v3453 = vunpack.c.l.s8.bf16 %v1837
        %v3454 = vunpack.c.h.s8.bf16 %v1836
        %v3455 = vunpack.c.h.s8.bf16 %v1837
        %v3456 = vunpack.c.l.s8.bf16 %v1838
        %v3457 = vunpack.c.l.s8.bf16 %v1839
        %v3458 = vunpack.c.h.s8.bf16 %v1838
        %v3459 = vunpack.c.h.s8.bf16 %v1839
        %v3460 = vunpack.c.l.s8.bf16 %v1840
        %v3461 = vunpack.c.l.s8.bf16 %v1841
        %v3462 = vunpack.c.h.s8.bf16 %v1840
        %v3463 = vunpack.c.h.s8.bf16 %v1841
        %v3464 = vunpack.c.l.s8.bf16 %v1842
        %v3465 = vunpack.c.l.s8.bf16 %v1843
        %v3466 = vunpack.c.h.s8.bf16 %v1842
        %v3467 = vunpack.c.h.s8.bf16 %v1843
        %v3468 = vunpack.c.l.s8.bf16 %v1844
        %v3469 = vunpack.c.l.s8.bf16 %v1845
        %v3470 = vunpack.c.h.s8.bf16 %v1844
        %v3471 = vunpack.c.h.s8.bf16 %v1845
        %v3472 = vunpack.c.l.s8.bf16 %v1846
        %v3473 = vunpack.c.l.s8.bf16 %v1847
        %v3474 = vunpack.c.h.s8.bf16 %v1846
        %v3475 = vunpack.c.h.s8.bf16 %v1847
        %v3476 = vunpack.c.l.s8.bf16 %v1848
        %v3477 = vunpack.c.l.s8.bf16 %v1849
        %v3478 = vunpack.c.h.s8.bf16 %v1848
        %v3479 = vunpack.c.h.s8.bf16 %v1849
        %v3480 = vunpack.c.l.s8.bf16 %v1850
        %v3481 = vunpack.c.l.s8.bf16 %v1851
        %v3482 = vunpack.c.h.s8.bf16 %v1850
        %v3483 = vunpack.c.h.s8.bf16 %v1851
        %v3484 = vunpack.c.l.s8.bf16 %v1852
        %v3485 = vunpack.c.l.s8.bf16 %v1853
        %v3486 = vunpack.c.h.s8.bf16 %v1852
        %v3487 = vunpack.c.h.s8.bf16 %v1853
        %v3488 = vunpack.c.l.s8.bf16 %v1854
        %v3489 = vunpack.c.l.s8.bf16 %v1855
        %v3490 = vunpack.c.h.s8.bf16 %v1854
        %v3491 = vunpack.c.h.s8.bf16 %v1855
        %v3492 = vunpack.c.l.s8.bf16 %v1856
        %v3493 = vunpack.c.l.s8.bf16 %v1857
        %v3494 = vunpack.c.h.s8.bf16 %v1856
        %v3495 = vunpack.c.h.s8.bf16 %v1857
        %v3496 = vunpack.c.l.s8.bf16 %v1858
        %v3497 = vunpack.c.l.s8.bf16 %v1859
        %v3498 = vunpack.c.h.s8.bf16 %v1858
        %v3499 = vunpack.c.h.s8.bf16 %v1859
        %v3500 = vunpack.c.l.s8.bf16 %v1860
        %v3501 = vunpack.c.l.s8.bf16 %v1861
        %v3502 = vunpack.c.h.s8.bf16 %v1860
        %v3503 = vunpack.c.h.s8.bf16 %v1861
        %v3504 = vunpack.c.l.s8.bf16 %v1862
        %v3505 = vunpack.c.l.s8.bf16 %v1863
        %v3506 = vunpack.c.h.s8.bf16 %v1862
        %v3507 = vunpack.c.h.s8.bf16 %v1863
        %v3508 = vunpack.c.l.s8.bf16 %v1864
        %v3509 = vunpack.c.l.s8.bf16 %v1865
        %v3510 = vunpack.c.h.s8.bf16 %v1864
        %v3511 = vunpack.c.h.s8.bf16 %v1865
        %v3512 = vunpack.c.l.s8.bf16 %v1866
        %v3513 = vunpack.c.l.s8.bf16 %v1867
        %v3514 = vunpack.c.h.s8.bf16 %v1866
        %v3515 = vunpack.c.h.s8.bf16 %v1867
        %v3516 = vunpack.c.l.s8.bf16 %v1868
        %v3517 = vunpack.c.l.s8.bf16 %v1869
        %v3518 = vunpack.c.h.s8.bf16 %v1868
        %v3519 = vunpack.c.h.s8.bf16 %v1869
        %v3520 = vunpack.c.l.s8.bf16 %v1870
        %v3521 = vunpack.c.l.s8.bf16 %v1871
        %v3522 = vunpack.c.h.s8.bf16 %v1870
        %v3523 = vunpack.c.h.s8.bf16 %v1871
        %v3524 = vunpack.c.l.s8.bf16 %v1872
        %v3525 = vunpack.c.l.s8.bf16 %v1873
        %v3526 = vunpack.c.h.s8.bf16 %v1872
        %v3527 = vunpack.c.h.s8.bf16 %v1873
        %v3528 = vunpack.c.l.s8.bf16 %v1874
        %v3529 = vunpack.c.l.s8.bf16 %v1875
        %v3530 = vunpack.c.h.s8.bf16 %v1874
        %v3531 = vunpack.c.h.s8.bf16 %v1875
        %v3532 = vunpack.c.l.s8.bf16 %v1876
        %v3533 = vunpack.c.l.s8.bf16 %v1877
        %v3534 = vunpack.c.h.s8.bf16 %v1876
        %v3535 = vunpack.c.h.s8.bf16 %v1877
        %v3536 = vunpack.c.l.s8.bf16 %v1878
        %v3537 = vunpack.c.l.s8.bf16 %v1879
        %v3538 = vunpack.c.h.s8.bf16 %v1878
        %v3539 = vunpack.c.h.s8.bf16 %v1879
        %v3540 = vunpack.c.l.s8.bf16 %v1880
        %v3541 = vunpack.c.l.s8.bf16 %v1881
        %v3542 = vunpack.c.h.s8.bf16 %v1880
        %v3543 = vunpack.c.h.s8.bf16 %v1881
        %v3544 = vunpack.c.l.s8.bf16 %v1882
        %v3545 = vunpack.c.l.s8.bf16 %v1883
        %v3546 = vunpack.c.h.s8.bf16 %v1882
        %v3547 = vunpack.c.h.s8.bf16 %v1883
        %v3548 = vunpack.c.l.s8.bf16 %v1884
        %v3549 = vunpack.c.l.s8.bf16 %v1885
        %v3550 = vunpack.c.h.s8.bf16 %v1884
        %v3551 = vunpack.c.h.s8.bf16 %v1885
        %v3552 = vunpack.c.l.s8.bf16 %v1886
        %v3553 = vunpack.c.l.s8.bf16 %v1887
        %v3554 = vunpack.c.h.s8.bf16 %v1886
        %v3555 = vunpack.c.h.s8.bf16 %v1887
        %v3556 = vunpack.c.l.s8.bf16 %v1888
        %v3557 = vunpack.c.l.s8.bf16 %v1889
        %v3558 = vunpack.c.h.s8.bf16 %v1888
        %v3559 = vunpack.c.h.s8.bf16 %v1889
        %v3560 = vunpack.c.l.s8.bf16 %v1890
        %v3561 = vunpack.c.l.s8.bf16 %v1891
        %v3562 = vunpack.c.h.s8.bf16 %v1890
        %v3563 = vunpack.c.h.s8.bf16 %v1891
        %v3564 = vunpack.c.l.s8.bf16 %v1892
        %v3565 = vunpack.c.l.s8.bf16 %v1893
        %v3566 = vunpack.c.h.s8.bf16 %v1892
        %v3567 = vunpack.c.h.s8.bf16 %v1893
        %v3568 = vunpack.c.l.s8.bf16 %v1894
        %v3569 = vunpack.c.l.s8.bf16 %v1895
        %v3570 = vunpack.c.h.s8.bf16 %v1894
        %v3571 = vunpack.c.h.s8.bf16 %v1895
        %v3572 = vunpack.c.l.s8.bf16 %v1896
        %v3573 = vunpack.c.l.s8.bf16 %v1897
        %v3574 = vunpack.c.h.s8.bf16 %v1896
        %v3575 = vunpack.c.h.s8.bf16 %v1897
        %v3576 = vunpack.c.l.s8.bf16 %v1898
        %v3577 = vunpack.c.l.s8.bf16 %v1899
        %v3578 = vunpack.c.h.s8.bf16 %v1898
        %v3579 = vunpack.c.h.s8.bf16 %v1899
        %v3580 = vunpack.c.l.s8.bf16 %v1900
        %v3581 = vunpack.c.l.s8.bf16 %v1901
        %v3582 = vunpack.c.h.s8.bf16 %v1900
        %v3583 = vunpack.c.h.s8.bf16 %v1901
        %v3584 = vunpack.c.l.s8.bf16 %v1902
        %v3585 = vunpack.c.l.s8.bf16 %v1903
        %v3586 = vunpack.c.h.s8.bf16 %v1902
        %v3587 = vunpack.c.h.s8.bf16 %v1903
        %v3588 = vunpack.c.l.s8.bf16 %v1904
        %v3589 = vunpack.c.l.s8.bf16 %v1905
        %v3590 = vunpack.c.h.s8.bf16 %v1904
        %v3591 = vunpack.c.h.s8.bf16 %v1905
        %v3592 = vunpack.c.l.s8.bf16 %v1906
        %v3593 = vunpack.c.l.s8.bf16 %v1907
        %v3594 = vunpack.c.h.s8.bf16 %v1906
        %v3595 = vunpack.c.h.s8.bf16 %v1907
        %v3596 = vunpack.c.l.s8.bf16 %v1908
        %v3597 = vunpack.c.l.s8.bf16 %v1909
        %v3598 = vunpack.c.h.s8.bf16 %v1908
        %v3599 = vunpack.c.h.s8.bf16 %v1909
        %v3600 = vunpack.c.l.s8.bf16 %v1910
        %v3601 = vunpack.c.l.s8.bf16 %v1911
        %v3602 = vunpack.c.h.s8.bf16 %v1910
        %v3603 = vunpack.c.h.s8.bf16 %v1911
        %v3604 = vunpack.c.l.s8.bf16 %v1912
        %v3605 = vunpack.c.l.s8.bf16 %v1913
        %v3606 = vunpack.c.h.s8.bf16 %v1912
        %v3607 = vunpack.c.h.s8.bf16 %v1913
        %v3608 = vunpack.c.l.s8.bf16 %v1914
        %v3609 = vunpack.c.l.s8.bf16 %v1915
        %v3610 = vunpack.c.h.s8.bf16 %v1914
        %v3611 = vunpack.c.h.s8.bf16 %v1915
        %v3612 = vunpack.c.l.s8.bf16 %v1916
        %v3613 = vunpack.c.l.s8.bf16 %v1917
        %v3614 = vunpack.c.h.s8.bf16 %v1916
        %v3615 = vunpack.c.h.s8.bf16 %v1917
        %v3616 = vunpack.c.l.s8.bf16 %v1918
        %v3617 = vunpack.c.l.s8.bf16 %v1919
        %v3618 = vunpack.c.h.s8.bf16 %v1918
        %v3619 = vunpack.c.h.s8.bf16 %v1919
        %v3620 = vunpack.c.l.s8.bf16 %v1920
        %v3621 = vunpack.c.l.s8.bf16 %v1921
        %v3622 = vunpack.c.h.s8.bf16 %v1920
        %v3623 = vunpack.c.h.s8.bf16 %v1921
        %v3624 = vunpack.c.l.s8.bf16 %v1922
        %v3625 = vunpack.c.l.s8.bf16 %v1923
        %v3626 = vunpack.c.h.s8.bf16 %v1922
        %v3627 = vunpack.c.h.s8.bf16 %v1923
        %v3628 = vunpack.c.l.s8.bf16 %v1924
        %v3629 = vunpack.c.l.s8.bf16 %v1925
        %v3630 = vunpack.c.h.s8.bf16 %v1924
        %v3631 = vunpack.c.h.s8.bf16 %v1925
        %v3632 = vunpack.c.l.s8.bf16 %v1926
        %v3633 = vunpack.c.l.s8.bf16 %v1927
        %v3634 = vunpack.c.h.s8.bf16 %v1926
        %v3635 = vunpack.c.h.s8.bf16 %v1927
        %v3636 = vunpack.c.l.s8.bf16 %v1928
        %v3637 = vunpack.c.l.s8.bf16 %v1929
        %v3638 = vunpack.c.h.s8.bf16 %v1928
        %v3639 = vunpack.c.h.s8.bf16 %v1929
        %v3640 = vunpack.c.l.s8.bf16 %v1930
        %v3641 = vunpack.c.l.s8.bf16 %v1931
        %v3642 = vunpack.c.h.s8.bf16 %v1930
        %v3643 = vunpack.c.h.s8.bf16 %v1931
        %v3644 = vunpack.c.l.s8.bf16 %v1932
        %v3645 = vunpack.c.l.s8.bf16 %v1933
        %v3646 = vunpack.c.h.s8.bf16 %v1932
        %v3647 = vunpack.c.h.s8.bf16 %v1933
        %v3648 = vunpack.c.l.s8.bf16 %v1934
        %v3649 = vunpack.c.l.s8.bf16 %v1935
        %v3650 = vunpack.c.h.s8.bf16 %v1934
        %v3651 = vunpack.c.h.s8.bf16 %v1935
        %v3652 = vunpack.c.l.s8.bf16 %v1936
        %v3653 = vunpack.c.l.s8.bf16 %v1937
        %v3654 = vunpack.c.h.s8.bf16 %v1936
        %v3655 = vunpack.c.h.s8.bf16 %v1937
        %v3656 = vunpack.c.l.s8.bf16 %v1938
        %v3657 = vunpack.c.l.s8.bf16 %v1939
        %v3658 = vunpack.c.h.s8.bf16 %v1938
        %v3659 = vunpack.c.h.s8.bf16 %v1939
        %v3660 = vunpack.c.l.s8.bf16 %v1940
        %v3661 = vunpack.c.l.s8.bf16 %v1941
        %v3662 = vunpack.c.h.s8.bf16 %v1940
        %v3663 = vunpack.c.h.s8.bf16 %v1941
        %v3664 = vunpack.c.l.s8.bf16 %v1942
        %v3665 = vunpack.c.l.s8.bf16 %v1943
        %v3666 = vunpack.c.h.s8.bf16 %v1942
        %v3667 = vunpack.c.h.s8.bf16 %v1943
        %v3668 = vunpack.c.l.s8.bf16 %v1944
        %v3669 = vunpack.c.l.s8.bf16 %v1945
        %v3670 = vunpack.c.h.s8.bf16 %v1944
        %v3671 = vunpack.c.h.s8.bf16 %v1945
        %v3672 = vunpack.c.l.s8.bf16 %v1946
        %v3673 = vunpack.c.l.s8.bf16 %v1947
        %v3674 = vunpack.c.h.s8.bf16 %v1946
        %v3675 = vunpack.c.h.s8.bf16 %v1947
        %v3676 = vunpack.c.l.s8.bf16 %v1948
        %v3677 = vunpack.c.l.s8.bf16 %v1949
        %v3678 = vunpack.c.h.s8.bf16 %v1948
        %v3679 = vunpack.c.h.s8.bf16 %v1949
        %v3680 = vunpack.c.l.s8.bf16 %v1950
        %v3681 = vunpack.c.l.s8.bf16 %v1951
        %v3682 = vunpack.c.h.s8.bf16 %v1950
        %v3683 = vunpack.c.h.s8.bf16 %v1951
        %v3684 = vunpack.c.l.s8.bf16 %v1952
        %v3685 = vunpack.c.l.s8.bf16 %v1953
        %v3686 = vunpack.c.h.s8.bf16 %v1952
        %v3687 = vunpack.c.h.s8.bf16 %v1953
        %v3688 = vunpack.c.l.s8.bf16 %v1954
        %v3689 = vunpack.c.l.s8.bf16 %v1955
        %v3690 = vunpack.c.h.s8.bf16 %v1954
        %v3691 = vunpack.c.h.s8.bf16 %v1955
        %v3692 = vunpack.c.l.s8.bf16 %v1956
        %v3693 = vunpack.c.l.s8.bf16 %v1957
        %v3694 = vunpack.c.h.s8.bf16 %v1956
        %v3695 = vunpack.c.h.s8.bf16 %v1957
        %v3696 = vunpack.c.l.s8.bf16 %v1958
        %v3697 = vunpack.c.l.s8.bf16 %v1959
        %v3698 = vunpack.c.h.s8.bf16 %v1958
        %v3699 = vunpack.c.h.s8.bf16 %v1959
        %v3700 = vunpack.c.l.s8.bf16 %v1960
        %v3701 = vunpack.c.l.s8.bf16 %v1961
        %v3702 = vunpack.c.h.s8.bf16 %v1960
        %v3703 = vunpack.c.h.s8.bf16 %v1961
        %v3704 = vunpack.c.l.s8.bf16 %v1962
        %v3705 = vunpack.c.l.s8.bf16 %v1963
        %v3706 = vunpack.c.h.s8.bf16 %v1962
        %v3707 = vunpack.c.h.s8.bf16 %v1963
        %v3708 = vunpack.c.l.s8.bf16 %v1964
        %v3709 = vunpack.c.l.s8.bf16 %v1965
        %v3710 = vunpack.c.h.s8.bf16 %v1964
        %v3711 = vunpack.c.h.s8.bf16 %v1965
        %v3712 = vunpack.c.l.s8.bf16 %v1966
        %v3713 = vunpack.c.l.s8.bf16 %v1967
        %v3714 = vunpack.c.h.s8.bf16 %v1966
        %v3715 = vunpack.c.h.s8.bf16 %v1967
        %v3716 = vunpack.c.l.s8.bf16 %v1968
        %v3717 = vunpack.c.l.s8.bf16 %v1969
        %v3718 = vunpack.c.h.s8.bf16 %v1968
        %v3719 = vunpack.c.h.s8.bf16 %v1969
        %v3720 = vunpack.c.l.s8.bf16 %v1970
        %v3721 = vunpack.c.l.s8.bf16 %v1971
        %v3722 = vunpack.c.h.s8.bf16 %v1970
        %v3723 = vunpack.c.h.s8.bf16 %v1971
        %v3724 = vunpack.c.l.s8.bf16 %v1972
        %v3725 = vunpack.c.l.s8.bf16 %v1973
        %v3726 = vunpack.c.h.s8.bf16 %v1972
        %v3727 = vunpack.c.h.s8.bf16 %v1973
        %v3728 = vunpack.c.l.s8.bf16 %v1974
        %v3729 = vunpack.c.l.s8.bf16 %v1975
        %v3730 = vunpack.c.h.s8.bf16 %v1974
        %v3731 = vunpack.c.h.s8.bf16 %v1975
        %v3732 = vunpack.c.l.s8.bf16 %v1976
        %v3733 = vunpack.c.l.s8.bf16 %v1977
        %v3734 = vunpack.c.h.s8.bf16 %v1976
        %v3735 = vunpack.c.h.s8.bf16 %v1977
        %v3736 = vunpack.c.l.s8.bf16 %v1978
        %v3737 = vunpack.c.l.s8.bf16 %v1979
        %v3738 = vunpack.c.h.s8.bf16 %v1978
        %v3739 = vunpack.c.h.s8.bf16 %v1979
        %v3740 = vunpack.c.l.s8.bf16 %v1980
        %v3741 = vunpack.c.l.s8.bf16 %v1981
        %v3742 = vunpack.c.h.s8.bf16 %v1980
        %v3743 = vunpack.c.h.s8.bf16 %v1981
        %v3744 = vunpack.c.l.s8.bf16 %v1982
        %v3745 = vunpack.c.l.s8.bf16 %v1983
        %v3746 = vunpack.c.h.s8.bf16 %v1982
        %v3747 = vunpack.c.h.s8.bf16 %v1983
        %v3748 = vunpack.c.l.s8.bf16 %v1984
        %v3749 = vunpack.c.l.s8.bf16 %v1985
        %v3750 = vunpack.c.h.s8.bf16 %v1984
        %v3751 = vunpack.c.h.s8.bf16 %v1985
        %v3752 = vunpack.c.l.s8.bf16 %v1986
        %v3753 = vunpack.c.l.s8.bf16 %v1987
        %v3754 = vunpack.c.h.s8.bf16 %v1986
        %v3755 = vunpack.c.h.s8.bf16 %v1987
        %v3756 = vunpack.c.l.s8.bf16 %v1988
        %v3757 = vunpack.c.l.s8.bf16 %v1989
        %v3758 = vunpack.c.h.s8.bf16 %v1988
        %v3759 = vunpack.c.h.s8.bf16 %v1989
        %v3760 = vunpack.c.l.s8.bf16 %v1990
        %v3761 = vunpack.c.l.s8.bf16 %v1991
        %v3762 = vunpack.c.h.s8.bf16 %v1990
        %v3763 = vunpack.c.h.s8.bf16 %v1991
        %v3764 = vunpack.c.l.s8.bf16 %v1992
        %v3765 = vunpack.c.l.s8.bf16 %v1993
        %v3766 = vunpack.c.h.s8.bf16 %v1992
        %v3767 = vunpack.c.h.s8.bf16 %v1993
        %v3768 = vunpack.c.l.s8.bf16 %v1994
        %v3769 = vunpack.c.l.s8.bf16 %v1995
        %v3770 = vunpack.c.h.s8.bf16 %v1994
        %v3771 = vunpack.c.h.s8.bf16 %v1995
        %v3772 = vunpack.c.l.s8.bf16 %v1996
        %v3773 = vunpack.c.l.s8.bf16 %v1997
        %v3774 = vunpack.c.h.s8.bf16 %v1996
        %v3775 = vunpack.c.h.s8.bf16 %v1997
        %v3776 = vunpack.c.l.s8.bf16 %v1998
        %v3777 = vunpack.c.l.s8.bf16 %v1999
        %v3778 = vunpack.c.h.s8.bf16 %v1998
        %v3779 = vunpack.c.h.s8.bf16 %v1999
        %v3780 = vunpack.c.l.s8.bf16 %v2000
        %v3781 = vunpack.c.l.s8.bf16 %v2001
        %v3782 = vunpack.c.h.s8.bf16 %v2000
        %v3783 = vunpack.c.h.s8.bf16 %v2001
        %v3784 = vunpack.c.l.s8.bf16 %v2002
        %v3785 = vunpack.c.l.s8.bf16 %v2003
        %v3786 = vunpack.c.h.s8.bf16 %v2002
        %v3787 = vunpack.c.h.s8.bf16 %v2003
        %v3788 = vunpack.c.l.s8.bf16 %v2004
        %v3789 = vunpack.c.l.s8.bf16 %v2005
        %v3790 = vunpack.c.h.s8.bf16 %v2004
        %v3791 = vunpack.c.h.s8.bf16 %v2005
        %v3792 = vunpack.c.l.s8.bf16 %v2006
        %v3793 = vunpack.c.l.s8.bf16 %v2007
        %v3794 = vunpack.c.h.s8.bf16 %v2006
        %v3795 = vunpack.c.h.s8.bf16 %v2007
        %v3796 = vunpack.c.l.s8.bf16 %v2008
        %v3797 = vunpack.c.l.s8.bf16 %v2009
        %v3798 = vunpack.c.h.s8.bf16 %v2008
        %v3799 = vunpack.c.h.s8.bf16 %v2009
        %v3800 = vunpack.c.l.s8.bf16 %v2010
        %v3801 = vunpack.c.l.s8.bf16 %v2011
        %v3802 = vunpack.c.h.s8.bf16 %v2010
        %v3803 = vunpack.c.h.s8.bf16 %v2011
        %v3804 = vunpack.c.l.s8.bf16 %v2012
        %v3805 = vunpack.c.l.s8.bf16 %v2013
        %v3806 = vunpack.c.h.s8.bf16 %v2012
        %v3807 = vunpack.c.h.s8.bf16 %v2013
        %v3808 = vunpack.c.l.s8.bf16 %v2014
        %v3809 = vunpack.c.l.s8.bf16 %v2015
        %v3810 = vunpack.c.h.s8.bf16 %v2014
        %v3811 = vunpack.c.h.s8.bf16 %v2015
        %v3812 = vunpack.c.l.s8.bf16 %v2016
        %v3813 = vunpack.c.l.s8.bf16 %v2017
        %v3814 = vunpack.c.h.s8.bf16 %v2016
        %v3815 = vunpack.c.h.s8.bf16 %v2017
        %v3816 = vunpack.c.l.s8.bf16 %v2018
        %v3817 = vunpack.c.l.s8.bf16 %v2019
        %v3818 = vunpack.c.h.s8.bf16 %v2018
        %v3819 = vunpack.c.h.s8.bf16 %v2019
        %v3820 = vunpack.c.l.s8.bf16 %v2020
        %v3821 = vunpack.c.l.s8.bf16 %v2021
        %v3822 = vunpack.c.h.s8.bf16 %v2020
        %v3823 = vunpack.c.h.s8.bf16 %v2021
        %v3824 = vunpack.c.l.s8.bf16 %v2022
        %v3825 = vunpack.c.l.s8.bf16 %v2023
        %v3826 = vunpack.c.h.s8.bf16 %v2022
        %v3827 = vunpack.c.h.s8.bf16 %v2023
        %v3828 = vunpack.c.l.s8.bf16 %v2024
        %v3829 = vunpack.c.l.s8.bf16 %v2025
        %v3830 = vunpack.c.h.s8.bf16 %v2024
        %v3831 = vunpack.c.h.s8.bf16 %v2025
        %v3832 = vunpack.c.l.s8.bf16 %v2026
        %v3833 = vunpack.c.l.s8.bf16 %v2027
        %v3834 = vunpack.c.h.s8.bf16 %v2026
        %v3835 = vunpack.c.h.s8.bf16 %v2027
        %v3836 = vunpack.c.l.s8.bf16 %v2028
        %v3837 = vunpack.c.l.s8.bf16 %v2029
        %v3838 = vunpack.c.h.s8.bf16 %v2028
        %v3839 = vunpack.c.h.s8.bf16 %v2029
        %v3840 = vunpack.c.l.s8.bf16 %v2030
        %v3841 = vunpack.c.l.s8.bf16 %v2031
        %v3842 = vunpack.c.h.s8.bf16 %v2030
        %v3843 = vunpack.c.h.s8.bf16 %v2031
        %v3844 = vunpack.c.l.s8.bf16 %v2032
        %v3845 = vunpack.c.l.s8.bf16 %v2033
        %v3846 = vunpack.c.h.s8.bf16 %v2032
        %v3847 = vunpack.c.h.s8.bf16 %v2033
        %v3848 = vunpack.c.l.s8.bf16 %v2034
        %v3849 = vunpack.c.l.s8.bf16 %v2035
        %v3850 = vunpack.c.h.s8.bf16 %v2034
        %v3851 = vunpack.c.h.s8.bf16 %v2035
        %v3852 = vunpack.c.l.s8.bf16 %v2036
        %v3853 = vunpack.c.l.s8.bf16 %v2037
        %v3854 = vunpack.c.h.s8.bf16 %v2036
        %v3855 = vunpack.c.h.s8.bf16 %v2037
        %v3856 = vunpack.c.l.s8.bf16 %v2038
        %v3857 = vunpack.c.l.s8.bf16 %v2039
        %v3858 = vunpack.c.h.s8.bf16 %v2038
        %v3859 = vunpack.c.h.s8.bf16 %v2039
        %v3860 = vunpack.c.l.s8.bf16 %v2040
        %v3861 = vunpack.c.l.s8.bf16 %v2041
        %v3862 = vunpack.c.h.s8.bf16 %v2040
        %v3863 = vunpack.c.h.s8.bf16 %v2041
        %v3864 = vunpack.c.l.s8.bf16 %v2042
        %v3865 = vunpack.c.l.s8.bf16 %v2043
        %v3866 = vunpack.c.h.s8.bf16 %v2042
        %v3867 = vunpack.c.h.s8.bf16 %v2043
        %v3868 = vunpack.c.l.s8.bf16 %v2044
        %v3869 = vunpack.c.l.s8.bf16 %v2045
        %v3870 = vunpack.c.h.s8.bf16 %v2044
        %v3871 = vunpack.c.h.s8.bf16 %v2045
        %v3872 = vunpack.c.l.s8.bf16 %v2046
        %v3873 = vunpack.c.l.s8.bf16 %v2047
        %v3874 = vunpack.c.h.s8.bf16 %v2046
        %v3875 = vunpack.c.h.s8.bf16 %v2047
        %v3876 = vunpack.c.l.s8.bf16 %v2048
        %v3877 = vunpack.c.l.s8.bf16 %v2049
        %v3878 = vunpack.c.h.s8.bf16 %v2048
        %v3879 = vunpack.c.h.s8.bf16 %v2049
        %v3880 = vunpack.c.l.s8.bf16 %v2050
        %v3881 = vunpack.c.l.s8.bf16 %v2051
        %v3882 = vunpack.c.h.s8.bf16 %v2050
        %v3883 = vunpack.c.h.s8.bf16 %v2051
        %v3884 = vunpack.c.l.s8.bf16 %v2052
        %v3885 = vunpack.c.l.s8.bf16 %v2053
        %v3886 = vunpack.c.h.s8.bf16 %v2052
        %v3887 = vunpack.c.h.s8.bf16 %v2053
        %v3888 = vunpack.c.l.s8.bf16 %v2054
        %v3889 = vunpack.c.l.s8.bf16 %v2055
        %v3890 = vunpack.c.h.s8.bf16 %v2054
        %v3891 = vunpack.c.h.s8.bf16 %v2055
        %v3892 = vunpack.c.l.s8.bf16 %v2056
        %v3893 = vunpack.c.l.s8.bf16 %v2057
        %v3894 = vunpack.c.h.s8.bf16 %v2056
        %v3895 = vunpack.c.h.s8.bf16 %v2057
        %v3896 = vunpack.c.l.s8.bf16 %v2058
        %v3897 = vunpack.c.l.s8.bf16 %v2059
        %v3898 = vunpack.c.h.s8.bf16 %v2058
        %v3899 = vunpack.c.h.s8.bf16 %v2059
        %v3900 = vunpack.c.l.s8.bf16 %v2060
        %v3901 = vunpack.c.l.s8.bf16 %v2061
        %v3902 = vunpack.c.h.s8.bf16 %v2060
        %v3903 = vunpack.c.h.s8.bf16 %v2061
        %v3904 = vunpack.c.l.s8.bf16 %v2062
        %v3905 = vunpack.c.l.s8.bf16 %v2063
        %v3906 = vunpack.c.h.s8.bf16 %v2062
        %v3907 = vunpack.c.h.s8.bf16 %v2063
        %v3908 = vunpack.c.l.s8.bf16 %v2064
        %v3909 = vunpack.c.l.s8.bf16 %v2065
        %v3910 = vunpack.c.h.s8.bf16 %v2064
        %v3911 = vunpack.c.h.s8.bf16 %v2065
        %v3912 = vunpack.c.l.s8.bf16 %v2066
        %v3913 = vunpack.c.l.s8.bf16 %v2067
        %v3914 = vunpack.c.h.s8.bf16 %v2066
        %v3915 = vunpack.c.h.s8.bf16 %v2067
        %v3916 = vunpack.c.l.s8.bf16 %v2068
        %v3917 = vunpack.c.l.s8.bf16 %v2069
        %v3918 = vunpack.c.h.s8.bf16 %v2068
        %v3919 = vunpack.c.h.s8.bf16 %v2069
        %v3920 = vunpack.c.l.s8.bf16 %v2070
        %v3921 = vunpack.c.l.s8.bf16 %v2071
        %v3922 = vunpack.c.h.s8.bf16 %v2070
        %v3923 = vunpack.c.h.s8.bf16 %v2071
        %v3924 = vunpack.c.l.s8.bf16 %v2072
        %v3925 = vunpack.c.l.s8.bf16 %v2073
        %v3926 = vunpack.c.h.s8.bf16 %v2072
        %v3927 = vunpack.c.h.s8.bf16 %v2073
        %v3928 = vunpack.c.l.s8.bf16 %v2074
        %v3929 = vunpack.c.l.s8.bf16 %v2075
        %v3930 = vunpack.c.h.s8.bf16 %v2074
        %v3931 = vunpack.c.h.s8.bf16 %v2075
        %v3932 = vunpack.c.l.s8.bf16 %v2076
        %v3933 = vunpack.c.l.s8.bf16 %v2077
        %v3934 = vunpack.c.h.s8.bf16 %v2076
        %v3935 = vunpack.c.h.s8.bf16 %v2077
        %v3936 = vunpack.c.l.s8.bf16 %v2078
        %v3937 = vunpack.c.l.s8.bf16 %v2079
        %v3938 = vunpack.c.h.s8.bf16 %v2078
        %v3939 = vunpack.c.h.s8.bf16 %v2079
        %v3940 = vunpack.c.l.s8.bf16 %v2080
        %v3941 = vunpack.c.l.s8.bf16 %v2081
        %v3942 = vunpack.c.h.s8.bf16 %v2080
        %v3943 = vunpack.c.h.s8.bf16 %v2081
        %v3944 = vunpack.c.l.s8.bf16 %v2082
        %v3945 = vunpack.c.l.s8.bf16 %v2083
        %v3946 = vunpack.c.h.s8.bf16 %v2082
        %v3947 = vunpack.c.h.s8.bf16 %v2083
        %v3948 = vunpack.c.l.s8.bf16 %v2084
        %v3949 = vunpack.c.l.s8.bf16 %v2085
        %v3950 = vunpack.c.h.s8.bf16 %v2084
        %v3951 = vunpack.c.h.s8.bf16 %v2085
        %v3952 = vunpack.c.l.s8.bf16 %v2086
        %v3953 = vunpack.c.l.s8.bf16 %v2087
        %v3954 = vunpack.c.h.s8.bf16 %v2086
        %v3955 = vunpack.c.h.s8.bf16 %v2087
        %v3956 = vunpack.c.l.s8.bf16 %v2088
        %v3957 = vunpack.c.l.s8.bf16 %v2089
        %v3958 = vunpack.c.h.s8.bf16 %v2088
        %v3959 = vunpack.c.h.s8.bf16 %v2089
        %v3960 = vunpack.c.l.s8.bf16 %v2090
        %v3961 = vunpack.c.l.s8.bf16 %v2091
        %v3962 = vunpack.c.h.s8.bf16 %v2090
        %v3963 = vunpack.c.h.s8.bf16 %v2091
        %v3964 = vunpack.c.l.s8.bf16 %v2092
        %v3965 = vunpack.c.l.s8.bf16 %v2093
        %v3966 = vunpack.c.h.s8.bf16 %v2092
        %v3967 = vunpack.c.h.s8.bf16 %v2093
        %v3968 = vunpack.c.l.s8.bf16 %v2094
        %v3969 = vunpack.c.l.s8.bf16 %v2095
        %v3970 = vunpack.c.h.s8.bf16 %v2094
        %v3971 = vunpack.c.h.s8.bf16 %v2095
        %v3972 = vunpack.c.l.s8.bf16 %v2096
        %v3973 = vunpack.c.l.s8.bf16 %v2097
        %v3974 = vunpack.c.h.s8.bf16 %v2096
        %v3975 = vunpack.c.h.s8.bf16 %v2097
        %v3976 = vunpack.c.l.s8.bf16 %v2098
        %v3977 = vunpack.c.l.s8.bf16 %v2099
        %v3978 = vunpack.c.h.s8.bf16 %v2098
        %v3979 = vunpack.c.h.s8.bf16 %v2099
        %v3980 = vunpack.c.l.s8.bf16 %v2100
        %v3981 = vunpack.c.l.s8.bf16 %v2101
        %v3982 = vunpack.c.h.s8.bf16 %v2100
        %v3983 = vunpack.c.h.s8.bf16 %v2101
        %v3984 = vunpack.c.l.s8.bf16 %v2102
        %v3985 = vunpack.c.l.s8.bf16 %v2103
        %v3986 = vunpack.c.h.s8.bf16 %v2102
        %v3987 = vunpack.c.h.s8.bf16 %v2103
        %v3988 = vunpack.c.l.s8.bf16 %v2104
        %v3989 = vunpack.c.l.s8.bf16 %v2105
        %v3990 = vunpack.c.h.s8.bf16 %v2104
        %v3991 = vunpack.c.h.s8.bf16 %v2105
        %v3992 = vunpack.c.l.s8.bf16 %v2106
        %v3993 = vunpack.c.l.s8.bf16 %v2107
        %v3994 = vunpack.c.h.s8.bf16 %v2106
        %v3995 = vunpack.c.h.s8.bf16 %v2107
        %v3996 = vunpack.c.l.s8.bf16 %v2108
        %v3997 = vunpack.c.l.s8.bf16 %v2109
        %v3998 = vunpack.c.h.s8.bf16 %v2108
        %v3999 = vunpack.c.h.s8.bf16 %v2109
        %v4000 = vunpack.c.l.s8.bf16 %v2110
        %v4001 = vunpack.c.l.s8.bf16 %v2111
        %v4002 = vunpack.c.h.s8.bf16 %v2110
        %v4003 = vunpack.c.h.s8.bf16 %v2111
        %v4004 = vunpack.c.l.s8.bf16 %v2112
        %v4005 = vunpack.c.l.s8.bf16 %v2113
        %v4006 = vunpack.c.h.s8.bf16 %v2112
        %v4007 = vunpack.c.h.s8.bf16 %v2113
        %v4008 = vunpack.c.l.s8.bf16 %v2114
        %v4009 = vunpack.c.l.s8.bf16 %v2115
        %v4010 = vunpack.c.h.s8.bf16 %v2114
        %v4011 = vunpack.c.h.s8.bf16 %v2115
        %v4012 = vunpack.c.l.s8.bf16 %v2116
        %v4013 = vunpack.c.l.s8.bf16 %v2117
        %v4014 = vunpack.c.h.s8.bf16 %v2116
        %v4015 = vunpack.c.h.s8.bf16 %v2117
        %v4016 = vunpack.c.l.s8.bf16 %v2118
        %v4017 = vunpack.c.l.s8.bf16 %v2119
        %v4018 = vunpack.c.h.s8.bf16 %v2118
        %v4019 = vunpack.c.h.s8.bf16 %v2119
        %v4020 = vunpack.c.l.s8.bf16 %v2120
        %v4021 = vunpack.c.l.s8.bf16 %v2121
        %v4022 = vunpack.c.h.s8.bf16 %v2120
        %v4023 = vunpack.c.h.s8.bf16 %v2121
        %v4024 = vunpack.c.l.s8.bf16 %v2122
        %v4025 = vunpack.c.l.s8.bf16 %v2123
        %v4026 = vunpack.c.h.s8.bf16 %v2122
        %v4027 = vunpack.c.h.s8.bf16 %v2123
        %v4028 = vunpack.c.l.s8.bf16 %v2124
        %v4029 = vunpack.c.l.s8.bf16 %v2125
        %v4030 = vunpack.c.h.s8.bf16 %v2124
        %v4031 = vunpack.c.h.s8.bf16 %v2125
        %v4032 = vunpack.c.l.s8.bf16 %v2126
        %v4033 = vunpack.c.l.s8.bf16 %v2127
        %v4034 = vunpack.c.h.s8.bf16 %v2126
        %v4035 = vunpack.c.h.s8.bf16 %v2127
        %v4036 = vunpack.c.l.s8.bf16 %v2128
        %v4037 = vunpack.c.l.s8.bf16 %v2129
        %v4038 = vunpack.c.h.s8.bf16 %v2128
        %v4039 = vunpack.c.h.s8.bf16 %v2129
        %v4040 = vunpack.c.l.s8.bf16 %v2130
        %v4041 = vunpack.c.l.s8.bf16 %v2131
        %v4042 = vunpack.c.h.s8.bf16 %v2130
        %v4043 = vunpack.c.h.s8.bf16 %v2131
        %v4044 = vunpack.c.l.s8.bf16 %v2132
        %v4045 = vunpack.c.l.s8.bf16 %v2133
        %v4046 = vunpack.c.h.s8.bf16 %v2132
        %v4047 = vunpack.c.h.s8.bf16 %v2133
        %v4048 = vunpack.c.l.s8.bf16 %v2134
        %v4049 = vunpack.c.l.s8.bf16 %v2135
        %v4050 = vunpack.c.h.s8.bf16 %v2134
        %v4051 = vunpack.c.h.s8.bf16 %v2135
        %v4052 = vunpack.c.l.s8.bf16 %v2136
        %v4053 = vunpack.c.l.s8.bf16 %v2137
        %v4054 = vunpack.c.h.s8.bf16 %v2136
        %v4055 = vunpack.c.h.s8.bf16 %v2137
        %v4056 = vunpack.c.l.s8.bf16 %v2138
        %v4057 = vunpack.c.l.s8.bf16 %v2139
        %v4058 = vunpack.c.h.s8.bf16 %v2138
        %v4059 = vunpack.c.h.s8.bf16 %v2139
        %v4060 = vunpack.c.l.s8.bf16 %v2140
        %v4061 = vunpack.c.l.s8.bf16 %v2141
        %v4062 = vunpack.c.h.s8.bf16 %v2140
        %v4063 = vunpack.c.h.s8.bf16 %v2141
        %v4064 = vunpack.c.l.s8.bf16 %v2142
        %v4065 = vunpack.c.l.s8.bf16 %v2143
        %v4066 = vunpack.c.h.s8.bf16 %v2142
        %v4067 = vunpack.c.h.s8.bf16 %v2143
        %v4068 = vunpack.c.l.s8.bf16 %v2144
        %v4069 = vunpack.c.l.s8.bf16 %v2145
        %v4070 = vunpack.c.h.s8.bf16 %v2144
        %v4071 = vunpack.c.h.s8.bf16 %v2145
        %v4072 = vunpack.c.l.s8.bf16 %v2146
        %v4073 = vunpack.c.l.s8.bf16 %v2147
        %v4074 = vunpack.c.h.s8.bf16 %v2146
        %v4075 = vunpack.c.h.s8.bf16 %v2147
        %v4076 = vunpack.c.l.s8.bf16 %v2148
        %v4077 = vunpack.c.l.s8.bf16 %v2149
        %v4078 = vunpack.c.h.s8.bf16 %v2148
        %v4079 = vunpack.c.h.s8.bf16 %v2149
        %v4080 = vunpack.c.l.s8.bf16 %v2150
        %v4081 = vunpack.c.l.s8.bf16 %v2151
        %v4082 = vunpack.c.h.s8.bf16 %v2150
        %v4083 = vunpack.c.h.s8.bf16 %v2151
        %v4084 = vunpack.c.l.s8.bf16 %v2152
        %v4085 = vunpack.c.l.s8.bf16 %v2153
        %v4086 = vunpack.c.h.s8.bf16 %v2152
        %v4087 = vunpack.c.h.s8.bf16 %v2153
        %v4088 = vunpack.c.l.s8.bf16 %v2154
        %v4089 = vunpack.c.l.s8.bf16 %v2155
        %v4090 = vunpack.c.h.s8.bf16 %v2154
        %v4091 = vunpack.c.h.s8.bf16 %v2155
        %v4092 = vunpack.c.l.s8.bf16 %v2156
        %v4093 = vunpack.c.l.s8.bf16 %v2157
        %v4094 = vunpack.c.h.s8.bf16 %v2156
        %v4095 = vunpack.c.h.s8.bf16 %v2157
        %v4096 = vunpack.c.l.s8.bf16 %v2158
        %v4097 = vunpack.c.l.s8.bf16 %v2159
        %v4098 = vunpack.c.h.s8.bf16 %v2158
        %v4099 = vunpack.c.h.s8.bf16 %v2159
        %v4100 = vunpack.c.l.s8.bf16 %v2160
        %v4101 = vunpack.c.l.s8.bf16 %v2161
        %v4102 = vunpack.c.h.s8.bf16 %v2160
        %v4103 = vunpack.c.h.s8.bf16 %v2161
        %v4104 = vunpack.c.l.s8.bf16 %v2162
        %v4105 = vunpack.c.l.s8.bf16 %v2163
        %v4106 = vunpack.c.h.s8.bf16 %v2162
        %v4107 = vunpack.c.h.s8.bf16 %v2163
        %v4108 = vunpack.c.l.s8.bf16 %v2164
        %v4109 = vunpack.c.l.s8.bf16 %v2165
        %v4110 = vunpack.c.h.s8.bf16 %v2164
        %v4111 = vunpack.c.h.s8.bf16 %v2165
        %v4112 = vunpack.c.l.s8.bf16 %v2166
        %v4113 = vunpack.c.l.s8.bf16 %v2167
        %v4114 = vunpack.c.h.s8.bf16 %v2166
        %v4115 = vunpack.c.h.s8.bf16 %v2167
        %v4116 = vunpack.c.l.s8.bf16 %v2168
        %v4117 = vunpack.c.l.s8.bf16 %v2169
        %v4118 = vunpack.c.h.s8.bf16 %v2168
        %v4119 = vunpack.c.h.s8.bf16 %v2169
        %v4120 = vunpack.c.l.s8.bf16 %v2170
        %v4121 = vunpack.c.l.s8.bf16 %v2171
        %v4122 = vunpack.c.h.s8.bf16 %v2170
        %v4123 = vunpack.c.h.s8.bf16 %v2171
        %v4124 = vunpack.c.l.s8.bf16 %v2172
        %v4125 = vunpack.c.l.s8.bf16 %v2173
        %v4126 = vunpack.c.h.s8.bf16 %v2172
        %v4127 = vunpack.c.h.s8.bf16 %v2173
        %v4128 = vunpack.c.l.s8.bf16 %v2174
        %v4129 = vunpack.c.l.s8.bf16 %v2175
        %v4130 = vunpack.c.h.s8.bf16 %v2174
        %v4131 = vunpack.c.h.s8.bf16 %v2175
        %v4132 = vunpack.c.l.s8.bf16 %v2176
        %v4133 = vunpack.c.l.s8.bf16 %v2177
        %v4134 = vunpack.c.h.s8.bf16 %v2176
        %v4135 = vunpack.c.h.s8.bf16 %v2177
        %v4136 = vunpack.c.l.s8.bf16 %v2178
        %v4137 = vunpack.c.l.s8.bf16 %v2179
        %v4138 = vunpack.c.h.s8.bf16 %v2178
        %v4139 = vunpack.c.h.s8.bf16 %v2179
        %v4140 = vunpack.c.l.s8.bf16 %v2180
        %v4141 = vunpack.c.l.s8.bf16 %v2181
        %v4142 = vunpack.c.h.s8.bf16 %v2180
        %v4143 = vunpack.c.h.s8.bf16 %v2181
        %v4144 = vunpack.c.l.s8.bf16 %v2182
        %v4145 = vunpack.c.l.s8.bf16 %v2183
        %v4146 = vunpack.c.h.s8.bf16 %v2182
        %v4147 = vunpack.c.h.s8.bf16 %v2183
        %v4148 = vunpack.c.l.s8.bf16 %v2184
        %v4149 = vunpack.c.l.s8.bf16 %v2185
        %v4150 = vunpack.c.h.s8.bf16 %v2184
        %v4151 = vunpack.c.h.s8.bf16 %v2185
        %v4152 = vunpack.c.l.s8.bf16 %v2186
        %v4153 = vunpack.c.l.s8.bf16 %v2187
        %v4154 = vunpack.c.h.s8.bf16 %v2186
        %v4155 = vunpack.c.h.s8.bf16 %v2187
        %v4156 = vunpack.c.l.s8.bf16 %v2188
        %v4157 = vunpack.c.l.s8.bf16 %v2189
        %v4158 = vunpack.c.h.s8.bf16 %v2188
        %v4159 = vunpack.c.h.s8.bf16 %v2189
        %v4160 = vunpack.c.l.s8.bf16 %v2190
        %v4161 = vunpack.c.l.s8.bf16 %v2191
        %v4162 = vunpack.c.h.s8.bf16 %v2190
        %v4163 = vunpack.c.h.s8.bf16 %v2191
        %v4164 = vunpack.c.l.s8.bf16 %v2192
        %v4165 = vunpack.c.l.s8.bf16 %v2193
        %v4166 = vunpack.c.h.s8.bf16 %v2192
        %v4167 = vunpack.c.h.s8.bf16 %v2193
        %v4168 = vunpack.c.l.s8.bf16 %v2194
        %v4169 = vunpack.c.l.s8.bf16 %v2195
        %v4170 = vunpack.c.h.s8.bf16 %v2194
        %v4171 = vunpack.c.h.s8.bf16 %v2195
        %v4172 = vunpack.c.l.s8.bf16 %v2196
        %v4173 = vunpack.c.l.s8.bf16 %v2197
        %v4174 = vunpack.c.h.s8.bf16 %v2196
        %v4175 = vunpack.c.h.s8.bf16 %v2197
        %v4176 = vunpack.c.l.s8.bf16 %v2198
        %v4177 = vunpack.c.l.s8.bf16 %v2199
        %v4178 = vunpack.c.h.s8.bf16 %v2198
        %v4179 = vunpack.c.h.s8.bf16 %v2199
        %v4180 = vunpack.c.l.s8.bf16 %v2200
        %v4181 = vunpack.c.l.s8.bf16 %v2201
        %v4182 = vunpack.c.h.s8.bf16 %v2200
        %v4183 = vunpack.c.h.s8.bf16 %v2201
        %v4184 = vunpack.c.l.s8.bf16 %v2202
        %v4185 = vunpack.c.l.s8.bf16 %v2203
        %v4186 = vunpack.c.h.s8.bf16 %v2202
        %v4187 = vunpack.c.h.s8.bf16 %v2203
        %v4188 = vunpack.c.l.s8.bf16 %v2204
        %v4189 = vunpack.c.l.s8.bf16 %v2205
        %v4190 = vunpack.c.h.s8.bf16 %v2204
        %v4191 = vunpack.c.h.s8.bf16 %v2205
        %v4192 = vunpack.c.l.s8.bf16 %v2206
        %v4193 = vunpack.c.l.s8.bf16 %v2207
        %v4194 = vunpack.c.h.s8.bf16 %v2206
        %v4195 = vunpack.c.h.s8.bf16 %v2207
        %v4196 = vunpack.c.l.s8.bf16 %v2208
        %v4197 = vunpack.c.l.s8.bf16 %v2209
        %v4198 = vunpack.c.h.s8.bf16 %v2208
        %v4199 = vunpack.c.h.s8.bf16 %v2209
        %v4200 = vunpack.c.l.s8.bf16 %v2210
        %v4201 = vunpack.c.l.s8.bf16 %v2211
        %v4202 = vunpack.c.h.s8.bf16 %v2210
        %v4203 = vunpack.c.h.s8.bf16 %v2211
        %v4204 = vunpack.c.l.s8.bf16 %v2212
        %v4205 = vunpack.c.l.s8.bf16 %v2213
        %v4206 = vunpack.c.h.s8.bf16 %v2212
        %v4207 = vunpack.c.h.s8.bf16 %v2213
        %v4208 = vunpack.c.l.s8.bf16 %v2214
        %v4209 = vunpack.c.l.s8.bf16 %v2215
        %v4210 = vunpack.c.h.s8.bf16 %v2214
        %v4211 = vunpack.c.h.s8.bf16 %v2215
        %v4212 = vunpack.c.l.s8.bf16 %v2216
        %v4213 = vunpack.c.l.s8.bf16 %v2217
        %v4214 = vunpack.c.h.s8.bf16 %v2216
        %v4215 = vunpack.c.h.s8.bf16 %v2217
        %v4216 = vunpack.c.l.s8.bf16 %v2218
        %v4217 = vunpack.c.l.s8.bf16 %v2219
        %v4218 = vunpack.c.h.s8.bf16 %v2218
        %v4219 = vunpack.c.h.s8.bf16 %v2219
        %v4220 = vunpack.c.l.s8.bf16 %v2220
        %v4221 = vunpack.c.l.s8.bf16 %v2221
        %v4222 = vunpack.c.h.s8.bf16 %v2220
        %v4223 = vunpack.c.h.s8.bf16 %v2221
        %v4224 = vunpack.c.l.s8.bf16 %v2222
        %v4225 = vunpack.c.l.s8.bf16 %v2223
        %v4226 = vunpack.c.h.s8.bf16 %v2222
        %v4227 = vunpack.c.h.s8.bf16 %v2223
        %v4228 = vunpack.c.l.s8.bf16 %v2224
        %v4229 = vunpack.c.l.s8.bf16 %v2225
        %v4230 = vunpack.c.h.s8.bf16 %v2224
        %v4231 = vunpack.c.h.s8.bf16 %v2225
        %v4232 = vunpack.c.l.s8.bf16 %v2226
        %v4233 = vunpack.c.l.s8.bf16 %v2227
        %v4234 = vunpack.c.h.s8.bf16 %v2226
        %v4235 = vunpack.c.h.s8.bf16 %v2227
        %v4236 = vunpack.c.l.s8.bf16 %v2228
        %v4237 = vunpack.c.l.s8.bf16 %v2229
        %v4238 = vunpack.c.h.s8.bf16 %v2228
        %v4239 = vunpack.c.h.s8.bf16 %v2229
        %v4240 = vunpack.c.l.s8.bf16 %v2230
        %v4241 = vunpack.c.l.s8.bf16 %v2231
        %v4242 = vunpack.c.h.s8.bf16 %v2230
        %v4243 = vunpack.c.h.s8.bf16 %v2231
        %v4244 = vunpack.c.l.s8.bf16 %v2232
        %v4245 = vunpack.c.l.s8.bf16 %v2233
        %v4246 = vunpack.c.h.s8.bf16 %v2232
        %v4247 = vunpack.c.h.s8.bf16 %v2233
        %v4248 = vunpack.c.l.s8.bf16 %v2234
        %v4249 = vunpack.c.l.s8.bf16 %v2235
        %v4250 = vunpack.c.h.s8.bf16 %v2234
        %v4251 = vunpack.c.h.s8.bf16 %v2235
        %v4252 = vunpack.c.l.s8.bf16 %v2236
        %v4253 = vunpack.c.l.s8.bf16 %v2237
        %v4254 = vunpack.c.h.s8.bf16 %v2236
        %v4255 = vunpack.c.h.s8.bf16 %v2237
        %v4256 = vunpack.c.l.s8.bf16 %v2238
        %v4257 = vunpack.c.l.s8.bf16 %v2239
        %v4258 = vunpack.c.h.s8.bf16 %v2238
        %v4259 = vunpack.c.h.s8.bf16 %v2239
        %v4260 = vunpack.c.l.s8.bf16 %v2240
        %v4261 = vunpack.c.l.s8.bf16 %v2241
        %v4262 = vunpack.c.h.s8.bf16 %v2240
        %v4263 = vunpack.c.h.s8.bf16 %v2241
        %v4264 = vunpack.c.l.s8.bf16 %v2242
        %v4265 = vunpack.c.l.s8.bf16 %v2243
        %v4266 = vunpack.c.h.s8.bf16 %v2242
        %v4267 = vunpack.c.h.s8.bf16 %v2243
        %v4268 = vunpack.c.l.s8.bf16 %v2244
        %v4269 = vunpack.c.l.s8.bf16 %v2245
        %v4270 = vunpack.c.h.s8.bf16 %v2244
        %v4271 = vunpack.c.h.s8.bf16 %v2245
        %v4272 = vunpack.c.l.s8.bf16 %v2246
        %v4273 = vunpack.c.l.s8.bf16 %v2247
        %v4274 = vunpack.c.h.s8.bf16 %v2246
        %v4275 = vunpack.c.h.s8.bf16 %v2247
        %v4276 = vunpack.c.l.s8.bf16 %v2248
        %v4277 = vunpack.c.l.s8.bf16 %v2249
        %v4278 = vunpack.c.h.s8.bf16 %v2248
        %v4279 = vunpack.c.h.s8.bf16 %v2249
        %v4280 = vunpack.c.l.s8.bf16 %v2250
        %v4281 = vunpack.c.l.s8.bf16 %v2251
        %v4282 = vunpack.c.h.s8.bf16 %v2250
        %v4283 = vunpack.c.h.s8.bf16 %v2251
        %v4284 = vunpack.c.l.s8.bf16 %v2252
        %v4285 = vunpack.c.l.s8.bf16 %v2253
        %v4286 = vunpack.c.h.s8.bf16 %v2252
        %v4287 = vunpack.c.h.s8.bf16 %v2253
        %v4288 = vunpack.c.l.s8.bf16 %v2254
        %v4289 = vunpack.c.l.s8.bf16 %v2255
        %v4290 = vunpack.c.h.s8.bf16 %v2254
        %v4291 = vunpack.c.h.s8.bf16 %v2255
        %v4292 = vunpack.c.l.s8.bf16 %v2256
        %v4293 = vunpack.c.l.s8.bf16 %v2257
        %v4294 = vunpack.c.h.s8.bf16 %v2256
        %v4295 = vunpack.c.h.s8.bf16 %v2257
        %v4296 = vunpack.c.l.s8.bf16 %v2258
        %v4297 = vunpack.c.l.s8.bf16 %v2259
        %v4298 = vunpack.c.h.s8.bf16 %v2258
        %v4299 = vunpack.c.h.s8.bf16 %v2259
        %v4300 = vunpack.c.l.s8.bf16 %v2260
        %v4301 = vunpack.c.l.s8.bf16 %v2261
        %v4302 = vunpack.c.h.s8.bf16 %v2260
        %v4303 = vunpack.c.h.s8.bf16 %v2261
        %v4304 = vunpack.c.l.s8.bf16 %v2262
        %v4305 = vunpack.c.l.s8.bf16 %v2263
        %v4306 = vunpack.c.h.s8.bf16 %v2262
        %v4307 = vunpack.c.h.s8.bf16 %v2263
        %v4308 = vunpack.c.l.s8.bf16 %v2264
        %v4309 = vunpack.c.l.s8.bf16 %v2265
        %v4310 = vunpack.c.h.s8.bf16 %v2264
        %v4311 = vunpack.c.h.s8.bf16 %v2265
        %v4312 = vunpack.c.l.s8.bf16 %v2266
        %v4313 = vunpack.c.l.s8.bf16 %v2267
        %v4314 = vunpack.c.h.s8.bf16 %v2266
        %v4315 = vunpack.c.h.s8.bf16 %v2267
        %v4316 = vunpack.c.l.s8.bf16 %v2268
        %v4317 = vunpack.c.l.s8.bf16 %v2269
        %v4318 = vunpack.c.h.s8.bf16 %v2268
        %v4319 = vunpack.c.h.s8.bf16 %v2269
        %v4320 = vunpack.c.l.s8.bf16 %v2270
        %v4321 = vunpack.c.l.s8.bf16 %v2271
        %v4322 = vunpack.c.h.s8.bf16 %v2270
        %v4323 = vunpack.c.h.s8.bf16 %v2271
        %v4324 = vunpack.c.l.s8.bf16 %v2272
        %v4325 = vunpack.c.l.s8.bf16 %v2273
        %v4326 = vunpack.c.h.s8.bf16 %v2272
        %v4327 = vunpack.c.h.s8.bf16 %v2273
        %v4328 = vunpack.c.l.s8.bf16 %v2274
        %v4329 = vunpack.c.l.s8.bf16 %v2275
        %v4330 = vunpack.c.h.s8.bf16 %v2274
        %v4331 = vunpack.c.h.s8.bf16 %v2275
        %v4332 = vunpack.c.l.s8.bf16 %v2276
        %v4333 = vunpack.c.l.s8.bf16 %v2277
        %v4334 = vunpack.c.h.s8.bf16 %v2276
        %v4335 = vunpack.c.h.s8.bf16 %v2277
        %v4336 = vunpack.c.l.s8.bf16 %v2278
        %v4337 = vunpack.c.l.s8.bf16 %v2279
        %v4338 = vunpack.c.h.s8.bf16 %v2278
        %v4339 = vunpack.c.h.s8.bf16 %v2279
        %v4340 = vunpack.c.l.s8.bf16 %v2280
        %v4341 = vunpack.c.l.s8.bf16 %v2281
        %v4342 = vunpack.c.h.s8.bf16 %v2280
        %v4343 = vunpack.c.h.s8.bf16 %v2281
        %v4344 = vunpack.c.l.s8.bf16 %v2282
        %v4345 = vunpack.c.l.s8.bf16 %v2283
        %v4346 = vunpack.c.h.s8.bf16 %v2282
        %v4347 = vunpack.c.h.s8.bf16 %v2283
        %v4348 = vunpack.c.l.s8.bf16 %v2284
        %v4349 = vunpack.c.l.s8.bf16 %v2285
        %v4350 = vunpack.c.h.s8.bf16 %v2284
        %v4351 = vunpack.c.h.s8.bf16 %v2285
        %v4352 = vunpack.c.l.s8.bf16 %v2286
        %v4353 = vunpack.c.l.s8.bf16 %v2287
        %v4354 = vunpack.c.h.s8.bf16 %v2286
        %v4355 = vunpack.c.h.s8.bf16 %v2287
        %v4356 = vunpack.c.l.s8.bf16 %v2288
        %v4357 = vunpack.c.l.s8.bf16 %v2289
        %v4358 = vunpack.c.h.s8.bf16 %v2288
        %v4359 = vunpack.c.h.s8.bf16 %v2289
        %v4360 = vunpack.c.l.s8.bf16 %v2290
        %v4361 = vunpack.c.l.s8.bf16 %v2291
        %v4362 = vunpack.c.h.s8.bf16 %v2290
        %v4363 = vunpack.c.h.s8.bf16 %v2291
        %v4364 = vunpack.c.l.s8.bf16 %v2292
        %v4365 = vunpack.c.l.s8.bf16 %v2293
        %v4366 = vunpack.c.h.s8.bf16 %v2292
        %v4367 = vunpack.c.h.s8.bf16 %v2293
        %v4368 = vunpack.c.l.s8.bf16 %v2294
        %v4369 = vunpack.c.l.s8.bf16 %v2295
        %v4370 = vunpack.c.h.s8.bf16 %v2294
        %v4371 = vunpack.c.h.s8.bf16 %v2295
        %v4372 = vunpack.c.l.s8.bf16 %v2296
        %v4373 = vunpack.c.l.s8.bf16 %v2297
        %v4374 = vunpack.c.h.s8.bf16 %v2296
        %v4375 = vunpack.c.h.s8.bf16 %v2297
        %v4376 = vunpack.c.l.s8.bf16 %v2298
        %v4377 = vunpack.c.l.s8.bf16 %v2299
        %v4378 = vunpack.c.h.s8.bf16 %v2298
        %v4379 = vunpack.c.h.s8.bf16 %v2299
        %v4380 = vunpack.c.l.s8.bf16 %v2300
        %v4381 = vunpack.c.l.s8.bf16 %v2301
        %v4382 = vunpack.c.h.s8.bf16 %v2300
        %v4383 = vunpack.c.h.s8.bf16 %v2301
        %v4384 = vunpack.c.l.s8.bf16 %v2302
        %v4385 = vunpack.c.l.s8.bf16 %v2303
        %v4386 = vunpack.c.h.s8.bf16 %v2302
        %v4387 = vunpack.c.h.s8.bf16 %v2303
        %v4388 = vunpack.c.l.s8.bf16 %v2304
        %v4389 = vunpack.c.l.s8.bf16 %v2305
        %v4390 = vunpack.c.h.s8.bf16 %v2304
        %v4391 = vunpack.c.h.s8.bf16 %v2305
        %v4392 = vunpack.c.l.s8.bf16 %v2306
        %v4393 = vunpack.c.l.s8.bf16 %v2307
        %v4394 = vunpack.c.h.s8.bf16 %v2306
        %v4395 = vunpack.c.h.s8.bf16 %v2307
        %v4396 = vunpack.c.l.s8.bf16 %v2308
        %v4397 = vunpack.c.l.s8.bf16 %v2309
        %v4398 = vunpack.c.h.s8.bf16 %v2308
        %v4399 = vunpack.c.h.s8.bf16 %v2309
        %v4400 = vunpack.c.l.s8.bf16 %v2310
        %v4401 = vunpack.c.l.s8.bf16 %v2311
        %v4402 = vunpack.c.h.s8.bf16 %v2310
        %v4403 = vunpack.c.h.s8.bf16 %v2311
        %v4404 = vunpack.c.l.s8.bf16 %v2312
        %v4405 = vunpack.c.l.s8.bf16 %v2313
        %v4406 = vunpack.c.h.s8.bf16 %v2312
        %v4407 = vunpack.c.h.s8.bf16 %v2313
        %v4408 = vunpack.c.l.s8.bf16 %v2314
        %v4409 = vunpack.c.l.s8.bf16 %v2315
        %v4410 = vunpack.c.h.s8.bf16 %v2314
        %v4411 = vunpack.c.h.s8.bf16 %v2315
        %v4412 = vunpack.c.l.s8.bf16 %v2316
        %v4413 = vunpack.c.l.s8.bf16 %v2317
        %v4414 = vunpack.c.h.s8.bf16 %v2316
        %v4415 = vunpack.c.h.s8.bf16 %v2317
        %v4416 = vunpack.c.l.s8.bf16 %v2318
        %v4417 = vunpack.c.l.s8.bf16 %v2319
        %v4418 = vunpack.c.h.s8.bf16 %v2318
        %v4419 = vunpack.c.h.s8.bf16 %v2319
        %v4420 = vunpack.c.l.s8.bf16 %v2320
        %v4421 = vunpack.c.l.s8.bf16 %v2321
        %v4422 = vunpack.c.h.s8.bf16 %v2320
        %v4423 = vunpack.c.h.s8.bf16 %v2321
        %v4424 = vunpack.c.l.s8.bf16 %v2322
        %v4425 = vunpack.c.l.s8.bf16 %v2323
        %v4426 = vunpack.c.h.s8.bf16 %v2322
        %v4427 = vunpack.c.h.s8.bf16 %v2323
        %v4428 = vunpack.c.l.s8.bf16 %v2324
        %v4429 = vunpack.c.l.s8.bf16 %v2325
        %v4430 = vunpack.c.h.s8.bf16 %v2324
        %v4431 = vunpack.c.h.s8.bf16 %v2325
        %v4432 = vunpack.c.l.s8.bf16 %v2326
        %v4433 = vunpack.c.l.s8.bf16 %v2327
        %v4434 = vunpack.c.h.s8.bf16 %v2326
        %v4435 = vunpack.c.h.s8.bf16 %v2327
        %v4436 = vunpack.c.l.s8.bf16 %v2328
        %v4437 = vunpack.c.l.s8.bf16 %v2329
        %v4438 = vunpack.c.h.s8.bf16 %v2328
        %v4439 = vunpack.c.h.s8.bf16 %v2329
        %v4440 = vunpack.c.l.s8.bf16 %v2330
        %v4441 = vunpack.c.l.s8.bf16 %v2331
        %v4442 = vunpack.c.h.s8.bf16 %v2330
        %v4443 = vunpack.c.h.s8.bf16 %v2331
        %v4444 = vunpack.c.l.s8.bf16 %v2332
        %v4445 = vunpack.c.l.s8.bf16 %v2333
        %v4446 = vunpack.c.h.s8.bf16 %v2332
        %v4447 = vunpack.c.h.s8.bf16 %v2333
        %v4448 = vunpack.c.l.s8.bf16 %v2334
        %v4449 = vunpack.c.l.s8.bf16 %v2335
        %v4450 = vunpack.c.h.s8.bf16 %v2334
        %v4451 = vunpack.c.h.s8.bf16 %v2335
        %v4452 = vunpack.c.l.s8.bf16 %v2336
        %v4453 = vunpack.c.l.s8.bf16 %v2337
        %v4454 = vunpack.c.h.s8.bf16 %v2336
        %v4455 = vunpack.c.h.s8.bf16 %v2337
        %v4456 = vunpack.c.l.s8.bf16 %v2338
        %v4457 = vunpack.c.l.s8.bf16 %v2339
        %v4458 = vunpack.c.h.s8.bf16 %v2338
        %v4459 = vunpack.c.h.s8.bf16 %v2339
        %v4460 = vunpack.c.l.s8.bf16 %v2340
        %v4461 = vunpack.c.l.s8.bf16 %v2341
        %v4462 = vunpack.c.h.s8.bf16 %v2340
        %v4463 = vunpack.c.h.s8.bf16 %v2341
        %v4464 = vunpack.c.l.s8.bf16 %v2342
        %v4465 = vunpack.c.l.s8.bf16 %v2343
        %v4466 = vunpack.c.h.s8.bf16 %v2342
        %v4467 = vunpack.c.h.s8.bf16 %v2343
        %v4468 = vunpack.c.l.s8.bf16 %v2344
        %v4469 = vunpack.c.l.s8.bf16 %v2345
        %v4470 = vunpack.c.h.s8.bf16 %v2344
        %v4471 = vunpack.c.h.s8.bf16 %v2345
        %v4472 = vunpack.c.l.s8.bf16 %v2346
        %v4473 = vunpack.c.l.s8.bf16 %v2347
        %v4474 = vunpack.c.h.s8.bf16 %v2346
        %v4475 = vunpack.c.h.s8.bf16 %v2347
        %v4476 = vunpack.c.l.s8.bf16 %v2348
        %v4477 = vunpack.c.l.s8.bf16 %v2349
        %v4478 = vunpack.c.h.s8.bf16 %v2348
        %v4479 = vunpack.c.h.s8.bf16 %v2349
        %v4480 = vunpack.c.l.s8.bf16 %v2350
        %v4481 = vunpack.c.l.s8.bf16 %v2351
        %v4482 = vunpack.c.h.s8.bf16 %v2350
        %v4483 = vunpack.c.h.s8.bf16 %v2351
        %v4484 = vunpack.c.l.s8.bf16 %v2352
        %v4485 = vunpack.c.l.s8.bf16 %v2353
        %v4486 = vunpack.c.h.s8.bf16 %v2352
        %v4487 = vunpack.c.h.s8.bf16 %v2353
        %v4488 = vunpack.c.l.s8.bf16 %v2354
        %v4489 = vunpack.c.l.s8.bf16 %v2355
        %v4490 = vunpack.c.h.s8.bf16 %v2354
        %v4491 = vunpack.c.h.s8.bf16 %v2355
        %v4492 = vunpack.c.l.s8.bf16 %v2356
        %v4493 = vunpack.c.l.s8.bf16 %v2357
        %v4494 = vunpack.c.h.s8.bf16 %v2356
        %v4495 = vunpack.c.h.s8.bf16 %v2357
        %v4496 = vunpack.c.l.s8.bf16 %v2358
        %v4497 = vunpack.c.l.s8.bf16 %v2359
        %v4498 = vunpack.c.h.s8.bf16 %v2358
        %v4499 = vunpack.c.h.s8.bf16 %v2359
        %v4500 = vunpack.c.l.s8.bf16 %v2360
        %v4501 = vunpack.c.l.s8.bf16 %v2361
        %v4502 = vunpack.c.h.s8.bf16 %v2360
        %v4503 = vunpack.c.h.s8.bf16 %v2361
        %v4504 = vunpack.c.l.s8.bf16 %v2362
        %v4505 = vunpack.c.l.s8.bf16 %v2363
        %v4506 = vunpack.c.h.s8.bf16 %v2362
        %v4507 = vunpack.c.h.s8.bf16 %v2363
        %v4508 = vunpack.c.l.s8.bf16 %v2364
        %v4509 = vunpack.c.l.s8.bf16 %v2365
        %v4510 = vunpack.c.h.s8.bf16 %v2364
        %v4511 = vunpack.c.h.s8.bf16 %v2365
        %v4512 = vunpack.c.l.s8.bf16 %v2366
        %v4513 = vunpack.c.l.s8.bf16 %v2367
        %v4514 = vunpack.c.h.s8.bf16 %v2366
        %v4515 = vunpack.c.h.s8.bf16 %v2367
        %v4516 = vunpack.c.l.s8.bf16 %v2368
        %v4517 = vunpack.c.l.s8.bf16 %v2369
        %v4518 = vunpack.c.h.s8.bf16 %v2368
        %v4519 = vunpack.c.h.s8.bf16 %v2369
        %v4520 = vunpack.c.l.s8.bf16 %v2370
        %v4521 = vunpack.c.l.s8.bf16 %v2371
        %v4522 = vunpack.c.h.s8.bf16 %v2370
        %v4523 = vunpack.c.h.s8.bf16 %v2371
        %v4524 = vunpack.c.l.s8.bf16 %v2372
        %v4525 = vunpack.c.l.s8.bf16 %v2373
        %v4526 = vunpack.c.h.s8.bf16 %v2372
        %v4527 = vunpack.c.h.s8.bf16 %v2373
        %v4528 = vunpack.c.l.s8.bf16 %v2374
        %v4529 = vunpack.c.l.s8.bf16 %v2375
        %v4530 = vunpack.c.h.s8.bf16 %v2374
        %v4531 = vunpack.c.h.s8.bf16 %v2375
        %v4532 = vunpack.c.l.s8.bf16 %v2376
        %v4533 = vunpack.c.l.s8.bf16 %v2377
        %v4534 = vunpack.c.h.s8.bf16 %v2376
        %v4535 = vunpack.c.h.s8.bf16 %v2377
        %v4536 = vunpack.c.l.s8.bf16 %v2378
        %v4537 = vunpack.c.l.s8.bf16 %v2379
        %v4538 = vunpack.c.h.s8.bf16 %v2378
        %v4539 = vunpack.c.h.s8.bf16 %v2379
        %v4540 = vunpack.c.l.s8.bf16 %v2380
        %v4541 = vunpack.c.l.s8.bf16 %v2381
        %v4542 = vunpack.c.h.s8.bf16 %v2380
        %v4543 = vunpack.c.h.s8.bf16 %v2381
        %v4544 = vunpack.c.l.s8.bf16 %v2382
        %v4545 = vunpack.c.l.s8.bf16 %v2383
        %v4546 = vunpack.c.h.s8.bf16 %v2382
        %v4547 = vunpack.c.h.s8.bf16 %v2383
        %v4548 = vunpack.c.l.s8.bf16 %v2384
        %v4549 = vunpack.c.l.s8.bf16 %v2385
        %v4550 = vunpack.c.h.s8.bf16 %v2384
        %v4551 = vunpack.c.h.s8.bf16 %v2385
        %v4552 = vunpack.c.l.s8.bf16 %v2386
        %v4553 = vunpack.c.l.s8.bf16 %v2387
        %v4554 = vunpack.c.h.s8.bf16 %v2386
        %v4555 = vunpack.c.h.s8.bf16 %v2387
        %v4556 = vunpack.c.l.s8.bf16 %v2388
        %v4557 = vunpack.c.l.s8.bf16 %v2389
        %v4558 = vunpack.c.h.s8.bf16 %v2388
        %v4559 = vunpack.c.h.s8.bf16 %v2389
        %v4560 = vunpack.c.l.s8.bf16 %v2390
        %v4561 = vunpack.c.l.s8.bf16 %v2391
        %v4562 = vunpack.c.h.s8.bf16 %v2390
        %v4563 = vunpack.c.h.s8.bf16 %v2391
        %v4564 = vunpack.c.l.s8.bf16 %v2392
        %v4565 = vunpack.c.l.s8.bf16 %v2393
        %v4566 = vunpack.c.h.s8.bf16 %v2392
        %v4567 = vunpack.c.h.s8.bf16 %v2393
        %v4568 = vunpack.c.l.s8.bf16 %v2394
        %v4569 = vunpack.c.l.s8.bf16 %v2395
        %v4570 = vunpack.c.h.s8.bf16 %v2394
        %v4571 = vunpack.c.h.s8.bf16 %v2395
        %v4572 = vunpack.c.l.s8.bf16 %v2396
        %v4573 = vunpack.c.l.s8.bf16 %v2397
        %v4574 = vunpack.c.h.s8.bf16 %v2396
        %v4575 = vunpack.c.h.s8.bf16 %v2397
        %v4576 = vunpack.c.l.s8.bf16 %v2398
        %v4577 = vunpack.c.l.s8.bf16 %v2399
        %v4578 = vunpack.c.h.s8.bf16 %v2398
        %v4579 = vunpack.c.h.s8.bf16 %v2399
        %v4580 = vunpack.c.l.s8.bf16 %v2400
        %v4581 = vunpack.c.l.s8.bf16 %v2401
        %v4582 = vunpack.c.h.s8.bf16 %v2400
        %v4583 = vunpack.c.h.s8.bf16 %v2401
        %v4584 = vunpack.c.l.s8.bf16 %v2402
        %v4585 = vunpack.c.l.s8.bf16 %v2403
        %v4586 = vunpack.c.h.s8.bf16 %v2402
        %v4587 = vunpack.c.h.s8.bf16 %v2403
        %v4588 = vunpack.c.l.s8.bf16 %v2404
        %v4589 = vunpack.c.l.s8.bf16 %v2405
        %v4590 = vunpack.c.h.s8.bf16 %v2404
        %v4591 = vunpack.c.h.s8.bf16 %v2405
        %v4592 = vunpack.c.l.s8.bf16 %v2406
        %v4593 = vunpack.c.l.s8.bf16 %v2407
        %v4594 = vunpack.c.h.s8.bf16 %v2406
        %v4595 = vunpack.c.h.s8.bf16 %v2407
        %v4596 = vunpack.c.l.s8.bf16 %v2408
        %v4597 = vunpack.c.l.s8.bf16 %v2409
        %v4598 = vunpack.c.h.s8.bf16 %v2408
        %v4599 = vunpack.c.h.s8.bf16 %v2409
        %v4600 = vunpack.c.l.s8.bf16 %v2410
        %v4601 = vunpack.c.l.s8.bf16 %v2411
        %v4602 = vunpack.c.h.s8.bf16 %v2410
        %v4603 = vunpack.c.h.s8.bf16 %v2411
        %v4604 = vunpack.c.l.s8.bf16 %v2412
        %v4605 = vunpack.c.l.s8.bf16 %v2413
        %v4606 = vunpack.c.h.s8.bf16 %v2412
        %v4607 = vunpack.c.h.s8.bf16 %v2413
        %v4608 = vunpack.c.l.s8.bf16 %v2414
        %v4609 = vunpack.c.l.s8.bf16 %v2415
        %v4610 = vunpack.c.h.s8.bf16 %v2414
        %v4611 = vunpack.c.h.s8.bf16 %v2415
        %v4612 = vunpack.c.l.s8.bf16 %v2416
        %v4613 = vunpack.c.l.s8.bf16 %v2417
        %v4614 = vunpack.c.h.s8.bf16 %v2416
        %v4615 = vunpack.c.h.s8.bf16 %v2417
        %v4616 = vunpack.c.l.s8.bf16 %v2418
        %v4617 = vunpack.c.l.s8.bf16 %v2419
        %v4618 = vunpack.c.h.s8.bf16 %v2418
        %v4619 = vunpack.c.h.s8.bf16 %v2419
        %v4620 = vunpack.c.l.s8.bf16 %v2420
        %v4621 = vunpack.c.l.s8.bf16 %v2421
        %v4622 = vunpack.c.h.s8.bf16 %v2420
        %v4623 = vunpack.c.h.s8.bf16 %v2421
        %v4624 = vunpack.c.l.s8.bf16 %v2422
        %v4625 = vunpack.c.l.s8.bf16 %v2423
        %v4626 = vunpack.c.h.s8.bf16 %v2422
        %v4627 = vunpack.c.h.s8.bf16 %v2423
        %v4628 = vunpack.c.l.s8.bf16 %v2424
        %v4629 = vunpack.c.l.s8.bf16 %v2425
        %v4630 = vunpack.c.h.s8.bf16 %v2424
        %v4631 = vunpack.c.h.s8.bf16 %v2425
        %v4632 = vunpack.c.l.s8.bf16 %v2426
        %v4633 = vunpack.c.l.s8.bf16 %v2427
        %v4634 = vunpack.c.h.s8.bf16 %v2426
        %v4635 = vunpack.c.h.s8.bf16 %v2427
        %v4636 = vunpack.c.l.s8.bf16 %v2428
        %v4637 = vunpack.c.l.s8.bf16 %v2429
        %v4638 = vunpack.c.h.s8.bf16 %v2428
        %v4639 = vunpack.c.h.s8.bf16 %v2429
        %v4640 = vunpack.c.l.s8.bf16 %v2430
        %v4641 = vunpack.c.l.s8.bf16 %v2431
        %v4642 = vunpack.c.h.s8.bf16 %v2430
        %v4643 = vunpack.c.h.s8.bf16 %v2431
        %v4644 = vunpack.c.l.s8.bf16 %v2432
        %v4645 = vunpack.c.l.s8.bf16 %v2433
        %v4646 = vunpack.c.h.s8.bf16 %v2432
        %v4647 = vunpack.c.h.s8.bf16 %v2433
        %v4648 = vunpack.c.l.s8.bf16 %v2434
        %v4649 = vunpack.c.l.s8.bf16 %v2435
        %v4650 = vunpack.c.h.s8.bf16 %v2434
        %v4651 = vunpack.c.h.s8.bf16 %v2435
        %v4652 = vunpack.c.l.s8.bf16 %v2436
        %v4653 = vunpack.c.l.s8.bf16 %v2437
        %v4654 = vunpack.c.h.s8.bf16 %v2436
        %v4655 = vunpack.c.h.s8.bf16 %v2437
        %v4656 = vunpack.c.l.s8.bf16 %v2438
        %v4657 = vunpack.c.l.s8.bf16 %v2439
        %v4658 = vunpack.c.h.s8.bf16 %v2438
        %v4659 = vunpack.c.h.s8.bf16 %v2439
        %v4660 = vunpack.c.l.s8.bf16 %v2440
        %v4661 = vunpack.c.l.s8.bf16 %v2441
        %v4662 = vunpack.c.h.s8.bf16 %v2440
        %v4663 = vunpack.c.h.s8.bf16 %v2441
        %v4664 = vunpack.c.l.s8.bf16 %v2442
        %v4665 = vunpack.c.l.s8.bf16 %v2443
        %v4666 = vunpack.c.h.s8.bf16 %v2442
        %v4667 = vunpack.c.h.s8.bf16 %v2443
        %v4668 = vunpack.c.l.s8.bf16 %v2444
        %v4669 = vunpack.c.l.s8.bf16 %v2445
        %v4670 = vunpack.c.h.s8.bf16 %v2444
        %v4671 = vunpack.c.h.s8.bf16 %v2445
        %v4672 = vunpack.c.l.s8.bf16 %v2446
        %v4673 = vunpack.c.l.s8.bf16 %v2447
        %v4674 = vunpack.c.h.s8.bf16 %v2446
        %v4675 = vunpack.c.h.s8.bf16 %v2447
        %v4676 = vunpack.c.l.s8.bf16 %v2448
        %v4677 = vunpack.c.l.s8.bf16 %v2449
        %v4678 = vunpack.c.h.s8.bf16 %v2448
        %v4679 = vunpack.c.h.s8.bf16 %v2449
        %v4680 = vunpack.c.l.s8.bf16 %v2450
        %v4681 = vunpack.c.l.s8.bf16 %v2451
        %v4682 = vunpack.c.h.s8.bf16 %v2450
        %v4683 = vunpack.c.h.s8.bf16 %v2451
        %v4684 = vunpack.c.l.s8.bf16 %v2452
        %v4685 = vunpack.c.l.s8.bf16 %v2453
        %v4686 = vunpack.c.h.s8.bf16 %v2452
        %v4687 = vunpack.c.h.s8.bf16 %v2453
        %v4688 = vunpack.c.l.s8.bf16 %v2454
        %v4689 = vunpack.c.l.s8.bf16 %v2455
        %v4690 = vunpack.c.h.s8.bf16 %v2454
        %v4691 = vunpack.c.h.s8.bf16 %v2455
        %v4692 = vunpack.c.l.s8.bf16 %v2456
        %v4693 = vunpack.c.l.s8.bf16 %v2457
        %v4694 = vunpack.c.h.s8.bf16 %v2456
        %v4695 = vunpack.c.h.s8.bf16 %v2457
        %v4696 = vunpack.c.l.s8.bf16 %v2458
        %v4697 = vunpack.c.l.s8.bf16 %v2459
        %v4698 = vunpack.c.h.s8.bf16 %v2458
        %v4699 = vunpack.c.h.s8.bf16 %v2459
        %v4700 = vld [vmem:[#allocation2] sm:$0xf]
        %4701 = vmatprep.subr.bf16.mxu0 %v2475
        %4702 = vmatpush1.bf16.msra.mxu0 %v2474
        %4703 = vmatprep.subr.bf16.mxu0 %v2473
        %4704 = vmatpush1.bf16.msra.mxu0 %v2472
        %4705 = vmatprep.subr.bf16.mxu0 %v2471
        %4706 = vmatpush1.bf16.msra.mxu0 %v2470
        %4707 = vmatprep.subr.bf16.mxu0 %v2469
        %4708 = vmatpush1.bf16.msra.mxu0 %v2468
        %4709 = vmatprep.subr.bf16.mxu0 %v2467
        %4710 = vmatpush1.bf16.msra.mxu0 %v2466
        %4711 = vmatprep.subr.bf16.mxu0 %v2465
        %4712 = vmatpush1.bf16.msra.mxu0 %v2464
        %4713 = vmatprep.subr.bf16.mxu0 %v2463
        %4714 = vmatpush1.bf16.msra.mxu0 %v2462
        %4715 = vmatprep.subr.bf16.mxu0 %v2461
        %4716 = vmatpush1.bf16.msra.mxu0 %v2460
        %4717 = vmatprep.subr.bf16.mxu0 %v2491
        %4718 = vmatpush2.bf16.msra.mxu0 %v2490
        %4719 = vmatprep.subr.bf16.mxu0 %v2489
        %4720 = vmatpush2.bf16.msra.mxu0 %v2488
        %4721 = vmatprep.subr.bf16.mxu0 %v2487
        %4722 = vmatpush2.bf16.msra.mxu0 %v2486
        %4723 = vmatprep.subr.bf16.mxu0 %v2485
        %4724 = vmatpush2.bf16.msra.mxu0 %v2484
        %4725 = vmatprep.subr.bf16.mxu0 %v2483
        %4726 = vmatpush2.bf16.msra.mxu0 %v2482
        %4727 = vmatprep.subr.bf16.mxu0 %v2481
        %4728 = vmatpush2.bf16.msra.mxu0 %v2480
        %4729 = vmatprep.subr.bf16.mxu0 %v2479
        %4730 = vmatpush2.bf16.msra.mxu0 %v2478
        %4731 = vmatprep.subr.bf16.mxu0 %v2477
        %4732 = vmatpush2.bf16.msra.mxu0 %v2476
        %4733 = vmatprep.mubr.bf16.mxu0 %v1201
        %4734 = vmatmul.mubr.bf16.gmra.mxu0 %v1200
        %v4735 = vpop.f32.mrf.mxu0
        %v4736 = vadd.f32 0.0, %v4735
        %v4737 = vpop.f32.mrf.mxu0
        %v4738 = vadd.f32 0.0, %v4737
        %v4739 = vpop.f32.mrf.mxu0
        %v4740 = vpop.f32.mrf.mxu0
        %4741 = vdwg.mxu0
        %4742 = vmatprep.subr.bf16.mxu0 %v2507
        %4743 = vmatpush1.bf16.msra.mxu0 %v2506
        %4744 = vmatprep.subr.bf16.mxu0 %v2505
        %4745 = vmatpush1.bf16.msra.mxu0 %v2504
        %4746 = vmatprep.subr.bf16.mxu0 %v2503
        %4747 = vmatpush1.bf16.msra.mxu0 %v2502
        %4748 = vmatprep.subr.bf16.mxu0 %v2501
        %4749 = vmatpush1.bf16.msra.mxu0 %v2500
        %4750 = vmatprep.subr.bf16.mxu0 %v2499
        %4751 = vmatpush1.bf16.msra.mxu0 %v2498
        %4752 = vmatprep.subr.bf16.mxu0 %v2497
        %4753 = vmatpush1.bf16.msra.mxu0 %v2496
        %4754 = vmatprep.subr.bf16.mxu0 %v2495
        %4755 = vmatpush1.bf16.msra.mxu0 %v2494
        %4756 = vmatprep.subr.bf16.mxu0 %v2493
        %4757 = vmatpush1.bf16.msra.mxu0 %v2492
        %4758 = vmatprep.subr.bf16.mxu0 %v2523
        %4759 = vmatpush2.bf16.msra.mxu0 %v2522
        %4760 = vmatprep.subr.bf16.mxu0 %v2521
        %4761 = vmatpush2.bf16.msra.mxu0 %v2520
        %4762 = vmatprep.subr.bf16.mxu0 %v2519
        %4763 = vmatpush2.bf16.msra.mxu0 %v2518
        %4764 = vmatprep.subr.bf16.mxu0 %v2517
        %4765 = vmatpush2.bf16.msra.mxu0 %v2516
        %4766 = vmatprep.subr.bf16.mxu0 %v2515
        %4767 = vmatpush2.bf16.msra.mxu0 %v2514
        %4768 = vmatprep.subr.bf16.mxu0 %v2513
        %4769 = vmatpush2.bf16.msra.mxu0 %v2512
        %4770 = vmatprep.subr.bf16.mxu0 %v2511
        %4771 = vmatpush2.bf16.msra.mxu0 %v2510
        %4772 = vmatprep.subr.bf16.mxu0 %v2509
        %4773 = vmatpush2.bf16.msra.mxu0 %v2508
        %4774 = vmatprep.mubr.bf16.mxu0 %v1203
        %4775 = vmatmul.mubr.bf16.gmra.mxu0 %v1202
        %v4776 = vpop.f32.mrf.mxu0
        %v4777 = vadd.f32 %v4736, %v4776
        %v4778 = vpop.f32.mrf.mxu0
        %v4779 = vadd.f32 %v4738, %v4778
        %v4780 = vpop.f32.mrf.mxu0
        %v4781 = vpop.f32.mrf.mxu0
        %4782 = vdwg.mxu0
        %4783 = vmatprep.subr.bf16.mxu0 %v2539
        %4784 = vmatpush1.bf16.msra.mxu0 %v2538
        %4785 = vmatprep.subr.bf16.mxu0 %v2537
        %4786 = vmatpush1.bf16.msra.mxu0 %v2536
        %4787 = vmatprep.subr.bf16.mxu0 %v2535
        %4788 = vmatpush1.bf16.msra.mxu0 %v2534
        %4789 = vmatprep.subr.bf16.mxu0 %v2533
        %4790 = vmatpush1.bf16.msra.mxu0 %v2532
        %4791 = vmatprep.subr.bf16.mxu0 %v2531
        %4792 = vmatpush1.bf16.msra.mxu0 %v2530
        %4793 = vmatprep.subr.bf16.mxu0 %v2529
        %4794 = vmatpush1.bf16.msra.mxu0 %v2528
        %4795 = vmatprep.subr.bf16.mxu0 %v2527
        %4796 = vmatpush1.bf16.msra.mxu0 %v2526
        %4797 = vmatprep.subr.bf16.mxu0 %v2525
        %4798 = vmatpush1.bf16.msra.mxu0 %v2524
        %4799 = vmatprep.subr.bf16.mxu0 %v2555
        %4800 = vmatpush2.bf16.msra.mxu0 %v2554
        %4801 = vmatprep.subr.bf16.mxu0 %v2553
        %4802 = vmatpush2.bf16.msra.mxu0 %v2552
        %4803 = vmatprep.subr.bf16.mxu0 %v2551
        %4804 = vmatpush2.bf16.msra.mxu0 %v2550
        %4805 = vmatprep.subr.bf16.mxu0 %v2549
        %4806 = vmatpush2.bf16.msra.mxu0 %v2548
        %4807 = vmatprep.subr.bf16.mxu0 %v2547
        %4808 = vmatpush2.bf16.msra.mxu0 %v2546
        %4809 = vmatprep.subr.bf16.mxu0 %v2545
        %4810 = vmatpush2.bf16.msra.mxu0 %v2544
        %4811 = vmatprep.subr.bf16.mxu0 %v2543
        %4812 = vmatpush2.bf16.msra.mxu0 %v2542
        %4813 = vmatprep.subr.bf16.mxu0 %v2541
        %4814 = vmatpush2.bf16.msra.mxu0 %v2540
        %4815 = vmatprep.mubr.bf16.mxu0 %v1205
        %4816 = vmatmul.mubr.bf16.gmra.mxu0 %v1204
        %v4817 = vpop.f32.mrf.mxu0
        %v4818 = vadd.f32 %v4777, %v4817
        %v4819 = vpop.f32.mrf.mxu0
        %v4820 = vadd.f32 %v4779, %v4819
        %v4821 = vpop.f32.mrf.mxu0
        %v4822 = vpop.f32.mrf.mxu0
        %4823 = vdwg.mxu0
        %4824 = vmatprep.subr.bf16.mxu0 %v2571
        %4825 = vmatpush1.bf16.msra.mxu0 %v2570
        %4826 = vmatprep.subr.bf16.mxu0 %v2569
        %4827 = vmatpush1.bf16.msra.mxu0 %v2568
        %4828 = vmatprep.subr.bf16.mxu0 %v2567
        %4829 = vmatpush1.bf16.msra.mxu0 %v2566
        %4830 = vmatprep.subr.bf16.mxu0 %v2565
        %4831 = vmatpush1.bf16.msra.mxu0 %v2564
        %4832 = vmatprep.subr.bf16.mxu0 %v2563
        %4833 = vmatpush1.bf16.msra.mxu0 %v2562
        %4834 = vmatprep.subr.bf16.mxu0 %v2561
        %4835 = vmatpush1.bf16.msra.mxu0 %v2560
        %4836 = vmatprep.subr.bf16.mxu0 %v2559
        %4837 = vmatpush1.bf16.msra.mxu0 %v2558
        %4838 = vmatprep.subr.bf16.mxu0 %v2557
        %4839 = vmatpush1.bf16.msra.mxu0 %v2556
        %4840 = vmatprep.subr.bf16.mxu0 %v2587
        %4841 = vmatpush2.bf16.msra.mxu0 %v2586
        %4842 = vmatprep.subr.bf16.mxu0 %v2585
        %4843 = vmatpush2.bf16.msra.mxu0 %v2584
        %4844 = vmatprep.subr.bf16.mxu0 %v2583
        %4845 = vmatpush2.bf16.msra.mxu0 %v2582
        %4846 = vmatprep.subr.bf16.mxu0 %v2581
        %4847 = vmatpush2.bf16.msra.mxu0 %v2580
        %4848 = vmatprep.subr.bf16.mxu0 %v2579
        %4849 = vmatpush2.bf16.msra.mxu0 %v2578
        %4850 = vmatprep.subr.bf16.mxu0 %v2577
        %4851 = vmatpush2.bf16.msra.mxu0 %v2576
        %4852 = vmatprep.subr.bf16.mxu0 %v2575
        %4853 = vmatpush2.bf16.msra.mxu0 %v2574
        %4854 = vmatprep.subr.bf16.mxu0 %v2573
        %4855 = vmatpush2.bf16.msra.mxu0 %v2572
        %4856 = vmatprep.mubr.bf16.mxu0 %v1207
        %4857 = vmatmul.mubr.bf16.gmra.mxu0 %v1206
        %v4858 = vpop.f32.mrf.mxu0
        %v4859 = vadd.f32 %v4818, %v4858
        %v4860 = vpop.f32.mrf.mxu0
        %v4861 = vadd.f32 %v4820, %v4860
        %v4862 = vpop.f32.mrf.mxu0
        %v4863 = vpop.f32.mrf.mxu0
        %4864 = vdwg.mxu0
        %4865 = vmatprep.subr.bf16.mxu0 %v2603
        %4866 = vmatpush1.bf16.msra.mxu0 %v2602
        %4867 = vmatprep.subr.bf16.mxu0 %v2601
        %4868 = vmatpush1.bf16.msra.mxu0 %v2600
        %4869 = vmatprep.subr.bf16.mxu0 %v2599
        %4870 = vmatpush1.bf16.msra.mxu0 %v2598
        %4871 = vmatprep.subr.bf16.mxu0 %v2597
        %4872 = vmatpush1.bf16.msra.mxu0 %v2596
        %4873 = vmatprep.subr.bf16.mxu0 %v2595
        %4874 = vmatpush1.bf16.msra.mxu0 %v2594
        %4875 = vmatprep.subr.bf16.mxu0 %v2593
        %4876 = vmatpush1.bf16.msra.mxu0 %v2592
        %4877 = vmatprep.subr.bf16.mxu0 %v2591
        %4878 = vmatpush1.bf16.msra.mxu0 %v2590
        %4879 = vmatprep.subr.bf16.mxu0 %v2589
        %4880 = vmatpush1.bf16.msra.mxu0 %v2588
        %4881 = vmatprep.subr.bf16.mxu0 %v2619
        %4882 = vmatpush2.bf16.msra.mxu0 %v2618
        %4883 = vmatprep.subr.bf16.mxu0 %v2617
        %4884 = vmatpush2.bf16.msra.mxu0 %v2616
        %4885 = vmatprep.subr.bf16.mxu0 %v2615
        %4886 = vmatpush2.bf16.msra.mxu0 %v2614
        %4887 = vmatprep.subr.bf16.mxu0 %v2613
        %4888 = vmatpush2.bf16.msra.mxu0 %v2612
        %4889 = vmatprep.subr.bf16.mxu0 %v2611
        %4890 = vmatpush2.bf16.msra.mxu0 %v2610
        %4891 = vmatprep.subr.bf16.mxu0 %v2609
        %4892 = vmatpush2.bf16.msra.mxu0 %v2608
        %4893 = vmatprep.subr.bf16.mxu0 %v2607
        %4894 = vmatpush2.bf16.msra.mxu0 %v2606
        %4895 = vmatprep.subr.bf16.mxu0 %v2605
        %4896 = vmatpush2.bf16.msra.mxu0 %v2604
        %4897 = vmatprep.mubr.bf16.mxu0 %v1209
        %4898 = vmatmul.mubr.bf16.gmra.mxu0 %v1208
        %v4899 = vpop.f32.mrf.mxu0
        %v4900 = vadd.f32 %v4859, %v4899
        %v4901 = vpop.f32.mrf.mxu0
        %v4902 = vadd.f32 %v4861, %v4901
        %v4903 = vpop.f32.mrf.mxu0
        %v4904 = vpop.f32.mrf.mxu0
        %4905 = vdwg.mxu0
        %4906 = vmatprep.subr.bf16.mxu0 %v2635
        %4907 = vmatpush1.bf16.msra.mxu0 %v2634
        %4908 = vmatprep.subr.bf16.mxu0 %v2633
        %4909 = vmatpush1.bf16.msra.mxu0 %v2632
        %4910 = vmatprep.subr.bf16.mxu0 %v2631
        %4911 = vmatpush1.bf16.msra.mxu0 %v2630
        %4912 = vmatprep.subr.bf16.mxu0 %v2629
        %4913 = vmatpush1.bf16.msra.mxu0 %v2628
        %4914 = vmatprep.subr.bf16.mxu0 %v2627
        %4915 = vmatpush1.bf16.msra.mxu0 %v2626
        %4916 = vmatprep.subr.bf16.mxu0 %v2625
        %4917 = vmatpush1.bf16.msra.mxu0 %v2624
        %4918 = vmatprep.subr.bf16.mxu0 %v2623
        %4919 = vmatpush1.bf16.msra.mxu0 %v2622
        %4920 = vmatprep.subr.bf16.mxu0 %v2621
        %4921 = vmatpush1.bf16.msra.mxu0 %v2620
        %4922 = vmatprep.subr.bf16.mxu0 %v2651
        %4923 = vmatpush2.bf16.msra.mxu0 %v2650
        %4924 = vmatprep.subr.bf16.mxu0 %v2649
        %4925 = vmatpush2.bf16.msra.mxu0 %v2648
        %4926 = vmatprep.subr.bf16.mxu0 %v2647
        %4927 = vmatpush2.bf16.msra.mxu0 %v2646
        %4928 = vmatprep.subr.bf16.mxu0 %v2645
        %4929 = vmatpush2.bf16.msra.mxu0 %v2644
        %4930 = vmatprep.subr.bf16.mxu0 %v2643
        %4931 = vmatpush2.bf16.msra.mxu0 %v2642
        %4932 = vmatprep.subr.bf16.mxu0 %v2641
        %4933 = vmatpush2.bf16.msra.mxu0 %v2640
        %4934 = vmatprep.subr.bf16.mxu0 %v2639
        %4935 = vmatpush2.bf16.msra.mxu0 %v2638
        %4936 = vmatprep.subr.bf16.mxu0 %v2637
        %4937 = vmatpush2.bf16.msra.mxu0 %v2636
        %4938 = vmatprep.mubr.bf16.mxu0 %v1211
        %4939 = vmatmul.mubr.bf16.gmra.mxu0 %v1210
        %v4940 = vpop.f32.mrf.mxu0
        %v4941 = vadd.f32 %v4900, %v4940
        %v4942 = vpop.f32.mrf.mxu0
        %v4943 = vadd.f32 %v4902, %v4942
        %v4944 = vpop.f32.mrf.mxu0
        %v4945 = vpop.f32.mrf.mxu0
        %4946 = vdwg.mxu0
        %4947 = vmatprep.subr.bf16.mxu0 %v2667
        %4948 = vmatpush1.bf16.msra.mxu0 %v2666
        %4949 = vmatprep.subr.bf16.mxu0 %v2665
        %4950 = vmatpush1.bf16.msra.mxu0 %v2664
        %4951 = vmatprep.subr.bf16.mxu0 %v2663
        %4952 = vmatpush1.bf16.msra.mxu0 %v2662
        %4953 = vmatprep.subr.bf16.mxu0 %v2661
        %4954 = vmatpush1.bf16.msra.mxu0 %v2660
        %4955 = vmatprep.subr.bf16.mxu0 %v2659
        %4956 = vmatpush1.bf16.msra.mxu0 %v2658
        %4957 = vmatprep.subr.bf16.mxu0 %v2657
        %4958 = vmatpush1.bf16.msra.mxu0 %v2656
        %4959 = vmatprep.subr.bf16.mxu0 %v2655
        %4960 = vmatpush1.bf16.msra.mxu0 %v2654
        %4961 = vmatprep.subr.bf16.mxu0 %v2653
        %4962 = vmatpush1.bf16.msra.mxu0 %v2652
        %4963 = vmatprep.subr.bf16.mxu0 %v2683
        %4964 = vmatpush2.bf16.msra.mxu0 %v2682
        %4965 = vmatprep.subr.bf16.mxu0 %v2681
        %4966 = vmatpush2.bf16.msra.mxu0 %v2680
        %4967 = vmatprep.subr.bf16.mxu0 %v2679
        %4968 = vmatpush2.bf16.msra.mxu0 %v2678
        %4969 = vmatprep.subr.bf16.mxu0 %v2677
        %4970 = vmatpush2.bf16.msra.mxu0 %v2676
        %4971 = vmatprep.subr.bf16.mxu0 %v2675
        %4972 = vmatpush2.bf16.msra.mxu0 %v2674
        %4973 = vmatprep.subr.bf16.mxu0 %v2673
        %4974 = vmatpush2.bf16.msra.mxu0 %v2672
        %4975 = vmatprep.subr.bf16.mxu0 %v2671
        %4976 = vmatpush2.bf16.msra.mxu0 %v2670
        %4977 = vmatprep.subr.bf16.mxu0 %v2669
        %4978 = vmatpush2.bf16.msra.mxu0 %v2668
        %4979 = vmatprep.mubr.bf16.mxu0 %v1213
        %4980 = vmatmul.mubr.bf16.gmra.mxu0 %v1212
        %v4981 = vpop.f32.mrf.mxu0
        %v4982 = vadd.f32 %v4941, %v4981
        %v4983 = vpop.f32.mrf.mxu0
        %v4984 = vadd.f32 %v4943, %v4983
        %v4985 = vpop.f32.mrf.mxu0
        %v4986 = vpop.f32.mrf.mxu0
        %4987 = vdwg.mxu0
        %4988 = vmatprep.subr.bf16.mxu0 %v2699
        %4989 = vmatpush1.bf16.msra.mxu0 %v2698
        %4990 = vmatprep.subr.bf16.mxu0 %v2697
        %4991 = vmatpush1.bf16.msra.mxu0 %v2696
        %4992 = vmatprep.subr.bf16.mxu0 %v2695
        %4993 = vmatpush1.bf16.msra.mxu0 %v2694
        %4994 = vmatprep.subr.bf16.mxu0 %v2693
        %4995 = vmatpush1.bf16.msra.mxu0 %v2692
        %4996 = vmatprep.subr.bf16.mxu0 %v2691
        %4997 = vmatpush1.bf16.msra.mxu0 %v2690
        %4998 = vmatprep.subr.bf16.mxu0 %v2689
        %4999 = vmatpush1.bf16.msra.mxu0 %v2688
        %5000 = vmatprep.subr.bf16.mxu0 %v2687
        %5001 = vmatpush1.bf16.msra.mxu0 %v2686
        %5002 = vmatprep.subr.bf16.mxu0 %v2685
        %5003 = vmatpush1.bf16.msra.mxu0 %v2684
        %5004 = vmatprep.subr.bf16.mxu0 %v2715
        %5005 = vmatpush2.bf16.msra.mxu0 %v2714
        %5006 = vmatprep.subr.bf16.mxu0 %v2713
        %5007 = vmatpush2.bf16.msra.mxu0 %v2712
        %5008 = vmatprep.subr.bf16.mxu0 %v2711
        %5009 = vmatpush2.bf16.msra.mxu0 %v2710
        %5010 = vmatprep.subr.bf16.mxu0 %v2709
        %5011 = vmatpush2.bf16.msra.mxu0 %v2708
        %5012 = vmatprep.subr.bf16.mxu0 %v2707
        %5013 = vmatpush2.bf16.msra.mxu0 %v2706
        %5014 = vmatprep.subr.bf16.mxu0 %v2705
        %5015 = vmatpush2.bf16.msra.mxu0 %v2704
        %5016 = vmatprep.subr.bf16.mxu0 %v2703
        %5017 = vmatpush2.bf16.msra.mxu0 %v2702
        %5018 = vmatprep.subr.bf16.mxu0 %v2701
        %5019 = vmatpush2.bf16.msra.mxu0 %v2700
        %5020 = vmatprep.mubr.bf16.mxu0 %v1215
        %5021 = vmatmul.mubr.bf16.gmra.mxu0 %v1214
        %v5022 = vpop.f32.mrf.mxu0
        %v5023 = vadd.f32 %v4982, %v5022
        %v5024 = vpop.f32.mrf.mxu0
        %v5025 = vadd.f32 %v4984, %v5024
        %v5026 = vpop.f32.mrf.mxu0
        %v5027 = vpop.f32.mrf.mxu0
        %5028 = vdwg.mxu0
        %5029 = vmatprep.subr.bf16.mxu0 %v2731
        %5030 = vmatpush1.bf16.msra.mxu0 %v2730
        %5031 = vmatprep.subr.bf16.mxu0 %v2729
        %5032 = vmatpush1.bf16.msra.mxu0 %v2728
        %5033 = vmatprep.subr.bf16.mxu0 %v2727
        %5034 = vmatpush1.bf16.msra.mxu0 %v2726
        %5035 = vmatprep.subr.bf16.mxu0 %v2725
        %5036 = vmatpush1.bf16.msra.mxu0 %v2724
        %5037 = vmatprep.subr.bf16.mxu0 %v2723
        %5038 = vmatpush1.bf16.msra.mxu0 %v2722
        %5039 = vmatprep.subr.bf16.mxu0 %v2721
        %5040 = vmatpush1.bf16.msra.mxu0 %v2720
        %5041 = vmatprep.subr.bf16.mxu0 %v2719
        %5042 = vmatpush1.bf16.msra.mxu0 %v2718
        %5043 = vmatprep.subr.bf16.mxu0 %v2717
        %5044 = vmatpush1.bf16.msra.mxu0 %v2716
        %5045 = vmatprep.subr.bf16.mxu0 %v2747
        %5046 = vmatpush2.bf16.msra.mxu0 %v2746
        %5047 = vmatprep.subr.bf16.mxu0 %v2745
        %5048 = vmatpush2.bf16.msra.mxu0 %v2744
        %5049 = vmatprep.subr.bf16.mxu0 %v2743
        %5050 = vmatpush2.bf16.msra.mxu0 %v2742
        %5051 = vmatprep.subr.bf16.mxu0 %v2741
        %5052 = vmatpush2.bf16.msra.mxu0 %v2740
        %5053 = vmatprep.subr.bf16.mxu0 %v2739
        %5054 = vmatpush2.bf16.msra.mxu0 %v2738
        %5055 = vmatprep.subr.bf16.mxu0 %v2737
        %5056 = vmatpush2.bf16.msra.mxu0 %v2736
        %5057 = vmatprep.subr.bf16.mxu0 %v2735
        %5058 = vmatpush2.bf16.msra.mxu0 %v2734
        %5059 = vmatprep.subr.bf16.mxu0 %v2733
        %5060 = vmatpush2.bf16.msra.mxu0 %v2732
        %5061 = vmatprep.mubr.bf16.mxu0 %v1217
        %5062 = vmatmul.mubr.bf16.gmra.mxu0 %v1216
        %v5063 = vpop.f32.mrf.mxu0
        %v5064 = vadd.f32 %v5023, %v5063
        %v5065 = vpop.f32.mrf.mxu0
        %v5066 = vadd.f32 %v5025, %v5065
        %v5067 = vpop.f32.mrf.mxu0
        %v5068 = vpop.f32.mrf.mxu0
        %5069 = vdwg.mxu0
        %5070 = vmatprep.subr.bf16.mxu0 %v2763
        %5071 = vmatpush1.bf16.msra.mxu0 %v2762
        %5072 = vmatprep.subr.bf16.mxu0 %v2761
        %5073 = vmatpush1.bf16.msra.mxu0 %v2760
        %5074 = vmatprep.subr.bf16.mxu0 %v2759
        %5075 = vmatpush1.bf16.msra.mxu0 %v2758
        %5076 = vmatprep.subr.bf16.mxu0 %v2757
        %5077 = vmatpush1.bf16.msra.mxu0 %v2756
        %5078 = vmatprep.subr.bf16.mxu0 %v2755
        %5079 = vmatpush1.bf16.msra.mxu0 %v2754
        %5080 = vmatprep.subr.bf16.mxu0 %v2753
        %5081 = vmatpush1.bf16.msra.mxu0 %v2752
        %5082 = vmatprep.subr.bf16.mxu0 %v2751
        %5083 = vmatpush1.bf16.msra.mxu0 %v2750
        %5084 = vmatprep.subr.bf16.mxu0 %v2749
        %5085 = vmatpush1.bf16.msra.mxu0 %v2748
        %5086 = vmatprep.subr.bf16.mxu0 %v2779
        %5087 = vmatpush2.bf16.msra.mxu0 %v2778
        %5088 = vmatprep.subr.bf16.mxu0 %v2777
        %5089 = vmatpush2.bf16.msra.mxu0 %v2776
        %5090 = vmatprep.subr.bf16.mxu0 %v2775
        %5091 = vmatpush2.bf16.msra.mxu0 %v2774
        %5092 = vmatprep.subr.bf16.mxu0 %v2773
        %5093 = vmatpush2.bf16.msra.mxu0 %v2772
        %5094 = vmatprep.subr.bf16.mxu0 %v2771
        %5095 = vmatpush2.bf16.msra.mxu0 %v2770
        %5096 = vmatprep.subr.bf16.mxu0 %v2769
        %5097 = vmatpush2.bf16.msra.mxu0 %v2768
        %5098 = vmatprep.subr.bf16.mxu0 %v2767
        %5099 = vmatpush2.bf16.msra.mxu0 %v2766
        %5100 = vmatprep.subr.bf16.mxu0 %v2765
        %5101 = vmatpush2.bf16.msra.mxu0 %v2764
        %5102 = vmatprep.mubr.bf16.mxu0 %v1219
        %5103 = vmatmul.mubr.bf16.gmra.mxu0 %v1218
        %v5104 = vpop.f32.mrf.mxu0
        %v5105 = vadd.f32 %v5064, %v5104
        %v5106 = vpop.f32.mrf.mxu0
        %v5107 = vadd.f32 %v5066, %v5106
        %v5108 = vpop.f32.mrf.mxu0
        %v5109 = vpop.f32.mrf.mxu0
        %5110 = vdwg.mxu0
        %5111 = vmatprep.subr.bf16.mxu0 %v2795
        %5112 = vmatpush1.bf16.msra.mxu0 %v2794
        %5113 = vmatprep.subr.bf16.mxu0 %v2793
        %5114 = vmatpush1.bf16.msra.mxu0 %v2792
        %5115 = vmatprep.subr.bf16.mxu0 %v2791
        %5116 = vmatpush1.bf16.msra.mxu0 %v2790
        %5117 = vmatprep.subr.bf16.mxu0 %v2789
        %5118 = vmatpush1.bf16.msra.mxu0 %v2788
        %5119 = vmatprep.subr.bf16.mxu0 %v2787
        %5120 = vmatpush1.bf16.msra.mxu0 %v2786
        %5121 = vmatprep.subr.bf16.mxu0 %v2785
        %5122 = vmatpush1.bf16.msra.mxu0 %v2784
        %5123 = vmatprep.subr.bf16.mxu0 %v2783
        %5124 = vmatpush1.bf16.msra.mxu0 %v2782
        %5125 = vmatprep.subr.bf16.mxu0 %v2781
        %5126 = vmatpush1.bf16.msra.mxu0 %v2780
        %5127 = vmatprep.subr.bf16.mxu0 %v2811
        %5128 = vmatpush2.bf16.msra.mxu0 %v2810
        %5129 = vmatprep.subr.bf16.mxu0 %v2809
        %5130 = vmatpush2.bf16.msra.mxu0 %v2808
        %5131 = vmatprep.subr.bf16.mxu0 %v2807
        %5132 = vmatpush2.bf16.msra.mxu0 %v2806
        %5133 = vmatprep.subr.bf16.mxu0 %v2805
        %5134 = vmatpush2.bf16.msra.mxu0 %v2804
        %5135 = vmatprep.subr.bf16.mxu0 %v2803
        %5136 = vmatpush2.bf16.msra.mxu0 %v2802
        %5137 = vmatprep.subr.bf16.mxu0 %v2801
        %5138 = vmatpush2.bf16.msra.mxu0 %v2800
        %5139 = vmatprep.subr.bf16.mxu0 %v2799
        %5140 = vmatpush2.bf16.msra.mxu0 %v2798
        %5141 = vmatprep.subr.bf16.mxu0 %v2797
        %5142 = vmatpush2.bf16.msra.mxu0 %v2796
        %5143 = vmatprep.mubr.bf16.mxu0 %v1221
        %5144 = vmatmul.mubr.bf16.gmra.mxu0 %v1220
        %v5145 = vpop.f32.mrf.mxu0
        %v5146 = vadd.f32 %v5105, %v5145
        %v5147 = vpop.f32.mrf.mxu0
        %v5148 = vadd.f32 %v5107, %v5147
        %v5149 = vpop.f32.mrf.mxu0
        %v5150 = vpop.f32.mrf.mxu0
        %5151 = vdwg.mxu0
        %5152 = vmatprep.subr.bf16.mxu0 %v2827
        %5153 = vmatpush1.bf16.msra.mxu0 %v2826
        %5154 = vmatprep.subr.bf16.mxu0 %v2825
        %5155 = vmatpush1.bf16.msra.mxu0 %v2824
        %5156 = vmatprep.subr.bf16.mxu0 %v2823
        %5157 = vmatpush1.bf16.msra.mxu0 %v2822
        %5158 = vmatprep.subr.bf16.mxu0 %v2821
        %5159 = vmatpush1.bf16.msra.mxu0 %v2820
        %5160 = vmatprep.subr.bf16.mxu0 %v2819
        %5161 = vmatpush1.bf16.msra.mxu0 %v2818
        %5162 = vmatprep.subr.bf16.mxu0 %v2817
        %5163 = vmatpush1.bf16.msra.mxu0 %v2816
        %5164 = vmatprep.subr.bf16.mxu0 %v2815
        %5165 = vmatpush1.bf16.msra.mxu0 %v2814
        %5166 = vmatprep.subr.bf16.mxu0 %v2813
        %5167 = vmatpush1.bf16.msra.mxu0 %v2812
        %5168 = vmatprep.subr.bf16.mxu0 %v2843
        %5169 = vmatpush2.bf16.msra.mxu0 %v2842
        %5170 = vmatprep.subr.bf16.mxu0 %v2841
        %5171 = vmatpush2.bf16.msra.mxu0 %v2840
        %5172 = vmatprep.subr.bf16.mxu0 %v2839
        %5173 = vmatpush2.bf16.msra.mxu0 %v2838
        %5174 = vmatprep.subr.bf16.mxu0 %v2837
        %5175 = vmatpush2.bf16.msra.mxu0 %v2836
        %5176 = vmatprep.subr.bf16.mxu0 %v2835
        %5177 = vmatpush2.bf16.msra.mxu0 %v2834
        %5178 = vmatprep.subr.bf16.mxu0 %v2833
        %5179 = vmatpush2.bf16.msra.mxu0 %v2832
        %5180 = vmatprep.subr.bf16.mxu0 %v2831
        %5181 = vmatpush2.bf16.msra.mxu0 %v2830
        %5182 = vmatprep.subr.bf16.mxu0 %v2829
        %5183 = vmatpush2.bf16.msra.mxu0 %v2828
        %5184 = vmatprep.mubr.bf16.mxu0 %v1223
        %5185 = vmatmul.mubr.bf16.gmra.mxu0 %v1222
        %v5186 = vpop.f32.mrf.mxu0
        %v5187 = vadd.f32 %v5146, %v5186
        %v5188 = vpop.f32.mrf.mxu0
        %v5189 = vadd.f32 %v5148, %v5188
        %v5190 = vpop.f32.mrf.mxu0
        %v5191 = vpop.f32.mrf.mxu0
        %5192 = vdwg.mxu0
        %5193 = vmatprep.subr.bf16.mxu0 %v2859
        %5194 = vmatpush1.bf16.msra.mxu0 %v2858
        %5195 = vmatprep.subr.bf16.mxu0 %v2857
        %5196 = vmatpush1.bf16.msra.mxu0 %v2856
        %5197 = vmatprep.subr.bf16.mxu0 %v2855
        %5198 = vmatpush1.bf16.msra.mxu0 %v2854
        %5199 = vmatprep.subr.bf16.mxu0 %v2853
        %5200 = vmatpush1.bf16.msra.mxu0 %v2852
        %5201 = vmatprep.subr.bf16.mxu0 %v2851
        %5202 = vmatpush1.bf16.msra.mxu0 %v2850
        %5203 = vmatprep.subr.bf16.mxu0 %v2849
        %5204 = vmatpush1.bf16.msra.mxu0 %v2848
        %5205 = vmatprep.subr.bf16.mxu0 %v2847
        %5206 = vmatpush1.bf16.msra.mxu0 %v2846
        %5207 = vmatprep.subr.bf16.mxu0 %v2845
        %5208 = vmatpush1.bf16.msra.mxu0 %v2844
        %5209 = vmatprep.subr.bf16.mxu0 %v2875
        %5210 = vmatpush2.bf16.msra.mxu0 %v2874
        %5211 = vmatprep.subr.bf16.mxu0 %v2873
        %5212 = vmatpush2.bf16.msra.mxu0 %v2872
        %5213 = vmatprep.subr.bf16.mxu0 %v2871
        %5214 = vmatpush2.bf16.msra.mxu0 %v2870
        %5215 = vmatprep.subr.bf16.mxu0 %v2869
        %5216 = vmatpush2.bf16.msra.mxu0 %v2868
        %5217 = vmatprep.subr.bf16.mxu0 %v2867
        %5218 = vmatpush2.bf16.msra.mxu0 %v2866
        %5219 = vmatprep.subr.bf16.mxu0 %v2865
        %5220 = vmatpush2.bf16.msra.mxu0 %v2864
        %5221 = vmatprep.subr.bf16.mxu0 %v2863
        %5222 = vmatpush2.bf16.msra.mxu0 %v2862
        %5223 = vmatprep.subr.bf16.mxu0 %v2861
        %5224 = vmatpush2.bf16.msra.mxu0 %v2860
        %5225 = vmatprep.mubr.bf16.mxu0 %v1225
        %5226 = vmatmul.mubr.bf16.gmra.mxu0 %v1224
        %v5227 = vpop.f32.mrf.mxu0
        %v5228 = vadd.f32 %v5187, %v5227
        %v5229 = vpop.f32.mrf.mxu0
        %v5230 = vadd.f32 %v5189, %v5229
        %v5231 = vpop.f32.mrf.mxu0
        %v5232 = vpop.f32.mrf.mxu0
        %5233 = vdwg.mxu0
        %5234 = vmatprep.subr.bf16.mxu0 %v2891
        %5235 = vmatpush1.bf16.msra.mxu0 %v2890
        %5236 = vmatprep.subr.bf16.mxu0 %v2889
        %5237 = vmatpush1.bf16.msra.mxu0 %v2888
        %5238 = vmatprep.subr.bf16.mxu0 %v2887
        %5239 = vmatpush1.bf16.msra.mxu0 %v2886
        %5240 = vmatprep.subr.bf16.mxu0 %v2885
        %5241 = vmatpush1.bf16.msra.mxu0 %v2884
        %5242 = vmatprep.subr.bf16.mxu0 %v2883
        %5243 = vmatpush1.bf16.msra.mxu0 %v2882
        %5244 = vmatprep.subr.bf16.mxu0 %v2881
        %5245 = vmatpush1.bf16.msra.mxu0 %v2880
        %5246 = vmatprep.subr.bf16.mxu0 %v2879
        %5247 = vmatpush1.bf16.msra.mxu0 %v2878
        %5248 = vmatprep.subr.bf16.mxu0 %v2877
        %5249 = vmatpush1.bf16.msra.mxu0 %v2876
        %5250 = vmatprep.subr.bf16.mxu0 %v2907
        %5251 = vmatpush2.bf16.msra.mxu0 %v2906
        %5252 = vmatprep.subr.bf16.mxu0 %v2905
        %5253 = vmatpush2.bf16.msra.mxu0 %v2904
        %5254 = vmatprep.subr.bf16.mxu0 %v2903
        %5255 = vmatpush2.bf16.msra.mxu0 %v2902
        %5256 = vmatprep.subr.bf16.mxu0 %v2901
        %5257 = vmatpush2.bf16.msra.mxu0 %v2900
        %5258 = vmatprep.subr.bf16.mxu0 %v2899
        %5259 = vmatpush2.bf16.msra.mxu0 %v2898
        %5260 = vmatprep.subr.bf16.mxu0 %v2897
        %5261 = vmatpush2.bf16.msra.mxu0 %v2896
        %5262 = vmatprep.subr.bf16.mxu0 %v2895
        %5263 = vmatpush2.bf16.msra.mxu0 %v2894
        %5264 = vmatprep.subr.bf16.mxu0 %v2893
        %5265 = vmatpush2.bf16.msra.mxu0 %v2892
        %5266 = vmatprep.mubr.bf16.mxu0 %v1227
        %5267 = vmatmul.mubr.bf16.gmra.mxu0 %v1226
        %v5268 = vpop.f32.mrf.mxu0
        %v5269 = vadd.f32 %v5228, %v5268
        %v5270 = vpop.f32.mrf.mxu0
        %v5271 = vadd.f32 %v5230, %v5270
        %v5272 = vpop.f32.mrf.mxu0
        %v5273 = vpop.f32.mrf.mxu0
        %5274 = vdwg.mxu0
        %5275 = vmatprep.subr.bf16.mxu0 %v2923
        %5276 = vmatpush1.bf16.msra.mxu0 %v2922
        %5277 = vmatprep.subr.bf16.mxu0 %v2921
        %5278 = vmatpush1.bf16.msra.mxu0 %v2920
        %5279 = vmatprep.subr.bf16.mxu0 %v2919
        %5280 = vmatpush1.bf16.msra.mxu0 %v2918
        %5281 = vmatprep.subr.bf16.mxu0 %v2917
        %5282 = vmatpush1.bf16.msra.mxu0 %v2916
        %5283 = vmatprep.subr.bf16.mxu0 %v2915
        %5284 = vmatpush1.bf16.msra.mxu0 %v2914
        %5285 = vmatprep.subr.bf16.mxu0 %v2913
        %5286 = vmatpush1.bf16.msra.mxu0 %v2912
        %5287 = vmatprep.subr.bf16.mxu0 %v2911
        %5288 = vmatpush1.bf16.msra.mxu0 %v2910
        %5289 = vmatprep.subr.bf16.mxu0 %v2909
        %5290 = vmatpush1.bf16.msra.mxu0 %v2908
        %5291 = vmatprep.subr.bf16.mxu0 %v2939
        %5292 = vmatpush2.bf16.msra.mxu0 %v2938
        %5293 = vmatprep.subr.bf16.mxu0 %v2937
        %5294 = vmatpush2.bf16.msra.mxu0 %v2936
        %5295 = vmatprep.subr.bf16.mxu0 %v2935
        %5296 = vmatpush2.bf16.msra.mxu0 %v2934
        %5297 = vmatprep.subr.bf16.mxu0 %v2933
        %5298 = vmatpush2.bf16.msra.mxu0 %v2932
        %5299 = vmatprep.subr.bf16.mxu0 %v2931
        %5300 = vmatpush2.bf16.msra.mxu0 %v2930
        %5301 = vmatprep.subr.bf16.mxu0 %v2929
        %5302 = vmatpush2.bf16.msra.mxu0 %v2928
        %5303 = vmatprep.subr.bf16.mxu0 %v2927
        %5304 = vmatpush2.bf16.msra.mxu0 %v2926
        %5305 = vmatprep.subr.bf16.mxu0 %v2925
        %5306 = vmatpush2.bf16.msra.mxu0 %v2924
        %5307 = vmatprep.mubr.bf16.mxu0 %v1229
        %5308 = vmatmul.mubr.bf16.gmra.mxu0 %v1228
        %v5309 = vpop.f32.mrf.mxu0
        %v5310 = vadd.f32 %v5269, %v5309
        %v5311 = vpop.f32.mrf.mxu0
        %v5312 = vadd.f32 %v5271, %v5311
        %v5313 = vpop.f32.mrf.mxu0
        %v5314 = vpop.f32.mrf.mxu0
        %5315 = vdwg.mxu0
        %5316 = vmatprep.subr.bf16.mxu0 %v2955
        %5317 = vmatpush1.bf16.msra.mxu0 %v2954
        %5318 = vmatprep.subr.bf16.mxu0 %v2953
        %5319 = vmatpush1.bf16.msra.mxu0 %v2952
        %5320 = vmatprep.subr.bf16.mxu0 %v2951
        %5321 = vmatpush1.bf16.msra.mxu0 %v2950
        %5322 = vmatprep.subr.bf16.mxu0 %v2949
        %5323 = vmatpush1.bf16.msra.mxu0 %v2948
        %5324 = vmatprep.subr.bf16.mxu0 %v2947
        %5325 = vmatpush1.bf16.msra.mxu0 %v2946
        %5326 = vmatprep.subr.bf16.mxu0 %v2945
        %5327 = vmatpush1.bf16.msra.mxu0 %v2944
        %5328 = vmatprep.subr.bf16.mxu0 %v2943
        %5329 = vmatpush1.bf16.msra.mxu0 %v2942
        %5330 = vmatprep.subr.bf16.mxu0 %v2941
        %5331 = vmatpush1.bf16.msra.mxu0 %v2940
        %5332 = vmatprep.subr.bf16.mxu0 %v2971
        %5333 = vmatpush2.bf16.msra.mxu0 %v2970
        %5334 = vmatprep.subr.bf16.mxu0 %v2969
        %5335 = vmatpush2.bf16.msra.mxu0 %v2968
        %5336 = vmatprep.subr.bf16.mxu0 %v2967
        %5337 = vmatpush2.bf16.msra.mxu0 %v2966
        %5338 = vmatprep.subr.bf16.mxu0 %v2965
        %5339 = vmatpush2.bf16.msra.mxu0 %v2964
        %5340 = vmatprep.subr.bf16.mxu0 %v2963
        %5341 = vmatpush2.bf16.msra.mxu0 %v2962
        %5342 = vmatprep.subr.bf16.mxu0 %v2961
        %5343 = vmatpush2.bf16.msra.mxu0 %v2960
        %5344 = vmatprep.subr.bf16.mxu0 %v2959
        %5345 = vmatpush2.bf16.msra.mxu0 %v2958
        %5346 = vmatprep.subr.bf16.mxu0 %v2957
        %5347 = vmatpush2.bf16.msra.mxu0 %v2956
        %5348 = vmatprep.mubr.bf16.mxu0 %v1231
        %5349 = vmatmul.mubr.bf16.gmra.mxu0 %v1230
        %v5350 = vpop.f32.mrf.mxu0
        %v5351 = vadd.f32 %v5310, %v5350
        %v5352 = vpop.f32.mrf.mxu0
        %v5353 = vadd.f32 %v5312, %v5352
        %v5354 = vpop.f32.mrf.mxu0
        %v5355 = vpop.f32.mrf.mxu0
        %5356 = vdwg.mxu0
        %5357 = vmatprep.subr.bf16.mxu0 %v2987
        %5358 = vmatpush1.bf16.msra.mxu0 %v2986
        %5359 = vmatprep.subr.bf16.mxu0 %v2985
        %5360 = vmatpush1.bf16.msra.mxu0 %v2984
        %5361 = vmatprep.subr.bf16.mxu0 %v2983
        %5362 = vmatpush1.bf16.msra.mxu0 %v2982
        %5363 = vmatprep.subr.bf16.mxu0 %v2981
        %5364 = vmatpush1.bf16.msra.mxu0 %v2980
        %5365 = vmatprep.subr.bf16.mxu0 %v2979
        %5366 = vmatpush1.bf16.msra.mxu0 %v2978
        %5367 = vmatprep.subr.bf16.mxu0 %v2977
        %5368 = vmatpush1.bf16.msra.mxu0 %v2976
        %5369 = vmatprep.subr.bf16.mxu0 %v2975
        %5370 = vmatpush1.bf16.msra.mxu0 %v2974
        %5371 = vmatprep.subr.bf16.mxu0 %v2973
        %5372 = vmatpush1.bf16.msra.mxu0 %v2972
        %5373 = vmatprep.subr.bf16.mxu0 %v3003
        %5374 = vmatpush2.bf16.msra.mxu0 %v3002
        %5375 = vmatprep.subr.bf16.mxu0 %v3001
        %5376 = vmatpush2.bf16.msra.mxu0 %v3000
        %5377 = vmatprep.subr.bf16.mxu0 %v2999
        %5378 = vmatpush2.bf16.msra.mxu0 %v2998
        %5379 = vmatprep.subr.bf16.mxu0 %v2997
        %5380 = vmatpush2.bf16.msra.mxu0 %v2996
        %5381 = vmatprep.subr.bf16.mxu0 %v2995
        %5382 = vmatpush2.bf16.msra.mxu0 %v2994
        %5383 = vmatprep.subr.bf16.mxu0 %v2993
        %5384 = vmatpush2.bf16.msra.mxu0 %v2992
        %5385 = vmatprep.subr.bf16.mxu0 %v2991
        %5386 = vmatpush2.bf16.msra.mxu0 %v2990
        %5387 = vmatprep.subr.bf16.mxu0 %v2989
        %5388 = vmatpush2.bf16.msra.mxu0 %v2988
        %5389 = vmatprep.mubr.bf16.mxu0 %v1233
        %5390 = vmatmul.mubr.bf16.gmra.mxu0 %v1232
        %v5391 = vpop.f32.mrf.mxu0
        %v5392 = vadd.f32 %v5351, %v5391
        %v5393 = vpop.f32.mrf.mxu0
        %v5394 = vadd.f32 %v5353, %v5393
        %v5395 = vpop.f32.mrf.mxu0
        %v5396 = vpop.f32.mrf.mxu0
        %5397 = vdwg.mxu0
        %5398 = vmatprep.subr.bf16.mxu0 %v3019
        %5399 = vmatpush1.bf16.msra.mxu0 %v3018
        %5400 = vmatprep.subr.bf16.mxu0 %v3017
        %5401 = vmatpush1.bf16.msra.mxu0 %v3016
        %5402 = vmatprep.subr.bf16.mxu0 %v3015
        %5403 = vmatpush1.bf16.msra.mxu0 %v3014
        %5404 = vmatprep.subr.bf16.mxu0 %v3013
        %5405 = vmatpush1.bf16.msra.mxu0 %v3012
        %5406 = vmatprep.subr.bf16.mxu0 %v3011
        %5407 = vmatpush1.bf16.msra.mxu0 %v3010
        %5408 = vmatprep.subr.bf16.mxu0 %v3009
        %5409 = vmatpush1.bf16.msra.mxu0 %v3008
        %5410 = vmatprep.subr.bf16.mxu0 %v3007
        %5411 = vmatpush1.bf16.msra.mxu0 %v3006
        %5412 = vmatprep.subr.bf16.mxu0 %v3005
        %5413 = vmatpush1.bf16.msra.mxu0 %v3004
        %5414 = vmatprep.subr.bf16.mxu0 %v3035
        %5415 = vmatpush2.bf16.msra.mxu0 %v3034
        %5416 = vmatprep.subr.bf16.mxu0 %v3033
        %5417 = vmatpush2.bf16.msra.mxu0 %v3032
        %5418 = vmatprep.subr.bf16.mxu0 %v3031
        %5419 = vmatpush2.bf16.msra.mxu0 %v3030
        %5420 = vmatprep.subr.bf16.mxu0 %v3029
        %5421 = vmatpush2.bf16.msra.mxu0 %v3028
        %5422 = vmatprep.subr.bf16.mxu0 %v3027
        %5423 = vmatpush2.bf16.msra.mxu0 %v3026
        %5424 = vmatprep.subr.bf16.mxu0 %v3025
        %5425 = vmatpush2.bf16.msra.mxu0 %v3024
        %5426 = vmatprep.subr.bf16.mxu0 %v3023
        %5427 = vmatpush2.bf16.msra.mxu0 %v3022
        %5428 = vmatprep.subr.bf16.mxu0 %v3021
        %5429 = vmatpush2.bf16.msra.mxu0 %v3020
        %5430 = vmatprep.mubr.bf16.mxu0 %v1235
        %5431 = vmatmul.mubr.bf16.gmra.mxu0 %v1234
        %v5432 = vpop.f32.mrf.mxu0
        %v5433 = vadd.f32 %v5392, %v5432
        %v5434 = vpop.f32.mrf.mxu0
        %v5435 = vadd.f32 %v5394, %v5434
        %v5436 = vpop.f32.mrf.mxu0
        %v5437 = vpop.f32.mrf.mxu0
        %5438 = vdwg.mxu0
        %5439 = vmatprep.subr.bf16.mxu0 %v3051
        %5440 = vmatpush1.bf16.msra.mxu0 %v3050
        %5441 = vmatprep.subr.bf16.mxu0 %v3049
        %5442 = vmatpush1.bf16.msra.mxu0 %v3048
        %5443 = vmatprep.subr.bf16.mxu0 %v3047
        %5444 = vmatpush1.bf16.msra.mxu0 %v3046
        %5445 = vmatprep.subr.bf16.mxu0 %v3045
        %5446 = vmatpush1.bf16.msra.mxu0 %v3044
        %5447 = vmatprep.subr.bf16.mxu0 %v3043
        %5448 = vmatpush1.bf16.msra.mxu0 %v3042
        %5449 = vmatprep.subr.bf16.mxu0 %v3041
        %5450 = vmatpush1.bf16.msra.mxu0 %v3040
        %5451 = vmatprep.subr.bf16.mxu0 %v3039
        %5452 = vmatpush1.bf16.msra.mxu0 %v3038
        %5453 = vmatprep.subr.bf16.mxu0 %v3037
        %5454 = vmatpush1.bf16.msra.mxu0 %v3036
        %5455 = vmatprep.subr.bf16.mxu0 %v3067
        %5456 = vmatpush2.bf16.msra.mxu0 %v3066
        %5457 = vmatprep.subr.bf16.mxu0 %v3065
        %5458 = vmatpush2.bf16.msra.mxu0 %v3064
        %5459 = vmatprep.subr.bf16.mxu0 %v3063
        %5460 = vmatpush2.bf16.msra.mxu0 %v3062
        %5461 = vmatprep.subr.bf16.mxu0 %v3061
        %5462 = vmatpush2.bf16.msra.mxu0 %v3060
        %5463 = vmatprep.subr.bf16.mxu0 %v3059
        %5464 = vmatpush2.bf16.msra.mxu0 %v3058
        %5465 = vmatprep.subr.bf16.mxu0 %v3057
        %5466 = vmatpush2.bf16.msra.mxu0 %v3056
        %5467 = vmatprep.subr.bf16.mxu0 %v3055
        %5468 = vmatpush2.bf16.msra.mxu0 %v3054
        %5469 = vmatprep.subr.bf16.mxu0 %v3053
        %5470 = vmatpush2.bf16.msra.mxu0 %v3052
        %5471 = vmatprep.mubr.bf16.mxu0 %v1237
        %5472 = vmatmul.mubr.bf16.gmra.mxu0 %v1236
        %v5473 = vpop.f32.mrf.mxu0
        %v5474 = vadd.f32 %v5433, %v5473
        %v5475 = vpop.f32.mrf.mxu0
        %v5476 = vadd.f32 %v5435, %v5475
        %v5477 = vpop.f32.mrf.mxu0
        %v5478 = vpop.f32.mrf.mxu0
        %5479 = vdwg.mxu0
        %5480 = vmatprep.subr.bf16.mxu0 %v3083
        %5481 = vmatpush1.bf16.msra.mxu0 %v3082
        %5482 = vmatprep.subr.bf16.mxu0 %v3081
        %5483 = vmatpush1.bf16.msra.mxu0 %v3080
        %5484 = vmatprep.subr.bf16.mxu0 %v3079
        %5485 = vmatpush1.bf16.msra.mxu0 %v3078
        %5486 = vmatprep.subr.bf16.mxu0 %v3077
        %5487 = vmatpush1.bf16.msra.mxu0 %v3076
        %5488 = vmatprep.subr.bf16.mxu0 %v3075
        %5489 = vmatpush1.bf16.msra.mxu0 %v3074
        %5490 = vmatprep.subr.bf16.mxu0 %v3073
        %5491 = vmatpush1.bf16.msra.mxu0 %v3072
        %5492 = vmatprep.subr.bf16.mxu0 %v3071
        %5493 = vmatpush1.bf16.msra.mxu0 %v3070
        %5494 = vmatprep.subr.bf16.mxu0 %v3069
        %5495 = vmatpush1.bf16.msra.mxu0 %v3068
        %5496 = vmatprep.subr.bf16.mxu0 %v3099
        %5497 = vmatpush2.bf16.msra.mxu0 %v3098
        %5498 = vmatprep.subr.bf16.mxu0 %v3097
        %5499 = vmatpush2.bf16.msra.mxu0 %v3096
        %5500 = vmatprep.subr.bf16.mxu0 %v3095
        %5501 = vmatpush2.bf16.msra.mxu0 %v3094
        %5502 = vmatprep.subr.bf16.mxu0 %v3093
        %5503 = vmatpush2.bf16.msra.mxu0 %v3092
        %5504 = vmatprep.subr.bf16.mxu0 %v3091
        %5505 = vmatpush2.bf16.msra.mxu0 %v3090
        %5506 = vmatprep.subr.bf16.mxu0 %v3089
        %5507 = vmatpush2.bf16.msra.mxu0 %v3088
        %5508 = vmatprep.subr.bf16.mxu0 %v3087
        %5509 = vmatpush2.bf16.msra.mxu0 %v3086
        %5510 = vmatprep.subr.bf16.mxu0 %v3085
        %5511 = vmatpush2.bf16.msra.mxu0 %v3084
        %5512 = vmatprep.mubr.bf16.mxu0 %v1239
        %5513 = vmatmul.mubr.bf16.gmra.mxu0 %v1238
        %v5514 = vpop.f32.mrf.mxu0
        %v5515 = vadd.f32 %v5474, %v5514
        %v5516 = vpop.f32.mrf.mxu0
        %v5517 = vadd.f32 %v5476, %v5516
        %v5518 = vpop.f32.mrf.mxu0
        %v5519 = vpop.f32.mrf.mxu0
        %5520 = vdwg.mxu0
        %5521 = vmatprep.subr.bf16.mxu0 %v3115
        %5522 = vmatpush1.bf16.msra.mxu0 %v3114
        %5523 = vmatprep.subr.bf16.mxu0 %v3113
        %5524 = vmatpush1.bf16.msra.mxu0 %v3112
        %5525 = vmatprep.subr.bf16.mxu0 %v3111
        %5526 = vmatpush1.bf16.msra.mxu0 %v3110
        %5527 = vmatprep.subr.bf16.mxu0 %v3109
        %5528 = vmatpush1.bf16.msra.mxu0 %v3108
        %5529 = vmatprep.subr.bf16.mxu0 %v3107
        %5530 = vmatpush1.bf16.msra.mxu0 %v3106
        %5531 = vmatprep.subr.bf16.mxu0 %v3105
        %5532 = vmatpush1.bf16.msra.mxu0 %v3104
        %5533 = vmatprep.subr.bf16.mxu0 %v3103
        %5534 = vmatpush1.bf16.msra.mxu0 %v3102
        %5535 = vmatprep.subr.bf16.mxu0 %v3101
        %5536 = vmatpush1.bf16.msra.mxu0 %v3100
        %5537 = vmatprep.subr.bf16.mxu0 %v3131
        %5538 = vmatpush2.bf16.msra.mxu0 %v3130
        %5539 = vmatprep.subr.bf16.mxu0 %v3129
        %5540 = vmatpush2.bf16.msra.mxu0 %v3128
        %5541 = vmatprep.subr.bf16.mxu0 %v3127
        %5542 = vmatpush2.bf16.msra.mxu0 %v3126
        %5543 = vmatprep.subr.bf16.mxu0 %v3125
        %5544 = vmatpush2.bf16.msra.mxu0 %v3124
        %5545 = vmatprep.subr.bf16.mxu0 %v3123
        %5546 = vmatpush2.bf16.msra.mxu0 %v3122
        %5547 = vmatprep.subr.bf16.mxu0 %v3121
        %5548 = vmatpush2.bf16.msra.mxu0 %v3120
        %5549 = vmatprep.subr.bf16.mxu0 %v3119
        %5550 = vmatpush2.bf16.msra.mxu0 %v3118
        %5551 = vmatprep.subr.bf16.mxu0 %v3117
        %5552 = vmatpush2.bf16.msra.mxu0 %v3116
        %5553 = vmatprep.mubr.bf16.mxu0 %v1241
        %5554 = vmatmul.mubr.bf16.gmra.mxu0 %v1240
        %v5555 = vpop.f32.mrf.mxu0
        %v5556 = vadd.f32 %v5515, %v5555
        %v5557 = vpop.f32.mrf.mxu0
        %v5558 = vadd.f32 %v5517, %v5557
        %v5559 = vpop.f32.mrf.mxu0
        %v5560 = vpop.f32.mrf.mxu0
        %5561 = vdwg.mxu0
        %5562 = vmatprep.subr.bf16.mxu0 %v3147
        %5563 = vmatpush1.bf16.msra.mxu0 %v3146
        %5564 = vmatprep.subr.bf16.mxu0 %v3145
        %5565 = vmatpush1.bf16.msra.mxu0 %v3144
        %5566 = vmatprep.subr.bf16.mxu0 %v3143
        %5567 = vmatpush1.bf16.msra.mxu0 %v3142
        %5568 = vmatprep.subr.bf16.mxu0 %v3141
        %5569 = vmatpush1.bf16.msra.mxu0 %v3140
        %5570 = vmatprep.subr.bf16.mxu0 %v3139
        %5571 = vmatpush1.bf16.msra.mxu0 %v3138
        %5572 = vmatprep.subr.bf16.mxu0 %v3137
        %5573 = vmatpush1.bf16.msra.mxu0 %v3136
        %5574 = vmatprep.subr.bf16.mxu0 %v3135
        %5575 = vmatpush1.bf16.msra.mxu0 %v3134
        %5576 = vmatprep.subr.bf16.mxu0 %v3133
        %5577 = vmatpush1.bf16.msra.mxu0 %v3132
        %5578 = vmatprep.subr.bf16.mxu0 %v3163
        %5579 = vmatpush2.bf16.msra.mxu0 %v3162
        %5580 = vmatprep.subr.bf16.mxu0 %v3161
        %5581 = vmatpush2.bf16.msra.mxu0 %v3160
        %5582 = vmatprep.subr.bf16.mxu0 %v3159
        %5583 = vmatpush2.bf16.msra.mxu0 %v3158
        %5584 = vmatprep.subr.bf16.mxu0 %v3157
        %5585 = vmatpush2.bf16.msra.mxu0 %v3156
        %5586 = vmatprep.subr.bf16.mxu0 %v3155
        %5587 = vmatpush2.bf16.msra.mxu0 %v3154
        %5588 = vmatprep.subr.bf16.mxu0 %v3153
        %5589 = vmatpush2.bf16.msra.mxu0 %v3152
        %5590 = vmatprep.subr.bf16.mxu0 %v3151
        %5591 = vmatpush2.bf16.msra.mxu0 %v3150
        %5592 = vmatprep.subr.bf16.mxu0 %v3149
        %5593 = vmatpush2.bf16.msra.mxu0 %v3148
        %5594 = vmatprep.mubr.bf16.mxu0 %v1243
        %5595 = vmatmul.mubr.bf16.gmra.mxu0 %v1242
        %v5596 = vpop.f32.mrf.mxu0
        %v5597 = vadd.f32 %v5556, %v5596
        %v5598 = vpop.f32.mrf.mxu0
        %v5599 = vadd.f32 %v5558, %v5598
        %v5600 = vpop.f32.mrf.mxu0
        %v5601 = vpop.f32.mrf.mxu0
        %5602 = vdwg.mxu0
        %5603 = vmatprep.subr.bf16.mxu0 %v3179
        %5604 = vmatpush1.bf16.msra.mxu0 %v3178
        %5605 = vmatprep.subr.bf16.mxu0 %v3177
        %5606 = vmatpush1.bf16.msra.mxu0 %v3176
        %5607 = vmatprep.subr.bf16.mxu0 %v3175
        %5608 = vmatpush1.bf16.msra.mxu0 %v3174
        %5609 = vmatprep.subr.bf16.mxu0 %v3173
        %5610 = vmatpush1.bf16.msra.mxu0 %v3172
        %5611 = vmatprep.subr.bf16.mxu0 %v3171
        %5612 = vmatpush1.bf16.msra.mxu0 %v3170
        %5613 = vmatprep.subr.bf16.mxu0 %v3169
        %5614 = vmatpush1.bf16.msra.mxu0 %v3168
        %5615 = vmatprep.subr.bf16.mxu0 %v3167
        %5616 = vmatpush1.bf16.msra.mxu0 %v3166
        %5617 = vmatprep.subr.bf16.mxu0 %v3165
        %5618 = vmatpush1.bf16.msra.mxu0 %v3164
        %5619 = vmatprep.subr.bf16.mxu0 %v3195
        %5620 = vmatpush2.bf16.msra.mxu0 %v3194
        %5621 = vmatprep.subr.bf16.mxu0 %v3193
        %5622 = vmatpush2.bf16.msra.mxu0 %v3192
        %5623 = vmatprep.subr.bf16.mxu0 %v3191
        %5624 = vmatpush2.bf16.msra.mxu0 %v3190
        %5625 = vmatprep.subr.bf16.mxu0 %v3189
        %5626 = vmatpush2.bf16.msra.mxu0 %v3188
        %5627 = vmatprep.subr.bf16.mxu0 %v3187
        %5628 = vmatpush2.bf16.msra.mxu0 %v3186
        %5629 = vmatprep.subr.bf16.mxu0 %v3185
        %5630 = vmatpush2.bf16.msra.mxu0 %v3184
        %5631 = vmatprep.subr.bf16.mxu0 %v3183
        %5632 = vmatpush2.bf16.msra.mxu0 %v3182
        %5633 = vmatprep.subr.bf16.mxu0 %v3181
        %5634 = vmatpush2.bf16.msra.mxu0 %v3180
        %5635 = vmatprep.mubr.bf16.mxu0 %v1245
        %5636 = vmatmul.mubr.bf16.gmra.mxu0 %v1244
        %v5637 = vpop.f32.mrf.mxu0
        %v5638 = vadd.f32 %v5597, %v5637
        %v5639 = vpop.f32.mrf.mxu0
        %v5640 = vadd.f32 %v5599, %v5639
        %v5641 = vpop.f32.mrf.mxu0
        %v5642 = vpop.f32.mrf.mxu0
        %5643 = vdwg.mxu0
        %5644 = vmatprep.subr.bf16.mxu0 %v3211
        %5645 = vmatpush1.bf16.msra.mxu0 %v3210
        %5646 = vmatprep.subr.bf16.mxu0 %v3209
        %5647 = vmatpush1.bf16.msra.mxu0 %v3208
        %5648 = vmatprep.subr.bf16.mxu0 %v3207
        %5649 = vmatpush1.bf16.msra.mxu0 %v3206
        %5650 = vmatprep.subr.bf16.mxu0 %v3205
        %5651 = vmatpush1.bf16.msra.mxu0 %v3204
        %5652 = vmatprep.subr.bf16.mxu0 %v3203
        %5653 = vmatpush1.bf16.msra.mxu0 %v3202
        %5654 = vmatprep.subr.bf16.mxu0 %v3201
        %5655 = vmatpush1.bf16.msra.mxu0 %v3200
        %5656 = vmatprep.subr.bf16.mxu0 %v3199
        %5657 = vmatpush1.bf16.msra.mxu0 %v3198
        %5658 = vmatprep.subr.bf16.mxu0 %v3197
        %5659 = vmatpush1.bf16.msra.mxu0 %v3196
        %5660 = vmatprep.subr.bf16.mxu0 %v3227
        %5661 = vmatpush2.bf16.msra.mxu0 %v3226
        %5662 = vmatprep.subr.bf16.mxu0 %v3225
        %5663 = vmatpush2.bf16.msra.mxu0 %v3224
        %5664 = vmatprep.subr.bf16.mxu0 %v3223
        %5665 = vmatpush2.bf16.msra.mxu0 %v3222
        %5666 = vmatprep.subr.bf16.mxu0 %v3221
        %5667 = vmatpush2.bf16.msra.mxu0 %v3220
        %5668 = vmatprep.subr.bf16.mxu0 %v3219
        %5669 = vmatpush2.bf16.msra.mxu0 %v3218
        %5670 = vmatprep.subr.bf16.mxu0 %v3217
        %5671 = vmatpush2.bf16.msra.mxu0 %v3216
        %5672 = vmatprep.subr.bf16.mxu0 %v3215
        %5673 = vmatpush2.bf16.msra.mxu0 %v3214
        %5674 = vmatprep.subr.bf16.mxu0 %v3213
        %5675 = vmatpush2.bf16.msra.mxu0 %v3212
        %5676 = vmatprep.mubr.bf16.mxu0 %v1247
        %5677 = vmatmul.mubr.bf16.gmra.mxu0 %v1246
        %v5678 = vpop.f32.mrf.mxu0
        %v5679 = vadd.f32 %v5638, %v5678
        %v5680 = vpop.f32.mrf.mxu0
        %v5681 = vadd.f32 %v5640, %v5680
        %v5682 = vpop.f32.mrf.mxu0
        %v5683 = vpop.f32.mrf.mxu0
        %5684 = vdwg.mxu0
        %5685 = vmatprep.subr.bf16.mxu0 %v3243
        %5686 = vmatpush1.bf16.msra.mxu0 %v3242
        %5687 = vmatprep.subr.bf16.mxu0 %v3241
        %5688 = vmatpush1.bf16.msra.mxu0 %v3240
        %5689 = vmatprep.subr.bf16.mxu0 %v3239
        %5690 = vmatpush1.bf16.msra.mxu0 %v3238
        %5691 = vmatprep.subr.bf16.mxu0 %v3237
        %5692 = vmatpush1.bf16.msra.mxu0 %v3236
        %5693 = vmatprep.subr.bf16.mxu0 %v3235
        %5694 = vmatpush1.bf16.msra.mxu0 %v3234
        %5695 = vmatprep.subr.bf16.mxu0 %v3233
        %5696 = vmatpush1.bf16.msra.mxu0 %v3232
        %5697 = vmatprep.subr.bf16.mxu0 %v3231
        %5698 = vmatpush1.bf16.msra.mxu0 %v3230
        %5699 = vmatprep.subr.bf16.mxu0 %v3229
        %5700 = vmatpush1.bf16.msra.mxu0 %v3228
        %5701 = vmatprep.subr.bf16.mxu0 %v3259
        %5702 = vmatpush2.bf16.msra.mxu0 %v3258
        %5703 = vmatprep.subr.bf16.mxu0 %v3257
        %5704 = vmatpush2.bf16.msra.mxu0 %v3256
        %5705 = vmatprep.subr.bf16.mxu0 %v3255
        %5706 = vmatpush2.bf16.msra.mxu0 %v3254
        %5707 = vmatprep.subr.bf16.mxu0 %v3253
        %5708 = vmatpush2.bf16.msra.mxu0 %v3252
        %5709 = vmatprep.subr.bf16.mxu0 %v3251
        %5710 = vmatpush2.bf16.msra.mxu0 %v3250
        %5711 = vmatprep.subr.bf16.mxu0 %v3249
        %5712 = vmatpush2.bf16.msra.mxu0 %v3248
        %5713 = vmatprep.subr.bf16.mxu0 %v3247
        %5714 = vmatpush2.bf16.msra.mxu0 %v3246
        %5715 = vmatprep.subr.bf16.mxu0 %v3245
        %5716 = vmatpush2.bf16.msra.mxu0 %v3244
        %5717 = vmatprep.mubr.bf16.mxu0 %v1249
        %5718 = vmatmul.mubr.bf16.gmra.mxu0 %v1248
        %v5719 = vpop.f32.mrf.mxu0
        %v5720 = vadd.f32 %v5679, %v5719
        %v5721 = vpop.f32.mrf.mxu0
        %v5722 = vadd.f32 %v5681, %v5721
        %v5723 = vpop.f32.mrf.mxu0
        %v5724 = vpop.f32.mrf.mxu0
        %5725 = vdwg.mxu0
        %5726 = vmatprep.subr.bf16.mxu0 %v3275
        %5727 = vmatpush1.bf16.msra.mxu0 %v3274
        %5728 = vmatprep.subr.bf16.mxu0 %v3273
        %5729 = vmatpush1.bf16.msra.mxu0 %v3272
        %5730 = vmatprep.subr.bf16.mxu0 %v3271
        %5731 = vmatpush1.bf16.msra.mxu0 %v3270
        %5732 = vmatprep.subr.bf16.mxu0 %v3269
        %5733 = vmatpush1.bf16.msra.mxu0 %v3268
        %5734 = vmatprep.subr.bf16.mxu0 %v3267
        %5735 = vmatpush1.bf16.msra.mxu0 %v3266
        %5736 = vmatprep.subr.bf16.mxu0 %v3265
        %5737 = vmatpush1.bf16.msra.mxu0 %v3264
        %5738 = vmatprep.subr.bf16.mxu0 %v3263
        %5739 = vmatpush1.bf16.msra.mxu0 %v3262
        %5740 = vmatprep.subr.bf16.mxu0 %v3261
        %5741 = vmatpush1.bf16.msra.mxu0 %v3260
        %5742 = vmatprep.subr.bf16.mxu0 %v3291
        %5743 = vmatpush2.bf16.msra.mxu0 %v3290
        %5744 = vmatprep.subr.bf16.mxu0 %v3289
        %5745 = vmatpush2.bf16.msra.mxu0 %v3288
        %5746 = vmatprep.subr.bf16.mxu0 %v3287
        %5747 = vmatpush2.bf16.msra.mxu0 %v3286
        %5748 = vmatprep.subr.bf16.mxu0 %v3285
        %5749 = vmatpush2.bf16.msra.mxu0 %v3284
        %5750 = vmatprep.subr.bf16.mxu0 %v3283
        %5751 = vmatpush2.bf16.msra.mxu0 %v3282
        %5752 = vmatprep.subr.bf16.mxu0 %v3281
        %5753 = vmatpush2.bf16.msra.mxu0 %v3280
        %5754 = vmatprep.subr.bf16.mxu0 %v3279
        %5755 = vmatpush2.bf16.msra.mxu0 %v3278
        %5756 = vmatprep.subr.bf16.mxu0 %v3277
        %5757 = vmatpush2.bf16.msra.mxu0 %v3276
        %5758 = vmatprep.mubr.bf16.mxu0 %v1251
        %5759 = vmatmul.mubr.bf16.gmra.mxu0 %v1250
        %v5760 = vpop.f32.mrf.mxu0
        %v5761 = vadd.f32 %v5720, %v5760
        %v5762 = vpop.f32.mrf.mxu0
        %v5763 = vadd.f32 %v5722, %v5762
        %v5764 = vpop.f32.mrf.mxu0
        %v5765 = vpop.f32.mrf.mxu0
        %5766 = vdwg.mxu0
        %5767 = vmatprep.subr.bf16.mxu0 %v3307
        %5768 = vmatpush1.bf16.msra.mxu0 %v3306
        %5769 = vmatprep.subr.bf16.mxu0 %v3305
        %5770 = vmatpush1.bf16.msra.mxu0 %v3304
        %5771 = vmatprep.subr.bf16.mxu0 %v3303
        %5772 = vmatpush1.bf16.msra.mxu0 %v3302
        %5773 = vmatprep.subr.bf16.mxu0 %v3301
        %5774 = vmatpush1.bf16.msra.mxu0 %v3300
        %5775 = vmatprep.subr.bf16.mxu0 %v3299
        %5776 = vmatpush1.bf16.msra.mxu0 %v3298
        %5777 = vmatprep.subr.bf16.mxu0 %v3297
        %5778 = vmatpush1.bf16.msra.mxu0 %v3296
        %5779 = vmatprep.subr.bf16.mxu0 %v3295
        %5780 = vmatpush1.bf16.msra.mxu0 %v3294
        %5781 = vmatprep.subr.bf16.mxu0 %v3293
        %5782 = vmatpush1.bf16.msra.mxu0 %v3292
        %5783 = vmatprep.subr.bf16.mxu0 %v3323
        %5784 = vmatpush2.bf16.msra.mxu0 %v3322
        %5785 = vmatprep.subr.bf16.mxu0 %v3321
        %5786 = vmatpush2.bf16.msra.mxu0 %v3320
        %5787 = vmatprep.subr.bf16.mxu0 %v3319
        %5788 = vmatpush2.bf16.msra.mxu0 %v3318
        %5789 = vmatprep.subr.bf16.mxu0 %v3317
        %5790 = vmatpush2.bf16.msra.mxu0 %v3316
        %5791 = vmatprep.subr.bf16.mxu0 %v3315
        %5792 = vmatpush2.bf16.msra.mxu0 %v3314
        %5793 = vmatprep.subr.bf16.mxu0 %v3313
        %5794 = vmatpush2.bf16.msra.mxu0 %v3312
        %5795 = vmatprep.subr.bf16.mxu0 %v3311
        %5796 = vmatpush2.bf16.msra.mxu0 %v3310
        %5797 = vmatprep.subr.bf16.mxu0 %v3309
        %5798 = vmatpush2.bf16.msra.mxu0 %v3308
        %5799 = vmatprep.mubr.bf16.mxu0 %v1253
        %5800 = vmatmul.mubr.bf16.gmra.mxu0 %v1252
        %v5801 = vpop.f32.mrf.mxu0
        %v5802 = vadd.f32 %v5761, %v5801
        %v5803 = vpop.f32.mrf.mxu0
        %v5804 = vadd.f32 %v5763, %v5803
        %v5805 = vpop.f32.mrf.mxu0
        %v5806 = vpop.f32.mrf.mxu0
        %5807 = vdwg.mxu0
        %5808 = vmatprep.subr.bf16.mxu0 %v3339
        %5809 = vmatpush1.bf16.msra.mxu0 %v3338
        %5810 = vmatprep.subr.bf16.mxu0 %v3337
        %5811 = vmatpush1.bf16.msra.mxu0 %v3336
        %5812 = vmatprep.subr.bf16.mxu0 %v3335
        %5813 = vmatpush1.bf16.msra.mxu0 %v3334
        %5814 = vmatprep.subr.bf16.mxu0 %v3333
        %5815 = vmatpush1.bf16.msra.mxu0 %v3332
        %5816 = vmatprep.subr.bf16.mxu0 %v3331
        %5817 = vmatpush1.bf16.msra.mxu0 %v3330
        %5818 = vmatprep.subr.bf16.mxu0 %v3329
        %5819 = vmatpush1.bf16.msra.mxu0 %v3328
        %5820 = vmatprep.subr.bf16.mxu0 %v3327
        %5821 = vmatpush1.bf16.msra.mxu0 %v3326
        %5822 = vmatprep.subr.bf16.mxu0 %v3325
        %5823 = vmatpush1.bf16.msra.mxu0 %v3324
        %5824 = vmatprep.subr.bf16.mxu0 %v3355
        %5825 = vmatpush2.bf16.msra.mxu0 %v3354
        %5826 = vmatprep.subr.bf16.mxu0 %v3353
        %5827 = vmatpush2.bf16.msra.mxu0 %v3352
        %5828 = vmatprep.subr.bf16.mxu0 %v3351
        %5829 = vmatpush2.bf16.msra.mxu0 %v3350
        %5830 = vmatprep.subr.bf16.mxu0 %v3349
        %5831 = vmatpush2.bf16.msra.mxu0 %v3348
        %5832 = vmatprep.subr.bf16.mxu0 %v3347
        %5833 = vmatpush2.bf16.msra.mxu0 %v3346
        %5834 = vmatprep.subr.bf16.mxu0 %v3345
        %5835 = vmatpush2.bf16.msra.mxu0 %v3344
        %5836 = vmatprep.subr.bf16.mxu0 %v3343
        %5837 = vmatpush2.bf16.msra.mxu0 %v3342
        %5838 = vmatprep.subr.bf16.mxu0 %v3341
        %5839 = vmatpush2.bf16.msra.mxu0 %v3340
        %5840 = vmatprep.mubr.bf16.mxu0 %v1255
        %5841 = vmatmul.mubr.bf16.gmra.mxu0 %v1254
        %v5842 = vpop.f32.mrf.mxu0
        %v5843 = vadd.f32 %v5802, %v5842
        %v5844 = vpop.f32.mrf.mxu0
        %v5845 = vadd.f32 %v5804, %v5844
        %v5846 = vpop.f32.mrf.mxu0
        %v5847 = vpop.f32.mrf.mxu0
        %5848 = vdwg.mxu0
        %5849 = vmatprep.subr.bf16.mxu0 %v3371
        %5850 = vmatpush1.bf16.msra.mxu0 %v3370
        %5851 = vmatprep.subr.bf16.mxu0 %v3369
        %5852 = vmatpush1.bf16.msra.mxu0 %v3368
        %5853 = vmatprep.subr.bf16.mxu0 %v3367
        %5854 = vmatpush1.bf16.msra.mxu0 %v3366
        %5855 = vmatprep.subr.bf16.mxu0 %v3365
        %5856 = vmatpush1.bf16.msra.mxu0 %v3364
        %5857 = vmatprep.subr.bf16.mxu0 %v3363
        %5858 = vmatpush1.bf16.msra.mxu0 %v3362
        %5859 = vmatprep.subr.bf16.mxu0 %v3361
        %5860 = vmatpush1.bf16.msra.mxu0 %v3360
        %5861 = vmatprep.subr.bf16.mxu0 %v3359
        %5862 = vmatpush1.bf16.msra.mxu0 %v3358
        %5863 = vmatprep.subr.bf16.mxu0 %v3357
        %5864 = vmatpush1.bf16.msra.mxu0 %v3356
        %5865 = vmatprep.subr.bf16.mxu0 %v3387
        %5866 = vmatpush2.bf16.msra.mxu0 %v3386
        %5867 = vmatprep.subr.bf16.mxu0 %v3385
        %5868 = vmatpush2.bf16.msra.mxu0 %v3384
        %5869 = vmatprep.subr.bf16.mxu0 %v3383
        %5870 = vmatpush2.bf16.msra.mxu0 %v3382
        %5871 = vmatprep.subr.bf16.mxu0 %v3381
        %5872 = vmatpush2.bf16.msra.mxu0 %v3380
        %5873 = vmatprep.subr.bf16.mxu0 %v3379
        %5874 = vmatpush2.bf16.msra.mxu0 %v3378
        %5875 = vmatprep.subr.bf16.mxu0 %v3377
        %5876 = vmatpush2.bf16.msra.mxu0 %v3376
        %5877 = vmatprep.subr.bf16.mxu0 %v3375
        %5878 = vmatpush2.bf16.msra.mxu0 %v3374
        %5879 = vmatprep.subr.bf16.mxu0 %v3373
        %5880 = vmatpush2.bf16.msra.mxu0 %v3372
        %5881 = vmatprep.mubr.bf16.mxu0 %v1257
        %5882 = vmatmul.mubr.bf16.gmra.mxu0 %v1256
        %v5883 = vpop.f32.mrf.mxu0
        %v5884 = vadd.f32 %v5843, %v5883
        %v5885 = vpop.f32.mrf.mxu0
        %v5886 = vadd.f32 %v5845, %v5885
        %v5887 = vpop.f32.mrf.mxu0
        %v5888 = vpop.f32.mrf.mxu0
        %5889 = vdwg.mxu0
        %5890 = vmatprep.subr.bf16.mxu0 %v3403
        %5891 = vmatpush1.bf16.msra.mxu0 %v3402
        %5892 = vmatprep.subr.bf16.mxu0 %v3401
        %5893 = vmatpush1.bf16.msra.mxu0 %v3400
        %5894 = vmatprep.subr.bf16.mxu0 %v3399
        %5895 = vmatpush1.bf16.msra.mxu0 %v3398
        %5896 = vmatprep.subr.bf16.mxu0 %v3397
        %5897 = vmatpush1.bf16.msra.mxu0 %v3396
        %5898 = vmatprep.subr.bf16.mxu0 %v3395
        %5899 = vmatpush1.bf16.msra.mxu0 %v3394
        %5900 = vmatprep.subr.bf16.mxu0 %v3393
        %5901 = vmatpush1.bf16.msra.mxu0 %v3392
        %5902 = vmatprep.subr.bf16.mxu0 %v3391
        %5903 = vmatpush1.bf16.msra.mxu0 %v3390
        %5904 = vmatprep.subr.bf16.mxu0 %v3389
        %5905 = vmatpush1.bf16.msra.mxu0 %v3388
        %5906 = vmatprep.subr.bf16.mxu0 %v3419
        %5907 = vmatpush2.bf16.msra.mxu0 %v3418
        %5908 = vmatprep.subr.bf16.mxu0 %v3417
        %5909 = vmatpush2.bf16.msra.mxu0 %v3416
        %5910 = vmatprep.subr.bf16.mxu0 %v3415
        %5911 = vmatpush2.bf16.msra.mxu0 %v3414
        %5912 = vmatprep.subr.bf16.mxu0 %v3413
        %5913 = vmatpush2.bf16.msra.mxu0 %v3412
        %5914 = vmatprep.subr.bf16.mxu0 %v3411
        %5915 = vmatpush2.bf16.msra.mxu0 %v3410
        %5916 = vmatprep.subr.bf16.mxu0 %v3409
        %5917 = vmatpush2.bf16.msra.mxu0 %v3408
        %5918 = vmatprep.subr.bf16.mxu0 %v3407
        %5919 = vmatpush2.bf16.msra.mxu0 %v3406
        %5920 = vmatprep.subr.bf16.mxu0 %v3405
        %5921 = vmatpush2.bf16.msra.mxu0 %v3404
        %5922 = vmatprep.mubr.bf16.mxu0 %v1259
        %5923 = vmatmul.mubr.bf16.gmra.mxu0 %v1258
        %v5924 = vpop.f32.mrf.mxu0
        %v5925 = vadd.f32 %v5884, %v5924
        %v5926 = vpop.f32.mrf.mxu0
        %v5927 = vadd.f32 %v5886, %v5926
        %v5928 = vpop.f32.mrf.mxu0
        %v5929 = vpop.f32.mrf.mxu0
        %5930 = vdwg.mxu0
        %5931 = vmatprep.subr.bf16.mxu0 %v3435
        %5932 = vmatpush1.bf16.msra.mxu0 %v3434
        %5933 = vmatprep.subr.bf16.mxu0 %v3433
        %5934 = vmatpush1.bf16.msra.mxu0 %v3432
        %5935 = vmatprep.subr.bf16.mxu0 %v3431
        %5936 = vmatpush1.bf16.msra.mxu0 %v3430
        %5937 = vmatprep.subr.bf16.mxu0 %v3429
        %5938 = vmatpush1.bf16.msra.mxu0 %v3428
        %5939 = vmatprep.subr.bf16.mxu0 %v3427
        %5940 = vmatpush1.bf16.msra.mxu0 %v3426
        %5941 = vmatprep.subr.bf16.mxu0 %v3425
        %5942 = vmatpush1.bf16.msra.mxu0 %v3424
        %5943 = vmatprep.subr.bf16.mxu0 %v3423
        %5944 = vmatpush1.bf16.msra.mxu0 %v3422
        %5945 = vmatprep.subr.bf16.mxu0 %v3421
        %5946 = vmatpush1.bf16.msra.mxu0 %v3420
        %5947 = vmatprep.subr.bf16.mxu0 %v3451
        %5948 = vmatpush2.bf16.msra.mxu0 %v3450
        %5949 = vmatprep.subr.bf16.mxu0 %v3449
        %5950 = vmatpush2.bf16.msra.mxu0 %v3448
        %5951 = vmatprep.subr.bf16.mxu0 %v3447
        %5952 = vmatpush2.bf16.msra.mxu0 %v3446
        %5953 = vmatprep.subr.bf16.mxu0 %v3445
        %5954 = vmatpush2.bf16.msra.mxu0 %v3444
        %5955 = vmatprep.subr.bf16.mxu0 %v3443
        %5956 = vmatpush2.bf16.msra.mxu0 %v3442
        %5957 = vmatprep.subr.bf16.mxu0 %v3441
        %5958 = vmatpush2.bf16.msra.mxu0 %v3440
        %5959 = vmatprep.subr.bf16.mxu0 %v3439
        %5960 = vmatpush2.bf16.msra.mxu0 %v3438
        %5961 = vmatprep.subr.bf16.mxu0 %v3437
        %5962 = vmatpush2.bf16.msra.mxu0 %v3436
        %5963 = vmatprep.mubr.bf16.mxu0 %v1261
        %5964 = vmatmul.mubr.bf16.gmra.mxu0 %v1260
        %v5965 = vpop.f32.mrf.mxu0
        %v5966 = vadd.f32 %v5925, %v5965
        %v5967 = vpop.f32.mrf.mxu0
        %v5968 = vadd.f32 %v5927, %v5967
        %v5969 = vpop.f32.mrf.mxu0
        %v5970 = vpop.f32.mrf.mxu0
        %5971 = vdwg.mxu0
        %5972 = vmatprep.subr.bf16.mxu0 %v3467
        %5973 = vmatpush1.bf16.msra.mxu0 %v3466
        %5974 = vmatprep.subr.bf16.mxu0 %v3465
        %5975 = vmatpush1.bf16.msra.mxu0 %v3464
        %5976 = vmatprep.subr.bf16.mxu0 %v3463
        %5977 = vmatpush1.bf16.msra.mxu0 %v3462
        %5978 = vmatprep.subr.bf16.mxu0 %v3461
        %5979 = vmatpush1.bf16.msra.mxu0 %v3460
        %5980 = vmatprep.subr.bf16.mxu0 %v3459
        %5981 = vmatpush1.bf16.msra.mxu0 %v3458
        %5982 = vmatprep.subr.bf16.mxu0 %v3457
        %5983 = vmatpush1.bf16.msra.mxu0 %v3456
        %5984 = vmatprep.subr.bf16.mxu0 %v3455
        %5985 = vmatpush1.bf16.msra.mxu0 %v3454
        %5986 = vmatprep.subr.bf16.mxu0 %v3453
        %5987 = vmatpush1.bf16.msra.mxu0 %v3452
        %5988 = vmatprep.subr.bf16.mxu0 %v3483
        %5989 = vmatpush2.bf16.msra.mxu0 %v3482
        %5990 = vmatprep.subr.bf16.mxu0 %v3481
        %5991 = vmatpush2.bf16.msra.mxu0 %v3480
        %5992 = vmatprep.subr.bf16.mxu0 %v3479
        %5993 = vmatpush2.bf16.msra.mxu0 %v3478
        %5994 = vmatprep.subr.bf16.mxu0 %v3477
        %5995 = vmatpush2.bf16.msra.mxu0 %v3476
        %5996 = vmatprep.subr.bf16.mxu0 %v3475
        %5997 = vmatpush2.bf16.msra.mxu0 %v3474
        %5998 = vmatprep.subr.bf16.mxu0 %v3473
        %5999 = vmatpush2.bf16.msra.mxu0 %v3472
        %6000 = vmatprep.subr.bf16.mxu0 %v3471
        %6001 = vmatpush2.bf16.msra.mxu0 %v3470
        %6002 = vmatprep.subr.bf16.mxu0 %v3469
        %6003 = vmatpush2.bf16.msra.mxu0 %v3468
        %6004 = vmatprep.mubr.bf16.mxu0 %v1263
        %6005 = vmatmul.mubr.bf16.gmra.mxu0 %v1262
        %v6006 = vpop.f32.mrf.mxu0
        %v6007 = vadd.f32 %v5966, %v6006
        %v6008 = vpop.f32.mrf.mxu0
        %v6009 = vadd.f32 %v5968, %v6008
        %v6010 = vpop.f32.mrf.mxu0
        %v6011 = vpop.f32.mrf.mxu0
        %6012 = vdwg.mxu0
        %6013 = vmatprep.subr.bf16.mxu0 %v3499
        %6014 = vmatpush1.bf16.msra.mxu0 %v3498
        %6015 = vmatprep.subr.bf16.mxu0 %v3497
        %6016 = vmatpush1.bf16.msra.mxu0 %v3496
        %6017 = vmatprep.subr.bf16.mxu0 %v3495
        %6018 = vmatpush1.bf16.msra.mxu0 %v3494
        %6019 = vmatprep.subr.bf16.mxu0 %v3493
        %6020 = vmatpush1.bf16.msra.mxu0 %v3492
        %6021 = vmatprep.subr.bf16.mxu0 %v3491
        %6022 = vmatpush1.bf16.msra.mxu0 %v3490
        %6023 = vmatprep.subr.bf16.mxu0 %v3489
        %6024 = vmatpush1.bf16.msra.mxu0 %v3488
        %6025 = vmatprep.subr.bf16.mxu0 %v3487
        %6026 = vmatpush1.bf16.msra.mxu0 %v3486
        %6027 = vmatprep.subr.bf16.mxu0 %v3485
        %6028 = vmatpush1.bf16.msra.mxu0 %v3484
        %6029 = vmatprep.subr.bf16.mxu0 %v3515
        %6030 = vmatpush2.bf16.msra.mxu0 %v3514
        %6031 = vmatprep.subr.bf16.mxu0 %v3513
        %6032 = vmatpush2.bf16.msra.mxu0 %v3512
        %6033 = vmatprep.subr.bf16.mxu0 %v3511
        %6034 = vmatpush2.bf16.msra.mxu0 %v3510
        %6035 = vmatprep.subr.bf16.mxu0 %v3509
        %6036 = vmatpush2.bf16.msra.mxu0 %v3508
        %6037 = vmatprep.subr.bf16.mxu0 %v3507
        %6038 = vmatpush2.bf16.msra.mxu0 %v3506
        %6039 = vmatprep.subr.bf16.mxu0 %v3505
        %6040 = vmatpush2.bf16.msra.mxu0 %v3504
        %6041 = vmatprep.subr.bf16.mxu0 %v3503
        %6042 = vmatpush2.bf16.msra.mxu0 %v3502
        %6043 = vmatprep.subr.bf16.mxu0 %v3501
        %6044 = vmatpush2.bf16.msra.mxu0 %v3500
        %6045 = vmatprep.mubr.bf16.mxu0 %v1265
        %6046 = vmatmul.mubr.bf16.gmra.mxu0 %v1264
        %v6047 = vpop.f32.mrf.mxu0
        %v6048 = vadd.f32 %v6007, %v6047
        %v6049 = vpop.f32.mrf.mxu0
        %v6050 = vadd.f32 %v6009, %v6049
        %v6051 = vpop.f32.mrf.mxu0
        %v6052 = vpop.f32.mrf.mxu0
        %6053 = vdwg.mxu0
        %6054 = vmatprep.subr.bf16.mxu0 %v3531
        %6055 = vmatpush1.bf16.msra.mxu0 %v3530
        %6056 = vmatprep.subr.bf16.mxu0 %v3529
        %6057 = vmatpush1.bf16.msra.mxu0 %v3528
        %6058 = vmatprep.subr.bf16.mxu0 %v3527
        %6059 = vmatpush1.bf16.msra.mxu0 %v3526
        %6060 = vmatprep.subr.bf16.mxu0 %v3525
        %6061 = vmatpush1.bf16.msra.mxu0 %v3524
        %6062 = vmatprep.subr.bf16.mxu0 %v3523
        %6063 = vmatpush1.bf16.msra.mxu0 %v3522
        %6064 = vmatprep.subr.bf16.mxu0 %v3521
        %6065 = vmatpush1.bf16.msra.mxu0 %v3520
        %6066 = vmatprep.subr.bf16.mxu0 %v3519
        %6067 = vmatpush1.bf16.msra.mxu0 %v3518
        %6068 = vmatprep.subr.bf16.mxu0 %v3517
        %6069 = vmatpush1.bf16.msra.mxu0 %v3516
        %6070 = vmatprep.subr.bf16.mxu0 %v3547
        %6071 = vmatpush2.bf16.msra.mxu0 %v3546
        %6072 = vmatprep.subr.bf16.mxu0 %v3545
        %6073 = vmatpush2.bf16.msra.mxu0 %v3544
        %6074 = vmatprep.subr.bf16.mxu0 %v3543
        %6075 = vmatpush2.bf16.msra.mxu0 %v3542
        %6076 = vmatprep.subr.bf16.mxu0 %v3541
        %6077 = vmatpush2.bf16.msra.mxu0 %v3540
        %6078 = vmatprep.subr.bf16.mxu0 %v3539
        %6079 = vmatpush2.bf16.msra.mxu0 %v3538
        %6080 = vmatprep.subr.bf16.mxu0 %v3537
        %6081 = vmatpush2.bf16.msra.mxu0 %v3536
        %6082 = vmatprep.subr.bf16.mxu0 %v3535
        %6083 = vmatpush2.bf16.msra.mxu0 %v3534
        %6084 = vmatprep.subr.bf16.mxu0 %v3533
        %6085 = vmatpush2.bf16.msra.mxu0 %v3532
        %6086 = vmatprep.mubr.bf16.mxu0 %v1267
        %6087 = vmatmul.mubr.bf16.gmra.mxu0 %v1266
        %v6088 = vpop.f32.mrf.mxu0
        %v6089 = vadd.f32 %v6048, %v6088
        %v6090 = vpop.f32.mrf.mxu0
        %v6091 = vadd.f32 %v6050, %v6090
        %v6092 = vpop.f32.mrf.mxu0
        %v6093 = vpop.f32.mrf.mxu0
        %6094 = vdwg.mxu0
        %6095 = vmatprep.subr.bf16.mxu0 %v3563
        %6096 = vmatpush1.bf16.msra.mxu0 %v3562
        %6097 = vmatprep.subr.bf16.mxu0 %v3561
        %6098 = vmatpush1.bf16.msra.mxu0 %v3560
        %6099 = vmatprep.subr.bf16.mxu0 %v3559
        %6100 = vmatpush1.bf16.msra.mxu0 %v3558
        %6101 = vmatprep.subr.bf16.mxu0 %v3557
        %6102 = vmatpush1.bf16.msra.mxu0 %v3556
        %6103 = vmatprep.subr.bf16.mxu0 %v3555
        %6104 = vmatpush1.bf16.msra.mxu0 %v3554
        %6105 = vmatprep.subr.bf16.mxu0 %v3553
        %6106 = vmatpush1.bf16.msra.mxu0 %v3552
        %6107 = vmatprep.subr.bf16.mxu0 %v3551
        %6108 = vmatpush1.bf16.msra.mxu0 %v3550
        %6109 = vmatprep.subr.bf16.mxu0 %v3549
        %6110 = vmatpush1.bf16.msra.mxu0 %v3548
        %6111 = vmatprep.subr.bf16.mxu0 %v3579
        %6112 = vmatpush2.bf16.msra.mxu0 %v3578
        %6113 = vmatprep.subr.bf16.mxu0 %v3577
        %6114 = vmatpush2.bf16.msra.mxu0 %v3576
        %6115 = vmatprep.subr.bf16.mxu0 %v3575
        %6116 = vmatpush2.bf16.msra.mxu0 %v3574
        %6117 = vmatprep.subr.bf16.mxu0 %v3573
        %6118 = vmatpush2.bf16.msra.mxu0 %v3572
        %6119 = vmatprep.subr.bf16.mxu0 %v3571
        %6120 = vmatpush2.bf16.msra.mxu0 %v3570
        %6121 = vmatprep.subr.bf16.mxu0 %v3569
        %6122 = vmatpush2.bf16.msra.mxu0 %v3568
        %6123 = vmatprep.subr.bf16.mxu0 %v3567
        %6124 = vmatpush2.bf16.msra.mxu0 %v3566
        %6125 = vmatprep.subr.bf16.mxu0 %v3565
        %6126 = vmatpush2.bf16.msra.mxu0 %v3564
        %6127 = vmatprep.mubr.bf16.mxu0 %v1269
        %6128 = vmatmul.mubr.bf16.gmra.mxu0 %v1268
        %v6129 = vpop.f32.mrf.mxu0
        %v6130 = vadd.f32 %v6089, %v6129
        %v6131 = vpop.f32.mrf.mxu0
        %v6132 = vadd.f32 %v6091, %v6131
        %v6133 = vpop.f32.mrf.mxu0
        %v6134 = vpop.f32.mrf.mxu0
        %6135 = vdwg.mxu0
        %6136 = vmatprep.subr.bf16.mxu0 %v3595
        %6137 = vmatpush1.bf16.msra.mxu0 %v3594
        %6138 = vmatprep.subr.bf16.mxu0 %v3593
        %6139 = vmatpush1.bf16.msra.mxu0 %v3592
        %6140 = vmatprep.subr.bf16.mxu0 %v3591
        %6141 = vmatpush1.bf16.msra.mxu0 %v3590
        %6142 = vmatprep.subr.bf16.mxu0 %v3589
        %6143 = vmatpush1.bf16.msra.mxu0 %v3588
        %6144 = vmatprep.subr.bf16.mxu0 %v3587
        %6145 = vmatpush1.bf16.msra.mxu0 %v3586
        %6146 = vmatprep.subr.bf16.mxu0 %v3585
        %6147 = vmatpush1.bf16.msra.mxu0 %v3584
        %6148 = vmatprep.subr.bf16.mxu0 %v3583
        %6149 = vmatpush1.bf16.msra.mxu0 %v3582
        %6150 = vmatprep.subr.bf16.mxu0 %v3581
        %6151 = vmatpush1.bf16.msra.mxu0 %v3580
        %6152 = vmatprep.subr.bf16.mxu0 %v3611
        %6153 = vmatpush2.bf16.msra.mxu0 %v3610
        %6154 = vmatprep.subr.bf16.mxu0 %v3609
        %6155 = vmatpush2.bf16.msra.mxu0 %v3608
        %6156 = vmatprep.subr.bf16.mxu0 %v3607
        %6157 = vmatpush2.bf16.msra.mxu0 %v3606
        %6158 = vmatprep.subr.bf16.mxu0 %v3605
        %6159 = vmatpush2.bf16.msra.mxu0 %v3604
        %6160 = vmatprep.subr.bf16.mxu0 %v3603
        %6161 = vmatpush2.bf16.msra.mxu0 %v3602
        %6162 = vmatprep.subr.bf16.mxu0 %v3601
        %6163 = vmatpush2.bf16.msra.mxu0 %v3600
        %6164 = vmatprep.subr.bf16.mxu0 %v3599
        %6165 = vmatpush2.bf16.msra.mxu0 %v3598
        %6166 = vmatprep.subr.bf16.mxu0 %v3597
        %6167 = vmatpush2.bf16.msra.mxu0 %v3596
        %6168 = vmatprep.mubr.bf16.mxu0 %v1271
        %6169 = vmatmul.mubr.bf16.gmra.mxu0 %v1270
        %v6170 = vpop.f32.mrf.mxu0
        %v6171 = vadd.f32 %v6130, %v6170
        %v6172 = vpop.f32.mrf.mxu0
        %v6173 = vadd.f32 %v6132, %v6172
        %v6174 = vpop.f32.mrf.mxu0
        %v6175 = vpop.f32.mrf.mxu0
        %6176 = vdwg.mxu0
        %6177 = vmatprep.subr.bf16.mxu0 %v3627
        %6178 = vmatpush1.bf16.msra.mxu0 %v3626
        %6179 = vmatprep.subr.bf16.mxu0 %v3625
        %6180 = vmatpush1.bf16.msra.mxu0 %v3624
        %6181 = vmatprep.subr.bf16.mxu0 %v3623
        %6182 = vmatpush1.bf16.msra.mxu0 %v3622
        %6183 = vmatprep.subr.bf16.mxu0 %v3621
        %6184 = vmatpush1.bf16.msra.mxu0 %v3620
        %6185 = vmatprep.subr.bf16.mxu0 %v3619
        %6186 = vmatpush1.bf16.msra.mxu0 %v3618
        %6187 = vmatprep.subr.bf16.mxu0 %v3617
        %6188 = vmatpush1.bf16.msra.mxu0 %v3616
        %6189 = vmatprep.subr.bf16.mxu0 %v3615
        %6190 = vmatpush1.bf16.msra.mxu0 %v3614
        %6191 = vmatprep.subr.bf16.mxu0 %v3613
        %6192 = vmatpush1.bf16.msra.mxu0 %v3612
        %6193 = vmatprep.subr.bf16.mxu0 %v3643
        %6194 = vmatpush2.bf16.msra.mxu0 %v3642
        %6195 = vmatprep.subr.bf16.mxu0 %v3641
        %6196 = vmatpush2.bf16.msra.mxu0 %v3640
        %6197 = vmatprep.subr.bf16.mxu0 %v3639
        %6198 = vmatpush2.bf16.msra.mxu0 %v3638
        %6199 = vmatprep.subr.bf16.mxu0 %v3637
        %6200 = vmatpush2.bf16.msra.mxu0 %v3636
        %6201 = vmatprep.subr.bf16.mxu0 %v3635
        %6202 = vmatpush2.bf16.msra.mxu0 %v3634
        %6203 = vmatprep.subr.bf16.mxu0 %v3633
        %6204 = vmatpush2.bf16.msra.mxu0 %v3632
        %6205 = vmatprep.subr.bf16.mxu0 %v3631
        %6206 = vmatpush2.bf16.msra.mxu0 %v3630
        %6207 = vmatprep.subr.bf16.mxu0 %v3629
        %6208 = vmatpush2.bf16.msra.mxu0 %v3628
        %6209 = vmatprep.mubr.bf16.mxu0 %v1273
        %6210 = vmatmul.mubr.bf16.gmra.mxu0 %v1272
        %v6211 = vpop.f32.mrf.mxu0
        %v6212 = vadd.f32 %v6171, %v6211
        %v6213 = vpop.f32.mrf.mxu0
        %v6214 = vadd.f32 %v6173, %v6213
        %v6215 = vpop.f32.mrf.mxu0
        %v6216 = vpop.f32.mrf.mxu0
        %6217 = vdwg.mxu0
        %6218 = vmatprep.subr.bf16.mxu0 %v3659
        %6219 = vmatpush1.bf16.msra.mxu0 %v3658
        %6220 = vmatprep.subr.bf16.mxu0 %v3657
        %6221 = vmatpush1.bf16.msra.mxu0 %v3656
        %6222 = vmatprep.subr.bf16.mxu0 %v3655
        %6223 = vmatpush1.bf16.msra.mxu0 %v3654
        %6224 = vmatprep.subr.bf16.mxu0 %v3653
        %6225 = vmatpush1.bf16.msra.mxu0 %v3652
        %6226 = vmatprep.subr.bf16.mxu0 %v3651
        %6227 = vmatpush1.bf16.msra.mxu0 %v3650
        %6228 = vmatprep.subr.bf16.mxu0 %v3649
        %6229 = vmatpush1.bf16.msra.mxu0 %v3648
        %6230 = vmatprep.subr.bf16.mxu0 %v3647
        %6231 = vmatpush1.bf16.msra.mxu0 %v3646
        %6232 = vmatprep.subr.bf16.mxu0 %v3645
        %6233 = vmatpush1.bf16.msra.mxu0 %v3644
        %6234 = vmatprep.subr.bf16.mxu0 %v3675
        %6235 = vmatpush2.bf16.msra.mxu0 %v3674
        %6236 = vmatprep.subr.bf16.mxu0 %v3673
        %6237 = vmatpush2.bf16.msra.mxu0 %v3672
        %6238 = vmatprep.subr.bf16.mxu0 %v3671
        %6239 = vmatpush2.bf16.msra.mxu0 %v3670
        %6240 = vmatprep.subr.bf16.mxu0 %v3669
        %6241 = vmatpush2.bf16.msra.mxu0 %v3668
        %6242 = vmatprep.subr.bf16.mxu0 %v3667
        %6243 = vmatpush2.bf16.msra.mxu0 %v3666
        %6244 = vmatprep.subr.bf16.mxu0 %v3665
        %6245 = vmatpush2.bf16.msra.mxu0 %v3664
        %6246 = vmatprep.subr.bf16.mxu0 %v3663
        %6247 = vmatpush2.bf16.msra.mxu0 %v3662
        %6248 = vmatprep.subr.bf16.mxu0 %v3661
        %6249 = vmatpush2.bf16.msra.mxu0 %v3660
        %6250 = vmatprep.mubr.bf16.mxu0 %v1275
        %6251 = vmatmul.mubr.bf16.gmra.mxu0 %v1274
        %v6252 = vpop.f32.mrf.mxu0
        %v6253 = vadd.f32 %v6212, %v6252
        %v6254 = vpop.f32.mrf.mxu0
        %v6255 = vadd.f32 %v6214, %v6254
        %v6256 = vpop.f32.mrf.mxu0
        %v6257 = vpop.f32.mrf.mxu0
        %6258 = vdwg.mxu0
        %6259 = vmatprep.subr.bf16.mxu0 %v3691
        %6260 = vmatpush1.bf16.msra.mxu0 %v3690
        %6261 = vmatprep.subr.bf16.mxu0 %v3689
        %6262 = vmatpush1.bf16.msra.mxu0 %v3688
        %6263 = vmatprep.subr.bf16.mxu0 %v3687
        %6264 = vmatpush1.bf16.msra.mxu0 %v3686
        %6265 = vmatprep.subr.bf16.mxu0 %v3685
        %6266 = vmatpush1.bf16.msra.mxu0 %v3684
        %6267 = vmatprep.subr.bf16.mxu0 %v3683
        %6268 = vmatpush1.bf16.msra.mxu0 %v3682
        %6269 = vmatprep.subr.bf16.mxu0 %v3681
        %6270 = vmatpush1.bf16.msra.mxu0 %v3680
        %6271 = vmatprep.subr.bf16.mxu0 %v3679
        %6272 = vmatpush1.bf16.msra.mxu0 %v3678
        %6273 = vmatprep.subr.bf16.mxu0 %v3677
        %6274 = vmatpush1.bf16.msra.mxu0 %v3676
        %6275 = vmatprep.subr.bf16.mxu0 %v3707
        %6276 = vmatpush2.bf16.msra.mxu0 %v3706
        %6277 = vmatprep.subr.bf16.mxu0 %v3705
        %6278 = vmatpush2.bf16.msra.mxu0 %v3704
        %6279 = vmatprep.subr.bf16.mxu0 %v3703
        %6280 = vmatpush2.bf16.msra.mxu0 %v3702
        %6281 = vmatprep.subr.bf16.mxu0 %v3701
        %6282 = vmatpush2.bf16.msra.mxu0 %v3700
        %6283 = vmatprep.subr.bf16.mxu0 %v3699
        %6284 = vmatpush2.bf16.msra.mxu0 %v3698
        %6285 = vmatprep.subr.bf16.mxu0 %v3697
        %6286 = vmatpush2.bf16.msra.mxu0 %v3696
        %6287 = vmatprep.subr.bf16.mxu0 %v3695
        %6288 = vmatpush2.bf16.msra.mxu0 %v3694
        %6289 = vmatprep.subr.bf16.mxu0 %v3693
        %6290 = vmatpush2.bf16.msra.mxu0 %v3692
        %6291 = vmatprep.mubr.bf16.mxu0 %v1277
        %6292 = vmatmul.mubr.bf16.gmra.mxu0 %v1276
        %v6293 = vpop.f32.mrf.mxu0
        %v6294 = vadd.f32 %v6253, %v6293
        %v6295 = vpop.f32.mrf.mxu0
        %v6296 = vadd.f32 %v6255, %v6295
        %v6297 = vpop.f32.mrf.mxu0
        %v6298 = vpop.f32.mrf.mxu0
        %6299 = vdwg.mxu0
        %6300 = vmatprep.subr.bf16.mxu0 %v3723
        %6301 = vmatpush1.bf16.msra.mxu0 %v3722
        %6302 = vmatprep.subr.bf16.mxu0 %v3721
        %6303 = vmatpush1.bf16.msra.mxu0 %v3720
        %6304 = vmatprep.subr.bf16.mxu0 %v3719
        %6305 = vmatpush1.bf16.msra.mxu0 %v3718
        %6306 = vmatprep.subr.bf16.mxu0 %v3717
        %6307 = vmatpush1.bf16.msra.mxu0 %v3716
        %6308 = vmatprep.subr.bf16.mxu0 %v3715
        %6309 = vmatpush1.bf16.msra.mxu0 %v3714
        %6310 = vmatprep.subr.bf16.mxu0 %v3713
        %6311 = vmatpush1.bf16.msra.mxu0 %v3712
        %6312 = vmatprep.subr.bf16.mxu0 %v3711
        %6313 = vmatpush1.bf16.msra.mxu0 %v3710
        %6314 = vmatprep.subr.bf16.mxu0 %v3709
        %6315 = vmatpush1.bf16.msra.mxu0 %v3708
        %6316 = vmatprep.subr.bf16.mxu0 %v3739
        %6317 = vmatpush2.bf16.msra.mxu0 %v3738
        %6318 = vmatprep.subr.bf16.mxu0 %v3737
        %6319 = vmatpush2.bf16.msra.mxu0 %v3736
        %6320 = vmatprep.subr.bf16.mxu0 %v3735
        %6321 = vmatpush2.bf16.msra.mxu0 %v3734
        %6322 = vmatprep.subr.bf16.mxu0 %v3733
        %6323 = vmatpush2.bf16.msra.mxu0 %v3732
        %6324 = vmatprep.subr.bf16.mxu0 %v3731
        %6325 = vmatpush2.bf16.msra.mxu0 %v3730
        %6326 = vmatprep.subr.bf16.mxu0 %v3729
        %6327 = vmatpush2.bf16.msra.mxu0 %v3728
        %6328 = vmatprep.subr.bf16.mxu0 %v3727
        %6329 = vmatpush2.bf16.msra.mxu0 %v3726
        %6330 = vmatprep.subr.bf16.mxu0 %v3725
        %6331 = vmatpush2.bf16.msra.mxu0 %v3724
        %6332 = vmatprep.mubr.bf16.mxu0 %v1279
        %6333 = vmatmul.mubr.bf16.gmra.mxu0 %v1278
        %v6334 = vpop.f32.mrf.mxu0
        %v6335 = vadd.f32 %v6294, %v6334
        %v6336 = vpop.f32.mrf.mxu0
        %v6337 = vadd.f32 %v6296, %v6336
        %v6338 = vpop.f32.mrf.mxu0
        %v6339 = vpop.f32.mrf.mxu0
        %6340 = vdwg.mxu0
        %6341 = vmatprep.subr.bf16.mxu0 %v3755
        %6342 = vmatpush1.bf16.msra.mxu0 %v3754
        %6343 = vmatprep.subr.bf16.mxu0 %v3753
        %6344 = vmatpush1.bf16.msra.mxu0 %v3752
        %6345 = vmatprep.subr.bf16.mxu0 %v3751
        %6346 = vmatpush1.bf16.msra.mxu0 %v3750
        %6347 = vmatprep.subr.bf16.mxu0 %v3749
        %6348 = vmatpush1.bf16.msra.mxu0 %v3748
        %6349 = vmatprep.subr.bf16.mxu0 %v3747
        %6350 = vmatpush1.bf16.msra.mxu0 %v3746
        %6351 = vmatprep.subr.bf16.mxu0 %v3745
        %6352 = vmatpush1.bf16.msra.mxu0 %v3744
        %6353 = vmatprep.subr.bf16.mxu0 %v3743
        %6354 = vmatpush1.bf16.msra.mxu0 %v3742
        %6355 = vmatprep.subr.bf16.mxu0 %v3741
        %6356 = vmatpush1.bf16.msra.mxu0 %v3740
        %6357 = vmatprep.subr.bf16.mxu0 %v3771
        %6358 = vmatpush2.bf16.msra.mxu0 %v3770
        %6359 = vmatprep.subr.bf16.mxu0 %v3769
        %6360 = vmatpush2.bf16.msra.mxu0 %v3768
        %6361 = vmatprep.subr.bf16.mxu0 %v3767
        %6362 = vmatpush2.bf16.msra.mxu0 %v3766
        %6363 = vmatprep.subr.bf16.mxu0 %v3765
        %6364 = vmatpush2.bf16.msra.mxu0 %v3764
        %6365 = vmatprep.subr.bf16.mxu0 %v3763
        %6366 = vmatpush2.bf16.msra.mxu0 %v3762
        %6367 = vmatprep.subr.bf16.mxu0 %v3761
        %6368 = vmatpush2.bf16.msra.mxu0 %v3760
        %6369 = vmatprep.subr.bf16.mxu0 %v3759
        %6370 = vmatpush2.bf16.msra.mxu0 %v3758
        %6371 = vmatprep.subr.bf16.mxu0 %v3757
        %6372 = vmatpush2.bf16.msra.mxu0 %v3756
        %6373 = vmatprep.mubr.bf16.mxu0 %v1281
        %6374 = vmatmul.mubr.bf16.gmra.mxu0 %v1280
        %v6375 = vpop.f32.mrf.mxu0
        %v6376 = vadd.f32 %v6335, %v6375
        %v6377 = vpop.f32.mrf.mxu0
        %v6378 = vadd.f32 %v6337, %v6377
        %v6379 = vpop.f32.mrf.mxu0
        %v6380 = vpop.f32.mrf.mxu0
        %6381 = vdwg.mxu0
        %6382 = vmatprep.subr.bf16.mxu0 %v3787
        %6383 = vmatpush1.bf16.msra.mxu0 %v3786
        %6384 = vmatprep.subr.bf16.mxu0 %v3785
        %6385 = vmatpush1.bf16.msra.mxu0 %v3784
        %6386 = vmatprep.subr.bf16.mxu0 %v3783
        %6387 = vmatpush1.bf16.msra.mxu0 %v3782
        %6388 = vmatprep.subr.bf16.mxu0 %v3781
        %6389 = vmatpush1.bf16.msra.mxu0 %v3780
        %6390 = vmatprep.subr.bf16.mxu0 %v3779
        %6391 = vmatpush1.bf16.msra.mxu0 %v3778
        %6392 = vmatprep.subr.bf16.mxu0 %v3777
        %6393 = vmatpush1.bf16.msra.mxu0 %v3776
        %6394 = vmatprep.subr.bf16.mxu0 %v3775
        %6395 = vmatpush1.bf16.msra.mxu0 %v3774
        %6396 = vmatprep.subr.bf16.mxu0 %v3773
        %6397 = vmatpush1.bf16.msra.mxu0 %v3772
        %6398 = vmatprep.subr.bf16.mxu0 %v3803
        %6399 = vmatpush2.bf16.msra.mxu0 %v3802
        %6400 = vmatprep.subr.bf16.mxu0 %v3801
        %6401 = vmatpush2.bf16.msra.mxu0 %v3800
        %6402 = vmatprep.subr.bf16.mxu0 %v3799
        %6403 = vmatpush2.bf16.msra.mxu0 %v3798
        %6404 = vmatprep.subr.bf16.mxu0 %v3797
        %6405 = vmatpush2.bf16.msra.mxu0 %v3796
        %6406 = vmatprep.subr.bf16.mxu0 %v3795
        %6407 = vmatpush2.bf16.msra.mxu0 %v3794
        %6408 = vmatprep.subr.bf16.mxu0 %v3793
        %6409 = vmatpush2.bf16.msra.mxu0 %v3792
        %6410 = vmatprep.subr.bf16.mxu0 %v3791
        %6411 = vmatpush2.bf16.msra.mxu0 %v3790
        %6412 = vmatprep.subr.bf16.mxu0 %v3789
        %6413 = vmatpush2.bf16.msra.mxu0 %v3788
        %6414 = vmatprep.mubr.bf16.mxu0 %v1283
        %6415 = vmatmul.mubr.bf16.gmra.mxu0 %v1282
        %v6416 = vpop.f32.mrf.mxu0
        %v6417 = vadd.f32 %v6376, %v6416
        %v6418 = vpop.f32.mrf.mxu0
        %v6419 = vadd.f32 %v6378, %v6418
        %v6420 = vpop.f32.mrf.mxu0
        %v6421 = vpop.f32.mrf.mxu0
        %6422 = vdwg.mxu0
        %6423 = vmatprep.subr.bf16.mxu0 %v3819
        %6424 = vmatpush1.bf16.msra.mxu0 %v3818
        %6425 = vmatprep.subr.bf16.mxu0 %v3817
        %6426 = vmatpush1.bf16.msra.mxu0 %v3816
        %6427 = vmatprep.subr.bf16.mxu0 %v3815
        %6428 = vmatpush1.bf16.msra.mxu0 %v3814
        %6429 = vmatprep.subr.bf16.mxu0 %v3813
        %6430 = vmatpush1.bf16.msra.mxu0 %v3812
        %6431 = vmatprep.subr.bf16.mxu0 %v3811
        %6432 = vmatpush1.bf16.msra.mxu0 %v3810
        %6433 = vmatprep.subr.bf16.mxu0 %v3809
        %6434 = vmatpush1.bf16.msra.mxu0 %v3808
        %6435 = vmatprep.subr.bf16.mxu0 %v3807
        %6436 = vmatpush1.bf16.msra.mxu0 %v3806
        %6437 = vmatprep.subr.bf16.mxu0 %v3805
        %6438 = vmatpush1.bf16.msra.mxu0 %v3804
        %6439 = vmatprep.subr.bf16.mxu0 %v3835
        %6440 = vmatpush2.bf16.msra.mxu0 %v3834
        %6441 = vmatprep.subr.bf16.mxu0 %v3833
        %6442 = vmatpush2.bf16.msra.mxu0 %v3832
        %6443 = vmatprep.subr.bf16.mxu0 %v3831
        %6444 = vmatpush2.bf16.msra.mxu0 %v3830
        %6445 = vmatprep.subr.bf16.mxu0 %v3829
        %6446 = vmatpush2.bf16.msra.mxu0 %v3828
        %6447 = vmatprep.subr.bf16.mxu0 %v3827
        %6448 = vmatpush2.bf16.msra.mxu0 %v3826
        %6449 = vmatprep.subr.bf16.mxu0 %v3825
        %6450 = vmatpush2.bf16.msra.mxu0 %v3824
        %6451 = vmatprep.subr.bf16.mxu0 %v3823
        %6452 = vmatpush2.bf16.msra.mxu0 %v3822
        %6453 = vmatprep.subr.bf16.mxu0 %v3821
        %6454 = vmatpush2.bf16.msra.mxu0 %v3820
        %6455 = vmatprep.mubr.bf16.mxu0 %v1285
        %6456 = vmatmul.mubr.bf16.gmra.mxu0 %v1284
        %v6457 = vpop.f32.mrf.mxu0
        %v6458 = vadd.f32 %v6417, %v6457
        %v6459 = vpop.f32.mrf.mxu0
        %v6460 = vadd.f32 %v6419, %v6459
        %v6461 = vpop.f32.mrf.mxu0
        %v6462 = vpop.f32.mrf.mxu0
        %6463 = vdwg.mxu0
        %6464 = vmatprep.subr.bf16.mxu0 %v3851
        %6465 = vmatpush1.bf16.msra.mxu0 %v3850
        %6466 = vmatprep.subr.bf16.mxu0 %v3849
        %6467 = vmatpush1.bf16.msra.mxu0 %v3848
        %6468 = vmatprep.subr.bf16.mxu0 %v3847
        %6469 = vmatpush1.bf16.msra.mxu0 %v3846
        %6470 = vmatprep.subr.bf16.mxu0 %v3845
        %6471 = vmatpush1.bf16.msra.mxu0 %v3844
        %6472 = vmatprep.subr.bf16.mxu0 %v3843
        %6473 = vmatpush1.bf16.msra.mxu0 %v3842
        %6474 = vmatprep.subr.bf16.mxu0 %v3841
        %6475 = vmatpush1.bf16.msra.mxu0 %v3840
        %6476 = vmatprep.subr.bf16.mxu0 %v3839
        %6477 = vmatpush1.bf16.msra.mxu0 %v3838
        %6478 = vmatprep.subr.bf16.mxu0 %v3837
        %6479 = vmatpush1.bf16.msra.mxu0 %v3836
        %6480 = vmatprep.subr.bf16.mxu0 %v3867
        %6481 = vmatpush2.bf16.msra.mxu0 %v3866
        %6482 = vmatprep.subr.bf16.mxu0 %v3865
        %6483 = vmatpush2.bf16.msra.mxu0 %v3864
        %6484 = vmatprep.subr.bf16.mxu0 %v3863
        %6485 = vmatpush2.bf16.msra.mxu0 %v3862
        %6486 = vmatprep.subr.bf16.mxu0 %v3861
        %6487 = vmatpush2.bf16.msra.mxu0 %v3860
        %6488 = vmatprep.subr.bf16.mxu0 %v3859
        %6489 = vmatpush2.bf16.msra.mxu0 %v3858
        %6490 = vmatprep.subr.bf16.mxu0 %v3857
        %6491 = vmatpush2.bf16.msra.mxu0 %v3856
        %6492 = vmatprep.subr.bf16.mxu0 %v3855
        %6493 = vmatpush2.bf16.msra.mxu0 %v3854
        %6494 = vmatprep.subr.bf16.mxu0 %v3853
        %6495 = vmatpush2.bf16.msra.mxu0 %v3852
        %6496 = vmatprep.mubr.bf16.mxu0 %v1287
        %6497 = vmatmul.mubr.bf16.gmra.mxu0 %v1286
        %v6498 = vpop.f32.mrf.mxu0
        %v6499 = vadd.f32 %v6458, %v6498
        %v6500 = vpop.f32.mrf.mxu0
        %v6501 = vadd.f32 %v6460, %v6500
        %v6502 = vpop.f32.mrf.mxu0
        %v6503 = vpop.f32.mrf.mxu0
        %6504 = vdwg.mxu0
        %6505 = vmatprep.subr.bf16.mxu0 %v3883
        %6506 = vmatpush1.bf16.msra.mxu0 %v3882
        %6507 = vmatprep.subr.bf16.mxu0 %v3881
        %6508 = vmatpush1.bf16.msra.mxu0 %v3880
        %6509 = vmatprep.subr.bf16.mxu0 %v3879
        %6510 = vmatpush1.bf16.msra.mxu0 %v3878
        %6511 = vmatprep.subr.bf16.mxu0 %v3877
        %6512 = vmatpush1.bf16.msra.mxu0 %v3876
        %6513 = vmatprep.subr.bf16.mxu0 %v3875
        %6514 = vmatpush1.bf16.msra.mxu0 %v3874
        %6515 = vmatprep.subr.bf16.mxu0 %v3873
        %6516 = vmatpush1.bf16.msra.mxu0 %v3872
        %6517 = vmatprep.subr.bf16.mxu0 %v3871
        %6518 = vmatpush1.bf16.msra.mxu0 %v3870
        %6519 = vmatprep.subr.bf16.mxu0 %v3869
        %6520 = vmatpush1.bf16.msra.mxu0 %v3868
        %6521 = vmatprep.subr.bf16.mxu0 %v3899
        %6522 = vmatpush2.bf16.msra.mxu0 %v3898
        %6523 = vmatprep.subr.bf16.mxu0 %v3897
        %6524 = vmatpush2.bf16.msra.mxu0 %v3896
        %6525 = vmatprep.subr.bf16.mxu0 %v3895
        %6526 = vmatpush2.bf16.msra.mxu0 %v3894
        %6527 = vmatprep.subr.bf16.mxu0 %v3893
        %6528 = vmatpush2.bf16.msra.mxu0 %v3892
        %6529 = vmatprep.subr.bf16.mxu0 %v3891
        %6530 = vmatpush2.bf16.msra.mxu0 %v3890
        %6531 = vmatprep.subr.bf16.mxu0 %v3889
        %6532 = vmatpush2.bf16.msra.mxu0 %v3888
        %6533 = vmatprep.subr.bf16.mxu0 %v3887
        %6534 = vmatpush2.bf16.msra.mxu0 %v3886
        %6535 = vmatprep.subr.bf16.mxu0 %v3885
        %6536 = vmatpush2.bf16.msra.mxu0 %v3884
        %6537 = vmatprep.mubr.bf16.mxu0 %v1289
        %6538 = vmatmul.mubr.bf16.gmra.mxu0 %v1288
        %v6539 = vpop.f32.mrf.mxu0
        %v6540 = vadd.f32 %v6499, %v6539
        %v6541 = vpop.f32.mrf.mxu0
        %v6542 = vadd.f32 %v6501, %v6541
        %v6543 = vpop.f32.mrf.mxu0
        %v6544 = vpop.f32.mrf.mxu0
        %6545 = vdwg.mxu0
        %6546 = vmatprep.subr.bf16.mxu0 %v3915
        %6547 = vmatpush1.bf16.msra.mxu0 %v3914
        %6548 = vmatprep.subr.bf16.mxu0 %v3913
        %6549 = vmatpush1.bf16.msra.mxu0 %v3912
        %6550 = vmatprep.subr.bf16.mxu0 %v3911
        %6551 = vmatpush1.bf16.msra.mxu0 %v3910
        %6552 = vmatprep.subr.bf16.mxu0 %v3909
        %6553 = vmatpush1.bf16.msra.mxu0 %v3908
        %6554 = vmatprep.subr.bf16.mxu0 %v3907
        %6555 = vmatpush1.bf16.msra.mxu0 %v3906
        %6556 = vmatprep.subr.bf16.mxu0 %v3905
        %6557 = vmatpush1.bf16.msra.mxu0 %v3904
        %6558 = vmatprep.subr.bf16.mxu0 %v3903
        %6559 = vmatpush1.bf16.msra.mxu0 %v3902
        %6560 = vmatprep.subr.bf16.mxu0 %v3901
        %6561 = vmatpush1.bf16.msra.mxu0 %v3900
        %6562 = vmatprep.subr.bf16.mxu0 %v3931
        %6563 = vmatpush2.bf16.msra.mxu0 %v3930
        %6564 = vmatprep.subr.bf16.mxu0 %v3929
        %6565 = vmatpush2.bf16.msra.mxu0 %v3928
        %6566 = vmatprep.subr.bf16.mxu0 %v3927
        %6567 = vmatpush2.bf16.msra.mxu0 %v3926
        %6568 = vmatprep.subr.bf16.mxu0 %v3925
        %6569 = vmatpush2.bf16.msra.mxu0 %v3924
        %6570 = vmatprep.subr.bf16.mxu0 %v3923
        %6571 = vmatpush2.bf16.msra.mxu0 %v3922
        %6572 = vmatprep.subr.bf16.mxu0 %v3921
        %6573 = vmatpush2.bf16.msra.mxu0 %v3920
        %6574 = vmatprep.subr.bf16.mxu0 %v3919
        %6575 = vmatpush2.bf16.msra.mxu0 %v3918
        %6576 = vmatprep.subr.bf16.mxu0 %v3917
        %6577 = vmatpush2.bf16.msra.mxu0 %v3916
        %6578 = vmatprep.mubr.bf16.mxu0 %v1291
        %6579 = vmatmul.mubr.bf16.gmra.mxu0 %v1290
        %v6580 = vpop.f32.mrf.mxu0
        %v6581 = vadd.f32 %v6540, %v6580
        %v6582 = vpop.f32.mrf.mxu0
        %v6583 = vadd.f32 %v6542, %v6582
        %v6584 = vpop.f32.mrf.mxu0
        %v6585 = vpop.f32.mrf.mxu0
        %6586 = vdwg.mxu0
        %6587 = vmatprep.subr.bf16.mxu0 %v3947
        %6588 = vmatpush1.bf16.msra.mxu0 %v3946
        %6589 = vmatprep.subr.bf16.mxu0 %v3945
        %6590 = vmatpush1.bf16.msra.mxu0 %v3944
        %6591 = vmatprep.subr.bf16.mxu0 %v3943
        %6592 = vmatpush1.bf16.msra.mxu0 %v3942
        %6593 = vmatprep.subr.bf16.mxu0 %v3941
        %6594 = vmatpush1.bf16.msra.mxu0 %v3940
        %6595 = vmatprep.subr.bf16.mxu0 %v3939
        %6596 = vmatpush1.bf16.msra.mxu0 %v3938
        %6597 = vmatprep.subr.bf16.mxu0 %v3937
        %6598 = vmatpush1.bf16.msra.mxu0 %v3936
        %6599 = vmatprep.subr.bf16.mxu0 %v3935
        %6600 = vmatpush1.bf16.msra.mxu0 %v3934
        %6601 = vmatprep.subr.bf16.mxu0 %v3933
        %6602 = vmatpush1.bf16.msra.mxu0 %v3932
        %6603 = vmatprep.subr.bf16.mxu0 %v3963
        %6604 = vmatpush2.bf16.msra.mxu0 %v3962
        %6605 = vmatprep.subr.bf16.mxu0 %v3961
        %6606 = vmatpush2.bf16.msra.mxu0 %v3960
        %6607 = vmatprep.subr.bf16.mxu0 %v3959
        %6608 = vmatpush2.bf16.msra.mxu0 %v3958
        %6609 = vmatprep.subr.bf16.mxu0 %v3957
        %6610 = vmatpush2.bf16.msra.mxu0 %v3956
        %6611 = vmatprep.subr.bf16.mxu0 %v3955
        %6612 = vmatpush2.bf16.msra.mxu0 %v3954
        %6613 = vmatprep.subr.bf16.mxu0 %v3953
        %6614 = vmatpush2.bf16.msra.mxu0 %v3952
        %6615 = vmatprep.subr.bf16.mxu0 %v3951
        %6616 = vmatpush2.bf16.msra.mxu0 %v3950
        %6617 = vmatprep.subr.bf16.mxu0 %v3949
        %6618 = vmatpush2.bf16.msra.mxu0 %v3948
        %6619 = vmatprep.mubr.bf16.mxu0 %v1293
        %6620 = vmatmul.mubr.bf16.gmra.mxu0 %v1292
        %v6621 = vpop.f32.mrf.mxu0
        %v6622 = vadd.f32 %v6581, %v6621
        %v6623 = vpop.f32.mrf.mxu0
        %v6624 = vadd.f32 %v6583, %v6623
        %v6625 = vpop.f32.mrf.mxu0
        %v6626 = vpop.f32.mrf.mxu0
        %6627 = vdwg.mxu0
        %6628 = vmatprep.subr.bf16.mxu0 %v3979
        %6629 = vmatpush1.bf16.msra.mxu0 %v3978
        %6630 = vmatprep.subr.bf16.mxu0 %v3977
        %6631 = vmatpush1.bf16.msra.mxu0 %v3976
        %6632 = vmatprep.subr.bf16.mxu0 %v3975
        %6633 = vmatpush1.bf16.msra.mxu0 %v3974
        %6634 = vmatprep.subr.bf16.mxu0 %v3973
        %6635 = vmatpush1.bf16.msra.mxu0 %v3972
        %6636 = vmatprep.subr.bf16.mxu0 %v3971
        %6637 = vmatpush1.bf16.msra.mxu0 %v3970
        %6638 = vmatprep.subr.bf16.mxu0 %v3969
        %6639 = vmatpush1.bf16.msra.mxu0 %v3968
        %6640 = vmatprep.subr.bf16.mxu0 %v3967
        %6641 = vmatpush1.bf16.msra.mxu0 %v3966
        %6642 = vmatprep.subr.bf16.mxu0 %v3965
        %6643 = vmatpush1.bf16.msra.mxu0 %v3964
        %6644 = vmatprep.subr.bf16.mxu0 %v3995
        %6645 = vmatpush2.bf16.msra.mxu0 %v3994
        %6646 = vmatprep.subr.bf16.mxu0 %v3993
        %6647 = vmatpush2.bf16.msra.mxu0 %v3992
        %6648 = vmatprep.subr.bf16.mxu0 %v3991
        %6649 = vmatpush2.bf16.msra.mxu0 %v3990
        %6650 = vmatprep.subr.bf16.mxu0 %v3989
        %6651 = vmatpush2.bf16.msra.mxu0 %v3988
        %6652 = vmatprep.subr.bf16.mxu0 %v3987
        %6653 = vmatpush2.bf16.msra.mxu0 %v3986
        %6654 = vmatprep.subr.bf16.mxu0 %v3985
        %6655 = vmatpush2.bf16.msra.mxu0 %v3984
        %6656 = vmatprep.subr.bf16.mxu0 %v3983
        %6657 = vmatpush2.bf16.msra.mxu0 %v3982
        %6658 = vmatprep.subr.bf16.mxu0 %v3981
        %6659 = vmatpush2.bf16.msra.mxu0 %v3980
        %6660 = vmatprep.mubr.bf16.mxu0 %v1295
        %6661 = vmatmul.mubr.bf16.gmra.mxu0 %v1294
        %v6662 = vpop.f32.mrf.mxu0
        %v6663 = vadd.f32 %v6622, %v6662
        %v6664 = vpop.f32.mrf.mxu0
        %v6665 = vadd.f32 %v6624, %v6664
        %v6666 = vpop.f32.mrf.mxu0
        %v6667 = vpop.f32.mrf.mxu0
        %6668 = vdwg.mxu0
        %6669 = vmatprep.subr.bf16.mxu0 %v4011
        %6670 = vmatpush1.bf16.msra.mxu0 %v4010
        %6671 = vmatprep.subr.bf16.mxu0 %v4009
        %6672 = vmatpush1.bf16.msra.mxu0 %v4008
        %6673 = vmatprep.subr.bf16.mxu0 %v4007
        %6674 = vmatpush1.bf16.msra.mxu0 %v4006
        %6675 = vmatprep.subr.bf16.mxu0 %v4005
        %6676 = vmatpush1.bf16.msra.mxu0 %v4004
        %6677 = vmatprep.subr.bf16.mxu0 %v4003
        %6678 = vmatpush1.bf16.msra.mxu0 %v4002
        %6679 = vmatprep.subr.bf16.mxu0 %v4001
        %6680 = vmatpush1.bf16.msra.mxu0 %v4000
        %6681 = vmatprep.subr.bf16.mxu0 %v3999
        %6682 = vmatpush1.bf16.msra.mxu0 %v3998
        %6683 = vmatprep.subr.bf16.mxu0 %v3997
        %6684 = vmatpush1.bf16.msra.mxu0 %v3996
        %6685 = vmatprep.subr.bf16.mxu0 %v4027
        %6686 = vmatpush2.bf16.msra.mxu0 %v4026
        %6687 = vmatprep.subr.bf16.mxu0 %v4025
        %6688 = vmatpush2.bf16.msra.mxu0 %v4024
        %6689 = vmatprep.subr.bf16.mxu0 %v4023
        %6690 = vmatpush2.bf16.msra.mxu0 %v4022
        %6691 = vmatprep.subr.bf16.mxu0 %v4021
        %6692 = vmatpush2.bf16.msra.mxu0 %v4020
        %6693 = vmatprep.subr.bf16.mxu0 %v4019
        %6694 = vmatpush2.bf16.msra.mxu0 %v4018
        %6695 = vmatprep.subr.bf16.mxu0 %v4017
        %6696 = vmatpush2.bf16.msra.mxu0 %v4016
        %6697 = vmatprep.subr.bf16.mxu0 %v4015
        %6698 = vmatpush2.bf16.msra.mxu0 %v4014
        %6699 = vmatprep.subr.bf16.mxu0 %v4013
        %6700 = vmatpush2.bf16.msra.mxu0 %v4012
        %6701 = vmatprep.mubr.bf16.mxu0 %v1297
        %6702 = vmatmul.mubr.bf16.gmra.mxu0 %v1296
        %v6703 = vpop.f32.mrf.mxu0
        %v6704 = vadd.f32 %v6663, %v6703
        %v6705 = vpop.f32.mrf.mxu0
        %v6706 = vadd.f32 %v6665, %v6705
        %v6707 = vpop.f32.mrf.mxu0
        %v6708 = vpop.f32.mrf.mxu0
        %6709 = vdwg.mxu0
        %6710 = vmatprep.subr.bf16.mxu0 %v4043
        %6711 = vmatpush1.bf16.msra.mxu0 %v4042
        %6712 = vmatprep.subr.bf16.mxu0 %v4041
        %6713 = vmatpush1.bf16.msra.mxu0 %v4040
        %6714 = vmatprep.subr.bf16.mxu0 %v4039
        %6715 = vmatpush1.bf16.msra.mxu0 %v4038
        %6716 = vmatprep.subr.bf16.mxu0 %v4037
        %6717 = vmatpush1.bf16.msra.mxu0 %v4036
        %6718 = vmatprep.subr.bf16.mxu0 %v4035
        %6719 = vmatpush1.bf16.msra.mxu0 %v4034
        %6720 = vmatprep.subr.bf16.mxu0 %v4033
        %6721 = vmatpush1.bf16.msra.mxu0 %v4032
        %6722 = vmatprep.subr.bf16.mxu0 %v4031
        %6723 = vmatpush1.bf16.msra.mxu0 %v4030
        %6724 = vmatprep.subr.bf16.mxu0 %v4029
        %6725 = vmatpush1.bf16.msra.mxu0 %v4028
        %6726 = vmatprep.subr.bf16.mxu0 %v4059
        %6727 = vmatpush2.bf16.msra.mxu0 %v4058
        %6728 = vmatprep.subr.bf16.mxu0 %v4057
        %6729 = vmatpush2.bf16.msra.mxu0 %v4056
        %6730 = vmatprep.subr.bf16.mxu0 %v4055
        %6731 = vmatpush2.bf16.msra.mxu0 %v4054
        %6732 = vmatprep.subr.bf16.mxu0 %v4053
        %6733 = vmatpush2.bf16.msra.mxu0 %v4052
        %6734 = vmatprep.subr.bf16.mxu0 %v4051
        %6735 = vmatpush2.bf16.msra.mxu0 %v4050
        %6736 = vmatprep.subr.bf16.mxu0 %v4049
        %6737 = vmatpush2.bf16.msra.mxu0 %v4048
        %6738 = vmatprep.subr.bf16.mxu0 %v4047
        %6739 = vmatpush2.bf16.msra.mxu0 %v4046
        %6740 = vmatprep.subr.bf16.mxu0 %v4045
        %6741 = vmatpush2.bf16.msra.mxu0 %v4044
        %6742 = vmatprep.mubr.bf16.mxu0 %v1299
        %6743 = vmatmul.mubr.bf16.gmra.mxu0 %v1298
        %v6744 = vpop.f32.mrf.mxu0
        %v6745 = vadd.f32 %v6704, %v6744
        %v6746 = vpop.f32.mrf.mxu0
        %v6747 = vadd.f32 %v6706, %v6746
        %v6748 = vpop.f32.mrf.mxu0
        %v6749 = vpop.f32.mrf.mxu0
        %6750 = vdwg.mxu0
        %6751 = vmatprep.subr.bf16.mxu0 %v4075
        %6752 = vmatpush1.bf16.msra.mxu0 %v4074
        %6753 = vmatprep.subr.bf16.mxu0 %v4073
        %6754 = vmatpush1.bf16.msra.mxu0 %v4072
        %6755 = vmatprep.subr.bf16.mxu0 %v4071
        %6756 = vmatpush1.bf16.msra.mxu0 %v4070
        %6757 = vmatprep.subr.bf16.mxu0 %v4069
        %6758 = vmatpush1.bf16.msra.mxu0 %v4068
        %6759 = vmatprep.subr.bf16.mxu0 %v4067
        %6760 = vmatpush1.bf16.msra.mxu0 %v4066
        %6761 = vmatprep.subr.bf16.mxu0 %v4065
        %6762 = vmatpush1.bf16.msra.mxu0 %v4064
        %6763 = vmatprep.subr.bf16.mxu0 %v4063
        %6764 = vmatpush1.bf16.msra.mxu0 %v4062
        %6765 = vmatprep.subr.bf16.mxu0 %v4061
        %6766 = vmatpush1.bf16.msra.mxu0 %v4060
        %6767 = vmatprep.subr.bf16.mxu0 %v4091
        %6768 = vmatpush2.bf16.msra.mxu0 %v4090
        %6769 = vmatprep.subr.bf16.mxu0 %v4089
        %6770 = vmatpush2.bf16.msra.mxu0 %v4088
        %6771 = vmatprep.subr.bf16.mxu0 %v4087
        %6772 = vmatpush2.bf16.msra.mxu0 %v4086
        %6773 = vmatprep.subr.bf16.mxu0 %v4085
        %6774 = vmatpush2.bf16.msra.mxu0 %v4084
        %6775 = vmatprep.subr.bf16.mxu0 %v4083
        %6776 = vmatpush2.bf16.msra.mxu0 %v4082
        %6777 = vmatprep.subr.bf16.mxu0 %v4081
        %6778 = vmatpush2.bf16.msra.mxu0 %v4080
        %6779 = vmatprep.subr.bf16.mxu0 %v4079
        %6780 = vmatpush2.bf16.msra.mxu0 %v4078
        %6781 = vmatprep.subr.bf16.mxu0 %v4077
        %6782 = vmatpush2.bf16.msra.mxu0 %v4076
        %6783 = vmatprep.mubr.bf16.mxu0 %v1301
        %6784 = vmatmul.mubr.bf16.gmra.mxu0 %v1300
        %v6785 = vpop.f32.mrf.mxu0
        %v6786 = vadd.f32 %v6745, %v6785
        %v6787 = vpop.f32.mrf.mxu0
        %v6788 = vadd.f32 %v6747, %v6787
        %v6789 = vpop.f32.mrf.mxu0
        %v6790 = vpop.f32.mrf.mxu0
        %6791 = vdwg.mxu0
        %6792 = vmatprep.subr.bf16.mxu0 %v4107
        %6793 = vmatpush1.bf16.msra.mxu0 %v4106
        %6794 = vmatprep.subr.bf16.mxu0 %v4105
        %6795 = vmatpush1.bf16.msra.mxu0 %v4104
        %6796 = vmatprep.subr.bf16.mxu0 %v4103
        %6797 = vmatpush1.bf16.msra.mxu0 %v4102
        %6798 = vmatprep.subr.bf16.mxu0 %v4101
        %6799 = vmatpush1.bf16.msra.mxu0 %v4100
        %6800 = vmatprep.subr.bf16.mxu0 %v4099
        %6801 = vmatpush1.bf16.msra.mxu0 %v4098
        %6802 = vmatprep.subr.bf16.mxu0 %v4097
        %6803 = vmatpush1.bf16.msra.mxu0 %v4096
        %6804 = vmatprep.subr.bf16.mxu0 %v4095
        %6805 = vmatpush1.bf16.msra.mxu0 %v4094
        %6806 = vmatprep.subr.bf16.mxu0 %v4093
        %6807 = vmatpush1.bf16.msra.mxu0 %v4092
        %6808 = vmatprep.subr.bf16.mxu0 %v4123
        %6809 = vmatpush2.bf16.msra.mxu0 %v4122
        %6810 = vmatprep.subr.bf16.mxu0 %v4121
        %6811 = vmatpush2.bf16.msra.mxu0 %v4120
        %6812 = vmatprep.subr.bf16.mxu0 %v4119
        %6813 = vmatpush2.bf16.msra.mxu0 %v4118
        %6814 = vmatprep.subr.bf16.mxu0 %v4117
        %6815 = vmatpush2.bf16.msra.mxu0 %v4116
        %6816 = vmatprep.subr.bf16.mxu0 %v4115
        %6817 = vmatpush2.bf16.msra.mxu0 %v4114
        %6818 = vmatprep.subr.bf16.mxu0 %v4113
        %6819 = vmatpush2.bf16.msra.mxu0 %v4112
        %6820 = vmatprep.subr.bf16.mxu0 %v4111
        %6821 = vmatpush2.bf16.msra.mxu0 %v4110
        %6822 = vmatprep.subr.bf16.mxu0 %v4109
        %6823 = vmatpush2.bf16.msra.mxu0 %v4108
        %6824 = vmatprep.mubr.bf16.mxu0 %v1303
        %6825 = vmatmul.mubr.bf16.gmra.mxu0 %v1302
        %v6826 = vpop.f32.mrf.mxu0
        %v6827 = vadd.f32 %v6786, %v6826
        %v6828 = vpop.f32.mrf.mxu0
        %v6829 = vadd.f32 %v6788, %v6828
        %v6830 = vpop.f32.mrf.mxu0
        %v6831 = vpop.f32.mrf.mxu0
        %6832 = vdwg.mxu0
        %6833 = vmatprep.subr.bf16.mxu0 %v4139
        %6834 = vmatpush1.bf16.msra.mxu0 %v4138
        %6835 = vmatprep.subr.bf16.mxu0 %v4137
        %6836 = vmatpush1.bf16.msra.mxu0 %v4136
        %6837 = vmatprep.subr.bf16.mxu0 %v4135
        %6838 = vmatpush1.bf16.msra.mxu0 %v4134
        %6839 = vmatprep.subr.bf16.mxu0 %v4133
        %6840 = vmatpush1.bf16.msra.mxu0 %v4132
        %6841 = vmatprep.subr.bf16.mxu0 %v4131
        %6842 = vmatpush1.bf16.msra.mxu0 %v4130
        %6843 = vmatprep.subr.bf16.mxu0 %v4129
        %6844 = vmatpush1.bf16.msra.mxu0 %v4128
        %6845 = vmatprep.subr.bf16.mxu0 %v4127
        %6846 = vmatpush1.bf16.msra.mxu0 %v4126
        %6847 = vmatprep.subr.bf16.mxu0 %v4125
        %6848 = vmatpush1.bf16.msra.mxu0 %v4124
        %6849 = vmatprep.subr.bf16.mxu0 %v4155
        %6850 = vmatpush2.bf16.msra.mxu0 %v4154
        %6851 = vmatprep.subr.bf16.mxu0 %v4153
        %6852 = vmatpush2.bf16.msra.mxu0 %v4152
        %6853 = vmatprep.subr.bf16.mxu0 %v4151
        %6854 = vmatpush2.bf16.msra.mxu0 %v4150
        %6855 = vmatprep.subr.bf16.mxu0 %v4149
        %6856 = vmatpush2.bf16.msra.mxu0 %v4148
        %6857 = vmatprep.subr.bf16.mxu0 %v4147
        %6858 = vmatpush2.bf16.msra.mxu0 %v4146
        %6859 = vmatprep.subr.bf16.mxu0 %v4145
        %6860 = vmatpush2.bf16.msra.mxu0 %v4144
        %6861 = vmatprep.subr.bf16.mxu0 %v4143
        %6862 = vmatpush2.bf16.msra.mxu0 %v4142
        %6863 = vmatprep.subr.bf16.mxu0 %v4141
        %6864 = vmatpush2.bf16.msra.mxu0 %v4140
        %6865 = vmatprep.mubr.bf16.mxu0 %v1305
        %6866 = vmatmul.mubr.bf16.gmra.mxu0 %v1304
        %v6867 = vpop.f32.mrf.mxu0
        %v6868 = vadd.f32 %v6827, %v6867
        %v6869 = vpop.f32.mrf.mxu0
        %v6870 = vadd.f32 %v6829, %v6869
        %v6871 = vpop.f32.mrf.mxu0
        %v6872 = vpop.f32.mrf.mxu0
        %6873 = vdwg.mxu0
        %6874 = vmatprep.subr.bf16.mxu0 %v4171
        %6875 = vmatpush1.bf16.msra.mxu0 %v4170
        %6876 = vmatprep.subr.bf16.mxu0 %v4169
        %6877 = vmatpush1.bf16.msra.mxu0 %v4168
        %6878 = vmatprep.subr.bf16.mxu0 %v4167
        %6879 = vmatpush1.bf16.msra.mxu0 %v4166
        %6880 = vmatprep.subr.bf16.mxu0 %v4165
        %6881 = vmatpush1.bf16.msra.mxu0 %v4164
        %6882 = vmatprep.subr.bf16.mxu0 %v4163
        %6883 = vmatpush1.bf16.msra.mxu0 %v4162
        %6884 = vmatprep.subr.bf16.mxu0 %v4161
        %6885 = vmatpush1.bf16.msra.mxu0 %v4160
        %6886 = vmatprep.subr.bf16.mxu0 %v4159
        %6887 = vmatpush1.bf16.msra.mxu0 %v4158
        %6888 = vmatprep.subr.bf16.mxu0 %v4157
        %6889 = vmatpush1.bf16.msra.mxu0 %v4156
        %6890 = vmatprep.subr.bf16.mxu0 %v4187
        %6891 = vmatpush2.bf16.msra.mxu0 %v4186
        %6892 = vmatprep.subr.bf16.mxu0 %v4185
        %6893 = vmatpush2.bf16.msra.mxu0 %v4184
        %6894 = vmatprep.subr.bf16.mxu0 %v4183
        %6895 = vmatpush2.bf16.msra.mxu0 %v4182
        %6896 = vmatprep.subr.bf16.mxu0 %v4181
        %6897 = vmatpush2.bf16.msra.mxu0 %v4180
        %6898 = vmatprep.subr.bf16.mxu0 %v4179
        %6899 = vmatpush2.bf16.msra.mxu0 %v4178
        %6900 = vmatprep.subr.bf16.mxu0 %v4177
        %6901 = vmatpush2.bf16.msra.mxu0 %v4176
        %6902 = vmatprep.subr.bf16.mxu0 %v4175
        %6903 = vmatpush2.bf16.msra.mxu0 %v4174
        %6904 = vmatprep.subr.bf16.mxu0 %v4173
        %6905 = vmatpush2.bf16.msra.mxu0 %v4172
        %6906 = vmatprep.mubr.bf16.mxu0 %v1307
        %6907 = vmatmul.mubr.bf16.gmra.mxu0 %v1306
        %v6908 = vpop.f32.mrf.mxu0
        %v6909 = vadd.f32 %v6868, %v6908
        %v6910 = vpop.f32.mrf.mxu0
        %v6911 = vadd.f32 %v6870, %v6910
        %v6912 = vpop.f32.mrf.mxu0
        %v6913 = vpop.f32.mrf.mxu0
        %6914 = vdwg.mxu0
        %6915 = vmatprep.subr.bf16.mxu0 %v4203
        %6916 = vmatpush1.bf16.msra.mxu0 %v4202
        %6917 = vmatprep.subr.bf16.mxu0 %v4201
        %6918 = vmatpush1.bf16.msra.mxu0 %v4200
        %6919 = vmatprep.subr.bf16.mxu0 %v4199
        %6920 = vmatpush1.bf16.msra.mxu0 %v4198
        %6921 = vmatprep.subr.bf16.mxu0 %v4197
        %6922 = vmatpush1.bf16.msra.mxu0 %v4196
        %6923 = vmatprep.subr.bf16.mxu0 %v4195
        %6924 = vmatpush1.bf16.msra.mxu0 %v4194
        %6925 = vmatprep.subr.bf16.mxu0 %v4193
        %6926 = vmatpush1.bf16.msra.mxu0 %v4192
        %6927 = vmatprep.subr.bf16.mxu0 %v4191
        %6928 = vmatpush1.bf16.msra.mxu0 %v4190
        %6929 = vmatprep.subr.bf16.mxu0 %v4189
        %6930 = vmatpush1.bf16.msra.mxu0 %v4188
        %6931 = vmatprep.subr.bf16.mxu0 %v4219
        %6932 = vmatpush2.bf16.msra.mxu0 %v4218
        %6933 = vmatprep.subr.bf16.mxu0 %v4217
        %6934 = vmatpush2.bf16.msra.mxu0 %v4216
        %6935 = vmatprep.subr.bf16.mxu0 %v4215
        %6936 = vmatpush2.bf16.msra.mxu0 %v4214
        %6937 = vmatprep.subr.bf16.mxu0 %v4213
        %6938 = vmatpush2.bf16.msra.mxu0 %v4212
        %6939 = vmatprep.subr.bf16.mxu0 %v4211
        %6940 = vmatpush2.bf16.msra.mxu0 %v4210
        %6941 = vmatprep.subr.bf16.mxu0 %v4209
        %6942 = vmatpush2.bf16.msra.mxu0 %v4208
        %6943 = vmatprep.subr.bf16.mxu0 %v4207
        %6944 = vmatpush2.bf16.msra.mxu0 %v4206
        %6945 = vmatprep.subr.bf16.mxu0 %v4205
        %6946 = vmatpush2.bf16.msra.mxu0 %v4204
        %6947 = vmatprep.mubr.bf16.mxu0 %v1309
        %6948 = vmatmul.mubr.bf16.gmra.mxu0 %v1308
        %v6949 = vpop.f32.mrf.mxu0
        %v6950 = vadd.f32 %v6909, %v6949
        %v6951 = vpop.f32.mrf.mxu0
        %v6952 = vadd.f32 %v6911, %v6951
        %v6953 = vpop.f32.mrf.mxu0
        %v6954 = vpop.f32.mrf.mxu0
        %6955 = vdwg.mxu0
        %6956 = vmatprep.subr.bf16.mxu0 %v4235
        %6957 = vmatpush1.bf16.msra.mxu0 %v4234
        %6958 = vmatprep.subr.bf16.mxu0 %v4233
        %6959 = vmatpush1.bf16.msra.mxu0 %v4232
        %6960 = vmatprep.subr.bf16.mxu0 %v4231
        %6961 = vmatpush1.bf16.msra.mxu0 %v4230
        %6962 = vmatprep.subr.bf16.mxu0 %v4229
        %6963 = vmatpush1.bf16.msra.mxu0 %v4228
        %6964 = vmatprep.subr.bf16.mxu0 %v4227
        %6965 = vmatpush1.bf16.msra.mxu0 %v4226
        %6966 = vmatprep.subr.bf16.mxu0 %v4225
        %6967 = vmatpush1.bf16.msra.mxu0 %v4224
        %6968 = vmatprep.subr.bf16.mxu0 %v4223
        %6969 = vmatpush1.bf16.msra.mxu0 %v4222
        %6970 = vmatprep.subr.bf16.mxu0 %v4221
        %6971 = vmatpush1.bf16.msra.mxu0 %v4220
        %6972 = vmatprep.subr.bf16.mxu0 %v4251
        %6973 = vmatpush2.bf16.msra.mxu0 %v4250
        %6974 = vmatprep.subr.bf16.mxu0 %v4249
        %6975 = vmatpush2.bf16.msra.mxu0 %v4248
        %6976 = vmatprep.subr.bf16.mxu0 %v4247
        %6977 = vmatpush2.bf16.msra.mxu0 %v4246
        %6978 = vmatprep.subr.bf16.mxu0 %v4245
        %6979 = vmatpush2.bf16.msra.mxu0 %v4244
        %6980 = vmatprep.subr.bf16.mxu0 %v4243
        %6981 = vmatpush2.bf16.msra.mxu0 %v4242
        %6982 = vmatprep.subr.bf16.mxu0 %v4241
        %6983 = vmatpush2.bf16.msra.mxu0 %v4240
        %6984 = vmatprep.subr.bf16.mxu0 %v4239
        %6985 = vmatpush2.bf16.msra.mxu0 %v4238
        %6986 = vmatprep.subr.bf16.mxu0 %v4237
        %6987 = vmatpush2.bf16.msra.mxu0 %v4236
        %6988 = vmatprep.mubr.bf16.mxu0 %v1311
        %6989 = vmatmul.mubr.bf16.gmra.mxu0 %v1310
        %v6990 = vpop.f32.mrf.mxu0
        %v6991 = vadd.f32 %v6950, %v6990
        %v6992 = vpop.f32.mrf.mxu0
        %v6993 = vadd.f32 %v6952, %v6992
        %v6994 = vpop.f32.mrf.mxu0
        %v6995 = vpop.f32.mrf.mxu0
        %6996 = vdwg.mxu0
        %6997 = vmatprep.subr.bf16.mxu0 %v4267
        %6998 = vmatpush1.bf16.msra.mxu0 %v4266
        %6999 = vmatprep.subr.bf16.mxu0 %v4265
        %7000 = vmatpush1.bf16.msra.mxu0 %v4264
        %7001 = vmatprep.subr.bf16.mxu0 %v4263
        %7002 = vmatpush1.bf16.msra.mxu0 %v4262
        %7003 = vmatprep.subr.bf16.mxu0 %v4261
        %7004 = vmatpush1.bf16.msra.mxu0 %v4260
        %7005 = vmatprep.subr.bf16.mxu0 %v4259
        %7006 = vmatpush1.bf16.msra.mxu0 %v4258
        %7007 = vmatprep.subr.bf16.mxu0 %v4257
        %7008 = vmatpush1.bf16.msra.mxu0 %v4256
        %7009 = vmatprep.subr.bf16.mxu0 %v4255
        %7010 = vmatpush1.bf16.msra.mxu0 %v4254
        %7011 = vmatprep.subr.bf16.mxu0 %v4253
        %7012 = vmatpush1.bf16.msra.mxu0 %v4252
        %7013 = vmatprep.subr.bf16.mxu0 %v4283
        %7014 = vmatpush2.bf16.msra.mxu0 %v4282
        %7015 = vmatprep.subr.bf16.mxu0 %v4281
        %7016 = vmatpush2.bf16.msra.mxu0 %v4280
        %7017 = vmatprep.subr.bf16.mxu0 %v4279
        %7018 = vmatpush2.bf16.msra.mxu0 %v4278
        %7019 = vmatprep.subr.bf16.mxu0 %v4277
        %7020 = vmatpush2.bf16.msra.mxu0 %v4276
        %7021 = vmatprep.subr.bf16.mxu0 %v4275
        %7022 = vmatpush2.bf16.msra.mxu0 %v4274
        %7023 = vmatprep.subr.bf16.mxu0 %v4273
        %7024 = vmatpush2.bf16.msra.mxu0 %v4272
        %7025 = vmatprep.subr.bf16.mxu0 %v4271
        %7026 = vmatpush2.bf16.msra.mxu0 %v4270
        %7027 = vmatprep.subr.bf16.mxu0 %v4269
        %7028 = vmatpush2.bf16.msra.mxu0 %v4268
        %7029 = vmatprep.mubr.bf16.mxu0 %v1313
        %7030 = vmatmul.mubr.bf16.gmra.mxu0 %v1312
        %v7031 = vpop.f32.mrf.mxu0
        %v7032 = vadd.f32 %v6991, %v7031
        %v7033 = vpop.f32.mrf.mxu0
        %v7034 = vadd.f32 %v6993, %v7033
        %v7035 = vpop.f32.mrf.mxu0
        %v7036 = vpop.f32.mrf.mxu0
        %7037 = vdwg.mxu0
        %7038 = vmatprep.subr.bf16.mxu0 %v4299
        %7039 = vmatpush1.bf16.msra.mxu0 %v4298
        %7040 = vmatprep.subr.bf16.mxu0 %v4297
        %7041 = vmatpush1.bf16.msra.mxu0 %v4296
        %7042 = vmatprep.subr.bf16.mxu0 %v4295
        %7043 = vmatpush1.bf16.msra.mxu0 %v4294
        %7044 = vmatprep.subr.bf16.mxu0 %v4293
        %7045 = vmatpush1.bf16.msra.mxu0 %v4292
        %7046 = vmatprep.subr.bf16.mxu0 %v4291
        %7047 = vmatpush1.bf16.msra.mxu0 %v4290
        %7048 = vmatprep.subr.bf16.mxu0 %v4289
        %7049 = vmatpush1.bf16.msra.mxu0 %v4288
        %7050 = vmatprep.subr.bf16.mxu0 %v4287
        %7051 = vmatpush1.bf16.msra.mxu0 %v4286
        %7052 = vmatprep.subr.bf16.mxu0 %v4285
        %7053 = vmatpush1.bf16.msra.mxu0 %v4284
        %7054 = vmatprep.subr.bf16.mxu0 %v4315
        %7055 = vmatpush2.bf16.msra.mxu0 %v4314
        %7056 = vmatprep.subr.bf16.mxu0 %v4313
        %7057 = vmatpush2.bf16.msra.mxu0 %v4312
        %7058 = vmatprep.subr.bf16.mxu0 %v4311
        %7059 = vmatpush2.bf16.msra.mxu0 %v4310
        %7060 = vmatprep.subr.bf16.mxu0 %v4309
        %7061 = vmatpush2.bf16.msra.mxu0 %v4308
        %7062 = vmatprep.subr.bf16.mxu0 %v4307
        %7063 = vmatpush2.bf16.msra.mxu0 %v4306
        %7064 = vmatprep.subr.bf16.mxu0 %v4305
        %7065 = vmatpush2.bf16.msra.mxu0 %v4304
        %7066 = vmatprep.subr.bf16.mxu0 %v4303
        %7067 = vmatpush2.bf16.msra.mxu0 %v4302
        %7068 = vmatprep.subr.bf16.mxu0 %v4301
        %7069 = vmatpush2.bf16.msra.mxu0 %v4300
        %7070 = vmatprep.mubr.bf16.mxu0 %v1315
        %7071 = vmatmul.mubr.bf16.gmra.mxu0 %v1314
        %v7072 = vpop.f32.mrf.mxu0
        %v7073 = vadd.f32 %v7032, %v7072
        %v7074 = vpop.f32.mrf.mxu0
        %v7075 = vadd.f32 %v7034, %v7074
        %v7076 = vpop.f32.mrf.mxu0
        %v7077 = vpop.f32.mrf.mxu0
        %7078 = vdwg.mxu0
        %7079 = vmatprep.subr.bf16.mxu0 %v4331
        %7080 = vmatpush1.bf16.msra.mxu0 %v4330
        %7081 = vmatprep.subr.bf16.mxu0 %v4329
        %7082 = vmatpush1.bf16.msra.mxu0 %v4328
        %7083 = vmatprep.subr.bf16.mxu0 %v4327
        %7084 = vmatpush1.bf16.msra.mxu0 %v4326
        %7085 = vmatprep.subr.bf16.mxu0 %v4325
        %7086 = vmatpush1.bf16.msra.mxu0 %v4324
        %7087 = vmatprep.subr.bf16.mxu0 %v4323
        %7088 = vmatpush1.bf16.msra.mxu0 %v4322
        %7089 = vmatprep.subr.bf16.mxu0 %v4321
        %7090 = vmatpush1.bf16.msra.mxu0 %v4320
        %7091 = vmatprep.subr.bf16.mxu0 %v4319
        %7092 = vmatpush1.bf16.msra.mxu0 %v4318
        %7093 = vmatprep.subr.bf16.mxu0 %v4317
        %7094 = vmatpush1.bf16.msra.mxu0 %v4316
        %7095 = vmatprep.subr.bf16.mxu0 %v4347
        %7096 = vmatpush2.bf16.msra.mxu0 %v4346
        %7097 = vmatprep.subr.bf16.mxu0 %v4345
        %7098 = vmatpush2.bf16.msra.mxu0 %v4344
        %7099 = vmatprep.subr.bf16.mxu0 %v4343
        %7100 = vmatpush2.bf16.msra.mxu0 %v4342
        %7101 = vmatprep.subr.bf16.mxu0 %v4341
        %7102 = vmatpush2.bf16.msra.mxu0 %v4340
        %7103 = vmatprep.subr.bf16.mxu0 %v4339
        %7104 = vmatpush2.bf16.msra.mxu0 %v4338
        %7105 = vmatprep.subr.bf16.mxu0 %v4337
        %7106 = vmatpush2.bf16.msra.mxu0 %v4336
        %7107 = vmatprep.subr.bf16.mxu0 %v4335
        %7108 = vmatpush2.bf16.msra.mxu0 %v4334
        %7109 = vmatprep.subr.bf16.mxu0 %v4333
        %7110 = vmatpush2.bf16.msra.mxu0 %v4332
        %7111 = vmatprep.mubr.bf16.mxu0 %v1317
        %7112 = vmatmul.mubr.bf16.gmra.mxu0 %v1316
        %v7113 = vpop.f32.mrf.mxu0
        %v7114 = vadd.f32 %v7073, %v7113
        %v7115 = vpop.f32.mrf.mxu0
        %v7116 = vadd.f32 %v7075, %v7115
        %v7117 = vpop.f32.mrf.mxu0
        %v7118 = vpop.f32.mrf.mxu0
        %7119 = vdwg.mxu0
        %7120 = vmatprep.subr.bf16.mxu0 %v4363
        %7121 = vmatpush1.bf16.msra.mxu0 %v4362
        %7122 = vmatprep.subr.bf16.mxu0 %v4361
        %7123 = vmatpush1.bf16.msra.mxu0 %v4360
        %7124 = vmatprep.subr.bf16.mxu0 %v4359
        %7125 = vmatpush1.bf16.msra.mxu0 %v4358
        %7126 = vmatprep.subr.bf16.mxu0 %v4357
        %7127 = vmatpush1.bf16.msra.mxu0 %v4356
        %7128 = vmatprep.subr.bf16.mxu0 %v4355
        %7129 = vmatpush1.bf16.msra.mxu0 %v4354
        %7130 = vmatprep.subr.bf16.mxu0 %v4353
        %7131 = vmatpush1.bf16.msra.mxu0 %v4352
        %7132 = vmatprep.subr.bf16.mxu0 %v4351
        %7133 = vmatpush1.bf16.msra.mxu0 %v4350
        %7134 = vmatprep.subr.bf16.mxu0 %v4349
        %7135 = vmatpush1.bf16.msra.mxu0 %v4348
        %7136 = vmatprep.subr.bf16.mxu0 %v4379
        %7137 = vmatpush2.bf16.msra.mxu0 %v4378
        %7138 = vmatprep.subr.bf16.mxu0 %v4377
        %7139 = vmatpush2.bf16.msra.mxu0 %v4376
        %7140 = vmatprep.subr.bf16.mxu0 %v4375
        %7141 = vmatpush2.bf16.msra.mxu0 %v4374
        %7142 = vmatprep.subr.bf16.mxu0 %v4373
        %7143 = vmatpush2.bf16.msra.mxu0 %v4372
        %7144 = vmatprep.subr.bf16.mxu0 %v4371
        %7145 = vmatpush2.bf16.msra.mxu0 %v4370
        %7146 = vmatprep.subr.bf16.mxu0 %v4369
        %7147 = vmatpush2.bf16.msra.mxu0 %v4368
        %7148 = vmatprep.subr.bf16.mxu0 %v4367
        %7149 = vmatpush2.bf16.msra.mxu0 %v4366
        %7150 = vmatprep.subr.bf16.mxu0 %v4365
        %7151 = vmatpush2.bf16.msra.mxu0 %v4364
        %7152 = vmatprep.mubr.bf16.mxu0 %v1319
        %7153 = vmatmul.mubr.bf16.gmra.mxu0 %v1318
        %v7154 = vpop.f32.mrf.mxu0
        %v7155 = vadd.f32 %v7114, %v7154
        %v7156 = vpop.f32.mrf.mxu0
        %v7157 = vadd.f32 %v7116, %v7156
        %v7158 = vpop.f32.mrf.mxu0
        %v7159 = vpop.f32.mrf.mxu0
        %7160 = vdwg.mxu0
        %7161 = vmatprep.subr.bf16.mxu0 %v4395
        %7162 = vmatpush1.bf16.msra.mxu0 %v4394
        %7163 = vmatprep.subr.bf16.mxu0 %v4393
        %7164 = vmatpush1.bf16.msra.mxu0 %v4392
        %7165 = vmatprep.subr.bf16.mxu0 %v4391
        %7166 = vmatpush1.bf16.msra.mxu0 %v4390
        %7167 = vmatprep.subr.bf16.mxu0 %v4389
        %7168 = vmatpush1.bf16.msra.mxu0 %v4388
        %7169 = vmatprep.subr.bf16.mxu0 %v4387
        %7170 = vmatpush1.bf16.msra.mxu0 %v4386
        %7171 = vmatprep.subr.bf16.mxu0 %v4385
        %7172 = vmatpush1.bf16.msra.mxu0 %v4384
        %7173 = vmatprep.subr.bf16.mxu0 %v4383
        %7174 = vmatpush1.bf16.msra.mxu0 %v4382
        %7175 = vmatprep.subr.bf16.mxu0 %v4381
        %7176 = vmatpush1.bf16.msra.mxu0 %v4380
        %7177 = vmatprep.subr.bf16.mxu0 %v4411
        %7178 = vmatpush2.bf16.msra.mxu0 %v4410
        %7179 = vmatprep.subr.bf16.mxu0 %v4409
        %7180 = vmatpush2.bf16.msra.mxu0 %v4408
        %7181 = vmatprep.subr.bf16.mxu0 %v4407
        %7182 = vmatpush2.bf16.msra.mxu0 %v4406
        %7183 = vmatprep.subr.bf16.mxu0 %v4405
        %7184 = vmatpush2.bf16.msra.mxu0 %v4404
        %7185 = vmatprep.subr.bf16.mxu0 %v4403
        %7186 = vmatpush2.bf16.msra.mxu0 %v4402
        %7187 = vmatprep.subr.bf16.mxu0 %v4401
        %7188 = vmatpush2.bf16.msra.mxu0 %v4400
        %7189 = vmatprep.subr.bf16.mxu0 %v4399
        %7190 = vmatpush2.bf16.msra.mxu0 %v4398
        %7191 = vmatprep.subr.bf16.mxu0 %v4397
        %7192 = vmatpush2.bf16.msra.mxu0 %v4396
        %7193 = vmatprep.mubr.bf16.mxu0 %v1321
        %7194 = vmatmul.mubr.bf16.gmra.mxu0 %v1320
        %v7195 = vpop.f32.mrf.mxu0
        %v7196 = vadd.f32 %v7155, %v7195
        %v7197 = vpop.f32.mrf.mxu0
        %v7198 = vadd.f32 %v7157, %v7197
        %v7199 = vpop.f32.mrf.mxu0
        %v7200 = vpop.f32.mrf.mxu0
        %7201 = vdwg.mxu0
        %7202 = vmatprep.subr.bf16.mxu0 %v4427
        %7203 = vmatpush1.bf16.msra.mxu0 %v4426
        %7204 = vmatprep.subr.bf16.mxu0 %v4425
        %7205 = vmatpush1.bf16.msra.mxu0 %v4424
        %7206 = vmatprep.subr.bf16.mxu0 %v4423
        %7207 = vmatpush1.bf16.msra.mxu0 %v4422
        %7208 = vmatprep.subr.bf16.mxu0 %v4421
        %7209 = vmatpush1.bf16.msra.mxu0 %v4420
        %7210 = vmatprep.subr.bf16.mxu0 %v4419
        %7211 = vmatpush1.bf16.msra.mxu0 %v4418
        %7212 = vmatprep.subr.bf16.mxu0 %v4417
        %7213 = vmatpush1.bf16.msra.mxu0 %v4416
        %7214 = vmatprep.subr.bf16.mxu0 %v4415
        %7215 = vmatpush1.bf16.msra.mxu0 %v4414
        %7216 = vmatprep.subr.bf16.mxu0 %v4413
        %7217 = vmatpush1.bf16.msra.mxu0 %v4412
        %7218 = vmatprep.subr.bf16.mxu0 %v4443
        %7219 = vmatpush2.bf16.msra.mxu0 %v4442
        %7220 = vmatprep.subr.bf16.mxu0 %v4441
        %7221 = vmatpush2.bf16.msra.mxu0 %v4440
        %7222 = vmatprep.subr.bf16.mxu0 %v4439
        %7223 = vmatpush2.bf16.msra.mxu0 %v4438
        %7224 = vmatprep.subr.bf16.mxu0 %v4437
        %7225 = vmatpush2.bf16.msra.mxu0 %v4436
        %7226 = vmatprep.subr.bf16.mxu0 %v4435
        %7227 = vmatpush2.bf16.msra.mxu0 %v4434
        %7228 = vmatprep.subr.bf16.mxu0 %v4433
        %7229 = vmatpush2.bf16.msra.mxu0 %v4432
        %7230 = vmatprep.subr.bf16.mxu0 %v4431
        %7231 = vmatpush2.bf16.msra.mxu0 %v4430
        %7232 = vmatprep.subr.bf16.mxu0 %v4429
        %7233 = vmatpush2.bf16.msra.mxu0 %v4428
        %7234 = vmatprep.mubr.bf16.mxu0 %v1323
        %7235 = vmatmul.mubr.bf16.gmra.mxu0 %v1322
        %v7236 = vpop.f32.mrf.mxu0
        %v7237 = vadd.f32 %v7196, %v7236
        %v7238 = vpop.f32.mrf.mxu0
        %v7239 = vadd.f32 %v7198, %v7238
        %v7240 = vpop.f32.mrf.mxu0
        %v7241 = vpop.f32.mrf.mxu0
        %7242 = vdwg.mxu0
        %7243 = vmatprep.subr.bf16.mxu0 %v4459
        %7244 = vmatpush1.bf16.msra.mxu0 %v4458
        %7245 = vmatprep.subr.bf16.mxu0 %v4457
        %7246 = vmatpush1.bf16.msra.mxu0 %v4456
        %7247 = vmatprep.subr.bf16.mxu0 %v4455
        %7248 = vmatpush1.bf16.msra.mxu0 %v4454
        %7249 = vmatprep.subr.bf16.mxu0 %v4453
        %7250 = vmatpush1.bf16.msra.mxu0 %v4452
        %7251 = vmatprep.subr.bf16.mxu0 %v4451
        %7252 = vmatpush1.bf16.msra.mxu0 %v4450
        %7253 = vmatprep.subr.bf16.mxu0 %v4449
        %7254 = vmatpush1.bf16.msra.mxu0 %v4448
        %7255 = vmatprep.subr.bf16.mxu0 %v4447
        %7256 = vmatpush1.bf16.msra.mxu0 %v4446
        %7257 = vmatprep.subr.bf16.mxu0 %v4445
        %7258 = vmatpush1.bf16.msra.mxu0 %v4444
        %7259 = vmatprep.subr.bf16.mxu0 %v4475
        %7260 = vmatpush2.bf16.msra.mxu0 %v4474
        %7261 = vmatprep.subr.bf16.mxu0 %v4473
        %7262 = vmatpush2.bf16.msra.mxu0 %v4472
        %7263 = vmatprep.subr.bf16.mxu0 %v4471
        %7264 = vmatpush2.bf16.msra.mxu0 %v4470
        %7265 = vmatprep.subr.bf16.mxu0 %v4469
        %7266 = vmatpush2.bf16.msra.mxu0 %v4468
        %7267 = vmatprep.subr.bf16.mxu0 %v4467
        %7268 = vmatpush2.bf16.msra.mxu0 %v4466
        %7269 = vmatprep.subr.bf16.mxu0 %v4465
        %7270 = vmatpush2.bf16.msra.mxu0 %v4464
        %7271 = vmatprep.subr.bf16.mxu0 %v4463
        %7272 = vmatpush2.bf16.msra.mxu0 %v4462
        %7273 = vmatprep.subr.bf16.mxu0 %v4461
        %7274 = vmatpush2.bf16.msra.mxu0 %v4460
        %7275 = vmatprep.mubr.bf16.mxu0 %v1325
        %7276 = vmatmul.mubr.bf16.gmra.mxu0 %v1324
        %v7277 = vpop.f32.mrf.mxu0
        %v7278 = vadd.f32 %v7237, %v7277
        %v7279 = vpop.f32.mrf.mxu0
        %v7280 = vadd.f32 %v7239, %v7279
        %v7281 = vpop.f32.mrf.mxu0
        %v7282 = vpop.f32.mrf.mxu0
        %7283 = vdwg.mxu0
        %7284 = vmatprep.subr.bf16.mxu0 %v4491
        %7285 = vmatpush1.bf16.msra.mxu0 %v4490
        %7286 = vmatprep.subr.bf16.mxu0 %v4489
        %7287 = vmatpush1.bf16.msra.mxu0 %v4488
        %7288 = vmatprep.subr.bf16.mxu0 %v4487
        %7289 = vmatpush1.bf16.msra.mxu0 %v4486
        %7290 = vmatprep.subr.bf16.mxu0 %v4485
        %7291 = vmatpush1.bf16.msra.mxu0 %v4484
        %7292 = vmatprep.subr.bf16.mxu0 %v4483
        %7293 = vmatpush1.bf16.msra.mxu0 %v4482
        %7294 = vmatprep.subr.bf16.mxu0 %v4481
        %7295 = vmatpush1.bf16.msra.mxu0 %v4480
        %7296 = vmatprep.subr.bf16.mxu0 %v4479
        %7297 = vmatpush1.bf16.msra.mxu0 %v4478
        %7298 = vmatprep.subr.bf16.mxu0 %v4477
        %7299 = vmatpush1.bf16.msra.mxu0 %v4476
        %7300 = vmatprep.subr.bf16.mxu0 %v4507
        %7301 = vmatpush2.bf16.msra.mxu0 %v4506
        %7302 = vmatprep.subr.bf16.mxu0 %v4505
        %7303 = vmatpush2.bf16.msra.mxu0 %v4504
        %7304 = vmatprep.subr.bf16.mxu0 %v4503
        %7305 = vmatpush2.bf16.msra.mxu0 %v4502
        %7306 = vmatprep.subr.bf16.mxu0 %v4501
        %7307 = vmatpush2.bf16.msra.mxu0 %v4500
        %7308 = vmatprep.subr.bf16.mxu0 %v4499
        %7309 = vmatpush2.bf16.msra.mxu0 %v4498
        %7310 = vmatprep.subr.bf16.mxu0 %v4497
        %7311 = vmatpush2.bf16.msra.mxu0 %v4496
        %7312 = vmatprep.subr.bf16.mxu0 %v4495
        %7313 = vmatpush2.bf16.msra.mxu0 %v4494
        %7314 = vmatprep.subr.bf16.mxu0 %v4493
        %7315 = vmatpush2.bf16.msra.mxu0 %v4492
        %7316 = vmatprep.mubr.bf16.mxu0 %v1327
        %7317 = vmatmul.mubr.bf16.gmra.mxu0 %v1326
        %v7318 = vpop.f32.mrf.mxu0
        %v7319 = vadd.f32 %v7278, %v7318
        %v7320 = vpop.f32.mrf.mxu0
        %v7321 = vadd.f32 %v7280, %v7320
        %v7322 = vpop.f32.mrf.mxu0
        %v7323 = vpop.f32.mrf.mxu0
        %7324 = vdwg.mxu0
        %7325 = vmatprep.subr.bf16.mxu0 %v4523
        %7326 = vmatpush1.bf16.msra.mxu0 %v4522
        %7327 = vmatprep.subr.bf16.mxu0 %v4521
        %7328 = vmatpush1.bf16.msra.mxu0 %v4520
        %7329 = vmatprep.subr.bf16.mxu0 %v4519
        %7330 = vmatpush1.bf16.msra.mxu0 %v4518
        %7331 = vmatprep.subr.bf16.mxu0 %v4517
        %7332 = vmatpush1.bf16.msra.mxu0 %v4516
        %7333 = vmatprep.subr.bf16.mxu0 %v4515
        %7334 = vmatpush1.bf16.msra.mxu0 %v4514
        %7335 = vmatprep.subr.bf16.mxu0 %v4513
        %7336 = vmatpush1.bf16.msra.mxu0 %v4512
        %7337 = vmatprep.subr.bf16.mxu0 %v4511
        %7338 = vmatpush1.bf16.msra.mxu0 %v4510
        %7339 = vmatprep.subr.bf16.mxu0 %v4509
        %7340 = vmatpush1.bf16.msra.mxu0 %v4508
        %7341 = vmatprep.subr.bf16.mxu0 %v4539
        %7342 = vmatpush2.bf16.msra.mxu0 %v4538
        %7343 = vmatprep.subr.bf16.mxu0 %v4537
        %7344 = vmatpush2.bf16.msra.mxu0 %v4536
        %7345 = vmatprep.subr.bf16.mxu0 %v4535
        %7346 = vmatpush2.bf16.msra.mxu0 %v4534
        %7347 = vmatprep.subr.bf16.mxu0 %v4533
        %7348 = vmatpush2.bf16.msra.mxu0 %v4532
        %7349 = vmatprep.subr.bf16.mxu0 %v4531
        %7350 = vmatpush2.bf16.msra.mxu0 %v4530
        %7351 = vmatprep.subr.bf16.mxu0 %v4529
        %7352 = vmatpush2.bf16.msra.mxu0 %v4528
        %7353 = vmatprep.subr.bf16.mxu0 %v4527
        %7354 = vmatpush2.bf16.msra.mxu0 %v4526
        %7355 = vmatprep.subr.bf16.mxu0 %v4525
        %7356 = vmatpush2.bf16.msra.mxu0 %v4524
        %7357 = vmatprep.mubr.bf16.mxu0 %v1329
        %7358 = vmatmul.mubr.bf16.gmra.mxu0 %v1328
        %v7359 = vpop.f32.mrf.mxu0
        %v7360 = vadd.f32 %v7319, %v7359
        %v7361 = vpop.f32.mrf.mxu0
        %v7362 = vadd.f32 %v7321, %v7361
        %v7363 = vpop.f32.mrf.mxu0
        %v7364 = vpop.f32.mrf.mxu0
        %7365 = vdwg.mxu0
        %7366 = vmatprep.subr.bf16.mxu0 %v4555
        %7367 = vmatpush1.bf16.msra.mxu0 %v4554
        %7368 = vmatprep.subr.bf16.mxu0 %v4553
        %7369 = vmatpush1.bf16.msra.mxu0 %v4552
        %7370 = vmatprep.subr.bf16.mxu0 %v4551
        %7371 = vmatpush1.bf16.msra.mxu0 %v4550
        %7372 = vmatprep.subr.bf16.mxu0 %v4549
        %7373 = vmatpush1.bf16.msra.mxu0 %v4548
        %7374 = vmatprep.subr.bf16.mxu0 %v4547
        %7375 = vmatpush1.bf16.msra.mxu0 %v4546
        %7376 = vmatprep.subr.bf16.mxu0 %v4545
        %7377 = vmatpush1.bf16.msra.mxu0 %v4544
        %7378 = vmatprep.subr.bf16.mxu0 %v4543
        %7379 = vmatpush1.bf16.msra.mxu0 %v4542
        %7380 = vmatprep.subr.bf16.mxu0 %v4541
        %7381 = vmatpush1.bf16.msra.mxu0 %v4540
        %7382 = vmatprep.subr.bf16.mxu0 %v4571
        %7383 = vmatpush2.bf16.msra.mxu0 %v4570
        %7384 = vmatprep.subr.bf16.mxu0 %v4569
        %7385 = vmatpush2.bf16.msra.mxu0 %v4568
        %7386 = vmatprep.subr.bf16.mxu0 %v4567
        %7387 = vmatpush2.bf16.msra.mxu0 %v4566
        %7388 = vmatprep.subr.bf16.mxu0 %v4565
        %7389 = vmatpush2.bf16.msra.mxu0 %v4564
        %7390 = vmatprep.subr.bf16.mxu0 %v4563
        %7391 = vmatpush2.bf16.msra.mxu0 %v4562
        %7392 = vmatprep.subr.bf16.mxu0 %v4561
        %7393 = vmatpush2.bf16.msra.mxu0 %v4560
        %7394 = vmatprep.subr.bf16.mxu0 %v4559
        %7395 = vmatpush2.bf16.msra.mxu0 %v4558
        %7396 = vmatprep.subr.bf16.mxu0 %v4557
        %7397 = vmatpush2.bf16.msra.mxu0 %v4556
        %7398 = vmatprep.mubr.bf16.mxu0 %v1331
        %7399 = vmatmul.mubr.bf16.gmra.mxu0 %v1330
        %v7400 = vpop.f32.mrf.mxu0
        %v7401 = vadd.f32 %v7360, %v7400
        %v7402 = vpop.f32.mrf.mxu0
        %v7403 = vadd.f32 %v7362, %v7402
        %v7404 = vpop.f32.mrf.mxu0
        %v7405 = vpop.f32.mrf.mxu0
        %7406 = vdwg.mxu0
        %7407 = vmatprep.subr.bf16.mxu0 %v4587
        %7408 = vmatpush1.bf16.msra.mxu0 %v4586
        %7409 = vmatprep.subr.bf16.mxu0 %v4585
        %7410 = vmatpush1.bf16.msra.mxu0 %v4584
        %7411 = vmatprep.subr.bf16.mxu0 %v4583
        %7412 = vmatpush1.bf16.msra.mxu0 %v4582
        %7413 = vmatprep.subr.bf16.mxu0 %v4581
        %7414 = vmatpush1.bf16.msra.mxu0 %v4580
        %7415 = vmatprep.subr.bf16.mxu0 %v4579
        %7416 = vmatpush1.bf16.msra.mxu0 %v4578
        %7417 = vmatprep.subr.bf16.mxu0 %v4577
        %7418 = vmatpush1.bf16.msra.mxu0 %v4576
        %7419 = vmatprep.subr.bf16.mxu0 %v4575
        %7420 = vmatpush1.bf16.msra.mxu0 %v4574
        %7421 = vmatprep.subr.bf16.mxu0 %v4573
        %7422 = vmatpush1.bf16.msra.mxu0 %v4572
        %7423 = vmatprep.subr.bf16.mxu0 %v4603
        %7424 = vmatpush2.bf16.msra.mxu0 %v4602
        %7425 = vmatprep.subr.bf16.mxu0 %v4601
        %7426 = vmatpush2.bf16.msra.mxu0 %v4600
        %7427 = vmatprep.subr.bf16.mxu0 %v4599
        %7428 = vmatpush2.bf16.msra.mxu0 %v4598
        %7429 = vmatprep.subr.bf16.mxu0 %v4597
        %7430 = vmatpush2.bf16.msra.mxu0 %v4596
        %7431 = vmatprep.subr.bf16.mxu0 %v4595
        %7432 = vmatpush2.bf16.msra.mxu0 %v4594
        %7433 = vmatprep.subr.bf16.mxu0 %v4593
        %7434 = vmatpush2.bf16.msra.mxu0 %v4592
        %7435 = vmatprep.subr.bf16.mxu0 %v4591
        %7436 = vmatpush2.bf16.msra.mxu0 %v4590
        %7437 = vmatprep.subr.bf16.mxu0 %v4589
        %7438 = vmatpush2.bf16.msra.mxu0 %v4588
        %7439 = vmatprep.mubr.bf16.mxu0 %v1333
        %7440 = vmatmul.mubr.bf16.gmra.mxu0 %v1332
        %v7441 = vpop.f32.mrf.mxu0
        %v7442 = vadd.f32 %v7401, %v7441
        %v7443 = vpop.f32.mrf.mxu0
        %v7444 = vadd.f32 %v7403, %v7443
        %v7445 = vpop.f32.mrf.mxu0
        %v7446 = vpop.f32.mrf.mxu0
        %7447 = vdwg.mxu0
        %7448 = vmatprep.subr.bf16.mxu0 %v4619
        %7449 = vmatpush1.bf16.msra.mxu0 %v4618
        %7450 = vmatprep.subr.bf16.mxu0 %v4617
        %7451 = vmatpush1.bf16.msra.mxu0 %v4616
        %7452 = vmatprep.subr.bf16.mxu0 %v4615
        %7453 = vmatpush1.bf16.msra.mxu0 %v4614
        %7454 = vmatprep.subr.bf16.mxu0 %v4613
        %7455 = vmatpush1.bf16.msra.mxu0 %v4612
        %7456 = vmatprep.subr.bf16.mxu0 %v4611
        %7457 = vmatpush1.bf16.msra.mxu0 %v4610
        %7458 = vmatprep.subr.bf16.mxu0 %v4609
        %7459 = vmatpush1.bf16.msra.mxu0 %v4608
        %7460 = vmatprep.subr.bf16.mxu0 %v4607
        %7461 = vmatpush1.bf16.msra.mxu0 %v4606
        %7462 = vmatprep.subr.bf16.mxu0 %v4605
        %7463 = vmatpush1.bf16.msra.mxu0 %v4604
        %7464 = vmatprep.subr.bf16.mxu0 %v4635
        %7465 = vmatpush2.bf16.msra.mxu0 %v4634
        %7466 = vmatprep.subr.bf16.mxu0 %v4633
        %7467 = vmatpush2.bf16.msra.mxu0 %v4632
        %7468 = vmatprep.subr.bf16.mxu0 %v4631
        %7469 = vmatpush2.bf16.msra.mxu0 %v4630
        %7470 = vmatprep.subr.bf16.mxu0 %v4629
        %7471 = vmatpush2.bf16.msra.mxu0 %v4628
        %7472 = vmatprep.subr.bf16.mxu0 %v4627
        %7473 = vmatpush2.bf16.msra.mxu0 %v4626
        %7474 = vmatprep.subr.bf16.mxu0 %v4625
        %7475 = vmatpush2.bf16.msra.mxu0 %v4624
        %7476 = vmatprep.subr.bf16.mxu0 %v4623
        %7477 = vmatpush2.bf16.msra.mxu0 %v4622
        %7478 = vmatprep.subr.bf16.mxu0 %v4621
        %7479 = vmatpush2.bf16.msra.mxu0 %v4620
        %7480 = vmatprep.mubr.bf16.mxu0 %v1335
        %7481 = vmatmul.mubr.bf16.gmra.mxu0 %v1334
        %v7482 = vpop.f32.mrf.mxu0
        %v7483 = vadd.f32 %v7442, %v7482
        %v7484 = vpop.f32.mrf.mxu0
        %v7485 = vadd.f32 %v7444, %v7484
        %v7486 = vpop.f32.mrf.mxu0
        %v7487 = vpop.f32.mrf.mxu0
        %7488 = vdwg.mxu0
        %7489 = vmatprep.subr.bf16.mxu0 %v4651
        %7490 = vmatpush1.bf16.msra.mxu0 %v4650
        %7491 = vmatprep.subr.bf16.mxu0 %v4649
        %7492 = vmatpush1.bf16.msra.mxu0 %v4648
        %7493 = vmatprep.subr.bf16.mxu0 %v4647
        %7494 = vmatpush1.bf16.msra.mxu0 %v4646
        %7495 = vmatprep.subr.bf16.mxu0 %v4645
        %7496 = vmatpush1.bf16.msra.mxu0 %v4644
        %7497 = vmatprep.subr.bf16.mxu0 %v4643
        %7498 = vmatpush1.bf16.msra.mxu0 %v4642
        %7499 = vmatprep.subr.bf16.mxu0 %v4641
        %7500 = vmatpush1.bf16.msra.mxu0 %v4640
        %7501 = vmatprep.subr.bf16.mxu0 %v4639
        %7502 = vmatpush1.bf16.msra.mxu0 %v4638
        %7503 = vmatprep.subr.bf16.mxu0 %v4637
        %7504 = vmatpush1.bf16.msra.mxu0 %v4636
        %7505 = vmatprep.subr.bf16.mxu0 %v4667
        %7506 = vmatpush2.bf16.msra.mxu0 %v4666
        %7507 = vmatprep.subr.bf16.mxu0 %v4665
        %7508 = vmatpush2.bf16.msra.mxu0 %v4664
        %7509 = vmatprep.subr.bf16.mxu0 %v4663
        %7510 = vmatpush2.bf16.msra.mxu0 %v4662
        %7511 = vmatprep.subr.bf16.mxu0 %v4661
        %7512 = vmatpush2.bf16.msra.mxu0 %v4660
        %7513 = vmatprep.subr.bf16.mxu0 %v4659
        %7514 = vmatpush2.bf16.msra.mxu0 %v4658
        %7515 = vmatprep.subr.bf16.mxu0 %v4657
        %7516 = vmatpush2.bf16.msra.mxu0 %v4656
        %7517 = vmatprep.subr.bf16.mxu0 %v4655
        %7518 = vmatpush2.bf16.msra.mxu0 %v4654
        %7519 = vmatprep.subr.bf16.mxu0 %v4653
        %7520 = vmatpush2.bf16.msra.mxu0 %v4652
        %7521 = vmatprep.mubr.bf16.mxu0 %v1337
        %7522 = vmatmul.mubr.bf16.gmra.mxu0 %v1336
        %v7523 = vpop.f32.mrf.mxu0
        %v7524 = vadd.f32 %v7483, %v7523
        %v7525 = vpop.f32.mrf.mxu0
        %v7526 = vadd.f32 %v7485, %v7525
        %v7527 = vpop.f32.mrf.mxu0
        %v7528 = vpop.f32.mrf.mxu0
        %7529 = vdwg.mxu0
        %7530 = vmatprep.subr.bf16.mxu0 %v4683
        %7531 = vmatpush1.bf16.msra.mxu0 %v4682
        %7532 = vmatprep.subr.bf16.mxu0 %v4681
        %7533 = vmatpush1.bf16.msra.mxu0 %v4680
        %7534 = vmatprep.subr.bf16.mxu0 %v4679
        %7535 = vmatpush1.bf16.msra.mxu0 %v4678
        %7536 = vmatprep.subr.bf16.mxu0 %v4677
        %7537 = vmatpush1.bf16.msra.mxu0 %v4676
        %7538 = vmatprep.subr.bf16.mxu0 %v4675
        %7539 = vmatpush1.bf16.msra.mxu0 %v4674
        %7540 = vmatprep.subr.bf16.mxu0 %v4673
        %7541 = vmatpush1.bf16.msra.mxu0 %v4672
        %7542 = vmatprep.subr.bf16.mxu0 %v4671
        %7543 = vmatpush1.bf16.msra.mxu0 %v4670
        %7544 = vmatprep.subr.bf16.mxu0 %v4669
        %7545 = vmatpush1.bf16.msra.mxu0 %v4668
        %7546 = vmatprep.subr.bf16.mxu0 %v4699
        %7547 = vmatpush2.bf16.msra.mxu0 %v4698
        %7548 = vmatprep.subr.bf16.mxu0 %v4697
        %7549 = vmatpush2.bf16.msra.mxu0 %v4696
        %7550 = vmatprep.subr.bf16.mxu0 %v4695
        %7551 = vmatpush2.bf16.msra.mxu0 %v4694
        %7552 = vmatprep.subr.bf16.mxu0 %v4693
        %7553 = vmatpush2.bf16.msra.mxu0 %v4692
        %7554 = vmatprep.subr.bf16.mxu0 %v4691
        %7555 = vmatpush2.bf16.msra.mxu0 %v4690
        %7556 = vmatprep.subr.bf16.mxu0 %v4689
        %7557 = vmatpush2.bf16.msra.mxu0 %v4688
        %7558 = vmatprep.subr.bf16.mxu0 %v4687
        %7559 = vmatpush2.bf16.msra.mxu0 %v4686
        %7560 = vmatprep.subr.bf16.mxu0 %v4685
        %7561 = vmatpush2.bf16.msra.mxu0 %v4684
        %7562 = vmatprep.mubr.bf16.mxu0 %v1339
        %7563 = vmatmul.mubr.bf16.gmra.mxu0 %v1338
        %v7564 = vpop.f32.mrf.mxu0
        %v7565 = vadd.f32 %v7524, %v7564
        %v7566 = vpop.f32.mrf.mxu0
        %v7567 = vadd.f32 %v7526, %v7566
        %v7568 = vpop.f32.mrf.mxu0
        %v7569 = vpop.f32.mrf.mxu0
        %7570 = vdwg.mxu0
        %v7573 = vcombine.low %v7565, %v7567
        %v7575 = vunpack.c.l.s4 1983009808
        %v7576 = vunpack.c.0.s8 %v7575
        %v7577 = vlaneseq
        %v7578 = vshrl.u32 %v7577, 7
        %v7579 = vsub.s32 %v7576, %v7578
        %v7580 = vrot.slane %v7573, %v7579
        %v7582 = vadd.f32 %v4700, %v7580
        %7583 = vst [vmem:[#allocation2] sm:$0xf] %v7582
        %p7584 = scmp.eq.s32.totalorder %s25, 7
        // Predicated region
        $region69: #{feedforward_model.1} parent=59 // pred_check
          %p7585 = pneg %p7584
        $region70: #{feedforward_model.1} parent=59 // pred_check_branch
          %7587 = sbr.rel (%p7585) target = $region72
        $region71: #{feedforward_model.1} parent=59 // pred_region
          %v7588 = vld [vmem:[#allocation2] sm:$0xf]
          %v7589 = vld [vmem:[%s2] sm:$0x3]
          %v7591 = vlaneseq
          %v7592 = vshrl.u32 %v7591, 7
          %v7593 = vsub.s32 0, %v7592
          %v7594 = vrot.slane %v7589, %v7593
          %v7595 = vlaneseq
          %v7596 = vshrl.u32 %v7595, 7
          %v7597 = vsub.s32 1, %v7596
          %v7598 = vrot.slane %v7589, %v7597
          %v7599 = vcombine.low %v7594, %v7598
          %v7601 = vunpack.c.l.s4 1983009808
          %v7602 = vunpack.c.0.s8 %v7601
          %v7603 = vlaneseq
          %v7604 = vshrl.u32 %v7603, 7
          %v7605 = vsub.s32 %v7602, %v7604
          %v7606 = vrot.slane %v7599, %v7605
          %v7608 = vmul.f32 %v7588, %v7606
          %v7609 = vld [vmem:[%s3] sm:$0x3]
          %v7611 = vlaneseq
          %v7612 = vshrl.u32 %v7611, 7
          %v7613 = vsub.s32 0, %v7612
          %v7614 = vrot.slane %v7609, %v7613
          %v7615 = vlaneseq
          %v7616 = vshrl.u32 %v7615, 7
          %v7617 = vsub.s32 1, %v7616
          %v7618 = vrot.slane %v7609, %v7617
          %v7619 = vcombine.low %v7614, %v7618
          %v7621 = vunpack.c.l.s4 1983009808
          %v7622 = vunpack.c.0.s8 %v7621
          %v7623 = vlaneseq
          %v7624 = vshrl.u32 %v7623, 7
          %v7625 = vsub.s32 %v7622, %v7624
          %v7626 = vrot.slane %v7619, %v7625
          %v7628 = vadd.f32 %v7608, %v7626
          %v7629 = vmax.f32 %v7628, 0.0
          %v7630 = vld [vmem:[%s4] sm:$0xff]
          %v7631 = vld [vmem:[%s4 + $0x8] sm:$0xff]
          %v7632 = vld [vmem:[%s4 + $0x10] sm:$0xff]
          %v7633 = vld [vmem:[%s4 + $0x18] sm:$0xff]
          %v7634 = vld [vmem:[%s4 + $0x20] sm:$0xff]
          %v7635 = vld [vmem:[%s4 + $0x28] sm:$0xff]
          %v7636 = vld [vmem:[%s4 + $0x30] sm:$0xff]
          %v7637 = vld [vmem:[%s4 + $0x38] sm:$0xff]
          %v7638 = vld [vmem:[%s4 + $0x40] sm:$0xff]
          %v7639 = vld [vmem:[%s4 + $0x48] sm:$0xff]
          %v7640 = vld [vmem:[%s4 + $0x50] sm:$0xff]
          %v7641 = vld [vmem:[%s4 + $0x58] sm:$0xff]
          %v7642 = vld [vmem:[%s4 + $0x60] sm:$0xff]
          %v7643 = vld [vmem:[%s4 + $0x68] sm:$0xff]
          %v7644 = vld [vmem:[%s4 + $0x70] sm:$0xff]
          %v7645 = vld [vmem:[%s4 + $0x78] sm:$0xff]
          %v7646 = vld [vmem:[%s4 + $0x80] sm:$0xff]
          %v7647 = vld [vmem:[%s4 + $0x88] sm:$0xff]
          %v7648 = vld [vmem:[%s4 + $0x90] sm:$0xff]
          %v7649 = vld [vmem:[%s4 + $0x98] sm:$0xff]
          %v7650 = vld [vmem:[%s4 + $0xa0] sm:$0xff]
          %v7651 = vld [vmem:[%s4 + $0xa8] sm:$0xff]
          %v7652 = vld [vmem:[%s4 + $0xb0] sm:$0xff]
          %v7653 = vld [vmem:[%s4 + $0xb8] sm:$0xff]
          %v7654 = vld [vmem:[%s4 + $0xc0] sm:$0xff]
          %v7655 = vld [vmem:[%s4 + $0xc8] sm:$0xff]
          %v7656 = vld [vmem:[%s4 + $0xd0] sm:$0xff]
          %v7657 = vld [vmem:[%s4 + $0xd8] sm:$0xff]
          %v7658 = vld [vmem:[%s4 + $0xe0] sm:$0xff]
          %v7659 = vld [vmem:[%s4 + $0xe8] sm:$0xff]
          %v7660 = vld [vmem:[%s4 + $0xf0] sm:$0xff]
          %v7661 = vld [vmem:[%s4 + $0xf8] sm:$0xff]
          %v7662 = vld [vmem:[%s5] sm:$0x1]
          %v7664 = vlaneseq
          %v7665 = vshrl.u32 %v7664, 7
          %v7666 = vsub.s32 0, %v7665
          %v7667 = vrot.slane %v7662, %v7666
          %v7671 = vunpack.c.l.s4 1983009808
          %v7672 = vunpack.c.0.s8 %v7671
          %v7673 = vlaneseq
          %v7674 = vshrl.u32 %v7673, 7
          %v7675 = vsub.s32 %v7672, %v7674
          %v7676 = vrot.slane %v7629, %v7675
          %v7677 = vcombine.high %v7676, %v7676
          %7680 = vmatprep.subr.mxu0 0.0
          %7681 = vmatpush1.msra.mxu0 %v7645
          %7682 = vmatprep.subr.mxu0 0.0
          %7683 = vmatpush1.msra.mxu0 %v7644
          %7684 = vmatprep.subr.mxu0 0.0
          %7685 = vmatpush1.msra.mxu0 %v7643
          %7686 = vmatprep.subr.mxu0 0.0
          %7687 = vmatpush1.msra.mxu0 %v7642
          %7688 = vmatprep.subr.mxu0 0.0
          %7689 = vmatpush1.msra.mxu0 %v7641
          %7690 = vmatprep.subr.mxu0 0.0
          %7691 = vmatpush1.msra.mxu0 %v7640
          %7692 = vmatprep.subr.mxu0 0.0
          %7693 = vmatpush1.msra.mxu0 %v7639
          %7694 = vmatprep.subr.mxu0 0.0
          %7695 = vmatpush1.msra.mxu0 %v7638
          %7696 = vmatprep.subr.mxu0 0.0
          %7697 = vmatpush1.msra.mxu0 %v7637
          %7698 = vmatprep.subr.mxu0 0.0
          %7699 = vmatpush1.msra.mxu0 %v7636
          %7700 = vmatprep.subr.mxu0 0.0
          %7701 = vmatpush1.msra.mxu0 %v7635
          %7702 = vmatprep.subr.mxu0 0.0
          %7703 = vmatpush1.msra.mxu0 %v7634
          %7704 = vmatprep.subr.mxu0 0.0
          %7705 = vmatpush1.msra.mxu0 %v7633
          %7706 = vmatprep.subr.mxu0 0.0
          %7707 = vmatpush1.msra.mxu0 %v7632
          %7708 = vmatprep.subr.mxu0 0.0
          %7709 = vmatpush1.msra.mxu0 %v7631
          %7710 = vmatprep.subr.mxu0 0.0
          %7711 = vmatpush1.msra.mxu0 %v7630
          %7712 = vmatprep.subr.mxu0 0.0
          %7713 = vmatpush2.msra.mxu0 %v7661
          %7714 = vmatprep.subr.mxu0 0.0
          %7715 = vmatpush2.msra.mxu0 %v7660
          %7716 = vmatprep.subr.mxu0 0.0
          %7717 = vmatpush2.msra.mxu0 %v7659
          %7718 = vmatprep.subr.mxu0 0.0
          %7719 = vmatpush2.msra.mxu0 %v7658
          %7720 = vmatprep.subr.mxu0 0.0
          %7721 = vmatpush2.msra.mxu0 %v7657
          %7722 = vmatprep.subr.mxu0 0.0
          %7723 = vmatpush2.msra.mxu0 %v7656
          %7724 = vmatprep.subr.mxu0 0.0
          %7725 = vmatpush2.msra.mxu0 %v7655
          %7726 = vmatprep.subr.mxu0 0.0
          %7727 = vmatpush2.msra.mxu0 %v7654
          %7728 = vmatprep.subr.mxu0 0.0
          %7729 = vmatpush2.msra.mxu0 %v7653
          %7730 = vmatprep.subr.mxu0 0.0
          %7731 = vmatpush2.msra.mxu0 %v7652
          %7732 = vmatprep.subr.mxu0 0.0
          %7733 = vmatpush2.msra.mxu0 %v7651
          %7734 = vmatprep.subr.mxu0 0.0
          %7735 = vmatpush2.msra.mxu0 %v7650
          %7736 = vmatprep.subr.mxu0 0.0
          %7737 = vmatpush2.msra.mxu0 %v7649
          %7738 = vmatprep.subr.mxu0 0.0
          %7739 = vmatpush2.msra.mxu0 %v7648
          %7740 = vmatprep.subr.mxu0 0.0
          %7741 = vmatpush2.msra.mxu0 %v7647
          %7742 = vmatprep.subr.mxu0 0.0
          %7743 = vmatpush2.msra.mxu0 %v7646
          %7744 = vmatprep.mubr.f32.mxu0 %v7677
          %7745 = vmatmul.mubr.f32.gmra.mxu0 %v7676
          %v7746 = vpop.f32.mrf.mxu0
          %v7747 = vadd.f32 %v7667, %v7746
          %v7748 = vpop.f32.mrf.mxu0
          %7749 = vdwg.mxu0
          %v7750 = vmax.f32 %v7747, 0.0
          %v7751 = vld [vmem:[%s6] sm:$0xff]
          %v7752 = vld [vmem:[%s6 + $0x8] sm:$0xff]
          %v7753 = vld [vmem:[%s6 + $0x10] sm:$0xff]
          %v7754 = vld [vmem:[%s6 + $0x18] sm:$0xff]
          %v7755 = vld [vmem:[%s6 + $0x20] sm:$0xff]
          %v7756 = vld [vmem:[%s6 + $0x28] sm:$0xff]
          %v7757 = vld [vmem:[%s6 + $0x30] sm:$0xff]
          %v7758 = vld [vmem:[%s6 + $0x38] sm:$0xff]
          %v7759 = vld [vmem:[%s6 + $0x40] sm:$0xff]
          %v7760 = vld [vmem:[%s6 + $0x48] sm:$0xff]
          %v7761 = vld [vmem:[%s6 + $0x50] sm:$0xff]
          %v7762 = vld [vmem:[%s6 + $0x58] sm:$0xff]
          %v7763 = vld [vmem:[%s6 + $0x60] sm:$0xff]
          %v7764 = vld [vmem:[%s6 + $0x68] sm:$0xff]
          %v7765 = vld [vmem:[%s6 + $0x70] sm:$0xff]
          %v7766 = vld [vmem:[%s6 + $0x78] sm:$0xff]
          %v7767 = vld [vmem:[%s7] sm:$0x1]
          %v7769 = vlaneseq
          %v7770 = vshrl.u32 %v7769, 7
          %v7771 = vsub.s32 0, %v7770
          %v7772 = vrot.slane %v7767, %v7771
          %7774 = vmatprep.subr.mxu0 0.0
          %7775 = vmatpush1.msra.mxu0 %v7766
          %7776 = vmatprep.subr.mxu0 0.0
          %7777 = vmatpush1.msra.mxu0 %v7765
          %7778 = vmatprep.subr.mxu0 0.0
          %7779 = vmatpush1.msra.mxu0 %v7764
          %7780 = vmatprep.subr.mxu0 0.0
          %7781 = vmatpush1.msra.mxu0 %v7763
          %7782 = vmatprep.subr.mxu0 0.0
          %7783 = vmatpush1.msra.mxu0 %v7762
          %7784 = vmatprep.subr.mxu0 0.0
          %7785 = vmatpush1.msra.mxu0 %v7761
          %7786 = vmatprep.subr.mxu0 0.0
          %7787 = vmatpush1.msra.mxu0 %v7760
          %7788 = vmatprep.subr.mxu0 0.0
          %7789 = vmatpush1.msra.mxu0 %v7759
          %7790 = vmatprep.subr.mxu0 0.0
          %7791 = vmatpush1.msra.mxu0 %v7758
          %7792 = vmatprep.subr.mxu0 0.0
          %7793 = vmatpush1.msra.mxu0 %v7757
          %7794 = vmatprep.subr.mxu0 0.0
          %7795 = vmatpush1.msra.mxu0 %v7756
          %7796 = vmatprep.subr.mxu0 0.0
          %7797 = vmatpush1.msra.mxu0 %v7755
          %7798 = vmatprep.subr.mxu0 0.0
          %7799 = vmatpush1.msra.mxu0 %v7754
          %7800 = vmatprep.subr.mxu0 0.0
          %7801 = vmatpush1.msra.mxu0 %v7753
          %7802 = vmatprep.subr.mxu0 0.0
          %7803 = vmatpush1.msra.mxu0 %v7752
          %7804 = vmatprep.subr.mxu0 0.0
          %7805 = vmatpush1.msra.mxu0 %v7751
          %7806 = vmatprep.subr.mxu0 0.0
          %7807 = vmatpush2.msra.mxu0 0.0
          %7808 = vmatprep.subr.mxu0 0.0
          %7809 = vmatpush2.msra.mxu0 0.0
          %7810 = vmatprep.subr.mxu0 0.0
          %7811 = vmatpush2.msra.mxu0 0.0
          %7812 = vmatprep.subr.mxu0 0.0
          %7813 = vmatpush2.msra.mxu0 0.0
          %7814 = vmatprep.subr.mxu0 0.0
          %7815 = vmatpush2.msra.mxu0 0.0
          %7816 = vmatprep.subr.mxu0 0.0
          %7817 = vmatpush2.msra.mxu0 0.0
          %7818 = vmatprep.subr.mxu0 0.0
          %7819 = vmatpush2.msra.mxu0 0.0
          %7820 = vmatprep.subr.mxu0 0.0
          %7821 = vmatpush2.msra.mxu0 0.0
          %7822 = vmatprep.subr.mxu0 0.0
          %7823 = vmatpush2.msra.mxu0 0.0
          %7824 = vmatprep.subr.mxu0 0.0
          %7825 = vmatpush2.msra.mxu0 0.0
          %7826 = vmatprep.subr.mxu0 0.0
          %7827 = vmatpush2.msra.mxu0 0.0
          %7828 = vmatprep.subr.mxu0 0.0
          %7829 = vmatpush2.msra.mxu0 0.0
          %7830 = vmatprep.subr.mxu0 0.0
          %7831 = vmatpush2.msra.mxu0 0.0
          %7832 = vmatprep.subr.mxu0 0.0
          %7833 = vmatpush2.msra.mxu0 0.0
          %7834 = vmatprep.subr.mxu0 0.0
          %7835 = vmatpush2.msra.mxu0 0.0
          %7836 = vmatprep.subr.mxu0 0.0
          %7837 = vmatpush2.msra.mxu0 0.0
          %7838 = vmatprep.mubr.f32.mxu0 0.0
          %7839 = vmatmul.mubr.f32.gmra.mxu0 %v7750
          %v7840 = vpop.f32.mrf.mxu0
          %v7841 = vadd.f32 %v7772, %v7840
          %v7842 = vpop.f32.mrf.mxu0
          %7843 = vdwg.mxu0
          %v7844 = vmax.f32 %v7841, 0.0
          %v7845 = vld [vmem:[%s8] sm:$0xff]
          %v7846 = vld [vmem:[%s8 + $0x8] sm:$0xff]
          %v7847 = vld [vmem:[%s8 + $0x10] sm:$0xff]
          %v7848 = vld [vmem:[%s8 + $0x18] sm:$0xff]
          %v7849 = vld [vmem:[%s8 + $0x20] sm:$0xff]
          %v7850 = vld [vmem:[%s8 + $0x28] sm:$0xff]
          %v7851 = vld [vmem:[%s8 + $0x30] sm:$0xff]
          %v7852 = vld [vmem:[%s8 + $0x38] sm:$0xff]
          %v7853 = vld [vmem:[%s8 + $0x40] sm:$0xff]
          %v7854 = vld [vmem:[%s8 + $0x48] sm:$0xff]
          %v7855 = vld [vmem:[%s8 + $0x50] sm:$0xff]
          %v7856 = vld [vmem:[%s8 + $0x58] sm:$0xff]
          %v7857 = vld [vmem:[%s8 + $0x60] sm:$0xff]
          %v7858 = vld [vmem:[%s8 + $0x68] sm:$0xff]
          %v7859 = vld [vmem:[%s8 + $0x70] sm:$0xff]
          %v7860 = vld [vmem:[%s8 + $0x78] sm:$0xff]
          %v7861 = vld [vmem:[%s9] sm:$0x3]
          %v7863 = vlaneseq
          %v7864 = vshrl.u32 %v7863, 7
          %v7865 = vsub.s32 0, %v7864
          %v7866 = vrot.slane %v7861, %v7865
          %v7867 = vlaneseq
          %v7868 = vshrl.u32 %v7867, 7
          %v7869 = vsub.s32 1, %v7868
          %v7870 = vrot.slane %v7861, %v7869
          %vm7873 = vcmask 523264
          %v7875 = vsel %vm7873, %v7844, 0
          %7877 = vmatprep.subr.mxu0 0.0
          %7878 = vmatpush1.msra.mxu0 0.0
          %7879 = vmatprep.subr.mxu0 0.0
          %7880 = vmatpush1.msra.mxu0 0.0
          %7881 = vmatprep.subr.mxu0 0.0
          %7882 = vmatpush1.msra.mxu0 0.0
          %7883 = vmatprep.subr.mxu0 0.0
          %7884 = vmatpush1.msra.mxu0 0.0
          %7885 = vmatprep.subr.mxu0 0.0
          %7886 = vmatpush1.msra.mxu0 0.0
          %7887 = vmatprep.subr.mxu0 0.0
          %7888 = vmatpush1.msra.mxu0 0.0
          %7889 = vmatprep.subr.mxu0 0.0
          %7890 = vmatpush1.msra.mxu0 0.0
          %7891 = vmatprep.subr.mxu0 0.0
          %7892 = vmatpush1.msra.mxu0 0.0
          %7893 = vmatprep.subr.mxu0 %v7860
          %7894 = vmatpush1.msra.mxu0 %v7859
          %7895 = vmatprep.subr.mxu0 %v7858
          %7896 = vmatpush1.msra.mxu0 %v7857
          %7897 = vmatprep.subr.mxu0 %v7856
          %7898 = vmatpush1.msra.mxu0 %v7855
          %7899 = vmatprep.subr.mxu0 %v7854
          %7900 = vmatpush1.msra.mxu0 %v7853
          %7901 = vmatprep.subr.mxu0 %v7852
          %7902 = vmatpush1.msra.mxu0 %v7851
          %7903 = vmatprep.subr.mxu0 %v7850
          %7904 = vmatpush1.msra.mxu0 %v7849
          %7905 = vmatprep.subr.mxu0 %v7848
          %7906 = vmatpush1.msra.mxu0 %v7847
          %7907 = vmatprep.subr.mxu0 %v7846
          %7908 = vmatpush1.msra.mxu0 %v7845
          %7909 = vmatprep.subr.mxu0 0.0
          %7910 = vmatpush2.msra.mxu0 0.0
          %7911 = vmatprep.subr.mxu0 0.0
          %7912 = vmatpush2.msra.mxu0 0.0
          %7913 = vmatprep.subr.mxu0 0.0
          %7914 = vmatpush2.msra.mxu0 0.0
          %7915 = vmatprep.subr.mxu0 0.0
          %7916 = vmatpush2.msra.mxu0 0.0
          %7917 = vmatprep.subr.mxu0 0.0
          %7918 = vmatpush2.msra.mxu0 0.0
          %7919 = vmatprep.subr.mxu0 0.0
          %7920 = vmatpush2.msra.mxu0 0.0
          %7921 = vmatprep.subr.mxu0 0.0
          %7922 = vmatpush2.msra.mxu0 0.0
          %7923 = vmatprep.subr.mxu0 0.0
          %7924 = vmatpush2.msra.mxu0 0.0
          %7925 = vmatprep.subr.mxu0 0.0
          %7926 = vmatpush2.msra.mxu0 0.0
          %7927 = vmatprep.subr.mxu0 0.0
          %7928 = vmatpush2.msra.mxu0 0.0
          %7929 = vmatprep.subr.mxu0 0.0
          %7930 = vmatpush2.msra.mxu0 0.0
          %7931 = vmatprep.subr.mxu0 0.0
          %7932 = vmatpush2.msra.mxu0 0.0
          %7933 = vmatprep.subr.mxu0 0.0
          %7934 = vmatpush2.msra.mxu0 0.0
          %7935 = vmatprep.subr.mxu0 0.0
          %7936 = vmatpush2.msra.mxu0 0.0
          %7937 = vmatprep.subr.mxu0 0.0
          %7938 = vmatpush2.msra.mxu0 0.0
          %7939 = vmatprep.subr.mxu0 0.0
          %7940 = vmatpush2.msra.mxu0 0.0
          %7941 = vmatprep.mubr.f32.mxu0 0.0
          %7942 = vmatmul.mubr.f32.gmra.mxu0 %v7875
          %v7943 = vpop.f32.mrf.mxu0
          %v7944 = vadd.f32 %v7866, %v7943
          %v7945 = vpop.f32.mrf.mxu0
          %v7946 = vadd.f32 %v7870, %v7945
          %7947 = vdwg.mxu0
          %v7948 = vxor.u32 %v7944, 2147483648
          %v7949 = vxor.u32 %v7946, 2147483648
          %v7950 = vmul.f32 %v7948, 1.442695
          %v7951 = vpow.pop %v7950
          %v7952 = vmul.f32 %v7949, 1.442695
          %v7953 = vpow.pop %v7952
          %v7954 = vadd.f32 %v7951, 1.0
          %v7955 = vadd.f32 %v7953, 1.0
          %v7956 = vrcp.pop %v7954
          %v7957 = vmul.f32 1.0, %v7956
          %v7958 = vrcp.pop %v7955
          %v7959 = vmul.f32 1.0, %v7958
          %v7962 = vcombine.low %v7957, %v7959
          %v7964 = vunpack.c.l.s4 1983009808
          %v7965 = vunpack.c.0.s8 %v7964
          %v7966 = vlaneseq
          %v7967 = vshrl.u32 %v7966, 7
          %v7968 = vsub.s32 %v7965, %v7967
          %v7969 = vrot.slane %v7962, %v7968
          %vm7971 = vcmask 1041408
          %vm7972 = vcmask 11266
          %vm7973 = vmor %vm7972, %vm7971
          %7974 = vst.msk [vmem:[#allocation6] sm:$0xf] %vm7973, %v7969
        $region72: #{feedforward_model.1} parent=59 // pred_fallthru
          _
        // Predicated region
        $region73: #{feedforward_model.1} parent=59 // pred_check
          %p7975 = pneg %p258
        $region74: #{feedforward_model.1} parent=59 // pred_check_branch
          %7977 = sbr.rel (%p7975) target = $region76
        $region75: #{feedforward_model.1} parent=59 // pred_region
          %s7979 = ssub.s32 64, 64
          %7980 = vsyncadd [#allocation5], %s7979
          %s7982 = sshll.u32 [#allocation6], 4
          %s7983 = int_to_ptr.vmem [resolvable:$true] %s7982
          %7985 = dma.vmem_to_hbm [thread:$0]  %s7983, 64, %s10, [#allocation5]
        $region76: #{feedforward_model.1} parent=59 // pred_fallthru
          _
        // Predicated region
        $region77: #{feedforward_model.1} parent=59 // pred_check
          %p7986 = pneg %p258
        $region78: #{feedforward_model.1} parent=59 // pred_check_branch
          %7988 = sbr.rel (%p7986) target = $region80
        $region79: #{feedforward_model.1} parent=59 // pred_region
          %7989 = dma.done [#allocation5], 64
        $region80: #{feedforward_model.1} parent=59 // pred_fallthru
          _
      $region60: #{feedforward_model.1} parent=5 // pred_fallthru
        _
      %p7990 = scmp.le.s32.totalorder 2, %s20
      // Predicated region
      $region81: #{feedforward_model.1} parent=5 // pred_check
        %p7991 = pneg %p7990
      $region82: #{feedforward_model.1} parent=5 // pred_check_branch
        %7993 = sbr.rel (%p7991) target = $region84
      $region83: #{feedforward_model.1} parent=5 // pred_region
        %s7994 = ssub.s32 %s20, 2
      $region84: #{feedforward_model.1} parent=5 // pred_fallthru
        _
    $region6: #{feedforward_model.1} parent=1 // loop_footer
      %s24 = sadd.s32 1, %s20
    $region7: #{feedforward_model.1} parent=1 // loop_footer_branch
      %19 = sbr.rel target = $region3
    $region8: #{feedforward_model.1} parent=1 // loop_exit
      _
    %7995 = vsyncpa [#allocation4], 1
    %s7996 = scalar_lea.sflag [#allocation4], 1
    %7997 = vsyncpa %s7996, 1
    %7998 = vsyncpa [#allocation5], 1
    %s7999 = scalar_lea.sflag [#allocation5], 1
    %8000 = vsyncpa %s7999, 1

</llo_original>
